<compile_context>
chip_gen: v7x
topology: tpu7x:2x2x1
jax: 0.10.0
libtpu: 0.0.40
codegen_flags: <defaults>
</compile_context>

<pallas_src>
import math

import jax
import jax.numpy as jnp
from jax.experimental import pallas as pl
from jax.experimental.pallas import tpu as pltpu

_BN_EPS = 1e-5
_OUT_H, _OUT_W = 480, 640
_VMEM_LIMIT = 32 * 1024 * 1024  # explicit scoped-VMEM budget (safe on v5e/v6e/v7x)


def _round_up(x, m):
    return ((x + m - 1) // m) * m


# ----------------------------------------------------------------------------
# Pallas kernels
# ----------------------------------------------------------------------------
def _matmul_stats_kernel(p_ref, w_ref, y_ref, s_ref, ss_ref):
    # p_ref: (TM, Kp) bf16 im2col tile, w_ref: (Kp, Np) bf16 folded weights.
    # Emits the f32 pre-BN activations plus per-tile partial column sums and
    # sums of squares (row 0 of an (8, Np) block; rows 1..7 are zero) so the
    # training-mode BN statistics reduction stays tiny in XLA.
    y = jnp.dot(p_ref[...], w_ref[...], preferred_element_type=jnp.float32)
    y_ref[...] = y
    row0 = jax.lax.broadcasted_iota(jnp.int32, (8, y.shape[1]), 0) == 0
    s_ref[...] = jnp.where(row0, jnp.sum(y, axis=0, keepdims=True), 0.0)
    ss_ref[...] = jnp.where(row0, jnp.sum(y * y, axis=0, keepdims=True), 0.0)


def _scale_shift_relu_kernel(y_ref, sc_ref, sh_ref, o_ref):
    # One fused per-channel multiply-add + ReLU per element (BN folded).
    o_ref[...] = jnp.maximum(
        y_ref[...] * sc_ref[...] + sh_ref[...], 0.0
    ).astype(o_ref.dtype)


def _matmul_bias_kernel(p_ref, w_ref, b_ref, o_ref):
    # Last refiner conv: no BN, no ReLU.
    o_ref[...] = (
        jnp.dot(p_ref[...], w_ref[...], preferred_element_type=jnp.float32)
        + b_ref[...]
    )


def _upsample_kernel(x_ref, rh_ref, rwt_ref, o_ref):
    # Separable bilinear resize for one (batch, row-tile) grid point:
    #   out[b, rows] = Rh[rows] @ x[b] @ Rw^T   (Rw^T pre-transposed + padded)
    t = jnp.dot(rh_ref[...], x_ref[0], preferred_element_type=jnp.float32)
    o_ref[0] = jnp.dot(t, rwt_ref[...], preferred_element_type=jnp.float32)


# ----------------------------------------------------------------------------
# Glue: im2col, interpolation matrices, parameter init
# ----------------------------------------------------------------------------
def _im2col(x_nhwc, k, stride, pad):
    B, H, W, C = x_nhwc.shape
    xp = jnp.pad(x_nhwc, ((0, 0), (pad, pad), (pad, pad), (0, 0)))
    OH = (H + 2 * pad - k) // stride + 1
    OW = (W + 2 * pad - k) // stride + 1
    cols = []
    for i in range(k):
        for j in range(k):
            cols.append(
                xp[:, i:i + stride * (OH - 1) + 1:stride,
                      j:j + stride * (OW - 1) + 1:stride, :]
            )
    patches = jnp.stack(cols, axis=3)              # (B, OH, OW, k*k, C)
    return patches.reshape(B * OH * OW, k * k * C), (B, OH, OW)


def _interp_matrix(n_out, n_in):
    # align_corners=True bilinear interpolation matrix (n_out, n_in).
    if n_in == 1:
        return jnp.ones((n_out, 1), jnp.float32)
    src = jnp.arange(n_out, dtype=jnp.float32) * ((n_in - 1) / (n_out - 1))
    i0 = jnp.clip(jnp.floor(src).astype(jnp.int32), 0, n_in - 2)
    frac = src - i0.astype(jnp.float32)
    rows = jnp.arange(n_out)
    R = jnp.zeros((n_out, n_in), jnp.float32)
    R = R.at[rows, i0].add(1.0 - frac)
    R = R.at[rows, i0 + 1].add(frac)
    return R


def _init_params(key, in_channels):
    keys = list(jax.random.split(key, 32))
    kit = iter(keys)

    def conv_init(cin, cout, k):
        fan_in = k * k * cin
        W = jax.random.normal(next(kit), (k, k, cin, cout), jnp.float32)
        W = W * (1.0 / math.sqrt(fan_in))
        b = jax.random.normal(next(kit), (cout,), jnp.float32) * 0.01
        return W, b

    def bn_init(cout):
        # PyTorch BatchNorm2d default init: gamma=1, beta=0.
        return jnp.ones((cout,), jnp.float32), jnp.zeros((cout,), jnp.float32)

    feat = []
    for cin, cout in [(in_channels, 32), (32, 64), (64, 128)]:
        W, b = conv_init(cin, cout, 5)
        g, bt = bn_init(cout)
        feat.append((W, b, g, bt))

    ref = []
    for cin, cout in [(256, 128), (128, 64), (64, 32)]:
        W, b = conv_init(cin, cout, 3)
        g, bt = bn_init(cout)
        ref.append((W, b, g, bt))

    W_last, b_last = conv_init(32, 1, 3)
    return {"feat": feat, "ref": ref, "last": (W_last, b_last)}


# ----------------------------------------------------------------------------
# Pallas-call wrappers
# ----------------------------------------------------------------------------
def _conv_geometry(M, K, cout, tm_max):
    Kp = _round_up(K, 128)
    Np = _round_up(cout, 128)
    TM = min(tm_max, _round_up(M, 8))
    Mp = _round_up(M, TM)
    return Kp, Np, TM, Mp, Mp // TM


def _conv_bn_relu_layer(x_nhwc, W, g, bt, k, stride, pad, tm_max=512):
    """conv (no bias: cancelled by BN) + training-mode BN + ReLU, bf16 out."""
    patches, (B, OH, OW) = _im2col(x_nhwc, k, stride, pad)
    M, K = patches.shape
    cout = W.shape[-1]
    Kp, Np, TM, Mp, G = _conv_geometry(M, K, cout, tm_max)

    # bf16 operands for the MXU; zero-pad M/K/N so tiles are (8,128) aligned
    # and output stores are lane-dense (last dim 128).
    p = jnp.pad(patches, ((0, Mp - M), (0, Kp - K))).astype(jnp.bfloat16)
    Wm = jnp.pad(W.reshape(K, cout),
                 ((0, Kp - K), (0, Np - cout))).astype(jnp.bfloat16)

    # Phase 1: matmul + per-tile partial BN statistics (pipelined over M).
    y, psum, psumsq = pl.pallas_call(
        _matmul_stats_kernel,
        out_shape=(jax.ShapeDtypeStruct((Mp, Np), jnp.float32),
                   jax.ShapeDtypeStruct((G * 8, Np), jnp.float32),
                   jax.ShapeDtypeStruct((G * 8, Np), jnp.float32)),
        grid=(G,),
        in_specs=[
            pl.BlockSpec((TM, Kp), lambda m: (m, 0)),
            pl.BlockSpec((Kp, Np), lambda m: (0, 0)),   # weights stay resident
        ],
        out_specs=(
            pl.BlockSpec((TM, Np), lambda m: (m, 0)),
            pl.BlockSpec((8, Np), lambda m: (m, 0)),
            pl.BlockSpec((8, Np), lambda m: (m, 0)),
        ),
        compiler_params=pltpu.CompilerParams(
            dimension_semantics=("parallel",),
            vmem_limit_bytes=_VMEM_LIMIT),
    )(p, Wm)

    # Tiny per-channel reduction + BN fold in XLA.  Padded output channels
    # (zero weight columns) get gamma/beta = 0 so they stay exactly 0.
    inv_m = 1.0 / float(M)
    mean = psum.sum(axis=0) * inv_m
    var = jnp.maximum(psumsq.sum(axis=0) * inv_m - mean * mean, 0.0)
    g_pad = jnp.pad(g, (0, Np - cout))
    bt_pad = jnp.pad(bt, (0, Np - cout))
    scale = g_pad * jax.lax.rsqrt(var + _BN_EPS)
    shift = bt_pad - mean * scale

    # Phase 2: fused scale/shift + ReLU, bf16 activations out (halves the
    # inter-layer HBM traffic feeding the next layer's im2col).
    out = pl.pallas_call(
        _scale_shift_relu_kernel,
        out_shape=jax.ShapeDtypeStruct((Mp, Np), jnp.bfloat16),
        grid=(G,),
        in_specs=[
            pl.BlockSpec((TM, Np), lambda m: (m, 0)),
            pl.BlockSpec((1, Np), lambda m: (0, 0)),
            pl.BlockSpec((1, Np), lambda m: (0, 0)),
        ],
        out_specs=pl.BlockSpec((TM, Np), lambda m: (m, 0)),
        compiler_params=pltpu.CompilerParams(
            dimension_semantics=("parallel",),
            vmem_limit_bytes=_VMEM_LIMIT),
    )(y, scale.reshape(1, Np), shift.reshape(1, Np))

    return out[:M, :cout].reshape(B, OH, OW, cout)


def _conv_bias_layer(x_nhwc, W, b, k, stride, pad, tm_max=512):
    """Plain conv + bias (final refiner layer), f32 out."""
    patches, (B, OH, OW) = _im2col(x_nhwc, k, stride, pad)
    M, K = patches.shape
    cout = W.shape[-1]
    Kp, Np, TM, Mp, G = _conv_geometry(M, K, cout, tm_max)

    p = jnp.pad(patches, ((0, Mp - M), (0, Kp - K))).astype(jnp.bfloat16)
    Wm = jnp.pad(W.reshape(K, cout),
                 ((0, Kp - K), (0, Np - cout))).astype(jnp.bfloat16)
    bp = jnp.pad(b, (0, Np - cout)).reshape(1, Np)

    out = pl.pallas_call(
        _matmul_bias_kernel,
        out_shape=jax.ShapeDtypeStruct((Mp, Np), jnp.float32),
        grid=(G,),
        in_specs=[
            pl.BlockSpec((TM, Kp), lambda m: (m, 0)),
            pl.BlockSpec((Kp, Np), lambda m: (0, 0)),
            pl.BlockSpec((1, Np), lambda m: (0, 0)),
        ],
        out_specs=pl.BlockSpec((TM, Np), lambda m: (m, 0)),
        compiler_params=pltpu.CompilerParams(
            dimension_semantics=("parallel",),
            vmem_limit_bytes=_VMEM_LIMIT),
    )(p, Wm, bp)

    return out[:M, :cout].reshape(B, OH, OW, cout)


def _bilinear_upsample(x_bhw, th=120):
    # x_bhw: (B, h, w) -> (B, 480, 640), bilinear, align_corners=True.
    B, h, w = x_bhw.shape
    Rh = _interp_matrix(_OUT_H, h)          # (480, h)
    Rw = _interp_matrix(_OUT_W, w)          # (640, w)

    h_pad = max(8, _round_up(h, 8))
    w_pad = max(128, _round_up(w, 128))
    x_pad = jnp.pad(x_bhw.astype(jnp.float32),
                    ((0, 0), (0, h_pad - h), (0, w_pad - w)))
    Rh_pad = jnp.pad(Rh, ((0, 0), (0, h_pad - h)))           # (480, h_pad)
    RwT_pad = jnp.pad(Rw.T, ((0, w_pad - w), (0, 0)))        # (w_pad, 640)

    n_row_tiles = _OUT_H // th                               # 480 / 120 = 4
    out = pl.pallas_call(
        _upsample_kernel,
        out_shape=jax.ShapeDtypeStruct((B, _OUT_H, _OUT_W), jnp.float32),
        grid=(B, n_row_tiles),
        in_specs=[
            pl.BlockSpec((1, h_pad, w_pad), lambda b, r: (b, 0, 0)),
            pl.BlockSpec((th, h_pad), lambda b, r: (r, 0)),
            pl.BlockSpec((w_pad, _OUT_W), lambda b, r: (0, 0)),
        ],
        out_specs=pl.BlockSpec((1, th, _OUT_W), lambda b, r: (b, r, 0)),
        compiler_params=pltpu.CompilerParams(
            dimension_semantics=("parallel", "parallel"),
            vmem_limit_bytes=_VMEM_LIMIT),
    )(x_pad, Rh_pad, RwT_pad)
    return out


def _feature_extractor(x_nhwc, feat_params):
    for (W, _b, g, bt) in feat_params:
        x_nhwc = _conv_bn_relu_layer(x_nhwc, W, g, bt, k=5, stride=2, pad=2)
    return x_nhwc


def stereonet_forward(left_nchw, right_nchw, params):
    left = jnp.transpose(left_nchw, (0, 2, 3, 1)).astype(jnp.float32)
    right = jnp.transpose(right_nchw, (0, 2, 3, 1)).astype(jnp.float32)

    # Two independent forward passes through the feature extractor: PyTorch
    # computes BatchNorm batch statistics separately per call, so left/right
    # must NOT be batched together.
    lf = _feature_extractor(left, params["feat"])
    rf = _feature_extractor(right, params["feat"])

    x = jnp.concatenate([lf, rf], axis=-1)          # channel concat (NHWC)

    for (W, _b, g, bt) in params["ref"]:
        x = _conv_bn_relu_layer(x, W, g, bt, k=3, stride=1, pad=1)

    W_last, b_last = params["last"]
    x = _conv_bias_layer(x, W_last, b_last, k=3, stride=1, pad=1)  # (B,h,w,1)

    depth = _bilinear_upsample(x[..., 0])           # (B, 480, 640)
    return depth[:, None, :, :]                     # NCHW (B, 1, 480, 640)


# ----------------------------------------------------------------------------
# Main
# ----------------------------------------------------------------------------
if __name__ == "__main__":
    B, C, H, W = 2, 4, 16, 16
    key = jax.random.PRNGKey(0)
    k_left, k_right = jax.random.split(key)
    left_images = jax.random.normal(k_left, (B, C, H, W), jnp.float32)
    right_images = jax.random.normal(k_right, (B, C, H, W), jnp.float32)

    params = _init_params(jax.random.PRNGKey(42), C)

    fwd = jax.jit(stereonet_forward)
    depth_map = fwd(left_images, right_images, params)
    depth_map = jax.block_until_ready(depth_map)

    assert depth_map.shape == (B, 1, _OUT_H, _OUT_W), depth_map.shape
    assert bool(jnp.all(jnp.isfinite(depth_map)))
    print("KERNEL_OK")
</pallas_src>

<mosaic_0001>
module attributes {stable_mosaic.version = 11 : i64} {
  func.func private @main(%arg0: i32) attributes {dimension_semantics = [#tpu.dimension_semantics<core_parallel>], iteration_bounds = array<i64: 2>, tpu.core_type = #tpu.core_type<sc_scalar_subcore>, window_params = []} {
    return
  }
}

module attributes {stable_mosaic.version = 11 : i64} {
  func.func private @main(%arg0: i32) attributes {dimension_semantics = [#tpu.dimension_semantics<core_parallel>], iteration_bounds = array<i64: 2>, tpu.core_type = #tpu.core_type<sc_scalar_subcore>, window_params = []} {
    return
  }
}

module attributes {stable_mosaic.version = 11 : i64} {
  func.func @_matmul_stats_kernel(%arg0: i32, %arg1: memref<128x128xbf16, #tpu.memory_space<vmem>>, %arg2: memref<128x128xbf16, #tpu.memory_space<vmem>>, %arg3: memref<128x128xf32, #tpu.memory_space<vmem>>, %arg4: memref<8x128xf32, #tpu.memory_space<vmem>>, %arg5: memref<8x128xf32, #tpu.memory_space<vmem>>) attributes {dimension_semantics = [#tpu.dimension_semantics<parallel>], iteration_bounds = array<i64: 1>, scalar_prefetch = 0 : i64, scratch_operands = 0 : i64, tpu.core_type = #tpu.core_type<tc>, window_params = [{transform_indices = @transform_0, window_bounds = array<i64: 128, 128>}, {pipeline_mode = #tpu.pipeline_mode<synchronous>, transform_indices = @transform_1, window_bounds = array<i64: 128, 128>}, {transform_indices = @transform_2, window_bounds = array<i64: 128, 128>}, {transform_indices = @transform_3, window_bounds = array<i64: 8, 128>}, {transform_indices = @transform_4, window_bounds = array<i64: 8, 128>}]} {
    %c0 = arith.constant 0 : index
    %c0_0 = arith.constant 0 : index
    %0 = vector.load %arg1[%c0, %c0_0] : memref<128x128xbf16, #tpu.memory_space<vmem>>, vector<128x128xbf16>
    %c0_1 = arith.constant 0 : index
    %c0_2 = arith.constant 0 : index
    %1 = vector.load %arg2[%c0_1, %c0_2] : memref<128x128xbf16, #tpu.memory_space<vmem>>, vector<128x128xbf16>
    %cst = arith.constant dense<0.000000e+00> : vector<128x128xf32>
    %2 = tpu.matmul %0, %1, %cst {dimension_numbers = #tpu.dot_dimension_numbers<[1], [0], [0], [1], [0, 0, 1, 1], [], []>} : vector<128x128xbf16>, vector<128x128xbf16>, vector<128x128xf32> -> vector<128x128xf32>
    %c0_3 = arith.constant 0 : index
    %c0_4 = arith.constant 0 : index
    %3 = vector.load %arg3[%c0_3, %c0_4] : memref<128x128xf32, #tpu.memory_space<vmem>>, vector<128x128xf32>
    tpu.vector_store %arg3[%c0_3, %c0_4], %2 {strides = array<i32>} : memref<128x128xf32, #tpu.memory_space<vmem>>, vector<128x128xf32>,
    %4 = tpu.iota {dimensions = array<i32: 0>} : vector<8x128xi32>
    %c0_i32 = arith.constant 0 : i32
    %5 = vector.broadcast %c0_i32 : i32 to vector<8x128xi32>
    %6 = arith.cmpi eq, %4, %5 : vector<8x128xi32>
    %cst_5 = arith.constant dense<0.000000e+00> : vector<128xf32>
    %7 = vector.multi_reduction <add>, %2, %cst_5 [0] : vector<128x128xf32> to vector<128xf32>
    %8 = vector.shape_cast %7 : vector<128xf32> to vector<1x128xf32>
    %cst_6 = arith.constant 0.000000e+00 : f32
    %9 = vector.shape_cast %8 : vector<1x128xf32> to vector<1x128xf32>
    %10 = vector.broadcast %9 : vector<1x128xf32> to vector<8x128xf32>
    %11 = vector.broadcast %cst_6 : f32 to vector<8x128xf32>
    %12 = arith.select %6, %10, %11 : vector<8x128xi1>, vector<8x128xf32>
    %c0_7 = arith.constant 0 : index
    %c0_8 = arith.constant 0 : index
    %13 = vector.load %arg4[%c0_7, %c0_8] : memref<8x128xf32, #tpu.memory_space<vmem>>, vector<8x128xf32>
    tpu.vector_store %arg4[%c0_7, %c0_8], %12 {strides = array<i32>} : memref<8x128xf32, #tpu.memory_space<vmem>>, vector<8x128xf32>,
    %14 = arith.mulf %2, %2 : vector<128x128xf32>
    %cst_9 = arith.constant dense<0.000000e+00> : vector<128xf32>
    %15 = vector.multi_reduction <add>, %14, %cst_9 [0] : vector<128x128xf32> to vector<128xf32>
    %16 = vector.shape_cast %15 : vector<128xf32> to vector<1x128xf32>
    %cst_10 = arith.constant 0.000000e+00 : f32
    %17 = vector.shape_cast %16 : vector<1x128xf32> to vector<1x128xf32>
    %18 = vector.broadcast %17 : vector<1x128xf32> to vector<8x128xf32>
    %19 = vector.broadcast %cst_10 : f32 to vector<8x128xf32>
    %20 = arith.select %6, %18, %19 : vector<8x128xi1>, vector<8x128xf32>
    %c0_11 = arith.constant 0 : index
    %c0_12 = arith.constant 0 : index
    %21 = vector.load %arg5[%c0_11, %c0_12] : memref<8x128xf32, #tpu.memory_space<vmem>>, vector<8x128xf32>
    tpu.vector_store %arg5[%c0_11, %c0_12], %20 {strides = array<i32>} : memref<8x128xf32, #tpu.memory_space<vmem>>, vector<8x128xf32>,
    return
  }
  func.func @transform_0(%arg0: i32) -> (i32, i32) {
    %c0_i32 = arith.constant 0 : i32
    %c0_i32_0 = arith.constant 0 : i32
    return %arg0, %c0_i32 : i32, i32
  }
  func.func @transform_1(%arg0: i32) -> (i32, i32) {
    %c0_i32 = arith.constant 0 : i32
    %c0_i32_0 = arith.constant 0 : i32
    %c0_i32_1 = arith.constant 0 : i32
    return %c0_i32, %c0_i32_0 : i32, i32
  }
  func.func @transform_2(%arg0: i32) -> (i32, i32) {
    %c0_i32 = arith.constant 0 : i32
    %c0_i32_0 = arith.constant 0 : i32
    return %arg0, %c0_i32 : i32, i32
  }
  func.func @transform_3(%arg0: i32) -> (i32, i32) {
    %c0_i32 = arith.constant 0 : i32
    %c0_i32_0 = arith.constant 0 : i32
    return %arg0, %c0_i32 : i32, i32
  }
  func.func @transform_4(%arg0: i32) -> (i32, i32) {
    %c0_i32 = arith.constant 0 : i32
    %c0_i32_0 = arith.constant 0 : i32
    return %arg0, %c0_i32 : i32, i32
  }
}

module attributes {stable_mosaic.version = 11 : i64} {
  func.func @_scale_shift_relu_kernel(%arg0: i32, %arg1: memref<128x128xf32, #tpu.memory_space<vmem>>, %arg2: memref<1x128xf32, #tpu.memory_space<vmem>>, %arg3: memref<1x128xf32, #tpu.memory_space<vmem>>, %arg4: memref<128x128xbf16, #tpu.memory_space<vmem>>) attributes {dimension_semantics = [#tpu.dimension_semantics<parallel>], iteration_bounds = array<i64: 1>, scalar_prefetch = 0 : i64, scratch_operands = 0 : i64, tpu.core_type = #tpu.core_type<tc>, window_params = [{transform_indices = @transform_0, window_bounds = array<i64: 128, 128>}, {pipeline_mode = #tpu.pipeline_mode<synchronous>, transform_indices = @transform_1, window_bounds = array<i64: 1, 128>}, {pipeline_mode = #tpu.pipeline_mode<synchronous>, transform_indices = @transform_2, window_bounds = array<i64: 1, 128>}, {transform_indices = @transform_3, window_bounds = array<i64: 128, 128>}]} {
    %c0 = arith.constant 0 : index
    %c0_0 = arith.constant 0 : index
    %0 = vector.load %arg1[%c0, %c0_0] : memref<128x128xf32, #tpu.memory_space<vmem>>, vector<128x128xf32>
    %c0_1 = arith.constant 0 : index
    %c0_2 = arith.constant 0 : index
    %1 = vector.load %arg2[%c0_1, %c0_2] : memref<1x128xf32, #tpu.memory_space<vmem>>, vector<1x128xf32>
    %2 = vector.broadcast %1 : vector<1x128xf32> to vector<128x128xf32>
    %3 = arith.mulf %0, %2 : vector<128x128xf32>
    %c0_3 = arith.constant 0 : index
    %c0_4 = arith.constant 0 : index
    %4 = vector.load %arg3[%c0_3, %c0_4] : memref<1x128xf32, #tpu.memory_space<vmem>>, vector<1x128xf32>
    %5 = vector.broadcast %4 : vector<1x128xf32> to vector<128x128xf32>
    %6 = arith.addf %3, %5 : vector<128x128xf32>
    %cst = arith.constant 0.000000e+00 : f32
    %7 = vector.broadcast %cst : f32 to vector<128x128xf32>
    %8 = arith.maximumf %6, %7 : vector<128x128xf32>
    %9 = arith.truncf %8 : vector<128x128xf32> to vector<128x128xbf16>
    %c0_5 = arith.constant 0 : index
    %c0_6 = arith.constant 0 : index
    %10 = vector.load %arg4[%c0_5, %c0_6] : memref<128x128xbf16, #tpu.memory_space<vmem>>, vector<128x128xbf16>
    tpu.vector_store %arg4[%c0_5, %c0_6], %9 {strides = array<i32>} : memref<128x128xbf16, #tpu.memory_space<vmem>>, vector<128x128xbf16>,
    return
  }
  func.func @transform_0(%arg0: i32) -> (i32, i32) {
    %c0_i32 = arith.constant 0 : i32
    %c0_i32_0 = arith.constant 0 : i32
    return %arg0, %c0_i32 : i32, i32
  }
  func.func @transform_1(%arg0: i32) -> (i32, i32) {
    %c0_i32 = arith.constant 0 : i32
    %c0_i32_0 = arith.constant 0 : i32
    %c0_i32_1 = arith.constant 0 : i32
    return %c0_i32, %c0_i32_0 : i32, i32
  }
  func.func @transform_2(%arg0: i32) -> (i32, i32) {
    %c0_i32 = arith.constant 0 : i32
    %c0_i32_0 = arith.constant 0 : i32
    %c0_i32_1 = arith.constant 0 : i32
    return %c0_i32, %c0_i32_0 : i32, i32
  }
  func.func @transform_3(%arg0: i32) -> (i32, i32) {
    %c0_i32 = arith.constant 0 : i32
    %c0_i32_0 = arith.constant 0 : i32
    return %arg0, %c0_i32 : i32, i32
  }
}

module attributes {stable_mosaic.version = 11 : i64} {
  func.func @_matmul_stats_kernel(%arg0: i32, %arg1: memref<32x896xbf16, #tpu.memory_space<vmem>>, %arg2: memref<896x128xbf16, #tpu.memory_space<vmem>>, %arg3: memref<32x128xf32, #tpu.memory_space<vmem>>, %arg4: memref<8x128xf32, #tpu.memory_space<vmem>>, %arg5: memref<8x128xf32, #tpu.memory_space<vmem>>) attributes {dimension_semantics = [#tpu.dimension_semantics<parallel>], iteration_bounds = array<i64: 1>, scalar_prefetch = 0 : i64, scratch_operands = 0 : i64, tpu.core_type = #tpu.core_type<tc>, window_params = [{transform_indices = @transform_0, window_bounds = array<i64: 32, 896>}, {pipeline_mode = #tpu.pipeline_mode<synchronous>, transform_indices = @transform_1, window_bounds = array<i64: 896, 128>}, {transform_indices = @transform_2, window_bounds = array<i64: 32, 128>}, {transform_indices = @transform_3, window_bounds = array<i64: 8, 128>}, {transform_indices = @transform_4, window_bounds = array<i64: 8, 128>}]} {
    %c0 = arith.constant 0 : index
    %c0_0 = arith.constant 0 : index
    %0 = vector.load %arg1[%c0, %c0_0] : memref<32x896xbf16, #tpu.memory_space<vmem>>, vector<32x896xbf16>
    %c0_1 = arith.constant 0 : index
    %c0_2 = arith.constant 0 : index
    %1 = vector.load %arg2[%c0_1, %c0_2] : memref<896x128xbf16, #tpu.memory_space<vmem>>, vector<896x128xbf16>
    %cst = arith.constant dense<0.000000e+00> : vector<32x128xf32>
    %2 = tpu.matmul %0, %1, %cst {dimension_numbers = #tpu.dot_dimension_numbers<[1], [0], [0], [1], [0, 0, 1, 1], [], []>} : vector<32x896xbf16>, vector<896x128xbf16>, vector<32x128xf32> -> vector<32x128xf32>
    %c0_3 = arith.constant 0 : index
    %c0_4 = arith.constant 0 : index
    %3 = vector.load %arg3[%c0_3, %c0_4] : memref<32x128xf32, #tpu.memory_space<vmem>>, vector<32x128xf32>
    tpu.vector_store %arg3[%c0_3, %c0_4], %2 {strides = array<i32>} : memref<32x128xf32, #tpu.memory_space<vmem>>, vector<32x128xf32>,
    %4 = tpu.iota {dimensions = array<i32: 0>} : vector<8x128xi32>
    %c0_i32 = arith.constant 0 : i32
    %5 = vector.broadcast %c0_i32 : i32 to vector<8x128xi32>
    %6 = arith.cmpi eq, %4, %5 : vector<8x128xi32>
    %cst_5 = arith.constant dense<0.000000e+00> : vector<128xf32>
    %7 = vector.multi_reduction <add>, %2, %cst_5 [0] : vector<32x128xf32> to vector<128xf32>
    %8 = vector.shape_cast %7 : vector<128xf32> to vector<1x128xf32>
    %cst_6 = arith.constant 0.000000e+00 : f32
    %9 = vector.shape_cast %8 : vector<1x128xf32> to vector<1x128xf32>
    %10 = vector.broadcast %9 : vector<1x128xf32> to vector<8x128xf32>
    %11 = vector.broadcast %cst_6 : f32 to vector<8x128xf32>
    %12 = arith.select %6, %10, %11 : vector<8x128xi1>, vector<8x128xf32>
    %c0_7 = arith.constant 0 : index
    %c0_8 = arith.constant 0 : index
    %13 = vector.load %arg4[%c0_7, %c0_8] : memref<8x128xf32, #tpu.memory_space<vmem>>, vector<8x128xf32>
    tpu.vector_store %arg4[%c0_7, %c0_8], %12 {strides = array<i32>} : memref<8x128xf32, #tpu.memory_space<vmem>>, vector<8x128xf32>,
    %14 = arith.mulf %2, %2 : vector<32x128xf32>
    %cst_9 = arith.constant dense<0.000000e+00> : vector<128xf32>
    %15 = vector.multi_reduction <add>, %14, %cst_9 [0] : vector<32x128xf32> to vector<128xf32>
    %16 = vector.shape_cast %15 : vector<128xf32> to vector<1x128xf32>
    %cst_10 = arith.constant 0.000000e+00 : f32
    %17 = vector.shape_cast %16 : vector<1x128xf32> to vector<1x128xf32>
    %18 = vector.broadcast %17 : vector<1x128xf32> to vector<8x128xf32>
    %19 = vector.broadcast %cst_10 : f32 to vector<8x128xf32>
    %20 = arith.select %6, %18, %19 : vector<8x128xi1>, vector<8x128xf32>
    %c0_11 = arith.constant 0 : index
    %c0_12 = arith.constant 0 : index
    %21 = vector.load %arg5[%c0_11, %c0_12] : memref<8x128xf32, #tpu.memory_space<vmem>>, vector<8x128xf32>
    tpu.vector_store %arg5[%c0_11, %c0_12], %20 {strides = array<i32>} : memref<8x128xf32, #tpu.memory_space<vmem>>, vector<8x128xf32>,
    return
  }
  func.func @transform_0(%arg0: i32) -> (i32, i32) {
    %c0_i32 = arith.constant 0 : i32
    %c0_i32_0 = arith.constant 0 : i32
    return %arg0, %c0_i32 : i32, i32
  }
  func.func @transform_1(%arg0: i32) -> (i32, i32) {
    %c0_i32 = arith.constant 0 : i32
    %c0_i32_0 = arith.constant 0 : i32
    %c0_i32_1 = arith.constant 0 : i32
    return %c0_i32, %c0_i32_0 : i32, i32
  }
  func.func @transform_2(%arg0: i32) -> (i32, i32) {
    %c0_i32 = arith.constant 0 : i32
    %c0_i32_0 = arith.constant 0 : i32
    return %arg0, %c0_i32 : i32, i32
  }
  func.func @transform_3(%arg0: i32) -> (i32, i32) {
    %c0_i32 = arith.constant 0 : i32
    %c0_i32_0 = arith.constant 0 : i32
    return %arg0, %c0_i32 : i32, i32
  }
  func.func @transform_4(%arg0: i32) -> (i32, i32) {
    %c0_i32 = arith.constant 0 : i32
    %c0_i32_0 = arith.constant 0 : i32
    return %arg0, %c0_i32 : i32, i32
  }
}

module attributes {stable_mosaic.version = 11 : i64} {
  func.func @_scale_shift_relu_kernel(%arg0: i32, %arg1: memref<32x128xf32, #tpu.memory_space<vmem>>, %arg2: memref<1x128xf32, #tpu.memory_space<vmem>>, %arg3: memref<1x128xf32, #tpu.memory_space<vmem>>, %arg4: memref<32x128xbf16, #tpu.memory_space<vmem>>) attributes {dimension_semantics = [#tpu.dimension_semantics<parallel>], iteration_bounds = array<i64: 1>, scalar_prefetch = 0 : i64, scratch_operands = 0 : i64, tpu.core_type = #tpu.core_type<tc>, window_params = [{transform_indices = @transform_0, window_bounds = array<i64: 32, 128>}, {pipeline_mode = #tpu.pipeline_mode<synchronous>, transform_indices = @transform_1, window_bounds = array<i64: 1, 128>}, {pipeline_mode = #tpu.pipeline_mode<synchronous>, transform_indices = @transform_2, window_bounds = array<i64: 1, 128>}, {transform_indices = @transform_3, window_bounds = array<i64: 32, 128>}]} {
    %c0 = arith.constant 0 : index
    %c0_0 = arith.constant 0 : index
    %0 = vector.load %arg1[%c0, %c0_0] : memref<32x128xf32, #tpu.memory_space<vmem>>, vector<32x128xf32>
    %c0_1 = arith.constant 0 : index
    %c0_2 = arith.constant 0 : index
    %1 = vector.load %arg2[%c0_1, %c0_2] : memref<1x128xf32, #tpu.memory_space<vmem>>, vector<1x128xf32>
    %2 = vector.broadcast %1 : vector<1x128xf32> to vector<32x128xf32>
    %3 = arith.mulf %0, %2 : vector<32x128xf32>
    %c0_3 = arith.constant 0 : index
    %c0_4 = arith.constant 0 : index
    %4 = vector.load %arg3[%c0_3, %c0_4] : memref<1x128xf32, #tpu.memory_space<vmem>>, vector<1x128xf32>
    %5 = vector.broadcast %4 : vector<1x128xf32> to vector<32x128xf32>
    %6 = arith.addf %3, %5 : vector<32x128xf32>
    %cst = arith.constant 0.000000e+00 : f32
    %7 = vector.broadcast %cst : f32 to vector<32x128xf32>
    %8 = arith.maximumf %6, %7 : vector<32x128xf32>
    %9 = arith.truncf %8 : vector<32x128xf32> to vector<32x128xbf16>
    %c0_5 = arith.constant 0 : index
    %c0_6 = arith.constant 0 : index
    %10 = vector.load %arg4[%c0_5, %c0_6] : memref<32x128xbf16, #tpu.memory_space<vmem>>, vector<32x128xbf16>
    tpu.vector_store %arg4[%c0_5, %c0_6], %9 {strides = array<i32>} : memref<32x128xbf16, #tpu.memory_space<vmem>>, vector<32x128xbf16>,
    return
  }
  func.func @transform_0(%arg0: i32) -> (i32, i32) {
    %c0_i32 = arith.constant 0 : i32
    %c0_i32_0 = arith.constant 0 : i32
    return %arg0, %c0_i32 : i32, i32
  }
  func.func @transform_1(%arg0: i32) -> (i32, i32) {
    %c0_i32 = arith.constant 0 : i32
    %c0_i32_0 = arith.constant 0 : i32
    %c0_i32_1 = arith.constant 0 : i32
    return %c0_i32, %c0_i32_0 : i32, i32
  }
  func.func @transform_2(%arg0: i32) -> (i32, i32) {
    %c0_i32 = arith.constant 0 : i32
    %c0_i32_0 = arith.constant 0 : i32
    %c0_i32_1 = arith.constant 0 : i32
    return %c0_i32, %c0_i32_0 : i32, i32
  }
  func.func @transform_3(%arg0: i32) -> (i32, i32) {
    %c0_i32 = arith.constant 0 : i32
    %c0_i32_0 = arith.constant 0 : i32
    return %arg0, %c0_i32 : i32, i32
  }
}

module attributes {stable_mosaic.version = 11 : i64} {
  func.func @_scale_shift_relu_kernel(%arg0: i32, %arg1: memref<8x128xf32, #tpu.memory_space<vmem>>, %arg2: memref<1x128xf32, #tpu.memory_space<vmem>>, %arg3: memref<1x128xf32, #tpu.memory_space<vmem>>, %arg4: memref<8x128xbf16, #tpu.memory_space<vmem>>) attributes {dimension_semantics = [#tpu.dimension_semantics<parallel>], iteration_bounds = array<i64: 1>, scalar_prefetch = 0 : i64, scratch_operands = 0 : i64, tpu.core_type = #tpu.core_type<tc>, window_params = [{transform_indices = @transform_0, window_bounds = array<i64: 8, 128>}, {pipeline_mode = #tpu.pipeline_mode<synchronous>, transform_indices = @transform_1, window_bounds = array<i64: 1, 128>}, {pipeline_mode = #tpu.pipeline_mode<synchronous>, transform_indices = @transform_2, window_bounds = array<i64: 1, 128>}, {transform_indices = @transform_3, window_bounds = array<i64: 8, 128>}]} {
    %c0 = arith.constant 0 : index
    %c0_0 = arith.constant 0 : index
    %0 = vector.load %arg1[%c0, %c0_0] : memref<8x128xf32, #tpu.memory_space<vmem>>, vector<8x128xf32>
    %c0_1 = arith.constant 0 : index
    %c0_2 = arith.constant 0 : index
    %1 = vector.load %arg2[%c0_1, %c0_2] : memref<1x128xf32, #tpu.memory_space<vmem>>, vector<1x128xf32>
    %2 = vector.broadcast %1 : vector<1x128xf32> to vector<8x128xf32>
    %3 = arith.mulf %0, %2 : vector<8x128xf32>
    %c0_3 = arith.constant 0 : index
    %c0_4 = arith.constant 0 : index
    %4 = vector.load %arg3[%c0_3, %c0_4] : memref<1x128xf32, #tpu.memory_space<vmem>>, vector<1x128xf32>
    %5 = vector.broadcast %4 : vector<1x128xf32> to vector<8x128xf32>
    %6 = arith.addf %3, %5 : vector<8x128xf32>
    %cst = arith.constant 0.000000e+00 : f32
    %7 = vector.broadcast %cst : f32 to vector<8x128xf32>
    %8 = arith.maximumf %6, %7 : vector<8x128xf32>
    %9 = arith.truncf %8 : vector<8x128xf32> to vector<8x128xbf16>
    %c0_5 = arith.constant 0 : index
    %c0_6 = arith.constant 0 : index
    %10 = vector.load %arg4[%c0_5, %c0_6] : memref<8x128xbf16, #tpu.memory_space<vmem>>, vector<8x128xbf16>
    tpu.vector_store %arg4[%c0_5, %c0_6], %9 {strides = array<i32>} : memref<8x128xbf16, #tpu.memory_space<vmem>>, vector<8x128xbf16>,
    return
  }
  func.func @transform_0(%arg0: i32) -> (i32, i32) {
    %c0_i32 = arith.constant 0 : i32
    %c0_i32_0 = arith.constant 0 : i32
    return %arg0, %c0_i32 : i32, i32
  }
  func.func @transform_1(%arg0: i32) -> (i32, i32) {
    %c0_i32 = arith.constant 0 : i32
    %c0_i32_0 = arith.constant 0 : i32
    %c0_i32_1 = arith.constant 0 : i32
    return %c0_i32, %c0_i32_0 : i32, i32
  }
  func.func @transform_2(%arg0: i32) -> (i32, i32) {
    %c0_i32 = arith.constant 0 : i32
    %c0_i32_0 = arith.constant 0 : i32
    %c0_i32_1 = arith.constant 0 : i32
    return %c0_i32, %c0_i32_0 : i32, i32
  }
  func.func @transform_3(%arg0: i32) -> (i32, i32) {
    %c0_i32 = arith.constant 0 : i32
    %c0_i32_0 = arith.constant 0 : i32
    return %arg0, %c0_i32 : i32, i32
  }
}

module attributes {stable_mosaic.version = 11 : i64} {
  func.func @_matmul_stats_kernel(%arg0: i32, %arg1: memref<8x1664xbf16, #tpu.memory_space<vmem>>, %arg2: memref<1664x128xbf16, #tpu.memory_space<vmem>>, %arg3: memref<8x128xf32, #tpu.memory_space<vmem>>, %arg4: memref<8x128xf32, #tpu.memory_space<vmem>>, %arg5: memref<8x128xf32, #tpu.memory_space<vmem>>) attributes {dimension_semantics = [#tpu.dimension_semantics<parallel>], iteration_bounds = array<i64: 1>, scalar_prefetch = 0 : i64, scratch_operands = 0 : i64, tpu.core_type = #tpu.core_type<tc>, window_params = [{transform_indices = @transform_0, window_bounds = array<i64: 8, 1664>}, {pipeline_mode = #tpu.pipeline_mode<synchronous>, transform_indices = @transform_1, window_bounds = array<i64: 1664, 128>}, {transform_indices = @transform_2, window_bounds = array<i64: 8, 128>}, {transform_indices = @transform_3, window_bounds = array<i64: 8, 128>}, {transform_indices = @transform_4, window_bounds = array<i64: 8, 128>}]} {
    %c0 = arith.constant 0 : index
    %c0_0 = arith.constant 0 : index
    %0 = vector.load %arg1[%c0, %c0_0] : memref<8x1664xbf16, #tpu.memory_space<vmem>>, vector<8x1664xbf16>
    %c0_1 = arith.constant 0 : index
    %c0_2 = arith.constant 0 : index
    %1 = vector.load %arg2[%c0_1, %c0_2] : memref<1664x128xbf16, #tpu.memory_space<vmem>>, vector<1664x128xbf16>
    %cst = arith.constant dense<0.000000e+00> : vector<8x128xf32>
    %2 = tpu.matmul %0, %1, %cst {dimension_numbers = #tpu.dot_dimension_numbers<[1], [0], [0], [1], [0, 0, 1, 1], [], []>} : vector<8x1664xbf16>, vector<1664x128xbf16>, vector<8x128xf32> -> vector<8x128xf32>
    %c0_3 = arith.constant 0 : index
    %c0_4 = arith.constant 0 : index
    %3 = vector.load %arg3[%c0_3, %c0_4] : memref<8x128xf32, #tpu.memory_space<vmem>>, vector<8x128xf32>
    tpu.vector_store %arg3[%c0_3, %c0_4], %2 {strides = array<i32>} : memref<8x128xf32, #tpu.memory_space<vmem>>, vector<8x128xf32>,
    %4 = tpu.iota {dimensions = array<i32: 0>} : vector<8x128xi32>
    %c0_i32 = arith.constant 0 : i32
    %5 = vector.broadcast %c0_i32 : i32 to vector<8x128xi32>
    %6 = arith.cmpi eq, %4, %5 : vector<8x128xi32>
    %cst_5 = arith.constant dense<0.000000e+00> : vector<128xf32>
    %7 = vector.multi_reduction <add>, %2, %cst_5 [0] : vector<8x128xf32> to vector<128xf32>
    %8 = vector.shape_cast %7 : vector<128xf32> to vector<1x128xf32>
    %cst_6 = arith.constant 0.000000e+00 : f32
    %9 = vector.shape_cast %8 : vector<1x128xf32> to vector<1x128xf32>
    %10 = vector.broadcast %9 : vector<1x128xf32> to vector<8x128xf32>
    %11 = vector.broadcast %cst_6 : f32 to vector<8x128xf32>
    %12 = arith.select %6, %10, %11 : vector<8x128xi1>, vector<8x128xf32>
    %c0_7 = arith.constant 0 : index
    %c0_8 = arith.constant 0 : index
    %13 = vector.load %arg4[%c0_7, %c0_8] : memref<8x128xf32, #tpu.memory_space<vmem>>, vector<8x128xf32>
    tpu.vector_store %arg4[%c0_7, %c0_8], %12 {strides = array<i32>} : memref<8x128xf32, #tpu.memory_space<vmem>>, vector<8x128xf32>,
    %14 = arith.mulf %2, %2 : vector<8x128xf32>
    %cst_9 = arith.constant dense<0.000000e+00> : vector<128xf32>
    %15 = vector.multi_reduction <add>, %14, %cst_9 [0] : vector<8x128xf32> to vector<128xf32>
    %16 = vector.shape_cast %15 : vector<128xf32> to vector<1x128xf32>
    %cst_10 = arith.constant 0.000000e+00 : f32
    %17 = vector.shape_cast %16 : vector<1x128xf32> to vector<1x128xf32>
    %18 = vector.broadcast %17 : vector<1x128xf32> to vector<8x128xf32>
    %19 = vector.broadcast %cst_10 : f32 to vector<8x128xf32>
    %20 = arith.select %6, %18, %19 : vector<8x128xi1>, vector<8x128xf32>
    %c0_11 = arith.constant 0 : index
    %c0_12 = arith.constant 0 : index
    %21 = vector.load %arg5[%c0_11, %c0_12] : memref<8x128xf32, #tpu.memory_space<vmem>>, vector<8x128xf32>
    tpu.vector_store %arg5[%c0_11, %c0_12], %20 {strides = array<i32>} : memref<8x128xf32, #tpu.memory_space<vmem>>, vector<8x128xf32>,
    return
  }
  func.func @transform_0(%arg0: i32) -> (i32, i32) {
    %c0_i32 = arith.constant 0 : i32
    %c0_i32_0 = arith.constant 0 : i32
    return %arg0, %c0_i32 : i32, i32
  }
  func.func @transform_1(%arg0: i32) -> (i32, i32) {
    %c0_i32 = arith.constant 0 : i32
    %c0_i32_0 = arith.constant 0 : i32
    %c0_i32_1 = arith.constant 0 : i32
    return %c0_i32, %c0_i32_0 : i32, i32
  }
  func.func @transform_2(%arg0: i32) -> (i32, i32) {
    %c0_i32 = arith.constant 0 : i32
    %c0_i32_0 = arith.constant 0 : i32
    return %arg0, %c0_i32 : i32, i32
  }
  func.func @transform_3(%arg0: i32) -> (i32, i32) {
    %c0_i32 = arith.constant 0 : i32
    %c0_i32_0 = arith.constant 0 : i32
    return %arg0, %c0_i32 : i32, i32
  }
  func.func @transform_4(%arg0: i32) -> (i32, i32) {
    %c0_i32 = arith.constant 0 : i32
    %c0_i32_0 = arith.constant 0 : i32
    return %arg0, %c0_i32 : i32, i32
  }
}

module attributes {stable_mosaic.version = 11 : i64} {
  func.func @_matmul_stats_kernel(%arg0: i32, %arg1: memref<8x2304xbf16, #tpu.memory_space<vmem>>, %arg2: memref<2304x128xbf16, #tpu.memory_space<vmem>>, %arg3: memref<8x128xf32, #tpu.memory_space<vmem>>, %arg4: memref<8x128xf32, #tpu.memory_space<vmem>>, %arg5: memref<8x128xf32, #tpu.memory_space<vmem>>) attributes {dimension_semantics = [#tpu.dimension_semantics<parallel>], iteration_bounds = array<i64: 1>, scalar_prefetch = 0 : i64, scratch_operands = 0 : i64, tpu.core_type = #tpu.core_type<tc>, window_params = [{transform_indices = @transform_0, window_bounds = array<i64: 8, 2304>}, {pipeline_mode = #tpu.pipeline_mode<synchronous>, transform_indices = @transform_1, window_bounds = array<i64: 2304, 128>}, {transform_indices = @transform_2, window_bounds = array<i64: 8, 128>}, {transform_indices = @transform_3, window_bounds = array<i64: 8, 128>}, {transform_indices = @transform_4, window_bounds = array<i64: 8, 128>}]} {
    %c0 = arith.constant 0 : index
    %c0_0 = arith.constant 0 : index
    %0 = vector.load %arg1[%c0, %c0_0] : memref<8x2304xbf16, #tpu.memory_space<vmem>>, vector<8x2304xbf16>
    %c0_1 = arith.constant 0 : index
    %c0_2 = arith.constant 0 : index
    %1 = vector.load %arg2[%c0_1, %c0_2] : memref<2304x128xbf16, #tpu.memory_space<vmem>>, vector<2304x128xbf16>
    %cst = arith.constant dense<0.000000e+00> : vector<8x128xf32>
    %2 = tpu.matmul %0, %1, %cst {dimension_numbers = #tpu.dot_dimension_numbers<[1], [0], [0], [1], [0, 0, 1, 1], [], []>} : vector<8x2304xbf16>, vector<2304x128xbf16>, vector<8x128xf32> -> vector<8x128xf32>
    %c0_3 = arith.constant 0 : index
    %c0_4 = arith.constant 0 : index
    %3 = vector.load %arg3[%c0_3, %c0_4] : memref<8x128xf32, #tpu.memory_space<vmem>>, vector<8x128xf32>
    tpu.vector_store %arg3[%c0_3, %c0_4], %2 {strides = array<i32>} : memref<8x128xf32, #tpu.memory_space<vmem>>, vector<8x128xf32>,
    %4 = tpu.iota {dimensions = array<i32: 0>} : vector<8x128xi32>
    %c0_i32 = arith.constant 0 : i32
    %5 = vector.broadcast %c0_i32 : i32 to vector<8x128xi32>
    %6 = arith.cmpi eq, %4, %5 : vector<8x128xi32>
    %cst_5 = arith.constant dense<0.000000e+00> : vector<128xf32>
    %7 = vector.multi_reduction <add>, %2, %cst_5 [0] : vector<8x128xf32> to vector<128xf32>
    %8 = vector.shape_cast %7 : vector<128xf32> to vector<1x128xf32>
    %cst_6 = arith.constant 0.000000e+00 : f32
    %9 = vector.shape_cast %8 : vector<1x128xf32> to vector<1x128xf32>
    %10 = vector.broadcast %9 : vector<1x128xf32> to vector<8x128xf32>
    %11 = vector.broadcast %cst_6 : f32 to vector<8x128xf32>
    %12 = arith.select %6, %10, %11 : vector<8x128xi1>, vector<8x128xf32>
    %c0_7 = arith.constant 0 : index
    %c0_8 = arith.constant 0 : index
    %13 = vector.load %arg4[%c0_7, %c0_8] : memref<8x128xf32, #tpu.memory_space<vmem>>, vector<8x128xf32>
    tpu.vector_store %arg4[%c0_7, %c0_8], %12 {strides = array<i32>} : memref<8x128xf32, #tpu.memory_space<vmem>>, vector<8x128xf32>,
    %14 = arith.mulf %2, %2 : vector<8x128xf32>
    %cst_9 = arith.constant dense<0.000000e+00> : vector<128xf32>
    %15 = vector.multi_reduction <add>, %14, %cst_9 [0] : vector<8x128xf32> to vector<128xf32>
    %16 = vector.shape_cast %15 : vector<128xf32> to vector<1x128xf32>
    %cst_10 = arith.constant 0.000000e+00 : f32
    %17 = vector.shape_cast %16 : vector<1x128xf32> to vector<1x128xf32>
    %18 = vector.broadcast %17 : vector<1x128xf32> to vector<8x128xf32>
    %19 = vector.broadcast %cst_10 : f32 to vector<8x128xf32>
    %20 = arith.select %6, %18, %19 : vector<8x128xi1>, vector<8x128xf32>
    %c0_11 = arith.constant 0 : index
    %c0_12 = arith.constant 0 : index
    %21 = vector.load %arg5[%c0_11, %c0_12] : memref<8x128xf32, #tpu.memory_space<vmem>>, vector<8x128xf32>
    tpu.vector_store %arg5[%c0_11, %c0_12], %20 {strides = array<i32>} : memref<8x128xf32, #tpu.memory_space<vmem>>, vector<8x128xf32>,
    return
  }
  func.func @transform_0(%arg0: i32) -> (i32, i32) {
    %c0_i32 = arith.constant 0 : i32
    %c0_i32_0 = arith.constant 0 : i32
    return %arg0, %c0_i32 : i32, i32
  }
  func.func @transform_1(%arg0: i32) -> (i32, i32) {
    %c0_i32 = arith.constant 0 : i32
    %c0_i32_0 = arith.constant 0 : i32
    %c0_i32_1 = arith.constant 0 : i32
    return %c0_i32, %c0_i32_0 : i32, i32
  }
  func.func @transform_2(%arg0: i32) -> (i32, i32) {
    %c0_i32 = arith.constant 0 : i32
    %c0_i32_0 = arith.constant 0 : i32
    return %arg0, %c0_i32 : i32, i32
  }
  func.func @transform_3(%arg0: i32) -> (i32, i32) {
    %c0_i32 = arith.constant 0 : i32
    %c0_i32_0 = arith.constant 0 : i32
    return %arg0, %c0_i32 : i32, i32
  }
  func.func @transform_4(%arg0: i32) -> (i32, i32) {
    %c0_i32 = arith.constant 0 : i32
    %c0_i32_0 = arith.constant 0 : i32
    return %arg0, %c0_i32 : i32, i32
  }
}

module attributes {stable_mosaic.version = 11 : i64} {
  func.func @_matmul_stats_kernel(%arg0: i32, %arg1: memref<8x1152xbf16, #tpu.memory_space<vmem>>, %arg2: memref<1152x128xbf16, #tpu.memory_space<vmem>>, %arg3: memref<8x128xf32, #tpu.memory_space<vmem>>, %arg4: memref<8x128xf32, #tpu.memory_space<vmem>>, %arg5: memref<8x128xf32, #tpu.memory_space<vmem>>) attributes {dimension_semantics = [#tpu.dimension_semantics<parallel>], iteration_bounds = array<i64: 1>, scalar_prefetch = 0 : i64, scratch_operands = 0 : i64, tpu.core_type = #tpu.core_type<tc>, window_params = [{transform_indices = @transform_0, window_bounds = array<i64: 8, 1152>}, {pipeline_mode = #tpu.pipeline_mode<synchronous>, transform_indices = @transform_1, window_bounds = array<i64: 1152, 128>}, {transform_indices = @transform_2, window_bounds = array<i64: 8, 128>}, {transform_indices = @transform_3, window_bounds = array<i64: 8, 128>}, {transform_indices = @transform_4, window_bounds = array<i64: 8, 128>}]} {
    %c0 = arith.constant 0 : index
    %c0_0 = arith.constant 0 : index
    %0 = vector.load %arg1[%c0, %c0_0] : memref<8x1152xbf16, #tpu.memory_space<vmem>>, vector<8x1152xbf16>
    %c0_1 = arith.constant 0 : index
    %c0_2 = arith.constant 0 : index
    %1 = vector.load %arg2[%c0_1, %c0_2] : memref<1152x128xbf16, #tpu.memory_space<vmem>>, vector<1152x128xbf16>
    %cst = arith.constant dense<0.000000e+00> : vector<8x128xf32>
    %2 = tpu.matmul %0, %1, %cst {dimension_numbers = #tpu.dot_dimension_numbers<[1], [0], [0], [1], [0, 0, 1, 1], [], []>} : vector<8x1152xbf16>, vector<1152x128xbf16>, vector<8x128xf32> -> vector<8x128xf32>
    %c0_3 = arith.constant 0 : index
    %c0_4 = arith.constant 0 : index
    %3 = vector.load %arg3[%c0_3, %c0_4] : memref<8x128xf32, #tpu.memory_space<vmem>>, vector<8x128xf32>
    tpu.vector_store %arg3[%c0_3, %c0_4], %2 {strides = array<i32>} : memref<8x128xf32, #tpu.memory_space<vmem>>, vector<8x128xf32>,
    %4 = tpu.iota {dimensions = array<i32: 0>} : vector<8x128xi32>
    %c0_i32 = arith.constant 0 : i32
    %5 = vector.broadcast %c0_i32 : i32 to vector<8x128xi32>
    %6 = arith.cmpi eq, %4, %5 : vector<8x128xi32>
    %cst_5 = arith.constant dense<0.000000e+00> : vector<128xf32>
    %7 = vector.multi_reduction <add>, %2, %cst_5 [0] : vector<8x128xf32> to vector<128xf32>
    %8 = vector.shape_cast %7 : vector<128xf32> to vector<1x128xf32>
    %cst_6 = arith.constant 0.000000e+00 : f32
    %9 = vector.shape_cast %8 : vector<1x128xf32> to vector<1x128xf32>
    %10 = vector.broadcast %9 : vector<1x128xf32> to vector<8x128xf32>
    %11 = vector.broadcast %cst_6 : f32 to vector<8x128xf32>
    %12 = arith.select %6, %10, %11 : vector<8x128xi1>, vector<8x128xf32>
    %c0_7 = arith.constant 0 : index
    %c0_8 = arith.constant 0 : index
    %13 = vector.load %arg4[%c0_7, %c0_8] : memref<8x128xf32, #tpu.memory_space<vmem>>, vector<8x128xf32>
    tpu.vector_store %arg4[%c0_7, %c0_8], %12 {strides = array<i32>} : memref<8x128xf32, #tpu.memory_space<vmem>>, vector<8x128xf32>,
    %14 = arith.mulf %2, %2 : vector<8x128xf32>
    %cst_9 = arith.constant dense<0.000000e+00> : vector<128xf32>
    %15 = vector.multi_reduction <add>, %14, %cst_9 [0] : vector<8x128xf32> to vector<128xf32>
    %16 = vector.shape_cast %15 : vector<128xf32> to vector<1x128xf32>
    %cst_10 = arith.constant 0.000000e+00 : f32
    %17 = vector.shape_cast %16 : vector<1x128xf32> to vector<1x128xf32>
    %18 = vector.broadcast %17 : vector<1x128xf32> to vector<8x128xf32>
    %19 = vector.broadcast %cst_10 : f32 to vector<8x128xf32>
    %20 = arith.select %6, %18, %19 : vector<8x128xi1>, vector<8x128xf32>
    %c0_11 = arith.constant 0 : index
    %c0_12 = arith.constant 0 : index
    %21 = vector.load %arg5[%c0_11, %c0_12] : memref<8x128xf32, #tpu.memory_space<vmem>>, vector<8x128xf32>
    tpu.vector_store %arg5[%c0_11, %c0_12], %20 {strides = array<i32>} : memref<8x128xf32, #tpu.memory_space<vmem>>, vector<8x128xf32>,
    return
  }
  func.func @transform_0(%arg0: i32) -> (i32, i32) {
    %c0_i32 = arith.constant 0 : i32
    %c0_i32_0 = arith.constant 0 : i32
    return %arg0, %c0_i32 : i32, i32
  }
  func.func @transform_1(%arg0: i32) -> (i32, i32) {
    %c0_i32 = arith.constant 0 : i32
    %c0_i32_0 = arith.constant 0 : i32
    %c0_i32_1 = arith.constant 0 : i32
    return %c0_i32, %c0_i32_0 : i32, i32
  }
  func.func @transform_2(%arg0: i32) -> (i32, i32) {
    %c0_i32 = arith.constant 0 : i32
    %c0_i32_0 = arith.constant 0 : i32
    return %arg0, %c0_i32 : i32, i32
  }
  func.func @transform_3(%arg0: i32) -> (i32, i32) {
    %c0_i32 = arith.constant 0 : i32
    %c0_i32_0 = arith.constant 0 : i32
    return %arg0, %c0_i32 : i32, i32
  }
  func.func @transform_4(%arg0: i32) -> (i32, i32) {
    %c0_i32 = arith.constant 0 : i32
    %c0_i32_0 = arith.constant 0 : i32
    return %arg0, %c0_i32 : i32, i32
  }
}

module attributes {stable_mosaic.version = 11 : i64} {
  func.func @_matmul_stats_kernel(%arg0: i32, %arg1: memref<8x640xbf16, #tpu.memory_space<vmem>>, %arg2: memref<640x128xbf16, #tpu.memory_space<vmem>>, %arg3: memref<8x128xf32, #tpu.memory_space<vmem>>, %arg4: memref<8x128xf32, #tpu.memory_space<vmem>>, %arg5: memref<8x128xf32, #tpu.memory_space<vmem>>) attributes {dimension_semantics = [#tpu.dimension_semantics<parallel>], iteration_bounds = array<i64: 1>, scalar_prefetch = 0 : i64, scratch_operands = 0 : i64, tpu.core_type = #tpu.core_type<tc>, window_params = [{transform_indices = @transform_0, window_bounds = array<i64: 8, 640>}, {pipeline_mode = #tpu.pipeline_mode<synchronous>, transform_indices = @transform_1, window_bounds = array<i64: 640, 128>}, {transform_indices = @transform_2, window_bounds = array<i64: 8, 128>}, {transform_indices = @transform_3, window_bounds = array<i64: 8, 128>}, {transform_indices = @transform_4, window_bounds = array<i64: 8, 128>}]} {
    %c0 = arith.constant 0 : index
    %c0_0 = arith.constant 0 : index
    %0 = vector.load %arg1[%c0, %c0_0] : memref<8x640xbf16, #tpu.memory_space<vmem>>, vector<8x640xbf16>
    %c0_1 = arith.constant 0 : index
    %c0_2 = arith.constant 0 : index
    %1 = vector.load %arg2[%c0_1, %c0_2] : memref<640x128xbf16, #tpu.memory_space<vmem>>, vector<640x128xbf16>
    %cst = arith.constant dense<0.000000e+00> : vector<8x128xf32>
    %2 = tpu.matmul %0, %1, %cst {dimension_numbers = #tpu.dot_dimension_numbers<[1], [0], [0], [1], [0, 0, 1, 1], [], []>} : vector<8x640xbf16>, vector<640x128xbf16>, vector<8x128xf32> -> vector<8x128xf32>
    %c0_3 = arith.constant 0 : index
    %c0_4 = arith.constant 0 : index
    %3 = vector.load %arg3[%c0_3, %c0_4] : memref<8x128xf32, #tpu.memory_space<vmem>>, vector<8x128xf32>
    tpu.vector_store %arg3[%c0_3, %c0_4], %2 {strides = array<i32>} : memref<8x128xf32, #tpu.memory_space<vmem>>, vector<8x128xf32>,
    %4 = tpu.iota {dimensions = array<i32: 0>} : vector<8x128xi32>
    %c0_i32 = arith.constant 0 : i32
    %5 = vector.broadcast %c0_i32 : i32 to vector<8x128xi32>
    %6 = arith.cmpi eq, %4, %5 : vector<8x128xi32>
    %cst_5 = arith.constant dense<0.000000e+00> : vector<128xf32>
    %7 = vector.multi_reduction <add>, %2, %cst_5 [0] : vector<8x128xf32> to vector<128xf32>
    %8 = vector.shape_cast %7 : vector<128xf32> to vector<1x128xf32>
    %cst_6 = arith.constant 0.000000e+00 : f32
    %9 = vector.shape_cast %8 : vector<1x128xf32> to vector<1x128xf32>
    %10 = vector.broadcast %9 : vector<1x128xf32> to vector<8x128xf32>
    %11 = vector.broadcast %cst_6 : f32 to vector<8x128xf32>
    %12 = arith.select %6, %10, %11 : vector<8x128xi1>, vector<8x128xf32>
    %c0_7 = arith.constant 0 : index
    %c0_8 = arith.constant 0 : index
    %13 = vector.load %arg4[%c0_7, %c0_8] : memref<8x128xf32, #tpu.memory_space<vmem>>, vector<8x128xf32>
    tpu.vector_store %arg4[%c0_7, %c0_8], %12 {strides = array<i32>} : memref<8x128xf32, #tpu.memory_space<vmem>>, vector<8x128xf32>,
    %14 = arith.mulf %2, %2 : vector<8x128xf32>
    %cst_9 = arith.constant dense<0.000000e+00> : vector<128xf32>
    %15 = vector.multi_reduction <add>, %14, %cst_9 [0] : vector<8x128xf32> to vector<128xf32>
    %16 = vector.shape_cast %15 : vector<128xf32> to vector<1x128xf32>
    %cst_10 = arith.constant 0.000000e+00 : f32
    %17 = vector.shape_cast %16 : vector<1x128xf32> to vector<1x128xf32>
    %18 = vector.broadcast %17 : vector<1x128xf32> to vector<8x128xf32>
    %19 = vector.broadcast %cst_10 : f32 to vector<8x128xf32>
    %20 = arith.select %6, %18, %19 : vector<8x128xi1>, vector<8x128xf32>
    %c0_11 = arith.constant 0 : index
    %c0_12 = arith.constant 0 : index
    %21 = vector.load %arg5[%c0_11, %c0_12] : memref<8x128xf32, #tpu.memory_space<vmem>>, vector<8x128xf32>
    tpu.vector_store %arg5[%c0_11, %c0_12], %20 {strides = array<i32>} : memref<8x128xf32, #tpu.memory_space<vmem>>, vector<8x128xf32>,
    return
  }
  func.func @transform_0(%arg0: i32) -> (i32, i32) {
    %c0_i32 = arith.constant 0 : i32
    %c0_i32_0 = arith.constant 0 : i32
    return %arg0, %c0_i32 : i32, i32
  }
  func.func @transform_1(%arg0: i32) -> (i32, i32) {
    %c0_i32 = arith.constant 0 : i32
    %c0_i32_0 = arith.constant 0 : i32
    %c0_i32_1 = arith.constant 0 : i32
    return %c0_i32, %c0_i32_0 : i32, i32
  }
  func.func @transform_2(%arg0: i32) -> (i32, i32) {
    %c0_i32 = arith.constant 0 : i32
    %c0_i32_0 = arith.constant 0 : i32
    return %arg0, %c0_i32 : i32, i32
  }
  func.func @transform_3(%arg0: i32) -> (i32, i32) {
    %c0_i32 = arith.constant 0 : i32
    %c0_i32_0 = arith.constant 0 : i32
    return %arg0, %c0_i32 : i32, i32
  }
  func.func @transform_4(%arg0: i32) -> (i32, i32) {
    %c0_i32 = arith.constant 0 : i32
    %c0_i32_0 = arith.constant 0 : i32
    return %arg0, %c0_i32 : i32, i32
  }
}

module attributes {stable_mosaic.version = 11 : i64} {
  func.func @_matmul_bias_kernel(%arg0: i32, %arg1: memref<8x384xbf16, #tpu.memory_space<vmem>>, %arg2: memref<384x128xbf16, #tpu.memory_space<vmem>>, %arg3: memref<1x128xf32, #tpu.memory_space<vmem>>, %arg4: memref<8x128xf32, #tpu.memory_space<vmem>>) attributes {dimension_semantics = [#tpu.dimension_semantics<parallel>], iteration_bounds = array<i64: 1>, scalar_prefetch = 0 : i64, scratch_operands = 0 : i64, tpu.core_type = #tpu.core_type<tc>, window_params = [{transform_indices = @transform_0, window_bounds = array<i64: 8, 384>}, {pipeline_mode = #tpu.pipeline_mode<synchronous>, transform_indices = @transform_1, window_bounds = array<i64: 384, 128>}, {pipeline_mode = #tpu.pipeline_mode<synchronous>, transform_indices = @transform_2, window_bounds = array<i64: 1, 128>}, {transform_indices = @transform_3, window_bounds = array<i64: 8, 128>}]} {
    %c0 = arith.constant 0 : index
    %c0_0 = arith.constant 0 : index
    %0 = vector.load %arg1[%c0, %c0_0] : memref<8x384xbf16, #tpu.memory_space<vmem>>, vector<8x384xbf16>
    %c0_1 = arith.constant 0 : index
    %c0_2 = arith.constant 0 : index
    %1 = vector.load %arg2[%c0_1, %c0_2] : memref<384x128xbf16, #tpu.memory_space<vmem>>, vector<384x128xbf16>
    %cst = arith.constant dense<0.000000e+00> : vector<8x128xf32>
    %2 = tpu.matmul %0, %1, %cst {dimension_numbers = #tpu.dot_dimension_numbers<[1], [0], [0], [1], [0, 0, 1, 1], [], []>} : vector<8x384xbf16>, vector<384x128xbf16>, vector<8x128xf32> -> vector<8x128xf32>
    %c0_3 = arith.constant 0 : index
    %c0_4 = arith.constant 0 : index
    %3 = vector.load %arg3[%c0_3, %c0_4] : memref<1x128xf32, #tpu.memory_space<vmem>>, vector<1x128xf32>
    %4 = vector.broadcast %3 : vector<1x128xf32> to vector<8x128xf32>
    %5 = arith.addf %2, %4 : vector<8x128xf32>
    %c0_5 = arith.constant 0 : index
    %c0_6 = arith.constant 0 : index
    %6 = vector.load %arg4[%c0_5, %c0_6] : memref<8x128xf32, #tpu.memory_space<vmem>>, vector<8x128xf32>
    tpu.vector_store %arg4[%c0_5, %c0_6], %5 {strides = array<i32>} : memref<8x128xf32, #tpu.memory_space<vmem>>, vector<8x128xf32>,
    return
  }
  func.func @transform_0(%arg0: i32) -> (i32, i32) {
    %c0_i32 = arith.constant 0 : i32
    %c0_i32_0 = arith.constant 0 : i32
    return %arg0, %c0_i32 : i32, i32
  }
  func.func @transform_1(%arg0: i32) -> (i32, i32) {
    %c0_i32 = arith.constant 0 : i32
    %c0_i32_0 = arith.constant 0 : i32
    %c0_i32_1 = arith.constant 0 : i32
    return %c0_i32, %c0_i32_0 : i32, i32
  }
  func.func @transform_2(%arg0: i32) -> (i32, i32) {
    %c0_i32 = arith.constant 0 : i32
    %c0_i32_0 = arith.constant 0 : i32
    %c0_i32_1 = arith.constant 0 : i32
    return %c0_i32, %c0_i32_0 : i32, i32
  }
  func.func @transform_3(%arg0: i32) -> (i32, i32) {
    %c0_i32 = arith.constant 0 : i32
    %c0_i32_0 = arith.constant 0 : i32
    return %arg0, %c0_i32 : i32, i32
  }
}

module attributes {stable_mosaic.version = 11 : i64} {
  func.func @_upsample_kernel(%arg0: i32, %arg1: i32, %arg2: memref<1x8x128xf32, #tpu.memory_space<vmem>>, %arg3: memref<120x8xf32, #tpu.memory_space<vmem>>, %arg4: memref<128x640xf32, #tpu.memory_space<vmem>>, %arg5: memref<1x120x640xf32, #tpu.memory_space<vmem>>) attributes {dimension_semantics = [#tpu.dimension_semantics<parallel>, #tpu.dimension_semantics<parallel>], iteration_bounds = array<i64: 2, 4>, scalar_prefetch = 0 : i64, scratch_operands = 0 : i64, tpu.core_type = #tpu.core_type<tc>, window_params = [{transform_indices = @transform_0, window_bounds = array<i64: 1, 8, 128>}, {transform_indices = @transform_1, window_bounds = array<i64: 120, 8>}, {pipeline_mode = #tpu.pipeline_mode<synchronous>, transform_indices = @transform_2, window_bounds = array<i64: 128, 640>}, {transform_indices = @transform_3, window_bounds = array<i64: 1, 120, 640>}]} {
    %c0 = arith.constant 0 : index
    %c0_0 = arith.constant 0 : index
    %0 = vector.load %arg3[%c0, %c0_0] : memref<120x8xf32, #tpu.memory_space<vmem>>, vector<120x8xf32>
    %c0_1 = arith.constant 0 : index
    %c0_2 = arith.constant 0 : index
    %c0_3 = arith.constant 0 : index
    %1 = vector.load %arg2[%c0_1, %c0_2, %c0_3] : memref<1x8x128xf32, #tpu.memory_space<vmem>>, vector<1x8x128xf32>
    %2 = vector.shape_cast %1 : vector<1x8x128xf32> to vector<8x128xf32>
    %cst = arith.constant dense<0.000000e+00> : vector<120x128xf32>
    %3 = tpu.matmul %0, %2, %cst {dimension_numbers = #tpu.dot_dimension_numbers<[1], [0], [0], [1], [0, 0, 1, 1], [], []>} : vector<120x8xf32>, vector<8x128xf32>, vector<120x128xf32> -> vector<120x128xf32>
    %c0_4 = arith.constant 0 : index
    %c0_5 = arith.constant 0 : index
    %4 = vector.load %arg4[%c0_4, %c0_5] : memref<128x640xf32, #tpu.memory_space<vmem>>, vector<128x640xf32>
    %cst_6 = arith.constant dense<0.000000e+00> : vector<120x640xf32>
    %5 = tpu.matmul %3, %4, %cst_6 {dimension_numbers = #tpu.dot_dimension_numbers<[1], [0], [0], [1], [0, 0, 1, 1], [], []>} : vector<120x128xf32>, vector<128x640xf32>, vector<120x640xf32> -> vector<120x640xf32>
    %c0_7 = arith.constant 0 : index
    %c0_8 = arith.constant 0 : index
    %c0_9 = arith.constant 0 : index
    %6 = vector.load %arg5[%c0_7, %c0_8, %c0_9] : memref<1x120x640xf32, #tpu.memory_space<vmem>>, vector<1x120x640xf32>
    %7 = vector.shape_cast %6 : vector<1x120x640xf32> to vector<120x640xf32>
    %8 = vector.shape_cast %5 : vector<120x640xf32> to vector<1x120x640xf32>
    tpu.vector_store %arg5[%c0_7, %c0_8, %c0_9], %8 {strides = array<i32>} : memref<1x120x640xf32, #tpu.memory_space<vmem>>, vector<1x120x640xf32>,
    return
  }
  func.func @transform_0(%arg0: i32, %arg1: i32) -> (i32, i32, i32) {
    %c0_i32 = arith.constant 0 : i32
    %c0_i32_0 = arith.constant 0 : i32
    %c0_i32_1 = arith.constant 0 : i32
    return %arg0, %c0_i32, %c0_i32_0 : i32, i32, i32
  }
  func.func @transform_1(%arg0: i32, %arg1: i32) -> (i32, i32) {
    %c0_i32 = arith.constant 0 : i32
    %c0_i32_0 = arith.constant 0 : i32
    return %arg1, %c0_i32 : i32, i32
  }
  func.func @transform_2(%arg0: i32, %arg1: i32) -> (i32, i32) {
    %c0_i32 = arith.constant 0 : i32
    %c0_i32_0 = arith.constant 0 : i32
    %c0_i32_1 = arith.constant 0 : i32
    return %c0_i32, %c0_i32_0 : i32, i32
  }
  func.func @transform_3(%arg0: i32, %arg1: i32) -> (i32, i32, i32) {
    %c0_i32 = arith.constant 0 : i32
    %c0_i32_0 = arith.constant 0 : i32
    return %arg0, %arg1, %c0_i32 : i32, i32, i32
  }
}

</mosaic_0001>

<llo_original>
// kernel: stereonet_forward.21
$region0: #{stereonet_forward.21}
  #allocation0 [shape = 'u32[]', space=smem, size = 0x4, offset = 0x4, fixed_abs, tag = 'smem constant byte address 0x4 - core index']
  #allocation1 [shape = 'u32[144,128]{1,0:T(1,128)}', space=vmem, size = 0x12000, scoped, tag = 'internal scratch']
  %s0 = inlined_call_operand.vmem [shape: f32[128,128], index: 0, kind: input, shape index: {}]
  %s1 = inlined_call_operand.vmem [shape: f32[1,128], index: 1, kind: input, shape index: {}]
  %s2 = inlined_call_operand.vmem [shape: f32[1,128], index: 2, kind: input, shape index: {}]
  %s3 = inlined_call_operand.vmem [shape: bf16[128,128], index: 3, kind: output, shape index: {}]
  %s4 = sld [smem:[#allocation0]]
  $region22: #{stereonet_forward.21} parent=0
    _
  %s6 = ssub.s32 1, %s4
  %s7 = scalar_select 0, %s6, %s4
  // Predicated region
  $region2: #{stereonet_forward.21} parent=0 // pred_check
    _
  $region3: #{stereonet_forward.21} parent=0 // pred_check_branch
    %9 = sbr.rel (0) target = $region5
  $region4: #{stereonet_forward.21} parent=0 // pred_region
    _
  $region5: #{stereonet_forward.21} parent=0 // pred_fallthru
    _
  // Predicated region
  $region6: #{stereonet_forward.21} parent=0 // pred_check
    _
  $region7: #{stereonet_forward.21} parent=0 // pred_check_branch
    %11 = sbr.rel (0) target = $region9
  $region8: #{stereonet_forward.21} parent=0 // pred_region
    _
  $region9: #{stereonet_forward.21} parent=0 // pred_fallthru
    _
  // Predicated region
  $region10: #{stereonet_forward.21} parent=0 // pred_check
    _
  $region11: #{stereonet_forward.21} parent=0 // pred_check_branch
    %13 = sbr.rel (0) target = $region13
  $region12: #{stereonet_forward.21} parent=0 // pred_region
    _
  $region13: #{stereonet_forward.21} parent=0 // pred_fallthru
    _
  %v14 = vld [vmem:[%s0] sm:$0xff]
  %v15 = vld [vmem:[%s0 + $0x8] sm:$0xff]
  %v16 = vld [vmem:[%s0 + $0x10] sm:$0xff]
  %v17 = vld [vmem:[%s0 + $0x18] sm:$0xff]
  %v18 = vld [vmem:[%s0 + $0x20] sm:$0xff]
  %v19 = vld [vmem:[%s0 + $0x28] sm:$0xff]
  %v20 = vld [vmem:[%s0 + $0x30] sm:$0xff]
  %v21 = vld [vmem:[%s0 + $0x38] sm:$0xff]
  %v22 = vld [vmem:[%s0 + $0x40] sm:$0xff]
  %v23 = vld [vmem:[%s0 + $0x48] sm:$0xff]
  %v24 = vld [vmem:[%s0 + $0x50] sm:$0xff]
  %v25 = vld [vmem:[%s0 + $0x58] sm:$0xff]
  %v26 = vld [vmem:[%s0 + $0x60] sm:$0xff]
  %v27 = vld [vmem:[%s0 + $0x68] sm:$0xff]
  %v28 = vld [vmem:[%s0 + $0x70] sm:$0xff]
  %v29 = vld [vmem:[%s0 + $0x78] sm:$0xff]
  %v30 = vld [vmem:[%s1] sm:$0x1]
  %v32 = vlaneseq
  %v33 = vshrl.u32 %v32, 7
  %v34 = vsub.s32 0, %v33
  %v35 = vrot.slane %v30, %v34
  %v37 = vmul.f32 %v14, %v35
  %v38 = vmul.f32 %v15, %v35
  %v39 = vmul.f32 %v16, %v35
  %v40 = vmul.f32 %v17, %v35
  %v41 = vmul.f32 %v18, %v35
  %v42 = vmul.f32 %v19, %v35
  %v43 = vmul.f32 %v20, %v35
  %v44 = vmul.f32 %v21, %v35
  %v45 = vmul.f32 %v22, %v35
  %v46 = vmul.f32 %v23, %v35
  %v47 = vmul.f32 %v24, %v35
  %v48 = vmul.f32 %v25, %v35
  %v49 = vmul.f32 %v26, %v35
  %v50 = vmul.f32 %v27, %v35
  %v51 = vmul.f32 %v28, %v35
  %v52 = vmul.f32 %v29, %v35
  %v53 = vld [vmem:[%s2] sm:$0x1]
  %v55 = vlaneseq
  %v56 = vshrl.u32 %v55, 7
  %v57 = vsub.s32 0, %v56
  %v58 = vrot.slane %v53, %v57
  %v60 = vadd.f32 %v37, %v58
  %v61 = vadd.f32 %v38, %v58
  %v62 = vadd.f32 %v39, %v58
  %v63 = vadd.f32 %v40, %v58
  %v64 = vadd.f32 %v41, %v58
  %v65 = vadd.f32 %v42, %v58
  %v66 = vadd.f32 %v43, %v58
  %v67 = vadd.f32 %v44, %v58
  %v68 = vadd.f32 %v45, %v58
  %v69 = vadd.f32 %v46, %v58
  %v70 = vadd.f32 %v47, %v58
  %v71 = vadd.f32 %v48, %v58
  %v72 = vadd.f32 %v49, %v58
  %v73 = vadd.f32 %v50, %v58
  %v74 = vadd.f32 %v51, %v58
  %v75 = vadd.f32 %v52, %v58
  %v76 = vmax.f32 %v60, 0.0
  %v77 = vmax.f32 %v61, 0.0
  %v78 = vmax.f32 %v62, 0.0
  %v79 = vmax.f32 %v63, 0.0
  %v80 = vmax.f32 %v64, 0.0
  %v81 = vmax.f32 %v65, 0.0
  %v82 = vmax.f32 %v66, 0.0
  %v83 = vmax.f32 %v67, 0.0
  %v84 = vmax.f32 %v68, 0.0
  %v85 = vmax.f32 %v69, 0.0
  %v86 = vmax.f32 %v70, 0.0
  %v87 = vmax.f32 %v71, 0.0
  %v88 = vmax.f32 %v72, 0.0
  %v89 = vmax.f32 %v73, 0.0
  %v90 = vmax.f32 %v74, 0.0
  %v91 = vmax.f32 %v75, 0.0
  %v92 = vpack.c.bf16 %v77, %v76
  %v93 = vpack.c.bf16 %v79, %v78
  %v94 = vpack.c.bf16 %v81, %v80
  %v95 = vpack.c.bf16 %v83, %v82
  %v96 = vpack.c.bf16 %v85, %v84
  %v97 = vpack.c.bf16 %v87, %v86
  %v98 = vpack.c.bf16 %v89, %v88
  %v99 = vpack.c.bf16 %v91, %v90
  %v108 = vunpack.c.l.b16 %v92
  %v109 = vunpack.c.h.b16 %v92
  %v110 = vunpack.c.l.b16 %v93
  %v111 = vunpack.c.h.b16 %v93
  %v112 = vunpack.c.l.b16 %v94
  %v113 = vunpack.c.h.b16 %v94
  %v114 = vunpack.c.l.b16 %v95
  %v115 = vunpack.c.h.b16 %v95
  %v116 = vunpack.c.l.b16 %v96
  %v117 = vunpack.c.h.b16 %v96
  %v118 = vunpack.c.l.b16 %v97
  %v119 = vunpack.c.h.b16 %v97
  %v120 = vunpack.c.l.b16 %v98
  %v121 = vunpack.c.h.b16 %v98
  %v122 = vunpack.c.l.b16 %v99
  %v123 = vunpack.c.h.b16 %v99
  %v124 = vpack.c.b16 %v108, %v108
  %v125 = vpack.c.b16 %v109, %v109
  %v126 = vpack.c.b16 %v110, %v110
  %v127 = vpack.c.b16 %v111, %v111
  %v128 = vpack.c.b16 %v112, %v112
  %v129 = vpack.c.b16 %v113, %v113
  %v130 = vpack.c.b16 %v114, %v114
  %v131 = vpack.c.b16 %v115, %v115
  %v132 = vpack.c.b16 %v116, %v116
  %v133 = vpack.c.b16 %v117, %v117
  %v134 = vpack.c.b16 %v118, %v118
  %v135 = vpack.c.b16 %v119, %v119
  %v136 = vpack.c.b16 %v120, %v120
  %v137 = vpack.c.b16 %v121, %v121
  %v138 = vpack.c.b16 %v122, %v122
  %v139 = vpack.c.b16 %v123, %v123
  %156 = vst [vmem:[%s3] sm:$0xf] %v124
  %157 = vst [vmem:[%s3 + $0x4] sm:$0xf] %v125
  %158 = vst [vmem:[%s3 + $0x8] sm:$0xf] %v126
  %159 = vst [vmem:[%s3 + $0xc] sm:$0xf] %v127
  %160 = vst [vmem:[%s3 + $0x10] sm:$0xf] %v128
  %161 = vst [vmem:[%s3 + $0x14] sm:$0xf] %v129
  %162 = vst [vmem:[%s3 + $0x18] sm:$0xf] %v130
  %163 = vst [vmem:[%s3 + $0x1c] sm:$0xf] %v131
  %164 = vst [vmem:[%s3 + $0x20] sm:$0xf] %v132
  %165 = vst [vmem:[%s3 + $0x24] sm:$0xf] %v133
  %166 = vst [vmem:[%s3 + $0x28] sm:$0xf] %v134
  %167 = vst [vmem:[%s3 + $0x2c] sm:$0xf] %v135
  %168 = vst [vmem:[%s3 + $0x30] sm:$0xf] %v136
  %169 = vst [vmem:[%s3 + $0x34] sm:$0xf] %v137
  %170 = vst [vmem:[%s3 + $0x38] sm:$0xf] %v138
  %171 = vst [vmem:[%s3 + $0x3c] sm:$0xf] %v139
  // Predicated region
  $region14: #{stereonet_forward.21} parent=0 // pred_check
    _
  $region15: #{stereonet_forward.21} parent=0 // pred_check_branch
    %173 = sbr.rel (0) target = $region17
  $region16: #{stereonet_forward.21} parent=0 // pred_region
    _
  $region17: #{stereonet_forward.21} parent=0 // pred_fallthru
    _
  // Predicated region
  $region18: #{stereonet_forward.21} parent=0 // pred_check
    _
  $region19: #{stereonet_forward.21} parent=0 // pred_check_branch
    %175 = sbr.rel (0) target = $region21
  $region20: #{stereonet_forward.21} parent=0 // pred_region
    _
  $region21: #{stereonet_forward.21} parent=0 // pred_fallthru
    _

// kernel: stereonet_forward.26
$region0: #{stereonet_forward.26}
  #allocation0 [shape = 'u32[]', space=smem, size = 0x4, offset = 0x4, fixed_abs, tag = 'smem constant byte address 0x4 - core index']
  #allocation1 [shape = 'u32[144,128]{1,0:T(1,128)}', space=vmem, size = 0x12000, scoped, tag = 'internal scratch']
  %s0 = inlined_call_operand.vmem [shape: bf16[128,128], index: 0, kind: input, shape index: {}]
  %s1 = inlined_call_operand.vmem [shape: bf16[128,128], index: 1, kind: input, shape index: {}]
  %s2 = inlined_call_operand.vmem [shape: f32[128,128], index: 2, kind: output, shape index: {0}]
  %s3 = inlined_call_operand.vmem [shape: f32[8,128], index: 3, kind: output, shape index: {1}]
  %s4 = inlined_call_operand.vmem [shape: f32[8,128], index: 4, kind: output, shape index: {2}]
  %5 = xla_tuple %s2, %s3, %s4
  %s6 = sld [smem:[#allocation0]]
  $region34: #{stereonet_forward.26} parent=0
    _
  %s8 = ssub.s32 1, %s6
  %s9 = scalar_select 0, %s8, %s6
  // Predicated region
  $region2: #{stereonet_forward.26} parent=0 // pred_check
    _
  $region3: #{stereonet_forward.26} parent=0 // pred_check_branch
    %11 = sbr.rel (0) target = $region5
  $region4: #{stereonet_forward.26} parent=0 // pred_region
    _
  $region5: #{stereonet_forward.26} parent=0 // pred_fallthru
    _
  // Predicated region
  $region6: #{stereonet_forward.26} parent=0 // pred_check
    _
  $region7: #{stereonet_forward.26} parent=0 // pred_check_branch
    %13 = sbr.rel (0) target = $region9
  $region8: #{stereonet_forward.26} parent=0 // pred_region
    _
  $region9: #{stereonet_forward.26} parent=0 // pred_fallthru
    _
  %v15 = vld [vmem:[%s0] sm:$0xf]
  %v16 = vld [vmem:[%s0 + $0x4] sm:$0xf]
  %v17 = vld [vmem:[%s0 + $0x8] sm:$0xf]
  %v18 = vld [vmem:[%s0 + $0xc] sm:$0xf]
  %v19 = vld [vmem:[%s0 + $0x10] sm:$0xf]
  %v20 = vld [vmem:[%s0 + $0x14] sm:$0xf]
  %v21 = vld [vmem:[%s0 + $0x18] sm:$0xf]
  %v22 = vld [vmem:[%s0 + $0x1c] sm:$0xf]
  %v23 = vld [vmem:[%s0 + $0x20] sm:$0xf]
  %v24 = vld [vmem:[%s0 + $0x24] sm:$0xf]
  %v25 = vld [vmem:[%s0 + $0x28] sm:$0xf]
  %v26 = vld [vmem:[%s0 + $0x2c] sm:$0xf]
  %v27 = vld [vmem:[%s0 + $0x30] sm:$0xf]
  %v28 = vld [vmem:[%s0 + $0x34] sm:$0xf]
  %v29 = vld [vmem:[%s0 + $0x38] sm:$0xf]
  %v30 = vld [vmem:[%s0 + $0x3c] sm:$0xf]
  %v31 = vld [vmem:[%s1] sm:$0xf]
  %v32 = vld [vmem:[%s1 + $0x4] sm:$0xf]
  %v33 = vld [vmem:[%s1 + $0x8] sm:$0xf]
  %v34 = vld [vmem:[%s1 + $0xc] sm:$0xf]
  %v35 = vld [vmem:[%s1 + $0x10] sm:$0xf]
  %v36 = vld [vmem:[%s1 + $0x14] sm:$0xf]
  %v37 = vld [vmem:[%s1 + $0x18] sm:$0xf]
  %v38 = vld [vmem:[%s1 + $0x1c] sm:$0xf]
  %v39 = vld [vmem:[%s1 + $0x20] sm:$0xf]
  %v40 = vld [vmem:[%s1 + $0x24] sm:$0xf]
  %v41 = vld [vmem:[%s1 + $0x28] sm:$0xf]
  %v42 = vld [vmem:[%s1 + $0x2c] sm:$0xf]
  %v43 = vld [vmem:[%s1 + $0x30] sm:$0xf]
  %v44 = vld [vmem:[%s1 + $0x34] sm:$0xf]
  %v45 = vld [vmem:[%s1 + $0x38] sm:$0xf]
  %v46 = vld [vmem:[%s1 + $0x3c] sm:$0xf]
  %v63 = vunpack.c.l.b16 %v15
  %v64 = vunpack.c.l.b16 %v16
  %v65 = vunpack.c.l.b16 %v17
  %v66 = vunpack.c.l.b16 %v18
  %v67 = vunpack.c.l.b16 %v19
  %v68 = vunpack.c.l.b16 %v20
  %v69 = vunpack.c.l.b16 %v21
  %v70 = vunpack.c.l.b16 %v22
  %v71 = vunpack.c.l.b16 %v23
  %v72 = vunpack.c.l.b16 %v24
  %v73 = vunpack.c.l.b16 %v25
  %v74 = vunpack.c.l.b16 %v26
  %v75 = vunpack.c.l.b16 %v27
  %v76 = vunpack.c.l.b16 %v28
  %v77 = vunpack.c.l.b16 %v29
  %v78 = vunpack.c.l.b16 %v30
  %v79 = vpack.c.b16 %v64, %v63
  %v80 = vpack.c.b16 %v66, %v65
  %v81 = vpack.c.b16 %v68, %v67
  %v82 = vpack.c.b16 %v70, %v69
  %v83 = vpack.c.b16 %v72, %v71
  %v84 = vpack.c.b16 %v74, %v73
  %v85 = vpack.c.b16 %v76, %v75
  %v86 = vpack.c.b16 %v78, %v77
  %v111 = vunpack.c.l.b16 %v31
  %v112 = vunpack.c.l.b16 %v32
  %v113 = vunpack.c.l.b16 %v33
  %v114 = vunpack.c.l.b16 %v34
  %v115 = vunpack.c.l.b16 %v35
  %v116 = vunpack.c.l.b16 %v36
  %v117 = vunpack.c.l.b16 %v37
  %v118 = vunpack.c.l.b16 %v38
  %v119 = vunpack.c.l.b16 %v39
  %v120 = vunpack.c.l.b16 %v40
  %v121 = vunpack.c.l.b16 %v41
  %v122 = vunpack.c.l.b16 %v42
  %v123 = vunpack.c.l.b16 %v43
  %v124 = vunpack.c.l.b16 %v44
  %v125 = vunpack.c.l.b16 %v45
  %v126 = vunpack.c.l.b16 %v46
  %v127 = vpack.c.b16 %v112, %v111
  %v128 = vpack.c.b16 %v114, %v113
  %v129 = vpack.c.b16 %v116, %v115
  %v130 = vpack.c.b16 %v118, %v117
  %v131 = vpack.c.b16 %v120, %v119
  %v132 = vpack.c.b16 %v122, %v121
  %v133 = vpack.c.b16 %v124, %v123
  %v134 = vpack.c.b16 %v126, %v125
  %143 = vmatprep.subr.bf16.mxu0 0
  %144 = vmatpush1.bf16.msra.mxu0 %v127
  %145 = vmatprep.subr.bf16.mxu0 0
  %146 = vmatpush1.bf16.msra.mxu0 %v128
  %147 = vmatprep.subr.bf16.mxu0 0
  %148 = vmatpush1.bf16.msra.mxu0 %v129
  %149 = vmatprep.subr.bf16.mxu0 0
  %150 = vmatpush1.bf16.msra.mxu0 %v130
  %151 = vmatprep.subr.bf16.mxu0 0
  %152 = vmatpush1.bf16.msra.mxu0 %v131
  %153 = vmatprep.subr.bf16.mxu0 0
  %154 = vmatpush1.bf16.msra.mxu0 %v132
  %155 = vmatprep.subr.bf16.mxu0 0
  %156 = vmatpush1.bf16.msra.mxu0 %v133
  %157 = vmatprep.subr.bf16.mxu0 0
  %158 = vmatpush1.bf16.msra.mxu0 %v134
  %159 = vmatprep.subr.bf16.mxu0 0
  %160 = vmatpush1.bf16.msra.mxu0 0
  %161 = vmatprep.subr.bf16.mxu0 0
  %162 = vmatpush1.bf16.msra.mxu0 0
  %163 = vmatprep.subr.bf16.mxu0 0
  %164 = vmatpush1.bf16.msra.mxu0 0
  %165 = vmatprep.subr.bf16.mxu0 0
  %166 = vmatpush1.bf16.msra.mxu0 0
  %167 = vmatprep.subr.bf16.mxu0 0
  %168 = vmatpush1.bf16.msra.mxu0 0
  %169 = vmatprep.subr.bf16.mxu0 0
  %170 = vmatpush1.bf16.msra.mxu0 0
  %171 = vmatprep.subr.bf16.mxu0 0
  %172 = vmatpush1.bf16.msra.mxu0 0
  %173 = vmatprep.subr.bf16.mxu0 0
  %174 = vmatpush1.bf16.msra.mxu0 0
  %175 = vmatprep.mubr.bf16.mxu0 0
  %176 = vmatmul.mubr.bf16.gmra.mrb[0].mxu0 %v79
  %v177 = vpop.f32.mrb[0].mxu0
  %v178 = vadd.f32 0.0, %v177
  %v179 = vpop.f32.mrb[0].mxu0
  %v180 = vpop.f32.mrb[0].mxu0
  %v181 = vadd.f32 0.0, %v180
  %v182 = vpop.f32.mrb[0].mxu0
  %183 = vmatprep.mubr.bf16.mxu0 0
  %184 = vmatmul.mubr.bf16.gmra.mrb[0].mxu0 %v80
  %v185 = vpop.f32.mrb[0].mxu0
  %v186 = vadd.f32 0.0, %v185
  %v187 = vpop.f32.mrb[0].mxu0
  %v188 = vpop.f32.mrb[0].mxu0
  %v189 = vadd.f32 0.0, %v188
  %v190 = vpop.f32.mrb[0].mxu0
  %191 = vmatprep.mubr.bf16.mxu0 0
  %192 = vmatmul.mubr.bf16.gmra.mrb[0].mxu0 %v81
  %v193 = vpop.f32.mrb[0].mxu0
  %v194 = vadd.f32 0.0, %v193
  %v195 = vpop.f32.mrb[0].mxu0
  %v196 = vpop.f32.mrb[0].mxu0
  %v197 = vadd.f32 0.0, %v196
  %v198 = vpop.f32.mrb[0].mxu0
  %199 = vmatprep.mubr.bf16.mxu0 0
  %200 = vmatmul.mubr.bf16.gmra.mrb[0].mxu0 %v82
  %v201 = vpop.f32.mrb[0].mxu0
  %v202 = vadd.f32 0.0, %v201
  %v203 = vpop.f32.mrb[0].mxu0
  %v204 = vpop.f32.mrb[0].mxu0
  %v205 = vadd.f32 0.0, %v204
  %v206 = vpop.f32.mrb[0].mxu0
  %207 = vmatprep.mubr.bf16.mxu0 0
  %208 = vmatmul.mubr.bf16.gmra.mrb[0].mxu0 %v83
  %v209 = vpop.f32.mrb[0].mxu0
  %v210 = vadd.f32 0.0, %v209
  %v211 = vpop.f32.mrb[0].mxu0
  %v212 = vpop.f32.mrb[0].mxu0
  %v213 = vadd.f32 0.0, %v212
  %v214 = vpop.f32.mrb[0].mxu0
  %215 = vmatprep.mubr.bf16.mxu0 0
  %216 = vmatmul.mubr.bf16.gmra.mrb[0].mxu0 %v84
  %v217 = vpop.f32.mrb[0].mxu0
  %v218 = vadd.f32 0.0, %v217
  %v219 = vpop.f32.mrb[0].mxu0
  %v220 = vpop.f32.mrb[0].mxu0
  %v221 = vadd.f32 0.0, %v220
  %v222 = vpop.f32.mrb[0].mxu0
  %223 = vmatprep.mubr.bf16.mxu0 0
  %224 = vmatmul.mubr.bf16.gmra.mrb[0].mxu0 %v85
  %v225 = vpop.f32.mrb[0].mxu0
  %v226 = vadd.f32 0.0, %v225
  %v227 = vpop.f32.mrb[0].mxu0
  %v228 = vpop.f32.mrb[0].mxu0
  %v229 = vadd.f32 0.0, %v228
  %v230 = vpop.f32.mrb[0].mxu0
  %231 = vmatprep.mubr.bf16.mxu0 0
  %232 = vmatmul.mubr.bf16.gmra.mrb[0].mxu0 %v86
  %v233 = vpop.f32.mrb[0].mxu0
  %v234 = vadd.f32 0.0, %v233
  %v235 = vpop.f32.mrb[0].mxu0
  %v236 = vpop.f32.mrb[0].mxu0
  %v237 = vadd.f32 0.0, %v236
  %v238 = vpop.f32.mrb[0].mxu0
  %239 = vdwg.mxu0
  %240 = vst [vmem:[%s2] sm:$0xff] %v178
  %241 = vst [vmem:[%s2 + $0x8] sm:$0xff] %v181
  %242 = vst [vmem:[%s2 + $0x10] sm:$0xff] %v186
  %243 = vst [vmem:[%s2 + $0x18] sm:$0xff] %v189
  %244 = vst [vmem:[%s2 + $0x20] sm:$0xff] %v194
  %245 = vst [vmem:[%s2 + $0x28] sm:$0xff] %v197
  %246 = vst [vmem:[%s2 + $0x30] sm:$0xff] %v202
  %247 = vst [vmem:[%s2 + $0x38] sm:$0xff] %v205
  %248 = vst [vmem:[%s2 + $0x40] sm:$0xff] %v210
  %249 = vst [vmem:[%s2 + $0x48] sm:$0xff] %v213
  %250 = vst [vmem:[%s2 + $0x50] sm:$0xff] %v218
  %251 = vst [vmem:[%s2 + $0x58] sm:$0xff] %v221
  %252 = vst [vmem:[%s2 + $0x60] sm:$0xff] %v226
  %253 = vst [vmem:[%s2 + $0x68] sm:$0xff] %v229
  %254 = vst [vmem:[%s2 + $0x70] sm:$0xff] %v234
  %255 = vst [vmem:[%s2 + $0x78] sm:$0xff] %v237
  %v256 = vlaneseq
  %v257 = vshrl.u32 %v256, 7
  %vm258 = vcmp.eq.s32.totalorder %v257, 0
  %v259 = vadd.f32 %v178, %v181
  %v260 = vadd.f32 %v259, %v186
  %v261 = vadd.f32 %v260, %v189
  %v262 = vadd.f32 %v261, %v194
  %v263 = vadd.f32 %v262, %v197
  %v264 = vadd.f32 %v263, %v202
  %v265 = vadd.f32 %v264, %v205
  %v266 = vadd.f32 %v265, %v210
  %v267 = vadd.f32 %v266, %v213
  %v268 = vadd.f32 %v267, %v218
  %v269 = vadd.f32 %v268, %v221
  %v270 = vadd.f32 %v269, %v226
  %v271 = vadd.f32 %v270, %v229
  %v272 = vadd.f32 %v271, %v234
  %v273 = vadd.f32 %v272, %v237
  %v274 = vrot.slane %v273, 4
  %v275 = vadd.f32 %v273, %v274
  %v276 = vrot.slane %v275, 2
  %v277 = vadd.f32 %v275, %v276
  %v278 = vrot.slane %v277, 1
  %v279 = vadd.f32 %v277, %v278
  %v280 = vsel %vm258, %v279, 0.0
  %281 = vst [vmem:[%s3] sm:$0xff] %v280
  %v282 = vmul.f32 %v178, %v178
  %v283 = vmul.f32 %v181, %v181
  %v284 = vmul.f32 %v186, %v186
  %v285 = vmul.f32 %v189, %v189
  %v286 = vmul.f32 %v194, %v194
  %v287 = vmul.f32 %v197, %v197
  %v288 = vmul.f32 %v202, %v202
  %v289 = vmul.f32 %v205, %v205
  %v290 = vmul.f32 %v210, %v210
  %v291 = vmul.f32 %v213, %v213
  %v292 = vmul.f32 %v218, %v218
  %v293 = vmul.f32 %v221, %v221
  %v294 = vmul.f32 %v226, %v226
  %v295 = vmul.f32 %v229, %v229
  %v296 = vmul.f32 %v234, %v234
  %v297 = vmul.f32 %v237, %v237
  %v298 = vadd.f32 %v282, %v283
  %v299 = vadd.f32 %v298, %v284
  %v300 = vadd.f32 %v299, %v285
  %v301 = vadd.f32 %v300, %v286
  %v302 = vadd.f32 %v301, %v287
  %v303 = vadd.f32 %v302, %v288
  %v304 = vadd.f32 %v303, %v289
  %v305 = vadd.f32 %v304, %v290
  %v306 = vadd.f32 %v305, %v291
  %v307 = vadd.f32 %v306, %v292
  %v308 = vadd.f32 %v307, %v293
  %v309 = vadd.f32 %v308, %v294
  %v310 = vadd.f32 %v309, %v295
  %v311 = vadd.f32 %v310, %v296
  %v312 = vadd.f32 %v311, %v297
  %v313 = vrot.slane %v312, 4
  %v314 = vadd.f32 %v312, %v313
  %v315 = vrot.slane %v314, 2
  %v316 = vadd.f32 %v314, %v315
  %v317 = vrot.slane %v316, 1
  %v318 = vadd.f32 %v316, %v317
  %v319 = vsel %vm258, %v318, 0.0
  %320 = vst [vmem:[%s4] sm:$0xff] %v319
  // Predicated region
  $region10: #{stereonet_forward.26} parent=0 // pred_check
    _
  $region11: #{stereonet_forward.26} parent=0 // pred_check_branch
    %322 = sbr.rel (0) target = $region13
  $region12: #{stereonet_forward.26} parent=0 // pred_region
    _
  $region13: #{stereonet_forward.26} parent=0 // pred_fallthru
    _
  // Predicated region
  $region14: #{stereonet_forward.26} parent=0 // pred_check
    _
  $region15: #{stereonet_forward.26} parent=0 // pred_check_branch
    %324 = sbr.rel (0) target = $region17
  $region16: #{stereonet_forward.26} parent=0 // pred_region
    _
  $region17: #{stereonet_forward.26} parent=0 // pred_fallthru
    _
  // Predicated region
  $region18: #{stereonet_forward.26} parent=0 // pred_check
    _
  $region19: #{stereonet_forward.26} parent=0 // pred_check_branch
    %326 = sbr.rel (0) target = $region21
  $region20: #{stereonet_forward.26} parent=0 // pred_region
    _
  $region21: #{stereonet_forward.26} parent=0 // pred_fallthru
    _
  // Predicated region
  $region22: #{stereonet_forward.26} parent=0 // pred_check
    _
  $region23: #{stereonet_forward.26} parent=0 // pred_check_branch
    %328 = sbr.rel (0) target = $region25
  $region24: #{stereonet_forward.26} parent=0 // pred_region
    _
  $region25: #{stereonet_forward.26} parent=0 // pred_fallthru
    _
  // Predicated region
  $region26: #{stereonet_forward.26} parent=0 // pred_check
    _
  $region27: #{stereonet_forward.26} parent=0 // pred_check_branch
    %330 = sbr.rel (0) target = $region29
  $region28: #{stereonet_forward.26} parent=0 // pred_region
    _
  $region29: #{stereonet_forward.26} parent=0 // pred_fallthru
    _
  // Predicated region
  $region30: #{stereonet_forward.26} parent=0 // pred_check
    _
  $region31: #{stereonet_forward.26} parent=0 // pred_check_branch
    %332 = sbr.rel (0) target = $region33
  $region32: #{stereonet_forward.26} parent=0 // pred_region
    _
  $region33: #{stereonet_forward.26} parent=0 // pred_fallthru
    _

// kernel: stereonet_forward.28
$region0: #{stereonet_forward.28}
  #allocation0 [shape = 'u32[]', space=smem, size = 0x4, offset = 0x4, fixed_abs, tag = 'smem constant byte address 0x4 - core index']
  #allocation1 [shape = 'u32[144,128]{1,0:T(1,128)}', space=vmem, size = 0x12000, scoped, tag = 'internal scratch']
  %s0 = inlined_call_operand.vmem [shape: bf16[32,896], index: 0, kind: input, shape index: {}]
  %s1 = inlined_call_operand.vmem [shape: bf16[896,128], index: 1, kind: input, shape index: {}]
  %s2 = inlined_call_operand.vmem [shape: f32[32,128], index: 2, kind: output, shape index: {0}]
  %s3 = inlined_call_operand.vmem [shape: f32[8,128], index: 3, kind: output, shape index: {1}]
  %s4 = inlined_call_operand.vmem [shape: f32[8,128], index: 4, kind: output, shape index: {2}]
  %5 = xla_tuple %s2, %s3, %s4
  %s6 = sld [smem:[#allocation0]]
  $region34: #{stereonet_forward.28} parent=0
    _
  %s8 = ssub.s32 1, %s6
  %s9 = scalar_select 0, %s8, %s6
  // Predicated region
  $region2: #{stereonet_forward.28} parent=0 // pred_check
    _
  $region3: #{stereonet_forward.28} parent=0 // pred_check_branch
    %11 = sbr.rel (0) target = $region5
  $region4: #{stereonet_forward.28} parent=0 // pred_region
    _
  $region5: #{stereonet_forward.28} parent=0 // pred_fallthru
    _
  // Predicated region
  $region6: #{stereonet_forward.28} parent=0 // pred_check
    _
  $region7: #{stereonet_forward.28} parent=0 // pred_check_branch
    %13 = sbr.rel (0) target = $region9
  $region8: #{stereonet_forward.28} parent=0 // pred_region
    _
  $region9: #{stereonet_forward.28} parent=0 // pred_fallthru
    _
  %v15 = vld [vmem:[%s0] sm:$0xff]
  %v16 = vld [vmem:[%s0 + $0x8] sm:$0xff]
  %v17 = vld [vmem:[%s0 + $0x10] sm:$0xff]
  %v18 = vld [vmem:[%s0 + $0x18] sm:$0xf]
  %v19 = vld [vmem:[%s0 + $0x1c] sm:$0xff]
  %v20 = vld [vmem:[%s0 + $0x24] sm:$0xff]
  %v21 = vld [vmem:[%s0 + $0x2c] sm:$0xff]
  %v22 = vld [vmem:[%s0 + $0x34] sm:$0xf]
  %v23 = vld [vmem:[%s0 + $0x38] sm:$0xff]
  %v24 = vld [vmem:[%s0 + $0x40] sm:$0xff]
  %v25 = vld [vmem:[%s0 + $0x48] sm:$0xff]
  %v26 = vld [vmem:[%s0 + $0x50] sm:$0xf]
  %v27 = vld [vmem:[%s0 + $0x54] sm:$0xff]
  %v28 = vld [vmem:[%s0 + $0x5c] sm:$0xff]
  %v29 = vld [vmem:[%s0 + $0x64] sm:$0xff]
  %v30 = vld [vmem:[%s0 + $0x6c] sm:$0xf]
  %v31 = vld [vmem:[%s1] sm:$0xf]
  %v32 = vld [vmem:[%s1 + $0x4] sm:$0xf]
  %v33 = vld [vmem:[%s1 + $0x8] sm:$0xf]
  %v34 = vld [vmem:[%s1 + $0xc] sm:$0xf]
  %v35 = vld [vmem:[%s1 + $0x10] sm:$0xf]
  %v36 = vld [vmem:[%s1 + $0x14] sm:$0xf]
  %v37 = vld [vmem:[%s1 + $0x18] sm:$0xf]
  %v38 = vld [vmem:[%s1 + $0x1c] sm:$0xf]
  %v39 = vld [vmem:[%s1 + $0x20] sm:$0xf]
  %v40 = vld [vmem:[%s1 + $0x24] sm:$0xf]
  %v41 = vld [vmem:[%s1 + $0x28] sm:$0xf]
  %v42 = vld [vmem:[%s1 + $0x2c] sm:$0xf]
  %v43 = vld [vmem:[%s1 + $0x30] sm:$0xf]
  %v44 = vld [vmem:[%s1 + $0x34] sm:$0xf]
  %v45 = vld [vmem:[%s1 + $0x38] sm:$0xf]
  %v46 = vld [vmem:[%s1 + $0x3c] sm:$0xf]
  %v47 = vld [vmem:[%s1 + $0x40] sm:$0xf]
  %v48 = vld [vmem:[%s1 + $0x44] sm:$0xf]
  %v49 = vld [vmem:[%s1 + $0x48] sm:$0xf]
  %v50 = vld [vmem:[%s1 + $0x4c] sm:$0xf]
  %v51 = vld [vmem:[%s1 + $0x50] sm:$0xf]
  %v52 = vld [vmem:[%s1 + $0x54] sm:$0xf]
  %v53 = vld [vmem:[%s1 + $0x58] sm:$0xf]
  %v54 = vld [vmem:[%s1 + $0x5c] sm:$0xf]
  %v55 = vld [vmem:[%s1 + $0x60] sm:$0xf]
  %v56 = vld [vmem:[%s1 + $0x64] sm:$0xf]
  %v57 = vld [vmem:[%s1 + $0x68] sm:$0xf]
  %v58 = vld [vmem:[%s1 + $0x6c] sm:$0xf]
  %v59 = vld [vmem:[%s1 + $0x70] sm:$0xf]
  %v60 = vld [vmem:[%s1 + $0x74] sm:$0xf]
  %v61 = vld [vmem:[%s1 + $0x78] sm:$0xf]
  %v62 = vld [vmem:[%s1 + $0x7c] sm:$0xf]
  %v63 = vld [vmem:[%s1 + $0x80] sm:$0xf]
  %v64 = vld [vmem:[%s1 + $0x84] sm:$0xf]
  %v65 = vld [vmem:[%s1 + $0x88] sm:$0xf]
  %v66 = vld [vmem:[%s1 + $0x8c] sm:$0xf]
  %v67 = vld [vmem:[%s1 + $0x90] sm:$0xf]
  %v68 = vld [vmem:[%s1 + $0x94] sm:$0xf]
  %v69 = vld [vmem:[%s1 + $0x98] sm:$0xf]
  %v70 = vld [vmem:[%s1 + $0x9c] sm:$0xf]
  %v71 = vld [vmem:[%s1 + $0xa0] sm:$0xf]
  %v72 = vld [vmem:[%s1 + $0xa4] sm:$0xf]
  %v73 = vld [vmem:[%s1 + $0xa8] sm:$0xf]
  %v74 = vld [vmem:[%s1 + $0xac] sm:$0xf]
  %v75 = vld [vmem:[%s1 + $0xb0] sm:$0xf]
  %v76 = vld [vmem:[%s1 + $0xb4] sm:$0xf]
  %v77 = vld [vmem:[%s1 + $0xb8] sm:$0xf]
  %v78 = vld [vmem:[%s1 + $0xbc] sm:$0xf]
  %v79 = vld [vmem:[%s1 + $0xc0] sm:$0xf]
  %v80 = vld [vmem:[%s1 + $0xc4] sm:$0xf]
  %v81 = vld [vmem:[%s1 + $0xc8] sm:$0xf]
  %v82 = vld [vmem:[%s1 + $0xcc] sm:$0xf]
  %v83 = vld [vmem:[%s1 + $0xd0] sm:$0xf]
  %v84 = vld [vmem:[%s1 + $0xd4] sm:$0xf]
  %v85 = vld [vmem:[%s1 + $0xd8] sm:$0xf]
  %v86 = vld [vmem:[%s1 + $0xdc] sm:$0xf]
  %v87 = vld [vmem:[%s1 + $0xe0] sm:$0xf]
  %v88 = vld [vmem:[%s1 + $0xe4] sm:$0xf]
  %v89 = vld [vmem:[%s1 + $0xe8] sm:$0xf]
  %v90 = vld [vmem:[%s1 + $0xec] sm:$0xf]
  %v91 = vld [vmem:[%s1 + $0xf0] sm:$0xf]
  %v92 = vld [vmem:[%s1 + $0xf4] sm:$0xf]
  %v93 = vld [vmem:[%s1 + $0xf8] sm:$0xf]
  %v94 = vld [vmem:[%s1 + $0xfc] sm:$0xf]
  %v95 = vld [vmem:[%s1 + $0x100] sm:$0xf]
  %v96 = vld [vmem:[%s1 + $0x104] sm:$0xf]
  %v97 = vld [vmem:[%s1 + $0x108] sm:$0xf]
  %v98 = vld [vmem:[%s1 + $0x10c] sm:$0xf]
  %v99 = vld [vmem:[%s1 + $0x110] sm:$0xf]
  %v100 = vld [vmem:[%s1 + $0x114] sm:$0xf]
  %v101 = vld [vmem:[%s1 + $0x118] sm:$0xf]
  %v102 = vld [vmem:[%s1 + $0x11c] sm:$0xf]
  %v103 = vld [vmem:[%s1 + $0x120] sm:$0xf]
  %v104 = vld [vmem:[%s1 + $0x124] sm:$0xf]
  %v105 = vld [vmem:[%s1 + $0x128] sm:$0xf]
  %v106 = vld [vmem:[%s1 + $0x12c] sm:$0xf]
  %v107 = vld [vmem:[%s1 + $0x130] sm:$0xf]
  %v108 = vld [vmem:[%s1 + $0x134] sm:$0xf]
  %v109 = vld [vmem:[%s1 + $0x138] sm:$0xf]
  %v110 = vld [vmem:[%s1 + $0x13c] sm:$0xf]
  %v111 = vld [vmem:[%s1 + $0x140] sm:$0xf]
  %v112 = vld [vmem:[%s1 + $0x144] sm:$0xf]
  %v113 = vld [vmem:[%s1 + $0x148] sm:$0xf]
  %v114 = vld [vmem:[%s1 + $0x14c] sm:$0xf]
  %v115 = vld [vmem:[%s1 + $0x150] sm:$0xf]
  %v116 = vld [vmem:[%s1 + $0x154] sm:$0xf]
  %v117 = vld [vmem:[%s1 + $0x158] sm:$0xf]
  %v118 = vld [vmem:[%s1 + $0x15c] sm:$0xf]
  %v119 = vld [vmem:[%s1 + $0x160] sm:$0xf]
  %v120 = vld [vmem:[%s1 + $0x164] sm:$0xf]
  %v121 = vld [vmem:[%s1 + $0x168] sm:$0xf]
  %v122 = vld [vmem:[%s1 + $0x16c] sm:$0xf]
  %v123 = vld [vmem:[%s1 + $0x170] sm:$0xf]
  %v124 = vld [vmem:[%s1 + $0x174] sm:$0xf]
  %v125 = vld [vmem:[%s1 + $0x178] sm:$0xf]
  %v126 = vld [vmem:[%s1 + $0x17c] sm:$0xf]
  %v127 = vld [vmem:[%s1 + $0x180] sm:$0xf]
  %v128 = vld [vmem:[%s1 + $0x184] sm:$0xf]
  %v129 = vld [vmem:[%s1 + $0x188] sm:$0xf]
  %v130 = vld [vmem:[%s1 + $0x18c] sm:$0xf]
  %v131 = vld [vmem:[%s1 + $0x190] sm:$0xf]
  %v132 = vld [vmem:[%s1 + $0x194] sm:$0xf]
  %v133 = vld [vmem:[%s1 + $0x198] sm:$0xf]
  %v134 = vld [vmem:[%s1 + $0x19c] sm:$0xf]
  %v135 = vld [vmem:[%s1 + $0x1a0] sm:$0xf]
  %v136 = vld [vmem:[%s1 + $0x1a4] sm:$0xf]
  %v137 = vld [vmem:[%s1 + $0x1a8] sm:$0xf]
  %v138 = vld [vmem:[%s1 + $0x1ac] sm:$0xf]
  %v139 = vld [vmem:[%s1 + $0x1b0] sm:$0xf]
  %v140 = vld [vmem:[%s1 + $0x1b4] sm:$0xf]
  %v141 = vld [vmem:[%s1 + $0x1b8] sm:$0xf]
  %v142 = vld [vmem:[%s1 + $0x1bc] sm:$0xf]
  %v159 = vunpack.c.l.b16 %v15
  %v160 = vunpack.c.h.b16 %v15
  %v161 = vunpack.c.l.b16 %v16
  %v162 = vunpack.c.h.b16 %v16
  %v163 = vunpack.c.l.b16 %v17
  %v164 = vunpack.c.h.b16 %v17
  %v165 = vunpack.c.l.b16 %v18
  %v166 = vunpack.c.l.b16 %v19
  %v167 = vunpack.c.h.b16 %v19
  %v168 = vunpack.c.l.b16 %v20
  %v169 = vunpack.c.h.b16 %v20
  %v170 = vunpack.c.l.b16 %v21
  %v171 = vunpack.c.h.b16 %v21
  %v172 = vunpack.c.l.b16 %v22
  %v173 = vunpack.c.l.b16 %v23
  %v174 = vunpack.c.h.b16 %v23
  %v175 = vunpack.c.l.b16 %v24
  %v176 = vunpack.c.h.b16 %v24
  %v177 = vunpack.c.l.b16 %v25
  %v178 = vunpack.c.h.b16 %v25
  %v179 = vunpack.c.l.b16 %v26
  %v180 = vunpack.c.l.b16 %v27
  %v181 = vunpack.c.h.b16 %v27
  %v182 = vunpack.c.l.b16 %v28
  %v183 = vunpack.c.h.b16 %v28
  %v184 = vunpack.c.l.b16 %v29
  %v185 = vunpack.c.h.b16 %v29
  %v186 = vunpack.c.l.b16 %v30
  %v187 = vpack.c.b16 %v166, %v159
  %v188 = vpack.c.b16 %v167, %v160
  %v189 = vpack.c.b16 %v168, %v161
  %v190 = vpack.c.b16 %v169, %v162
  %v191 = vpack.c.b16 %v170, %v163
  %v192 = vpack.c.b16 %v171, %v164
  %v193 = vpack.c.b16 %v172, %v165
  %v194 = vpack.c.b16 %v180, %v173
  %v195 = vpack.c.b16 %v181, %v174
  %v196 = vpack.c.b16 %v182, %v175
  %v197 = vpack.c.b16 %v183, %v176
  %v198 = vpack.c.b16 %v184, %v177
  %v199 = vpack.c.b16 %v185, %v178
  %v200 = vpack.c.b16 %v186, %v179
  %v327 = vunpack.c.l.b16 %v31
  %v328 = vunpack.c.l.b16 %v32
  %v329 = vunpack.c.l.b16 %v33
  %v330 = vunpack.c.l.b16 %v34
  %v331 = vunpack.c.l.b16 %v35
  %v332 = vunpack.c.l.b16 %v36
  %v333 = vunpack.c.l.b16 %v37
  %v334 = vunpack.c.l.b16 %v38
  %v335 = vunpack.c.l.b16 %v39
  %v336 = vunpack.c.l.b16 %v40
  %v337 = vunpack.c.l.b16 %v41
  %v338 = vunpack.c.l.b16 %v42
  %v339 = vunpack.c.l.b16 %v43
  %v340 = vunpack.c.l.b16 %v44
  %v341 = vunpack.c.l.b16 %v45
  %v342 = vunpack.c.l.b16 %v46
  %v343 = vunpack.c.l.b16 %v47
  %v344 = vunpack.c.l.b16 %v48
  %v345 = vunpack.c.l.b16 %v49
  %v346 = vunpack.c.l.b16 %v50
  %v347 = vunpack.c.l.b16 %v51
  %v348 = vunpack.c.l.b16 %v52
  %v349 = vunpack.c.l.b16 %v53
  %v350 = vunpack.c.l.b16 %v54
  %v351 = vunpack.c.l.b16 %v55
  %v352 = vunpack.c.l.b16 %v56
  %v353 = vunpack.c.l.b16 %v57
  %v354 = vunpack.c.l.b16 %v58
  %v355 = vunpack.c.l.b16 %v59
  %v356 = vunpack.c.l.b16 %v60
  %v357 = vunpack.c.l.b16 %v61
  %v358 = vunpack.c.l.b16 %v62
  %v359 = vunpack.c.l.b16 %v63
  %v360 = vunpack.c.l.b16 %v64
  %v361 = vunpack.c.l.b16 %v65
  %v362 = vunpack.c.l.b16 %v66
  %v363 = vunpack.c.l.b16 %v67
  %v364 = vunpack.c.l.b16 %v68
  %v365 = vunpack.c.l.b16 %v69
  %v366 = vunpack.c.l.b16 %v70
  %v367 = vunpack.c.l.b16 %v71
  %v368 = vunpack.c.l.b16 %v72
  %v369 = vunpack.c.l.b16 %v73
  %v370 = vunpack.c.l.b16 %v74
  %v371 = vunpack.c.l.b16 %v75
  %v372 = vunpack.c.l.b16 %v76
  %v373 = vunpack.c.l.b16 %v77
  %v374 = vunpack.c.l.b16 %v78
  %v375 = vunpack.c.l.b16 %v79
  %v376 = vunpack.c.l.b16 %v80
  %v377 = vunpack.c.l.b16 %v81
  %v378 = vunpack.c.l.b16 %v82
  %v379 = vunpack.c.l.b16 %v83
  %v380 = vunpack.c.l.b16 %v84
  %v381 = vunpack.c.l.b16 %v85
  %v382 = vunpack.c.l.b16 %v86
  %v383 = vunpack.c.l.b16 %v87
  %v384 = vunpack.c.l.b16 %v88
  %v385 = vunpack.c.l.b16 %v89
  %v386 = vunpack.c.l.b16 %v90
  %v387 = vunpack.c.l.b16 %v91
  %v388 = vunpack.c.l.b16 %v92
  %v389 = vunpack.c.l.b16 %v93
  %v390 = vunpack.c.l.b16 %v94
  %v391 = vunpack.c.l.b16 %v95
  %v392 = vunpack.c.l.b16 %v96
  %v393 = vunpack.c.l.b16 %v97
  %v394 = vunpack.c.l.b16 %v98
  %v395 = vunpack.c.l.b16 %v99
  %v396 = vunpack.c.l.b16 %v100
  %v397 = vunpack.c.l.b16 %v101
  %v398 = vunpack.c.l.b16 %v102
  %v399 = vunpack.c.l.b16 %v103
  %v400 = vunpack.c.l.b16 %v104
  %v401 = vunpack.c.l.b16 %v105
  %v402 = vunpack.c.l.b16 %v106
  %v403 = vunpack.c.l.b16 %v107
  %v404 = vunpack.c.l.b16 %v108
  %v405 = vunpack.c.l.b16 %v109
  %v406 = vunpack.c.l.b16 %v110
  %v407 = vunpack.c.l.b16 %v111
  %v408 = vunpack.c.l.b16 %v112
  %v409 = vunpack.c.l.b16 %v113
  %v410 = vunpack.c.l.b16 %v114
  %v411 = vunpack.c.l.b16 %v115
  %v412 = vunpack.c.l.b16 %v116
  %v413 = vunpack.c.l.b16 %v117
  %v414 = vunpack.c.l.b16 %v118
  %v415 = vunpack.c.l.b16 %v119
  %v416 = vunpack.c.l.b16 %v120
  %v417 = vunpack.c.l.b16 %v121
  %v418 = vunpack.c.l.b16 %v122
  %v419 = vunpack.c.l.b16 %v123
  %v420 = vunpack.c.l.b16 %v124
  %v421 = vunpack.c.l.b16 %v125
  %v422 = vunpack.c.l.b16 %v126
  %v423 = vunpack.c.l.b16 %v127
  %v424 = vunpack.c.l.b16 %v128
  %v425 = vunpack.c.l.b16 %v129
  %v426 = vunpack.c.l.b16 %v130
  %v427 = vunpack.c.l.b16 %v131
  %v428 = vunpack.c.l.b16 %v132
  %v429 = vunpack.c.l.b16 %v133
  %v430 = vunpack.c.l.b16 %v134
  %v431 = vunpack.c.l.b16 %v135
  %v432 = vunpack.c.l.b16 %v136
  %v433 = vunpack.c.l.b16 %v137
  %v434 = vunpack.c.l.b16 %v138
  %v435 = vunpack.c.l.b16 %v139
  %v436 = vunpack.c.l.b16 %v140
  %v437 = vunpack.c.l.b16 %v141
  %v438 = vunpack.c.l.b16 %v142
  %v439 = vpack.c.b16 %v328, %v327
  %v440 = vpack.c.b16 %v330, %v329
  %v441 = vpack.c.b16 %v332, %v331
  %v442 = vpack.c.b16 %v334, %v333
  %v443 = vpack.c.b16 %v336, %v335
  %v444 = vpack.c.b16 %v338, %v337
  %v445 = vpack.c.b16 %v340, %v339
  %v446 = vpack.c.b16 %v342, %v341
  %v447 = vpack.c.b16 %v344, %v343
  %v448 = vpack.c.b16 %v346, %v345
  %v449 = vpack.c.b16 %v348, %v347
  %v450 = vpack.c.b16 %v350, %v349
  %v451 = vpack.c.b16 %v352, %v351
  %v452 = vpack.c.b16 %v354, %v353
  %v453 = vpack.c.b16 %v356, %v355
  %v454 = vpack.c.b16 %v358, %v357
  %v455 = vpack.c.b16 %v360, %v359
  %v456 = vpack.c.b16 %v362, %v361
  %v457 = vpack.c.b16 %v364, %v363
  %v458 = vpack.c.b16 %v366, %v365
  %v459 = vpack.c.b16 %v368, %v367
  %v460 = vpack.c.b16 %v370, %v369
  %v461 = vpack.c.b16 %v372, %v371
  %v462 = vpack.c.b16 %v374, %v373
  %v463 = vpack.c.b16 %v376, %v375
  %v464 = vpack.c.b16 %v378, %v377
  %v465 = vpack.c.b16 %v380, %v379
  %v466 = vpack.c.b16 %v382, %v381
  %v467 = vpack.c.b16 %v384, %v383
  %v468 = vpack.c.b16 %v386, %v385
  %v469 = vpack.c.b16 %v388, %v387
  %v470 = vpack.c.b16 %v390, %v389
  %v471 = vpack.c.b16 %v392, %v391
  %v472 = vpack.c.b16 %v394, %v393
  %v473 = vpack.c.b16 %v396, %v395
  %v474 = vpack.c.b16 %v398, %v397
  %v475 = vpack.c.b16 %v400, %v399
  %v476 = vpack.c.b16 %v402, %v401
  %v477 = vpack.c.b16 %v404, %v403
  %v478 = vpack.c.b16 %v406, %v405
  %v479 = vpack.c.b16 %v408, %v407
  %v480 = vpack.c.b16 %v410, %v409
  %v481 = vpack.c.b16 %v412, %v411
  %v482 = vpack.c.b16 %v414, %v413
  %v483 = vpack.c.b16 %v416, %v415
  %v484 = vpack.c.b16 %v418, %v417
  %v485 = vpack.c.b16 %v420, %v419
  %v486 = vpack.c.b16 %v422, %v421
  %v487 = vpack.c.b16 %v424, %v423
  %v488 = vpack.c.b16 %v426, %v425
  %v489 = vpack.c.b16 %v428, %v427
  %v490 = vpack.c.b16 %v430, %v429
  %v491 = vpack.c.b16 %v432, %v431
  %v492 = vpack.c.b16 %v434, %v433
  %v493 = vpack.c.b16 %v436, %v435
  %v494 = vpack.c.b16 %v438, %v437
  %551 = vmatprep.subr.bf16.mxu0 0
  %552 = vmatpush1.bf16.msra.mxu0 %v439
  %553 = vmatprep.subr.bf16.mxu0 0
  %554 = vmatpush1.bf16.msra.mxu0 %v440
  %555 = vmatprep.subr.bf16.mxu0 0
  %556 = vmatpush1.bf16.msra.mxu0 %v441
  %557 = vmatprep.subr.bf16.mxu0 0
  %558 = vmatpush1.bf16.msra.mxu0 %v442
  %559 = vmatprep.subr.bf16.mxu0 0
  %560 = vmatpush1.bf16.msra.mxu0 %v443
  %561 = vmatprep.subr.bf16.mxu0 0
  %562 = vmatpush1.bf16.msra.mxu0 %v444
  %563 = vmatprep.subr.bf16.mxu0 0
  %564 = vmatpush1.bf16.msra.mxu0 %v445
  %565 = vmatprep.subr.bf16.mxu0 0
  %566 = vmatpush1.bf16.msra.mxu0 %v446
  %567 = vmatprep.subr.bf16.mxu0 0
  %568 = vmatpush1.bf16.msra.mxu0 %v447
  %569 = vmatprep.subr.bf16.mxu0 0
  %570 = vmatpush1.bf16.msra.mxu0 %v448
  %571 = vmatprep.subr.bf16.mxu0 0
  %572 = vmatpush1.bf16.msra.mxu0 %v449
  %573 = vmatprep.subr.bf16.mxu0 0
  %574 = vmatpush1.bf16.msra.mxu0 %v450
  %575 = vmatprep.subr.bf16.mxu0 0
  %576 = vmatpush1.bf16.msra.mxu0 %v451
  %577 = vmatprep.subr.bf16.mxu0 0
  %578 = vmatpush1.bf16.msra.mxu0 %v452
  %579 = vmatprep.subr.bf16.mxu0 0
  %580 = vmatpush1.bf16.msra.mxu0 %v453
  %581 = vmatprep.subr.bf16.mxu0 0
  %582 = vmatpush1.bf16.msra.mxu0 %v454
  %583 = vmatprep.mubr.bf16.mxu0 %v188
  %584 = vmatmul.mubr.bf16.gmra.mrb[0].mxu0 %v187
  %v585 = vpop.f32.mrb[0].mxu0
  %v586 = vadd.f32 0.0, %v585
  %v587 = vpop.f32.mrb[0].mxu0
  %v588 = vpop.f32.mrb[0].mxu0
  %v589 = vadd.f32 0.0, %v588
  %v590 = vpop.f32.mrb[0].mxu0
  %591 = vmatprep.mubr.bf16.mxu0 %v195
  %592 = vmatmul.mubr.bf16.gmra.mrb[0].mxu0 %v194
  %v593 = vpop.f32.mrb[0].mxu0
  %v594 = vadd.f32 0.0, %v593
  %v595 = vpop.f32.mrb[0].mxu0
  %v596 = vpop.f32.mrb[0].mxu0
  %v597 = vadd.f32 0.0, %v596
  %v598 = vpop.f32.mrb[0].mxu0
  %599 = vdwg.mxu0
  %600 = vmatprep.subr.bf16.mxu0 0
  %601 = vmatpush1.bf16.msra.mxu0 %v455
  %602 = vmatprep.subr.bf16.mxu0 0
  %603 = vmatpush1.bf16.msra.mxu0 %v456
  %604 = vmatprep.subr.bf16.mxu0 0
  %605 = vmatpush1.bf16.msra.mxu0 %v457
  %606 = vmatprep.subr.bf16.mxu0 0
  %607 = vmatpush1.bf16.msra.mxu0 %v458
  %608 = vmatprep.subr.bf16.mxu0 0
  %609 = vmatpush1.bf16.msra.mxu0 %v459
  %610 = vmatprep.subr.bf16.mxu0 0
  %611 = vmatpush1.bf16.msra.mxu0 %v460
  %612 = vmatprep.subr.bf16.mxu0 0
  %613 = vmatpush1.bf16.msra.mxu0 %v461
  %614 = vmatprep.subr.bf16.mxu0 0
  %615 = vmatpush1.bf16.msra.mxu0 %v462
  %616 = vmatprep.subr.bf16.mxu0 0
  %617 = vmatpush1.bf16.msra.mxu0 %v463
  %618 = vmatprep.subr.bf16.mxu0 0
  %619 = vmatpush1.bf16.msra.mxu0 %v464
  %620 = vmatprep.subr.bf16.mxu0 0
  %621 = vmatpush1.bf16.msra.mxu0 %v465
  %622 = vmatprep.subr.bf16.mxu0 0
  %623 = vmatpush1.bf16.msra.mxu0 %v466
  %624 = vmatprep.subr.bf16.mxu0 0
  %625 = vmatpush1.bf16.msra.mxu0 %v467
  %626 = vmatprep.subr.bf16.mxu0 0
  %627 = vmatpush1.bf16.msra.mxu0 %v468
  %628 = vmatprep.subr.bf16.mxu0 0
  %629 = vmatpush1.bf16.msra.mxu0 %v469
  %630 = vmatprep.subr.bf16.mxu0 0
  %631 = vmatpush1.bf16.msra.mxu0 %v470
  %632 = vmatprep.mubr.bf16.mxu0 %v190
  %633 = vmatmul.mubr.bf16.gmra.mrb[0].mxu0 %v189
  %v634 = vpop.f32.mrb[0].mxu0
  %v635 = vadd.f32 %v586, %v634
  %v636 = vpop.f32.mrb[0].mxu0
  %v637 = vpop.f32.mrb[0].mxu0
  %v638 = vadd.f32 %v589, %v637
  %v639 = vpop.f32.mrb[0].mxu0
  %640 = vmatprep.mubr.bf16.mxu0 %v197
  %641 = vmatmul.mubr.bf16.gmra.mrb[0].mxu0 %v196
  %v642 = vpop.f32.mrb[0].mxu0
  %v643 = vadd.f32 %v594, %v642
  %v644 = vpop.f32.mrb[0].mxu0
  %v645 = vpop.f32.mrb[0].mxu0
  %v646 = vadd.f32 %v597, %v645
  %v647 = vpop.f32.mrb[0].mxu0
  %648 = vdwg.mxu0
  %649 = vmatprep.subr.bf16.mxu0 0
  %650 = vmatpush1.bf16.msra.mxu0 %v471
  %651 = vmatprep.subr.bf16.mxu0 0
  %652 = vmatpush1.bf16.msra.mxu0 %v472
  %653 = vmatprep.subr.bf16.mxu0 0
  %654 = vmatpush1.bf16.msra.mxu0 %v473
  %655 = vmatprep.subr.bf16.mxu0 0
  %656 = vmatpush1.bf16.msra.mxu0 %v474
  %657 = vmatprep.subr.bf16.mxu0 0
  %658 = vmatpush1.bf16.msra.mxu0 %v475
  %659 = vmatprep.subr.bf16.mxu0 0
  %660 = vmatpush1.bf16.msra.mxu0 %v476
  %661 = vmatprep.subr.bf16.mxu0 0
  %662 = vmatpush1.bf16.msra.mxu0 %v477
  %663 = vmatprep.subr.bf16.mxu0 0
  %664 = vmatpush1.bf16.msra.mxu0 %v478
  %665 = vmatprep.subr.bf16.mxu0 0
  %666 = vmatpush1.bf16.msra.mxu0 %v479
  %667 = vmatprep.subr.bf16.mxu0 0
  %668 = vmatpush1.bf16.msra.mxu0 %v480
  %669 = vmatprep.subr.bf16.mxu0 0
  %670 = vmatpush1.bf16.msra.mxu0 %v481
  %671 = vmatprep.subr.bf16.mxu0 0
  %672 = vmatpush1.bf16.msra.mxu0 %v482
  %673 = vmatprep.subr.bf16.mxu0 0
  %674 = vmatpush1.bf16.msra.mxu0 %v483
  %675 = vmatprep.subr.bf16.mxu0 0
  %676 = vmatpush1.bf16.msra.mxu0 %v484
  %677 = vmatprep.subr.bf16.mxu0 0
  %678 = vmatpush1.bf16.msra.mxu0 %v485
  %679 = vmatprep.subr.bf16.mxu0 0
  %680 = vmatpush1.bf16.msra.mxu0 %v486
  %681 = vmatprep.mubr.bf16.mxu0 %v192
  %682 = vmatmul.mubr.bf16.gmra.mrb[0].mxu0 %v191
  %v683 = vpop.f32.mrb[0].mxu0
  %v684 = vadd.f32 %v635, %v683
  %v685 = vpop.f32.mrb[0].mxu0
  %v686 = vpop.f32.mrb[0].mxu0
  %v687 = vadd.f32 %v638, %v686
  %v688 = vpop.f32.mrb[0].mxu0
  %689 = vmatprep.mubr.bf16.mxu0 %v199
  %690 = vmatmul.mubr.bf16.gmra.mrb[0].mxu0 %v198
  %v691 = vpop.f32.mrb[0].mxu0
  %v692 = vadd.f32 %v643, %v691
  %v693 = vpop.f32.mrb[0].mxu0
  %v694 = vpop.f32.mrb[0].mxu0
  %v695 = vadd.f32 %v646, %v694
  %v696 = vpop.f32.mrb[0].mxu0
  %697 = vdwg.mxu0
  %698 = vmatprep.subr.bf16.mxu0 0
  %699 = vmatpush1.bf16.msra.mxu0 %v487
  %700 = vmatprep.subr.bf16.mxu0 0
  %701 = vmatpush1.bf16.msra.mxu0 %v488
  %702 = vmatprep.subr.bf16.mxu0 0
  %703 = vmatpush1.bf16.msra.mxu0 %v489
  %704 = vmatprep.subr.bf16.mxu0 0
  %705 = vmatpush1.bf16.msra.mxu0 %v490
  %706 = vmatprep.subr.bf16.mxu0 0
  %707 = vmatpush1.bf16.msra.mxu0 %v491
  %708 = vmatprep.subr.bf16.mxu0 0
  %709 = vmatpush1.bf16.msra.mxu0 %v492
  %710 = vmatprep.subr.bf16.mxu0 0
  %711 = vmatpush1.bf16.msra.mxu0 %v493
  %712 = vmatprep.subr.bf16.mxu0 0
  %713 = vmatpush1.bf16.msra.mxu0 %v494
  %714 = vmatprep.subr.bf16.mxu0 0
  %715 = vmatpush1.bf16.msra.mxu0 0
  %716 = vmatprep.subr.bf16.mxu0 0
  %717 = vmatpush1.bf16.msra.mxu0 0
  %718 = vmatprep.subr.bf16.mxu0 0
  %719 = vmatpush1.bf16.msra.mxu0 0
  %720 = vmatprep.subr.bf16.mxu0 0
  %721 = vmatpush1.bf16.msra.mxu0 0
  %722 = vmatprep.subr.bf16.mxu0 0
  %723 = vmatpush1.bf16.msra.mxu0 0
  %724 = vmatprep.subr.bf16.mxu0 0
  %725 = vmatpush1.bf16.msra.mxu0 0
  %726 = vmatprep.subr.bf16.mxu0 0
  %727 = vmatpush1.bf16.msra.mxu0 0
  %728 = vmatprep.subr.bf16.mxu0 0
  %729 = vmatpush1.bf16.msra.mxu0 0
  %730 = vmatprep.mubr.bf16.mxu0 0
  %731 = vmatmul.mubr.bf16.gmra.mrb[0].mxu0 %v193
  %v732 = vpop.f32.mrb[0].mxu0
  %v733 = vadd.f32 %v684, %v732
  %v734 = vpop.f32.mrb[0].mxu0
  %v735 = vpop.f32.mrb[0].mxu0
  %v736 = vadd.f32 %v687, %v735
  %v737 = vpop.f32.mrb[0].mxu0
  %738 = vmatprep.mubr.bf16.mxu0 0
  %739 = vmatmul.mubr.bf16.gmra.mrb[0].mxu0 %v200
  %v740 = vpop.f32.mrb[0].mxu0
  %v741 = vadd.f32 %v692, %v740
  %v742 = vpop.f32.mrb[0].mxu0
  %v743 = vpop.f32.mrb[0].mxu0
  %v744 = vadd.f32 %v695, %v743
  %v745 = vpop.f32.mrb[0].mxu0
  %746 = vdwg.mxu0
  %747 = vst [vmem:[%s2] sm:$0xff] %v733
  %748 = vst [vmem:[%s2 + $0x8] sm:$0xff] %v736
  %749 = vst [vmem:[%s2 + $0x10] sm:$0xff] %v741
  %750 = vst [vmem:[%s2 + $0x18] sm:$0xff] %v744
  %v751 = vlaneseq
  %v752 = vshrl.u32 %v751, 7
  %vm753 = vcmp.eq.s32.totalorder %v752, 0
  %v754 = vadd.f32 %v733, %v736
  %v755 = vadd.f32 %v754, %v741
  %v756 = vadd.f32 %v755, %v744
  %v757 = vrot.slane %v756, 4
  %v758 = vadd.f32 %v756, %v757
  %v759 = vrot.slane %v758, 2
  %v760 = vadd.f32 %v758, %v759
  %v761 = vrot.slane %v760, 1
  %v762 = vadd.f32 %v760, %v761
  %v763 = vsel %vm753, %v762, 0.0
  %764 = vst [vmem:[%s3] sm:$0xff] %v763
  %v765 = vmul.f32 %v733, %v733
  %v766 = vmul.f32 %v736, %v736
  %v767 = vmul.f32 %v741, %v741
  %v768 = vmul.f32 %v744, %v744
  %v769 = vadd.f32 %v765, %v766
  %v770 = vadd.f32 %v769, %v767
  %v771 = vadd.f32 %v770, %v768
  %v772 = vrot.slane %v771, 4
  %v773 = vadd.f32 %v771, %v772
  %v774 = vrot.slane %v773, 2
  %v775 = vadd.f32 %v773, %v774
  %v776 = vrot.slane %v775, 1
  %v777 = vadd.f32 %v775, %v776
  %v778 = vsel %vm753, %v777, 0.0
  %779 = vst [vmem:[%s4] sm:$0xff] %v778
  // Predicated region
  $region10: #{stereonet_forward.28} parent=0 // pred_check
    _
  $region11: #{stereonet_forward.28} parent=0 // pred_check_branch
    %781 = sbr.rel (0) target = $region13
  $region12: #{stereonet_forward.28} parent=0 // pred_region
    _
  $region13: #{stereonet_forward.28} parent=0 // pred_fallthru
    _
  // Predicated region
  $region14: #{stereonet_forward.28} parent=0 // pred_check
    _
  $region15: #{stereonet_forward.28} parent=0 // pred_check_branch
    %783 = sbr.rel (0) target = $region17
  $region16: #{stereonet_forward.28} parent=0 // pred_region
    _
  $region17: #{stereonet_forward.28} parent=0 // pred_fallthru
    _
  // Predicated region
  $region18: #{stereonet_forward.28} parent=0 // pred_check
    _
  $region19: #{stereonet_forward.28} parent=0 // pred_check_branch
    %785 = sbr.rel (0) target = $region21
  $region20: #{stereonet_forward.28} parent=0 // pred_region
    _
  $region21: #{stereonet_forward.28} parent=0 // pred_fallthru
    _
  // Predicated region
  $region22: #{stereonet_forward.28} parent=0 // pred_check
    _
  $region23: #{stereonet_forward.28} parent=0 // pred_check_branch
    %787 = sbr.rel (0) target = $region25
  $region24: #{stereonet_forward.28} parent=0 // pred_region
    _
  $region25: #{stereonet_forward.28} parent=0 // pred_fallthru
    _
  // Predicated region
  $region26: #{stereonet_forward.28} parent=0 // pred_check
    _
  $region27: #{stereonet_forward.28} parent=0 // pred_check_branch
    %789 = sbr.rel (0) target = $region29
  $region28: #{stereonet_forward.28} parent=0 // pred_region
    _
  $region29: #{stereonet_forward.28} parent=0 // pred_fallthru
    _
  // Predicated region
  $region30: #{stereonet_forward.28} parent=0 // pred_check
    _
  $region31: #{stereonet_forward.28} parent=0 // pred_check_branch
    %791 = sbr.rel (0) target = $region33
  $region32: #{stereonet_forward.28} parent=0 // pred_region
    _
  $region33: #{stereonet_forward.28} parent=0 // pred_fallthru
    _

// kernel: stereonet_forward.23
$region0: #{stereonet_forward.23}
  #allocation0 [shape = 'u32[]', space=smem, size = 0x4, offset = 0x4, fixed_abs, tag = 'smem constant byte address 0x4 - core index']
  #allocation1 [shape = 'u32[144,128]{1,0:T(1,128)}', space=vmem, size = 0x12000, scoped, tag = 'internal scratch']
  %s0 = inlined_call_operand.vmem [shape: f32[32,128], index: 0, kind: input, shape index: {}]
  %s1 = inlined_call_operand.vmem [shape: f32[1,128], index: 1, kind: input, shape index: {}]
  %s2 = inlined_call_operand.vmem [shape: f32[1,128], index: 2, kind: input, shape index: {}]
  %s3 = inlined_call_operand.vmem [shape: bf16[32,128], index: 3, kind: output, shape index: {}]
  %s4 = sld [smem:[#allocation0]]
  $region22: #{stereonet_forward.23} parent=0
    _
  %s6 = ssub.s32 1, %s4
  %s7 = scalar_select 0, %s6, %s4
  // Predicated region
  $region2: #{stereonet_forward.23} parent=0 // pred_check
    _
  $region3: #{stereonet_forward.23} parent=0 // pred_check_branch
    %9 = sbr.rel (0) target = $region5
  $region4: #{stereonet_forward.23} parent=0 // pred_region
    _
  $region5: #{stereonet_forward.23} parent=0 // pred_fallthru
    _
  // Predicated region
  $region6: #{stereonet_forward.23} parent=0 // pred_check
    _
  $region7: #{stereonet_forward.23} parent=0 // pred_check_branch
    %11 = sbr.rel (0) target = $region9
  $region8: #{stereonet_forward.23} parent=0 // pred_region
    _
  $region9: #{stereonet_forward.23} parent=0 // pred_fallthru
    _
  // Predicated region
  $region10: #{stereonet_forward.23} parent=0 // pred_check
    _
  $region11: #{stereonet_forward.23} parent=0 // pred_check_branch
    %13 = sbr.rel (0) target = $region13
  $region12: #{stereonet_forward.23} parent=0 // pred_region
    _
  $region13: #{stereonet_forward.23} parent=0 // pred_fallthru
    _
  %v14 = vld [vmem:[%s0] sm:$0xff]
  %v15 = vld [vmem:[%s0 + $0x8] sm:$0xff]
  %v16 = vld [vmem:[%s0 + $0x10] sm:$0xff]
  %v17 = vld [vmem:[%s0 + $0x18] sm:$0xff]
  %v18 = vld [vmem:[%s1] sm:$0x1]
  %v20 = vlaneseq
  %v21 = vshrl.u32 %v20, 7
  %v22 = vsub.s32 0, %v21
  %v23 = vrot.slane %v18, %v22
  %v25 = vmul.f32 %v14, %v23
  %v26 = vmul.f32 %v15, %v23
  %v27 = vmul.f32 %v16, %v23
  %v28 = vmul.f32 %v17, %v23
  %v29 = vld [vmem:[%s2] sm:$0x1]
  %v31 = vlaneseq
  %v32 = vshrl.u32 %v31, 7
  %v33 = vsub.s32 0, %v32
  %v34 = vrot.slane %v29, %v33
  %v36 = vadd.f32 %v25, %v34
  %v37 = vadd.f32 %v26, %v34
  %v38 = vadd.f32 %v27, %v34
  %v39 = vadd.f32 %v28, %v34
  %v40 = vmax.f32 %v36, 0.0
  %v41 = vmax.f32 %v37, 0.0
  %v42 = vmax.f32 %v38, 0.0
  %v43 = vmax.f32 %v39, 0.0
  %v44 = vpack.c.bf16 %v41, %v40
  %v45 = vpack.c.bf16 %v43, %v42
  %v48 = vunpack.c.l.b16 %v44
  %v49 = vunpack.c.h.b16 %v44
  %v50 = vunpack.c.l.b16 %v45
  %v51 = vunpack.c.h.b16 %v45
  %v52 = vpack.c.b16 %v48, %v48
  %v53 = vpack.c.b16 %v49, %v49
  %v54 = vpack.c.b16 %v50, %v50
  %v55 = vpack.c.b16 %v51, %v51
  %60 = vst [vmem:[%s3] sm:$0xf] %v52
  %61 = vst [vmem:[%s3 + $0x4] sm:$0xf] %v53
  %62 = vst [vmem:[%s3 + $0x8] sm:$0xf] %v54
  %63 = vst [vmem:[%s3 + $0xc] sm:$0xf] %v55
  // Predicated region
  $region14: #{stereonet_forward.23} parent=0 // pred_check
    _
  $region15: #{stereonet_forward.23} parent=0 // pred_check_branch
    %65 = sbr.rel (0) target = $region17
  $region16: #{stereonet_forward.23} parent=0 // pred_region
    _
  $region17: #{stereonet_forward.23} parent=0 // pred_fallthru
    _
  // Predicated region
  $region18: #{stereonet_forward.23} parent=0 // pred_check
    _
  $region19: #{stereonet_forward.23} parent=0 // pred_check_branch
    %67 = sbr.rel (0) target = $region21
  $region20: #{stereonet_forward.23} parent=0 // pred_region
    _
  $region21: #{stereonet_forward.23} parent=0 // pred_fallthru
    _

// kernel: stereonet_forward.31
$region0: #{stereonet_forward.31}
  #allocation0 [shape = 'u32[]', space=smem, size = 0x4, offset = 0x4, fixed_abs, tag = 'smem constant byte address 0x4 - core index']
  #allocation1 [shape = 'u32[144,128]{1,0:T(1,128)}', space=vmem, size = 0x12000, scoped, tag = 'internal scratch']
  %s0 = inlined_call_operand.vmem [shape: f32[8,128], index: 0, kind: input, shape index: {}]
  %s1 = inlined_call_operand.vmem [shape: f32[1,128], index: 1, kind: input, shape index: {}]
  %s2 = inlined_call_operand.vmem [shape: f32[1,128], index: 2, kind: input, shape index: {}]
  %s3 = inlined_call_operand.vmem [shape: bf16[8,128], index: 3, kind: output, shape index: {}]
  %s4 = sld [smem:[#allocation0]]
  $region22: #{stereonet_forward.31} parent=0
    _
  %s6 = ssub.s32 1, %s4
  %s7 = scalar_select 0, %s6, %s4
  // Predicated region
  $region2: #{stereonet_forward.31} parent=0 // pred_check
    _
  $region3: #{stereonet_forward.31} parent=0 // pred_check_branch
    %9 = sbr.rel (0) target = $region5
  $region4: #{stereonet_forward.31} parent=0 // pred_region
    _
  $region5: #{stereonet_forward.31} parent=0 // pred_fallthru
    _
  // Predicated region
  $region6: #{stereonet_forward.31} parent=0 // pred_check
    _
  $region7: #{stereonet_forward.31} parent=0 // pred_check_branch
    %11 = sbr.rel (0) target = $region9
  $region8: #{stereonet_forward.31} parent=0 // pred_region
    _
  $region9: #{stereonet_forward.31} parent=0 // pred_fallthru
    _
  // Predicated region
  $region10: #{stereonet_forward.31} parent=0 // pred_check
    _
  $region11: #{stereonet_forward.31} parent=0 // pred_check_branch
    %13 = sbr.rel (0) target = $region13
  $region12: #{stereonet_forward.31} parent=0 // pred_region
    _
  $region13: #{stereonet_forward.31} parent=0 // pred_fallthru
    _
  %v14 = vld [vmem:[%s0] sm:$0xff]
  %v15 = vld [vmem:[%s1] sm:$0x1]
  %v17 = vlaneseq
  %v18 = vshrl.u32 %v17, 7
  %v19 = vsub.s32 0, %v18
  %v20 = vrot.slane %v15, %v19
  %v22 = vmul.f32 %v14, %v20
  %v23 = vld [vmem:[%s2] sm:$0x1]
  %v25 = vlaneseq
  %v26 = vshrl.u32 %v25, 7
  %v27 = vsub.s32 0, %v26
  %v28 = vrot.slane %v23, %v27
  %v30 = vadd.f32 %v22, %v28
  %v31 = vmax.f32 %v30, 0.0
  %v32 = vpack.c.bf16 %v31, %v31
  %33 = vst [vmem:[%s3] sm:$0xf] %v32
  // Predicated region
  $region14: #{stereonet_forward.31} parent=0 // pred_check
    _
  $region15: #{stereonet_forward.31} parent=0 // pred_check_branch
    %35 = sbr.rel (0) target = $region17
  $region16: #{stereonet_forward.31} parent=0 // pred_region
    _
  $region17: #{stereonet_forward.31} parent=0 // pred_fallthru
    _
  // Predicated region
  $region18: #{stereonet_forward.31} parent=0 // pred_check
    _
  $region19: #{stereonet_forward.31} parent=0 // pred_check_branch
    %37 = sbr.rel (0) target = $region21
  $region20: #{stereonet_forward.31} parent=0 // pred_region
    _
  $region21: #{stereonet_forward.31} parent=0 // pred_fallthru
    _

// kernel: stereonet_forward.30
$region0: #{stereonet_forward.30}
  #allocation0 [shape = 'u32[]', space=smem, size = 0x4, offset = 0x4, fixed_abs, tag = 'smem constant byte address 0x4 - core index']
  #allocation1 [shape = 'u32[144,128]{1,0:T(1,128)}', space=vmem, size = 0x12000, scoped, tag = 'internal scratch']
  %s0 = inlined_call_operand.vmem [shape: bf16[8,1664], index: 0, kind: input, shape index: {}]
  %s1 = inlined_call_operand.vmem [shape: bf16[1664,128], index: 1, kind: input, shape index: {}]
  %s2 = inlined_call_operand.vmem [shape: f32[8,128], index: 2, kind: output, shape index: {0}]
  %s3 = inlined_call_operand.vmem [shape: f32[8,128], index: 3, kind: output, shape index: {1}]
  %s4 = inlined_call_operand.vmem [shape: f32[8,128], index: 4, kind: output, shape index: {2}]
  %5 = xla_tuple %s2, %s3, %s4
  %s6 = sld [smem:[#allocation0]]
  $region34: #{stereonet_forward.30} parent=0
    _
  %s8 = ssub.s32 1, %s6
  %s9 = scalar_select 0, %s8, %s6
  // Predicated region
  $region2: #{stereonet_forward.30} parent=0 // pred_check
    _
  $region3: #{stereonet_forward.30} parent=0 // pred_check_branch
    %11 = sbr.rel (0) target = $region5
  $region4: #{stereonet_forward.30} parent=0 // pred_region
    _
  $region5: #{stereonet_forward.30} parent=0 // pred_fallthru
    _
  // Predicated region
  $region6: #{stereonet_forward.30} parent=0 // pred_check
    _
  $region7: #{stereonet_forward.30} parent=0 // pred_check_branch
    %13 = sbr.rel (0) target = $region9
  $region8: #{stereonet_forward.30} parent=0 // pred_region
    _
  $region9: #{stereonet_forward.30} parent=0 // pred_fallthru
    _
  %v15 = vld [vmem:[%s0] sm:$0xff]
  %v16 = vld [vmem:[%s0 + $0x8] sm:$0xff]
  %v17 = vld [vmem:[%s0 + $0x10] sm:$0xff]
  %v18 = vld [vmem:[%s0 + $0x18] sm:$0xff]
  %v19 = vld [vmem:[%s0 + $0x20] sm:$0xff]
  %v20 = vld [vmem:[%s0 + $0x28] sm:$0xff]
  %v21 = vld [vmem:[%s0 + $0x30] sm:$0xf]
  %v22 = vld [vmem:[%s1] sm:$0xf]
  %v23 = vld [vmem:[%s1 + $0x4] sm:$0xf]
  %v24 = vld [vmem:[%s1 + $0x8] sm:$0xf]
  %v25 = vld [vmem:[%s1 + $0xc] sm:$0xf]
  %v26 = vld [vmem:[%s1 + $0x10] sm:$0xf]
  %v27 = vld [vmem:[%s1 + $0x14] sm:$0xf]
  %v28 = vld [vmem:[%s1 + $0x18] sm:$0xf]
  %v29 = vld [vmem:[%s1 + $0x1c] sm:$0xf]
  %v30 = vld [vmem:[%s1 + $0x20] sm:$0xf]
  %v31 = vld [vmem:[%s1 + $0x24] sm:$0xf]
  %v32 = vld [vmem:[%s1 + $0x28] sm:$0xf]
  %v33 = vld [vmem:[%s1 + $0x2c] sm:$0xf]
  %v34 = vld [vmem:[%s1 + $0x30] sm:$0xf]
  %v35 = vld [vmem:[%s1 + $0x34] sm:$0xf]
  %v36 = vld [vmem:[%s1 + $0x38] sm:$0xf]
  %v37 = vld [vmem:[%s1 + $0x3c] sm:$0xf]
  %v38 = vld [vmem:[%s1 + $0x40] sm:$0xf]
  %v39 = vld [vmem:[%s1 + $0x44] sm:$0xf]
  %v40 = vld [vmem:[%s1 + $0x48] sm:$0xf]
  %v41 = vld [vmem:[%s1 + $0x4c] sm:$0xf]
  %v42 = vld [vmem:[%s1 + $0x50] sm:$0xf]
  %v43 = vld [vmem:[%s1 + $0x54] sm:$0xf]
  %v44 = vld [vmem:[%s1 + $0x58] sm:$0xf]
  %v45 = vld [vmem:[%s1 + $0x5c] sm:$0xf]
  %v46 = vld [vmem:[%s1 + $0x60] sm:$0xf]
  %v47 = vld [vmem:[%s1 + $0x64] sm:$0xf]
  %v48 = vld [vmem:[%s1 + $0x68] sm:$0xf]
  %v49 = vld [vmem:[%s1 + $0x6c] sm:$0xf]
  %v50 = vld [vmem:[%s1 + $0x70] sm:$0xf]
  %v51 = vld [vmem:[%s1 + $0x74] sm:$0xf]
  %v52 = vld [vmem:[%s1 + $0x78] sm:$0xf]
  %v53 = vld [vmem:[%s1 + $0x7c] sm:$0xf]
  %v54 = vld [vmem:[%s1 + $0x80] sm:$0xf]
  %v55 = vld [vmem:[%s1 + $0x84] sm:$0xf]
  %v56 = vld [vmem:[%s1 + $0x88] sm:$0xf]
  %v57 = vld [vmem:[%s1 + $0x8c] sm:$0xf]
  %v58 = vld [vmem:[%s1 + $0x90] sm:$0xf]
  %v59 = vld [vmem:[%s1 + $0x94] sm:$0xf]
  %v60 = vld [vmem:[%s1 + $0x98] sm:$0xf]
  %v61 = vld [vmem:[%s1 + $0x9c] sm:$0xf]
  %v62 = vld [vmem:[%s1 + $0xa0] sm:$0xf]
  %v63 = vld [vmem:[%s1 + $0xa4] sm:$0xf]
  %v64 = vld [vmem:[%s1 + $0xa8] sm:$0xf]
  %v65 = vld [vmem:[%s1 + $0xac] sm:$0xf]
  %v66 = vld [vmem:[%s1 + $0xb0] sm:$0xf]
  %v67 = vld [vmem:[%s1 + $0xb4] sm:$0xf]
  %v68 = vld [vmem:[%s1 + $0xb8] sm:$0xf]
  %v69 = vld [vmem:[%s1 + $0xbc] sm:$0xf]
  %v70 = vld [vmem:[%s1 + $0xc0] sm:$0xf]
  %v71 = vld [vmem:[%s1 + $0xc4] sm:$0xf]
  %v72 = vld [vmem:[%s1 + $0xc8] sm:$0xf]
  %v73 = vld [vmem:[%s1 + $0xcc] sm:$0xf]
  %v74 = vld [vmem:[%s1 + $0xd0] sm:$0xf]
  %v75 = vld [vmem:[%s1 + $0xd4] sm:$0xf]
  %v76 = vld [vmem:[%s1 + $0xd8] sm:$0xf]
  %v77 = vld [vmem:[%s1 + $0xdc] sm:$0xf]
  %v78 = vld [vmem:[%s1 + $0xe0] sm:$0xf]
  %v79 = vld [vmem:[%s1 + $0xe4] sm:$0xf]
  %v80 = vld [vmem:[%s1 + $0xe8] sm:$0xf]
  %v81 = vld [vmem:[%s1 + $0xec] sm:$0xf]
  %v82 = vld [vmem:[%s1 + $0xf0] sm:$0xf]
  %v83 = vld [vmem:[%s1 + $0xf4] sm:$0xf]
  %v84 = vld [vmem:[%s1 + $0xf8] sm:$0xf]
  %v85 = vld [vmem:[%s1 + $0xfc] sm:$0xf]
  %v86 = vld [vmem:[%s1 + $0x100] sm:$0xf]
  %v87 = vld [vmem:[%s1 + $0x104] sm:$0xf]
  %v88 = vld [vmem:[%s1 + $0x108] sm:$0xf]
  %v89 = vld [vmem:[%s1 + $0x10c] sm:$0xf]
  %v90 = vld [vmem:[%s1 + $0x110] sm:$0xf]
  %v91 = vld [vmem:[%s1 + $0x114] sm:$0xf]
  %v92 = vld [vmem:[%s1 + $0x118] sm:$0xf]
  %v93 = vld [vmem:[%s1 + $0x11c] sm:$0xf]
  %v94 = vld [vmem:[%s1 + $0x120] sm:$0xf]
  %v95 = vld [vmem:[%s1 + $0x124] sm:$0xf]
  %v96 = vld [vmem:[%s1 + $0x128] sm:$0xf]
  %v97 = vld [vmem:[%s1 + $0x12c] sm:$0xf]
  %v98 = vld [vmem:[%s1 + $0x130] sm:$0xf]
  %v99 = vld [vmem:[%s1 + $0x134] sm:$0xf]
  %v100 = vld [vmem:[%s1 + $0x138] sm:$0xf]
  %v101 = vld [vmem:[%s1 + $0x13c] sm:$0xf]
  %v102 = vld [vmem:[%s1 + $0x140] sm:$0xf]
  %v103 = vld [vmem:[%s1 + $0x144] sm:$0xf]
  %v104 = vld [vmem:[%s1 + $0x148] sm:$0xf]
  %v105 = vld [vmem:[%s1 + $0x14c] sm:$0xf]
  %v106 = vld [vmem:[%s1 + $0x150] sm:$0xf]
  %v107 = vld [vmem:[%s1 + $0x154] sm:$0xf]
  %v108 = vld [vmem:[%s1 + $0x158] sm:$0xf]
  %v109 = vld [vmem:[%s1 + $0x15c] sm:$0xf]
  %v110 = vld [vmem:[%s1 + $0x160] sm:$0xf]
  %v111 = vld [vmem:[%s1 + $0x164] sm:$0xf]
  %v112 = vld [vmem:[%s1 + $0x168] sm:$0xf]
  %v113 = vld [vmem:[%s1 + $0x16c] sm:$0xf]
  %v114 = vld [vmem:[%s1 + $0x170] sm:$0xf]
  %v115 = vld [vmem:[%s1 + $0x174] sm:$0xf]
  %v116 = vld [vmem:[%s1 + $0x178] sm:$0xf]
  %v117 = vld [vmem:[%s1 + $0x17c] sm:$0xf]
  %v118 = vld [vmem:[%s1 + $0x180] sm:$0xf]
  %v119 = vld [vmem:[%s1 + $0x184] sm:$0xf]
  %v120 = vld [vmem:[%s1 + $0x188] sm:$0xf]
  %v121 = vld [vmem:[%s1 + $0x18c] sm:$0xf]
  %v122 = vld [vmem:[%s1 + $0x190] sm:$0xf]
  %v123 = vld [vmem:[%s1 + $0x194] sm:$0xf]
  %v124 = vld [vmem:[%s1 + $0x198] sm:$0xf]
  %v125 = vld [vmem:[%s1 + $0x19c] sm:$0xf]
  %v126 = vld [vmem:[%s1 + $0x1a0] sm:$0xf]
  %v127 = vld [vmem:[%s1 + $0x1a4] sm:$0xf]
  %v128 = vld [vmem:[%s1 + $0x1a8] sm:$0xf]
  %v129 = vld [vmem:[%s1 + $0x1ac] sm:$0xf]
  %v130 = vld [vmem:[%s1 + $0x1b0] sm:$0xf]
  %v131 = vld [vmem:[%s1 + $0x1b4] sm:$0xf]
  %v132 = vld [vmem:[%s1 + $0x1b8] sm:$0xf]
  %v133 = vld [vmem:[%s1 + $0x1bc] sm:$0xf]
  %v134 = vld [vmem:[%s1 + $0x1c0] sm:$0xf]
  %v135 = vld [vmem:[%s1 + $0x1c4] sm:$0xf]
  %v136 = vld [vmem:[%s1 + $0x1c8] sm:$0xf]
  %v137 = vld [vmem:[%s1 + $0x1cc] sm:$0xf]
  %v138 = vld [vmem:[%s1 + $0x1d0] sm:$0xf]
  %v139 = vld [vmem:[%s1 + $0x1d4] sm:$0xf]
  %v140 = vld [vmem:[%s1 + $0x1d8] sm:$0xf]
  %v141 = vld [vmem:[%s1 + $0x1dc] sm:$0xf]
  %v142 = vld [vmem:[%s1 + $0x1e0] sm:$0xf]
  %v143 = vld [vmem:[%s1 + $0x1e4] sm:$0xf]
  %v144 = vld [vmem:[%s1 + $0x1e8] sm:$0xf]
  %v145 = vld [vmem:[%s1 + $0x1ec] sm:$0xf]
  %v146 = vld [vmem:[%s1 + $0x1f0] sm:$0xf]
  %v147 = vld [vmem:[%s1 + $0x1f4] sm:$0xf]
  %v148 = vld [vmem:[%s1 + $0x1f8] sm:$0xf]
  %v149 = vld [vmem:[%s1 + $0x1fc] sm:$0xf]
  %v150 = vld [vmem:[%s1 + $0x200] sm:$0xf]
  %v151 = vld [vmem:[%s1 + $0x204] sm:$0xf]
  %v152 = vld [vmem:[%s1 + $0x208] sm:$0xf]
  %v153 = vld [vmem:[%s1 + $0x20c] sm:$0xf]
  %v154 = vld [vmem:[%s1 + $0x210] sm:$0xf]
  %v155 = vld [vmem:[%s1 + $0x214] sm:$0xf]
  %v156 = vld [vmem:[%s1 + $0x218] sm:$0xf]
  %v157 = vld [vmem:[%s1 + $0x21c] sm:$0xf]
  %v158 = vld [vmem:[%s1 + $0x220] sm:$0xf]
  %v159 = vld [vmem:[%s1 + $0x224] sm:$0xf]
  %v160 = vld [vmem:[%s1 + $0x228] sm:$0xf]
  %v161 = vld [vmem:[%s1 + $0x22c] sm:$0xf]
  %v162 = vld [vmem:[%s1 + $0x230] sm:$0xf]
  %v163 = vld [vmem:[%s1 + $0x234] sm:$0xf]
  %v164 = vld [vmem:[%s1 + $0x238] sm:$0xf]
  %v165 = vld [vmem:[%s1 + $0x23c] sm:$0xf]
  %v166 = vld [vmem:[%s1 + $0x240] sm:$0xf]
  %v167 = vld [vmem:[%s1 + $0x244] sm:$0xf]
  %v168 = vld [vmem:[%s1 + $0x248] sm:$0xf]
  %v169 = vld [vmem:[%s1 + $0x24c] sm:$0xf]
  %v170 = vld [vmem:[%s1 + $0x250] sm:$0xf]
  %v171 = vld [vmem:[%s1 + $0x254] sm:$0xf]
  %v172 = vld [vmem:[%s1 + $0x258] sm:$0xf]
  %v173 = vld [vmem:[%s1 + $0x25c] sm:$0xf]
  %v174 = vld [vmem:[%s1 + $0x260] sm:$0xf]
  %v175 = vld [vmem:[%s1 + $0x264] sm:$0xf]
  %v176 = vld [vmem:[%s1 + $0x268] sm:$0xf]
  %v177 = vld [vmem:[%s1 + $0x26c] sm:$0xf]
  %v178 = vld [vmem:[%s1 + $0x270] sm:$0xf]
  %v179 = vld [vmem:[%s1 + $0x274] sm:$0xf]
  %v180 = vld [vmem:[%s1 + $0x278] sm:$0xf]
  %v181 = vld [vmem:[%s1 + $0x27c] sm:$0xf]
  %v182 = vld [vmem:[%s1 + $0x280] sm:$0xf]
  %v183 = vld [vmem:[%s1 + $0x284] sm:$0xf]
  %v184 = vld [vmem:[%s1 + $0x288] sm:$0xf]
  %v185 = vld [vmem:[%s1 + $0x28c] sm:$0xf]
  %v186 = vld [vmem:[%s1 + $0x290] sm:$0xf]
  %v187 = vld [vmem:[%s1 + $0x294] sm:$0xf]
  %v188 = vld [vmem:[%s1 + $0x298] sm:$0xf]
  %v189 = vld [vmem:[%s1 + $0x29c] sm:$0xf]
  %v190 = vld [vmem:[%s1 + $0x2a0] sm:$0xf]
  %v191 = vld [vmem:[%s1 + $0x2a4] sm:$0xf]
  %v192 = vld [vmem:[%s1 + $0x2a8] sm:$0xf]
  %v193 = vld [vmem:[%s1 + $0x2ac] sm:$0xf]
  %v194 = vld [vmem:[%s1 + $0x2b0] sm:$0xf]
  %v195 = vld [vmem:[%s1 + $0x2b4] sm:$0xf]
  %v196 = vld [vmem:[%s1 + $0x2b8] sm:$0xf]
  %v197 = vld [vmem:[%s1 + $0x2bc] sm:$0xf]
  %v198 = vld [vmem:[%s1 + $0x2c0] sm:$0xf]
  %v199 = vld [vmem:[%s1 + $0x2c4] sm:$0xf]
  %v200 = vld [vmem:[%s1 + $0x2c8] sm:$0xf]
  %v201 = vld [vmem:[%s1 + $0x2cc] sm:$0xf]
  %v202 = vld [vmem:[%s1 + $0x2d0] sm:$0xf]
  %v203 = vld [vmem:[%s1 + $0x2d4] sm:$0xf]
  %v204 = vld [vmem:[%s1 + $0x2d8] sm:$0xf]
  %v205 = vld [vmem:[%s1 + $0x2dc] sm:$0xf]
  %v206 = vld [vmem:[%s1 + $0x2e0] sm:$0xf]
  %v207 = vld [vmem:[%s1 + $0x2e4] sm:$0xf]
  %v208 = vld [vmem:[%s1 + $0x2e8] sm:$0xf]
  %v209 = vld [vmem:[%s1 + $0x2ec] sm:$0xf]
  %v210 = vld [vmem:[%s1 + $0x2f0] sm:$0xf]
  %v211 = vld [vmem:[%s1 + $0x2f4] sm:$0xf]
  %v212 = vld [vmem:[%s1 + $0x2f8] sm:$0xf]
  %v213 = vld [vmem:[%s1 + $0x2fc] sm:$0xf]
  %v214 = vld [vmem:[%s1 + $0x300] sm:$0xf]
  %v215 = vld [vmem:[%s1 + $0x304] sm:$0xf]
  %v216 = vld [vmem:[%s1 + $0x308] sm:$0xf]
  %v217 = vld [vmem:[%s1 + $0x30c] sm:$0xf]
  %v218 = vld [vmem:[%s1 + $0x310] sm:$0xf]
  %v219 = vld [vmem:[%s1 + $0x314] sm:$0xf]
  %v220 = vld [vmem:[%s1 + $0x318] sm:$0xf]
  %v221 = vld [vmem:[%s1 + $0x31c] sm:$0xf]
  %v222 = vld [vmem:[%s1 + $0x320] sm:$0xf]
  %v223 = vld [vmem:[%s1 + $0x324] sm:$0xf]
  %v224 = vld [vmem:[%s1 + $0x328] sm:$0xf]
  %v225 = vld [vmem:[%s1 + $0x32c] sm:$0xf]
  %v226 = vld [vmem:[%s1 + $0x330] sm:$0xf]
  %v227 = vld [vmem:[%s1 + $0x334] sm:$0xf]
  %v228 = vld [vmem:[%s1 + $0x338] sm:$0xf]
  %v229 = vld [vmem:[%s1 + $0x33c] sm:$0xf]
  %v237 = vunpack.c.l.b16 %v15
  %v238 = vunpack.c.h.b16 %v15
  %v239 = vunpack.c.l.b16 %v16
  %v240 = vunpack.c.h.b16 %v16
  %v241 = vunpack.c.l.b16 %v17
  %v242 = vunpack.c.h.b16 %v17
  %v243 = vunpack.c.l.b16 %v18
  %v244 = vunpack.c.h.b16 %v18
  %v245 = vunpack.c.l.b16 %v19
  %v246 = vunpack.c.h.b16 %v19
  %v247 = vunpack.c.l.b16 %v20
  %v248 = vunpack.c.h.b16 %v20
  %v249 = vunpack.c.l.b16 %v21
  %v250 = vpack.c.b16 %v237, %v237
  %v251 = vpack.c.b16 %v238, %v238
  %v252 = vpack.c.b16 %v239, %v239
  %v253 = vpack.c.b16 %v240, %v240
  %v254 = vpack.c.b16 %v241, %v241
  %v255 = vpack.c.b16 %v242, %v242
  %v256 = vpack.c.b16 %v243, %v243
  %v257 = vpack.c.b16 %v244, %v244
  %v258 = vpack.c.b16 %v245, %v245
  %v259 = vpack.c.b16 %v246, %v246
  %v260 = vpack.c.b16 %v247, %v247
  %v261 = vpack.c.b16 %v248, %v248
  %v262 = vpack.c.b16 %v249, %v249
  %v484 = vunpack.c.l.b16 %v22
  %v485 = vunpack.c.l.b16 %v23
  %v486 = vunpack.c.l.b16 %v24
  %v487 = vunpack.c.l.b16 %v25
  %v488 = vunpack.c.l.b16 %v26
  %v489 = vunpack.c.l.b16 %v27
  %v490 = vunpack.c.l.b16 %v28
  %v491 = vunpack.c.l.b16 %v29
  %v492 = vunpack.c.l.b16 %v30
  %v493 = vunpack.c.l.b16 %v31
  %v494 = vunpack.c.l.b16 %v32
  %v495 = vunpack.c.l.b16 %v33
  %v496 = vunpack.c.l.b16 %v34
  %v497 = vunpack.c.l.b16 %v35
  %v498 = vunpack.c.l.b16 %v36
  %v499 = vunpack.c.l.b16 %v37
  %v500 = vunpack.c.l.b16 %v38
  %v501 = vunpack.c.l.b16 %v39
  %v502 = vunpack.c.l.b16 %v40
  %v503 = vunpack.c.l.b16 %v41
  %v504 = vunpack.c.l.b16 %v42
  %v505 = vunpack.c.l.b16 %v43
  %v506 = vunpack.c.l.b16 %v44
  %v507 = vunpack.c.l.b16 %v45
  %v508 = vunpack.c.l.b16 %v46
  %v509 = vunpack.c.l.b16 %v47
  %v510 = vunpack.c.l.b16 %v48
  %v511 = vunpack.c.l.b16 %v49
  %v512 = vunpack.c.l.b16 %v50
  %v513 = vunpack.c.l.b16 %v51
  %v514 = vunpack.c.l.b16 %v52
  %v515 = vunpack.c.l.b16 %v53
  %v516 = vunpack.c.l.b16 %v54
  %v517 = vunpack.c.l.b16 %v55
  %v518 = vunpack.c.l.b16 %v56
  %v519 = vunpack.c.l.b16 %v57
  %v520 = vunpack.c.l.b16 %v58
  %v521 = vunpack.c.l.b16 %v59
  %v522 = vunpack.c.l.b16 %v60
  %v523 = vunpack.c.l.b16 %v61
  %v524 = vunpack.c.l.b16 %v62
  %v525 = vunpack.c.l.b16 %v63
  %v526 = vunpack.c.l.b16 %v64
  %v527 = vunpack.c.l.b16 %v65
  %v528 = vunpack.c.l.b16 %v66
  %v529 = vunpack.c.l.b16 %v67
  %v530 = vunpack.c.l.b16 %v68
  %v531 = vunpack.c.l.b16 %v69
  %v532 = vunpack.c.l.b16 %v70
  %v533 = vunpack.c.l.b16 %v71
  %v534 = vunpack.c.l.b16 %v72
  %v535 = vunpack.c.l.b16 %v73
  %v536 = vunpack.c.l.b16 %v74
  %v537 = vunpack.c.l.b16 %v75
  %v538 = vunpack.c.l.b16 %v76
  %v539 = vunpack.c.l.b16 %v77
  %v540 = vunpack.c.l.b16 %v78
  %v541 = vunpack.c.l.b16 %v79
  %v542 = vunpack.c.l.b16 %v80
  %v543 = vunpack.c.l.b16 %v81
  %v544 = vunpack.c.l.b16 %v82
  %v545 = vunpack.c.l.b16 %v83
  %v546 = vunpack.c.l.b16 %v84
  %v547 = vunpack.c.l.b16 %v85
  %v548 = vunpack.c.l.b16 %v86
  %v549 = vunpack.c.l.b16 %v87
  %v550 = vunpack.c.l.b16 %v88
  %v551 = vunpack.c.l.b16 %v89
  %v552 = vunpack.c.l.b16 %v90
  %v553 = vunpack.c.l.b16 %v91
  %v554 = vunpack.c.l.b16 %v92
  %v555 = vunpack.c.l.b16 %v93
  %v556 = vunpack.c.l.b16 %v94
  %v557 = vunpack.c.l.b16 %v95
  %v558 = vunpack.c.l.b16 %v96
  %v559 = vunpack.c.l.b16 %v97
  %v560 = vunpack.c.l.b16 %v98
  %v561 = vunpack.c.l.b16 %v99
  %v562 = vunpack.c.l.b16 %v100
  %v563 = vunpack.c.l.b16 %v101
  %v564 = vunpack.c.l.b16 %v102
  %v565 = vunpack.c.l.b16 %v103
  %v566 = vunpack.c.l.b16 %v104
  %v567 = vunpack.c.l.b16 %v105
  %v568 = vunpack.c.l.b16 %v106
  %v569 = vunpack.c.l.b16 %v107
  %v570 = vunpack.c.l.b16 %v108
  %v571 = vunpack.c.l.b16 %v109
  %v572 = vunpack.c.l.b16 %v110
  %v573 = vunpack.c.l.b16 %v111
  %v574 = vunpack.c.l.b16 %v112
  %v575 = vunpack.c.l.b16 %v113
  %v576 = vunpack.c.l.b16 %v114
  %v577 = vunpack.c.l.b16 %v115
  %v578 = vunpack.c.l.b16 %v116
  %v579 = vunpack.c.l.b16 %v117
  %v580 = vunpack.c.l.b16 %v118
  %v581 = vunpack.c.l.b16 %v119
  %v582 = vunpack.c.l.b16 %v120
  %v583 = vunpack.c.l.b16 %v121
  %v584 = vunpack.c.l.b16 %v122
  %v585 = vunpack.c.l.b16 %v123
  %v586 = vunpack.c.l.b16 %v124
  %v587 = vunpack.c.l.b16 %v125
  %v588 = vunpack.c.l.b16 %v126
  %v589 = vunpack.c.l.b16 %v127
  %v590 = vunpack.c.l.b16 %v128
  %v591 = vunpack.c.l.b16 %v129
  %v592 = vunpack.c.l.b16 %v130
  %v593 = vunpack.c.l.b16 %v131
  %v594 = vunpack.c.l.b16 %v132
  %v595 = vunpack.c.l.b16 %v133
  %v596 = vunpack.c.l.b16 %v134
  %v597 = vunpack.c.l.b16 %v135
  %v598 = vunpack.c.l.b16 %v136
  %v599 = vunpack.c.l.b16 %v137
  %v600 = vunpack.c.l.b16 %v138
  %v601 = vunpack.c.l.b16 %v139
  %v602 = vunpack.c.l.b16 %v140
  %v603 = vunpack.c.l.b16 %v141
  %v604 = vunpack.c.l.b16 %v142
  %v605 = vunpack.c.l.b16 %v143
  %v606 = vunpack.c.l.b16 %v144
  %v607 = vunpack.c.l.b16 %v145
  %v608 = vunpack.c.l.b16 %v146
  %v609 = vunpack.c.l.b16 %v147
  %v610 = vunpack.c.l.b16 %v148
  %v611 = vunpack.c.l.b16 %v149
  %v612 = vunpack.c.l.b16 %v150
  %v613 = vunpack.c.l.b16 %v151
  %v614 = vunpack.c.l.b16 %v152
  %v615 = vunpack.c.l.b16 %v153
  %v616 = vunpack.c.l.b16 %v154
  %v617 = vunpack.c.l.b16 %v155
  %v618 = vunpack.c.l.b16 %v156
  %v619 = vunpack.c.l.b16 %v157
  %v620 = vunpack.c.l.b16 %v158
  %v621 = vunpack.c.l.b16 %v159
  %v622 = vunpack.c.l.b16 %v160
  %v623 = vunpack.c.l.b16 %v161
  %v624 = vunpack.c.l.b16 %v162
  %v625 = vunpack.c.l.b16 %v163
  %v626 = vunpack.c.l.b16 %v164
  %v627 = vunpack.c.l.b16 %v165
  %v628 = vunpack.c.l.b16 %v166
  %v629 = vunpack.c.l.b16 %v167
  %v630 = vunpack.c.l.b16 %v168
  %v631 = vunpack.c.l.b16 %v169
  %v632 = vunpack.c.l.b16 %v170
  %v633 = vunpack.c.l.b16 %v171
  %v634 = vunpack.c.l.b16 %v172
  %v635 = vunpack.c.l.b16 %v173
  %v636 = vunpack.c.l.b16 %v174
  %v637 = vunpack.c.l.b16 %v175
  %v638 = vunpack.c.l.b16 %v176
  %v639 = vunpack.c.l.b16 %v177
  %v640 = vunpack.c.l.b16 %v178
  %v641 = vunpack.c.l.b16 %v179
  %v642 = vunpack.c.l.b16 %v180
  %v643 = vunpack.c.l.b16 %v181
  %v644 = vunpack.c.l.b16 %v182
  %v645 = vunpack.c.l.b16 %v183
  %v646 = vunpack.c.l.b16 %v184
  %v647 = vunpack.c.l.b16 %v185
  %v648 = vunpack.c.l.b16 %v186
  %v649 = vunpack.c.l.b16 %v187
  %v650 = vunpack.c.l.b16 %v188
  %v651 = vunpack.c.l.b16 %v189
  %v652 = vunpack.c.l.b16 %v190
  %v653 = vunpack.c.l.b16 %v191
  %v654 = vunpack.c.l.b16 %v192
  %v655 = vunpack.c.l.b16 %v193
  %v656 = vunpack.c.l.b16 %v194
  %v657 = vunpack.c.l.b16 %v195
  %v658 = vunpack.c.l.b16 %v196
  %v659 = vunpack.c.l.b16 %v197
  %v660 = vunpack.c.l.b16 %v198
  %v661 = vunpack.c.l.b16 %v199
  %v662 = vunpack.c.l.b16 %v200
  %v663 = vunpack.c.l.b16 %v201
  %v664 = vunpack.c.l.b16 %v202
  %v665 = vunpack.c.l.b16 %v203
  %v666 = vunpack.c.l.b16 %v204
  %v667 = vunpack.c.l.b16 %v205
  %v668 = vunpack.c.l.b16 %v206
  %v669 = vunpack.c.l.b16 %v207
  %v670 = vunpack.c.l.b16 %v208
  %v671 = vunpack.c.l.b16 %v209
  %v672 = vunpack.c.l.b16 %v210
  %v673 = vunpack.c.l.b16 %v211
  %v674 = vunpack.c.l.b16 %v212
  %v675 = vunpack.c.l.b16 %v213
  %v676 = vunpack.c.l.b16 %v214
  %v677 = vunpack.c.l.b16 %v215
  %v678 = vunpack.c.l.b16 %v216
  %v679 = vunpack.c.l.b16 %v217
  %v680 = vunpack.c.l.b16 %v218
  %v681 = vunpack.c.l.b16 %v219
  %v682 = vunpack.c.l.b16 %v220
  %v683 = vunpack.c.l.b16 %v221
  %v684 = vunpack.c.l.b16 %v222
  %v685 = vunpack.c.l.b16 %v223
  %v686 = vunpack.c.l.b16 %v224
  %v687 = vunpack.c.l.b16 %v225
  %v688 = vunpack.c.l.b16 %v226
  %v689 = vunpack.c.l.b16 %v227
  %v690 = vunpack.c.l.b16 %v228
  %v691 = vunpack.c.l.b16 %v229
  %v692 = vpack.c.b16 %v485, %v484
  %v693 = vpack.c.b16 %v487, %v486
  %v694 = vpack.c.b16 %v489, %v488
  %v695 = vpack.c.b16 %v491, %v490
  %v696 = vpack.c.b16 %v493, %v492
  %v697 = vpack.c.b16 %v495, %v494
  %v698 = vpack.c.b16 %v497, %v496
  %v699 = vpack.c.b16 %v499, %v498
  %v700 = vpack.c.b16 %v501, %v500
  %v701 = vpack.c.b16 %v503, %v502
  %v702 = vpack.c.b16 %v505, %v504
  %v703 = vpack.c.b16 %v507, %v506
  %v704 = vpack.c.b16 %v509, %v508
  %v705 = vpack.c.b16 %v511, %v510
  %v706 = vpack.c.b16 %v513, %v512
  %v707 = vpack.c.b16 %v515, %v514
  %v708 = vpack.c.b16 %v517, %v516
  %v709 = vpack.c.b16 %v519, %v518
  %v710 = vpack.c.b16 %v521, %v520
  %v711 = vpack.c.b16 %v523, %v522
  %v712 = vpack.c.b16 %v525, %v524
  %v713 = vpack.c.b16 %v527, %v526
  %v714 = vpack.c.b16 %v529, %v528
  %v715 = vpack.c.b16 %v531, %v530
  %v716 = vpack.c.b16 %v533, %v532
  %v717 = vpack.c.b16 %v535, %v534
  %v718 = vpack.c.b16 %v537, %v536
  %v719 = vpack.c.b16 %v539, %v538
  %v720 = vpack.c.b16 %v541, %v540
  %v721 = vpack.c.b16 %v543, %v542
  %v722 = vpack.c.b16 %v545, %v544
  %v723 = vpack.c.b16 %v547, %v546
  %v724 = vpack.c.b16 %v549, %v548
  %v725 = vpack.c.b16 %v551, %v550
  %v726 = vpack.c.b16 %v553, %v552
  %v727 = vpack.c.b16 %v555, %v554
  %v728 = vpack.c.b16 %v557, %v556
  %v729 = vpack.c.b16 %v559, %v558
  %v730 = vpack.c.b16 %v561, %v560
  %v731 = vpack.c.b16 %v563, %v562
  %v732 = vpack.c.b16 %v565, %v564
  %v733 = vpack.c.b16 %v567, %v566
  %v734 = vpack.c.b16 %v569, %v568
  %v735 = vpack.c.b16 %v571, %v570
  %v736 = vpack.c.b16 %v573, %v572
  %v737 = vpack.c.b16 %v575, %v574
  %v738 = vpack.c.b16 %v577, %v576
  %v739 = vpack.c.b16 %v579, %v578
  %v740 = vpack.c.b16 %v581, %v580
  %v741 = vpack.c.b16 %v583, %v582
  %v742 = vpack.c.b16 %v585, %v584
  %v743 = vpack.c.b16 %v587, %v586
  %v744 = vpack.c.b16 %v589, %v588
  %v745 = vpack.c.b16 %v591, %v590
  %v746 = vpack.c.b16 %v593, %v592
  %v747 = vpack.c.b16 %v595, %v594
  %v748 = vpack.c.b16 %v597, %v596
  %v749 = vpack.c.b16 %v599, %v598
  %v750 = vpack.c.b16 %v601, %v600
  %v751 = vpack.c.b16 %v603, %v602
  %v752 = vpack.c.b16 %v605, %v604
  %v753 = vpack.c.b16 %v607, %v606
  %v754 = vpack.c.b16 %v609, %v608
  %v755 = vpack.c.b16 %v611, %v610
  %v756 = vpack.c.b16 %v613, %v612
  %v757 = vpack.c.b16 %v615, %v614
  %v758 = vpack.c.b16 %v617, %v616
  %v759 = vpack.c.b16 %v619, %v618
  %v760 = vpack.c.b16 %v621, %v620
  %v761 = vpack.c.b16 %v623, %v622
  %v762 = vpack.c.b16 %v625, %v624
  %v763 = vpack.c.b16 %v627, %v626
  %v764 = vpack.c.b16 %v629, %v628
  %v765 = vpack.c.b16 %v631, %v630
  %v766 = vpack.c.b16 %v633, %v632
  %v767 = vpack.c.b16 %v635, %v634
  %v768 = vpack.c.b16 %v637, %v636
  %v769 = vpack.c.b16 %v639, %v638
  %v770 = vpack.c.b16 %v641, %v640
  %v771 = vpack.c.b16 %v643, %v642
  %v772 = vpack.c.b16 %v645, %v644
  %v773 = vpack.c.b16 %v647, %v646
  %v774 = vpack.c.b16 %v649, %v648
  %v775 = vpack.c.b16 %v651, %v650
  %v776 = vpack.c.b16 %v653, %v652
  %v777 = vpack.c.b16 %v655, %v654
  %v778 = vpack.c.b16 %v657, %v656
  %v779 = vpack.c.b16 %v659, %v658
  %v780 = vpack.c.b16 %v661, %v660
  %v781 = vpack.c.b16 %v663, %v662
  %v782 = vpack.c.b16 %v665, %v664
  %v783 = vpack.c.b16 %v667, %v666
  %v784 = vpack.c.b16 %v669, %v668
  %v785 = vpack.c.b16 %v671, %v670
  %v786 = vpack.c.b16 %v673, %v672
  %v787 = vpack.c.b16 %v675, %v674
  %v788 = vpack.c.b16 %v677, %v676
  %v789 = vpack.c.b16 %v679, %v678
  %v790 = vpack.c.b16 %v681, %v680
  %v791 = vpack.c.b16 %v683, %v682
  %v792 = vpack.c.b16 %v685, %v684
  %v793 = vpack.c.b16 %v687, %v686
  %v794 = vpack.c.b16 %v689, %v688
  %v795 = vpack.c.b16 %v691, %v690
  %900 = vmatprep.subr.bf16.mxu0 0
  %901 = vmatpush1.bf16.msra.mxu0 %v692
  %902 = vmatprep.subr.bf16.mxu0 0
  %903 = vmatpush1.bf16.msra.mxu0 %v693
  %904 = vmatprep.subr.bf16.mxu0 0
  %905 = vmatpush1.bf16.msra.mxu0 %v694
  %906 = vmatprep.subr.bf16.mxu0 0
  %907 = vmatpush1.bf16.msra.mxu0 %v695
  %908 = vmatprep.subr.bf16.mxu0 0
  %909 = vmatpush1.bf16.msra.mxu0 %v696
  %910 = vmatprep.subr.bf16.mxu0 0
  %911 = vmatpush1.bf16.msra.mxu0 %v697
  %912 = vmatprep.subr.bf16.mxu0 0
  %913 = vmatpush1.bf16.msra.mxu0 %v698
  %914 = vmatprep.subr.bf16.mxu0 0
  %915 = vmatpush1.bf16.msra.mxu0 %v699
  %916 = vmatprep.subr.bf16.mxu0 0
  %917 = vmatpush1.bf16.msra.mxu0 %v700
  %918 = vmatprep.subr.bf16.mxu0 0
  %919 = vmatpush1.bf16.msra.mxu0 %v701
  %920 = vmatprep.subr.bf16.mxu0 0
  %921 = vmatpush1.bf16.msra.mxu0 %v702
  %922 = vmatprep.subr.bf16.mxu0 0
  %923 = vmatpush1.bf16.msra.mxu0 %v703
  %924 = vmatprep.subr.bf16.mxu0 0
  %925 = vmatpush1.bf16.msra.mxu0 %v704
  %926 = vmatprep.subr.bf16.mxu0 0
  %927 = vmatpush1.bf16.msra.mxu0 %v705
  %928 = vmatprep.subr.bf16.mxu0 0
  %929 = vmatpush1.bf16.msra.mxu0 %v706
  %930 = vmatprep.subr.bf16.mxu0 0
  %931 = vmatpush1.bf16.msra.mxu0 %v707
  %932 = vmatprep.mubr.bf16.mxu0 %v251
  %933 = vmatmul.mubr.bf16.gmra.mrb[0].mxu0 %v250
  %v934 = vpop.f32.mrb[0].mxu0
  %v935 = vadd.f32 0.0, %v934
  %v936 = vpop.f32.mrb[0].mxu0
  %v937 = vpop.f32.mrb[0].mxu0
  %v938 = vpop.f32.mrb[0].mxu0
  %939 = vdwg.mxu0
  %940 = vmatprep.subr.bf16.mxu0 0
  %941 = vmatpush1.bf16.msra.mxu0 %v708
  %942 = vmatprep.subr.bf16.mxu0 0
  %943 = vmatpush1.bf16.msra.mxu0 %v709
  %944 = vmatprep.subr.bf16.mxu0 0
  %945 = vmatpush1.bf16.msra.mxu0 %v710
  %946 = vmatprep.subr.bf16.mxu0 0
  %947 = vmatpush1.bf16.msra.mxu0 %v711
  %948 = vmatprep.subr.bf16.mxu0 0
  %949 = vmatpush1.bf16.msra.mxu0 %v712
  %950 = vmatprep.subr.bf16.mxu0 0
  %951 = vmatpush1.bf16.msra.mxu0 %v713
  %952 = vmatprep.subr.bf16.mxu0 0
  %953 = vmatpush1.bf16.msra.mxu0 %v714
  %954 = vmatprep.subr.bf16.mxu0 0
  %955 = vmatpush1.bf16.msra.mxu0 %v715
  %956 = vmatprep.subr.bf16.mxu0 0
  %957 = vmatpush1.bf16.msra.mxu0 %v716
  %958 = vmatprep.subr.bf16.mxu0 0
  %959 = vmatpush1.bf16.msra.mxu0 %v717
  %960 = vmatprep.subr.bf16.mxu0 0
  %961 = vmatpush1.bf16.msra.mxu0 %v718
  %962 = vmatprep.subr.bf16.mxu0 0
  %963 = vmatpush1.bf16.msra.mxu0 %v719
  %964 = vmatprep.subr.bf16.mxu0 0
  %965 = vmatpush1.bf16.msra.mxu0 %v720
  %966 = vmatprep.subr.bf16.mxu0 0
  %967 = vmatpush1.bf16.msra.mxu0 %v721
  %968 = vmatprep.subr.bf16.mxu0 0
  %969 = vmatpush1.bf16.msra.mxu0 %v722
  %970 = vmatprep.subr.bf16.mxu0 0
  %971 = vmatpush1.bf16.msra.mxu0 %v723
  %972 = vmatprep.mubr.bf16.mxu0 %v253
  %973 = vmatmul.mubr.bf16.gmra.mrb[0].mxu0 %v252
  %v974 = vpop.f32.mrb[0].mxu0
  %v975 = vadd.f32 %v935, %v974
  %v976 = vpop.f32.mrb[0].mxu0
  %v977 = vpop.f32.mrb[0].mxu0
  %v978 = vpop.f32.mrb[0].mxu0
  %979 = vdwg.mxu0
  %980 = vmatprep.subr.bf16.mxu0 0
  %981 = vmatpush1.bf16.msra.mxu0 %v724
  %982 = vmatprep.subr.bf16.mxu0 0
  %983 = vmatpush1.bf16.msra.mxu0 %v725
  %984 = vmatprep.subr.bf16.mxu0 0
  %985 = vmatpush1.bf16.msra.mxu0 %v726
  %986 = vmatprep.subr.bf16.mxu0 0
  %987 = vmatpush1.bf16.msra.mxu0 %v727
  %988 = vmatprep.subr.bf16.mxu0 0
  %989 = vmatpush1.bf16.msra.mxu0 %v728
  %990 = vmatprep.subr.bf16.mxu0 0
  %991 = vmatpush1.bf16.msra.mxu0 %v729
  %992 = vmatprep.subr.bf16.mxu0 0
  %993 = vmatpush1.bf16.msra.mxu0 %v730
  %994 = vmatprep.subr.bf16.mxu0 0
  %995 = vmatpush1.bf16.msra.mxu0 %v731
  %996 = vmatprep.subr.bf16.mxu0 0
  %997 = vmatpush1.bf16.msra.mxu0 %v732
  %998 = vmatprep.subr.bf16.mxu0 0
  %999 = vmatpush1.bf16.msra.mxu0 %v733
  %1000 = vmatprep.subr.bf16.mxu0 0
  %1001 = vmatpush1.bf16.msra.mxu0 %v734
  %1002 = vmatprep.subr.bf16.mxu0 0
  %1003 = vmatpush1.bf16.msra.mxu0 %v735
  %1004 = vmatprep.subr.bf16.mxu0 0
  %1005 = vmatpush1.bf16.msra.mxu0 %v736
  %1006 = vmatprep.subr.bf16.mxu0 0
  %1007 = vmatpush1.bf16.msra.mxu0 %v737
  %1008 = vmatprep.subr.bf16.mxu0 0
  %1009 = vmatpush1.bf16.msra.mxu0 %v738
  %1010 = vmatprep.subr.bf16.mxu0 0
  %1011 = vmatpush1.bf16.msra.mxu0 %v739
  %1012 = vmatprep.mubr.bf16.mxu0 %v255
  %1013 = vmatmul.mubr.bf16.gmra.mrb[0].mxu0 %v254
  %v1014 = vpop.f32.mrb[0].mxu0
  %v1015 = vadd.f32 %v975, %v1014
  %v1016 = vpop.f32.mrb[0].mxu0
  %v1017 = vpop.f32.mrb[0].mxu0
  %v1018 = vpop.f32.mrb[0].mxu0
  %1019 = vdwg.mxu0
  %1020 = vmatprep.subr.bf16.mxu0 0
  %1021 = vmatpush1.bf16.msra.mxu0 %v740
  %1022 = vmatprep.subr.bf16.mxu0 0
  %1023 = vmatpush1.bf16.msra.mxu0 %v741
  %1024 = vmatprep.subr.bf16.mxu0 0
  %1025 = vmatpush1.bf16.msra.mxu0 %v742
  %1026 = vmatprep.subr.bf16.mxu0 0
  %1027 = vmatpush1.bf16.msra.mxu0 %v743
  %1028 = vmatprep.subr.bf16.mxu0 0
  %1029 = vmatpush1.bf16.msra.mxu0 %v744
  %1030 = vmatprep.subr.bf16.mxu0 0
  %1031 = vmatpush1.bf16.msra.mxu0 %v745
  %1032 = vmatprep.subr.bf16.mxu0 0
  %1033 = vmatpush1.bf16.msra.mxu0 %v746
  %1034 = vmatprep.subr.bf16.mxu0 0
  %1035 = vmatpush1.bf16.msra.mxu0 %v747
  %1036 = vmatprep.subr.bf16.mxu0 0
  %1037 = vmatpush1.bf16.msra.mxu0 %v748
  %1038 = vmatprep.subr.bf16.mxu0 0
  %1039 = vmatpush1.bf16.msra.mxu0 %v749
  %1040 = vmatprep.subr.bf16.mxu0 0
  %1041 = vmatpush1.bf16.msra.mxu0 %v750
  %1042 = vmatprep.subr.bf16.mxu0 0
  %1043 = vmatpush1.bf16.msra.mxu0 %v751
  %1044 = vmatprep.subr.bf16.mxu0 0
  %1045 = vmatpush1.bf16.msra.mxu0 %v752
  %1046 = vmatprep.subr.bf16.mxu0 0
  %1047 = vmatpush1.bf16.msra.mxu0 %v753
  %1048 = vmatprep.subr.bf16.mxu0 0
  %1049 = vmatpush1.bf16.msra.mxu0 %v754
  %1050 = vmatprep.subr.bf16.mxu0 0
  %1051 = vmatpush1.bf16.msra.mxu0 %v755
  %1052 = vmatprep.mubr.bf16.mxu0 %v257
  %1053 = vmatmul.mubr.bf16.gmra.mrb[0].mxu0 %v256
  %v1054 = vpop.f32.mrb[0].mxu0
  %v1055 = vadd.f32 %v1015, %v1054
  %v1056 = vpop.f32.mrb[0].mxu0
  %v1057 = vpop.f32.mrb[0].mxu0
  %v1058 = vpop.f32.mrb[0].mxu0
  %1059 = vdwg.mxu0
  %1060 = vmatprep.subr.bf16.mxu0 0
  %1061 = vmatpush1.bf16.msra.mxu0 %v756
  %1062 = vmatprep.subr.bf16.mxu0 0
  %1063 = vmatpush1.bf16.msra.mxu0 %v757
  %1064 = vmatprep.subr.bf16.mxu0 0
  %1065 = vmatpush1.bf16.msra.mxu0 %v758
  %1066 = vmatprep.subr.bf16.mxu0 0
  %1067 = vmatpush1.bf16.msra.mxu0 %v759
  %1068 = vmatprep.subr.bf16.mxu0 0
  %1069 = vmatpush1.bf16.msra.mxu0 %v760
  %1070 = vmatprep.subr.bf16.mxu0 0
  %1071 = vmatpush1.bf16.msra.mxu0 %v761
  %1072 = vmatprep.subr.bf16.mxu0 0
  %1073 = vmatpush1.bf16.msra.mxu0 %v762
  %1074 = vmatprep.subr.bf16.mxu0 0
  %1075 = vmatpush1.bf16.msra.mxu0 %v763
  %1076 = vmatprep.subr.bf16.mxu0 0
  %1077 = vmatpush1.bf16.msra.mxu0 %v764
  %1078 = vmatprep.subr.bf16.mxu0 0
  %1079 = vmatpush1.bf16.msra.mxu0 %v765
  %1080 = vmatprep.subr.bf16.mxu0 0
  %1081 = vmatpush1.bf16.msra.mxu0 %v766
  %1082 = vmatprep.subr.bf16.mxu0 0
  %1083 = vmatpush1.bf16.msra.mxu0 %v767
  %1084 = vmatprep.subr.bf16.mxu0 0
  %1085 = vmatpush1.bf16.msra.mxu0 %v768
  %1086 = vmatprep.subr.bf16.mxu0 0
  %1087 = vmatpush1.bf16.msra.mxu0 %v769
  %1088 = vmatprep.subr.bf16.mxu0 0
  %1089 = vmatpush1.bf16.msra.mxu0 %v770
  %1090 = vmatprep.subr.bf16.mxu0 0
  %1091 = vmatpush1.bf16.msra.mxu0 %v771
  %1092 = vmatprep.mubr.bf16.mxu0 %v259
  %1093 = vmatmul.mubr.bf16.gmra.mrb[0].mxu0 %v258
  %v1094 = vpop.f32.mrb[0].mxu0
  %v1095 = vadd.f32 %v1055, %v1094
  %v1096 = vpop.f32.mrb[0].mxu0
  %v1097 = vpop.f32.mrb[0].mxu0
  %v1098 = vpop.f32.mrb[0].mxu0
  %1099 = vdwg.mxu0
  %1100 = vmatprep.subr.bf16.mxu0 0
  %1101 = vmatpush1.bf16.msra.mxu0 %v772
  %1102 = vmatprep.subr.bf16.mxu0 0
  %1103 = vmatpush1.bf16.msra.mxu0 %v773
  %1104 = vmatprep.subr.bf16.mxu0 0
  %1105 = vmatpush1.bf16.msra.mxu0 %v774
  %1106 = vmatprep.subr.bf16.mxu0 0
  %1107 = vmatpush1.bf16.msra.mxu0 %v775
  %1108 = vmatprep.subr.bf16.mxu0 0
  %1109 = vmatpush1.bf16.msra.mxu0 %v776
  %1110 = vmatprep.subr.bf16.mxu0 0
  %1111 = vmatpush1.bf16.msra.mxu0 %v777
  %1112 = vmatprep.subr.bf16.mxu0 0
  %1113 = vmatpush1.bf16.msra.mxu0 %v778
  %1114 = vmatprep.subr.bf16.mxu0 0
  %1115 = vmatpush1.bf16.msra.mxu0 %v779
  %1116 = vmatprep.subr.bf16.mxu0 0
  %1117 = vmatpush1.bf16.msra.mxu0 %v780
  %1118 = vmatprep.subr.bf16.mxu0 0
  %1119 = vmatpush1.bf16.msra.mxu0 %v781
  %1120 = vmatprep.subr.bf16.mxu0 0
  %1121 = vmatpush1.bf16.msra.mxu0 %v782
  %1122 = vmatprep.subr.bf16.mxu0 0
  %1123 = vmatpush1.bf16.msra.mxu0 %v783
  %1124 = vmatprep.subr.bf16.mxu0 0
  %1125 = vmatpush1.bf16.msra.mxu0 %v784
  %1126 = vmatprep.subr.bf16.mxu0 0
  %1127 = vmatpush1.bf16.msra.mxu0 %v785
  %1128 = vmatprep.subr.bf16.mxu0 0
  %1129 = vmatpush1.bf16.msra.mxu0 %v786
  %1130 = vmatprep.subr.bf16.mxu0 0
  %1131 = vmatpush1.bf16.msra.mxu0 %v787
  %1132 = vmatprep.mubr.bf16.mxu0 %v261
  %1133 = vmatmul.mubr.bf16.gmra.mrb[0].mxu0 %v260
  %v1134 = vpop.f32.mrb[0].mxu0
  %v1135 = vadd.f32 %v1095, %v1134
  %v1136 = vpop.f32.mrb[0].mxu0
  %v1137 = vpop.f32.mrb[0].mxu0
  %v1138 = vpop.f32.mrb[0].mxu0
  %1139 = vdwg.mxu0
  %1140 = vmatprep.subr.bf16.mxu0 0
  %1141 = vmatpush1.bf16.msra.mxu0 %v788
  %1142 = vmatprep.subr.bf16.mxu0 0
  %1143 = vmatpush1.bf16.msra.mxu0 %v789
  %1144 = vmatprep.subr.bf16.mxu0 0
  %1145 = vmatpush1.bf16.msra.mxu0 %v790
  %1146 = vmatprep.subr.bf16.mxu0 0
  %1147 = vmatpush1.bf16.msra.mxu0 %v791
  %1148 = vmatprep.subr.bf16.mxu0 0
  %1149 = vmatpush1.bf16.msra.mxu0 %v792
  %1150 = vmatprep.subr.bf16.mxu0 0
  %1151 = vmatpush1.bf16.msra.mxu0 %v793
  %1152 = vmatprep.subr.bf16.mxu0 0
  %1153 = vmatpush1.bf16.msra.mxu0 %v794
  %1154 = vmatprep.subr.bf16.mxu0 0
  %1155 = vmatpush1.bf16.msra.mxu0 %v795
  %1156 = vmatprep.subr.bf16.mxu0 0
  %1157 = vmatpush1.bf16.msra.mxu0 0
  %1158 = vmatprep.subr.bf16.mxu0 0
  %1159 = vmatpush1.bf16.msra.mxu0 0
  %1160 = vmatprep.subr.bf16.mxu0 0
  %1161 = vmatpush1.bf16.msra.mxu0 0
  %1162 = vmatprep.subr.bf16.mxu0 0
  %1163 = vmatpush1.bf16.msra.mxu0 0
  %1164 = vmatprep.subr.bf16.mxu0 0
  %1165 = vmatpush1.bf16.msra.mxu0 0
  %1166 = vmatprep.subr.bf16.mxu0 0
  %1167 = vmatpush1.bf16.msra.mxu0 0
  %1168 = vmatprep.subr.bf16.mxu0 0
  %1169 = vmatpush1.bf16.msra.mxu0 0
  %1170 = vmatprep.subr.bf16.mxu0 0
  %1171 = vmatpush1.bf16.msra.mxu0 0
  %1172 = vmatprep.mubr.bf16.mxu0 0
  %1173 = vmatmul.mubr.bf16.gmra.mrb[0].mxu0 %v262
  %v1174 = vpop.f32.mrb[0].mxu0
  %v1175 = vadd.f32 %v1135, %v1174
  %v1176 = vpop.f32.mrb[0].mxu0
  %v1177 = vpop.f32.mrb[0].mxu0
  %v1178 = vpop.f32.mrb[0].mxu0
  %1179 = vdwg.mxu0
  %1180 = vst [vmem:[%s2] sm:$0xff] %v1175
  %v1181 = vlaneseq
  %v1182 = vshrl.u32 %v1181, 7
  %vm1183 = vcmp.eq.s32.totalorder %v1182, 0
  %v1184 = vrot.slane %v1175, 4
  %v1185 = vadd.f32 %v1175, %v1184
  %v1186 = vrot.slane %v1185, 2
  %v1187 = vadd.f32 %v1185, %v1186
  %v1188 = vrot.slane %v1187, 1
  %v1189 = vadd.f32 %v1187, %v1188
  %v1190 = vsel %vm1183, %v1189, 0.0
  %1191 = vst [vmem:[%s3] sm:$0xff] %v1190
  %v1192 = vmul.f32 %v1175, %v1175
  %v1193 = vrot.slane %v1192, 4
  %v1194 = vadd.f32 %v1192, %v1193
  %v1195 = vrot.slane %v1194, 2
  %v1196 = vadd.f32 %v1194, %v1195
  %v1197 = vrot.slane %v1196, 1
  %v1198 = vadd.f32 %v1196, %v1197
  %v1199 = vsel %vm1183, %v1198, 0.0
  %1200 = vst [vmem:[%s4] sm:$0xff] %v1199
  // Predicated region
  $region10: #{stereonet_forward.30} parent=0 // pred_check
    _
  $region11: #{stereonet_forward.30} parent=0 // pred_check_branch
    %1202 = sbr.rel (0) target = $region13
  $region12: #{stereonet_forward.30} parent=0 // pred_region
    _
  $region13: #{stereonet_forward.30} parent=0 // pred_fallthru
    _
  // Predicated region
  $region14: #{stereonet_forward.30} parent=0 // pred_check
    _
  $region15: #{stereonet_forward.30} parent=0 // pred_check_branch
    %1204 = sbr.rel (0) target = $region17
  $region16: #{stereonet_forward.30} parent=0 // pred_region
    _
  $region17: #{stereonet_forward.30} parent=0 // pred_fallthru
    _
  // Predicated region
  $region18: #{stereonet_forward.30} parent=0 // pred_check
    _
  $region19: #{stereonet_forward.30} parent=0 // pred_check_branch
    %1206 = sbr.rel (0) target = $region21
  $region20: #{stereonet_forward.30} parent=0 // pred_region
    _
  $region21: #{stereonet_forward.30} parent=0 // pred_fallthru
    _
  // Predicated region
  $region22: #{stereonet_forward.30} parent=0 // pred_check
    _
  $region23: #{stereonet_forward.30} parent=0 // pred_check_branch
    %1208 = sbr.rel (0) target = $region25
  $region24: #{stereonet_forward.30} parent=0 // pred_region
    _
  $region25: #{stereonet_forward.30} parent=0 // pred_fallthru
    _
  // Predicated region
  $region26: #{stereonet_forward.30} parent=0 // pred_check
    _
  $region27: #{stereonet_forward.30} parent=0 // pred_check_branch
    %1210 = sbr.rel (0) target = $region29
  $region28: #{stereonet_forward.30} parent=0 // pred_region
    _
  $region29: #{stereonet_forward.30} parent=0 // pred_fallthru
    _
  // Predicated region
  $region30: #{stereonet_forward.30} parent=0 // pred_check
    _
  $region31: #{stereonet_forward.30} parent=0 // pred_check_branch
    %1212 = sbr.rel (0) target = $region33
  $region32: #{stereonet_forward.30} parent=0 // pred_region
    _
  $region33: #{stereonet_forward.30} parent=0 // pred_fallthru
    _

// kernel: stereonet_forward.34
$region0: #{stereonet_forward.34}
  #allocation0 [shape = 'u32[]', space=smem, size = 0x4, offset = 0x4, fixed_abs, tag = 'smem constant byte address 0x4 - core index']
  #allocation1 [shape = 'u32[144,128]{1,0:T(1,128)}', space=vmem, size = 0x12000, scoped, tag = 'internal scratch']
  %s0 = inlined_call_operand.vmem [shape: bf16[8,1152], index: 0, kind: input, shape index: {}]
  %s1 = inlined_call_operand.vmem [shape: bf16[1152,128], index: 1, kind: input, shape index: {}]
  %s2 = inlined_call_operand.vmem [shape: f32[8,128], index: 2, kind: output, shape index: {0}]
  %s3 = inlined_call_operand.vmem [shape: f32[8,128], index: 3, kind: output, shape index: {1}]
  %s4 = inlined_call_operand.vmem [shape: f32[8,128], index: 4, kind: output, shape index: {2}]
  %5 = xla_tuple %s2, %s3, %s4
  %s6 = sld [smem:[#allocation0]]
  $region34: #{stereonet_forward.34} parent=0
    _
  %s8 = ssub.s32 1, %s6
  %s9 = scalar_select 0, %s8, %s6
  // Predicated region
  $region2: #{stereonet_forward.34} parent=0 // pred_check
    _
  $region3: #{stereonet_forward.34} parent=0 // pred_check_branch
    %11 = sbr.rel (0) target = $region5
  $region4: #{stereonet_forward.34} parent=0 // pred_region
    _
  $region5: #{stereonet_forward.34} parent=0 // pred_fallthru
    _
  // Predicated region
  $region6: #{stereonet_forward.34} parent=0 // pred_check
    _
  $region7: #{stereonet_forward.34} parent=0 // pred_check_branch
    %13 = sbr.rel (0) target = $region9
  $region8: #{stereonet_forward.34} parent=0 // pred_region
    _
  $region9: #{stereonet_forward.34} parent=0 // pred_fallthru
    _
  %v15 = vld [vmem:[%s0] sm:$0xff]
  %v16 = vld [vmem:[%s0 + $0x8] sm:$0xff]
  %v17 = vld [vmem:[%s0 + $0x10] sm:$0xff]
  %v18 = vld [vmem:[%s0 + $0x18] sm:$0xff]
  %v19 = vld [vmem:[%s0 + $0x20] sm:$0xf]
  %v20 = vld [vmem:[%s1] sm:$0xf]
  %v21 = vld [vmem:[%s1 + $0x4] sm:$0xf]
  %v22 = vld [vmem:[%s1 + $0x8] sm:$0xf]
  %v23 = vld [vmem:[%s1 + $0xc] sm:$0xf]
  %v24 = vld [vmem:[%s1 + $0x10] sm:$0xf]
  %v25 = vld [vmem:[%s1 + $0x14] sm:$0xf]
  %v26 = vld [vmem:[%s1 + $0x18] sm:$0xf]
  %v27 = vld [vmem:[%s1 + $0x1c] sm:$0xf]
  %v28 = vld [vmem:[%s1 + $0x20] sm:$0xf]
  %v29 = vld [vmem:[%s1 + $0x24] sm:$0xf]
  %v30 = vld [vmem:[%s1 + $0x28] sm:$0xf]
  %v31 = vld [vmem:[%s1 + $0x2c] sm:$0xf]
  %v32 = vld [vmem:[%s1 + $0x30] sm:$0xf]
  %v33 = vld [vmem:[%s1 + $0x34] sm:$0xf]
  %v34 = vld [vmem:[%s1 + $0x38] sm:$0xf]
  %v35 = vld [vmem:[%s1 + $0x3c] sm:$0xf]
  %v36 = vld [vmem:[%s1 + $0x40] sm:$0xf]
  %v37 = vld [vmem:[%s1 + $0x44] sm:$0xf]
  %v38 = vld [vmem:[%s1 + $0x48] sm:$0xf]
  %v39 = vld [vmem:[%s1 + $0x4c] sm:$0xf]
  %v40 = vld [vmem:[%s1 + $0x50] sm:$0xf]
  %v41 = vld [vmem:[%s1 + $0x54] sm:$0xf]
  %v42 = vld [vmem:[%s1 + $0x58] sm:$0xf]
  %v43 = vld [vmem:[%s1 + $0x5c] sm:$0xf]
  %v44 = vld [vmem:[%s1 + $0x60] sm:$0xf]
  %v45 = vld [vmem:[%s1 + $0x64] sm:$0xf]
  %v46 = vld [vmem:[%s1 + $0x68] sm:$0xf]
  %v47 = vld [vmem:[%s1 + $0x6c] sm:$0xf]
  %v48 = vld [vmem:[%s1 + $0x70] sm:$0xf]
  %v49 = vld [vmem:[%s1 + $0x74] sm:$0xf]
  %v50 = vld [vmem:[%s1 + $0x78] sm:$0xf]
  %v51 = vld [vmem:[%s1 + $0x7c] sm:$0xf]
  %v52 = vld [vmem:[%s1 + $0x80] sm:$0xf]
  %v53 = vld [vmem:[%s1 + $0x84] sm:$0xf]
  %v54 = vld [vmem:[%s1 + $0x88] sm:$0xf]
  %v55 = vld [vmem:[%s1 + $0x8c] sm:$0xf]
  %v56 = vld [vmem:[%s1 + $0x90] sm:$0xf]
  %v57 = vld [vmem:[%s1 + $0x94] sm:$0xf]
  %v58 = vld [vmem:[%s1 + $0x98] sm:$0xf]
  %v59 = vld [vmem:[%s1 + $0x9c] sm:$0xf]
  %v60 = vld [vmem:[%s1 + $0xa0] sm:$0xf]
  %v61 = vld [vmem:[%s1 + $0xa4] sm:$0xf]
  %v62 = vld [vmem:[%s1 + $0xa8] sm:$0xf]
  %v63 = vld [vmem:[%s1 + $0xac] sm:$0xf]
  %v64 = vld [vmem:[%s1 + $0xb0] sm:$0xf]
  %v65 = vld [vmem:[%s1 + $0xb4] sm:$0xf]
  %v66 = vld [vmem:[%s1 + $0xb8] sm:$0xf]
  %v67 = vld [vmem:[%s1 + $0xbc] sm:$0xf]
  %v68 = vld [vmem:[%s1 + $0xc0] sm:$0xf]
  %v69 = vld [vmem:[%s1 + $0xc4] sm:$0xf]
  %v70 = vld [vmem:[%s1 + $0xc8] sm:$0xf]
  %v71 = vld [vmem:[%s1 + $0xcc] sm:$0xf]
  %v72 = vld [vmem:[%s1 + $0xd0] sm:$0xf]
  %v73 = vld [vmem:[%s1 + $0xd4] sm:$0xf]
  %v74 = vld [vmem:[%s1 + $0xd8] sm:$0xf]
  %v75 = vld [vmem:[%s1 + $0xdc] sm:$0xf]
  %v76 = vld [vmem:[%s1 + $0xe0] sm:$0xf]
  %v77 = vld [vmem:[%s1 + $0xe4] sm:$0xf]
  %v78 = vld [vmem:[%s1 + $0xe8] sm:$0xf]
  %v79 = vld [vmem:[%s1 + $0xec] sm:$0xf]
  %v80 = vld [vmem:[%s1 + $0xf0] sm:$0xf]
  %v81 = vld [vmem:[%s1 + $0xf4] sm:$0xf]
  %v82 = vld [vmem:[%s1 + $0xf8] sm:$0xf]
  %v83 = vld [vmem:[%s1 + $0xfc] sm:$0xf]
  %v84 = vld [vmem:[%s1 + $0x100] sm:$0xf]
  %v85 = vld [vmem:[%s1 + $0x104] sm:$0xf]
  %v86 = vld [vmem:[%s1 + $0x108] sm:$0xf]
  %v87 = vld [vmem:[%s1 + $0x10c] sm:$0xf]
  %v88 = vld [vmem:[%s1 + $0x110] sm:$0xf]
  %v89 = vld [vmem:[%s1 + $0x114] sm:$0xf]
  %v90 = vld [vmem:[%s1 + $0x118] sm:$0xf]
  %v91 = vld [vmem:[%s1 + $0x11c] sm:$0xf]
  %v92 = vld [vmem:[%s1 + $0x120] sm:$0xf]
  %v93 = vld [vmem:[%s1 + $0x124] sm:$0xf]
  %v94 = vld [vmem:[%s1 + $0x128] sm:$0xf]
  %v95 = vld [vmem:[%s1 + $0x12c] sm:$0xf]
  %v96 = vld [vmem:[%s1 + $0x130] sm:$0xf]
  %v97 = vld [vmem:[%s1 + $0x134] sm:$0xf]
  %v98 = vld [vmem:[%s1 + $0x138] sm:$0xf]
  %v99 = vld [vmem:[%s1 + $0x13c] sm:$0xf]
  %v100 = vld [vmem:[%s1 + $0x140] sm:$0xf]
  %v101 = vld [vmem:[%s1 + $0x144] sm:$0xf]
  %v102 = vld [vmem:[%s1 + $0x148] sm:$0xf]
  %v103 = vld [vmem:[%s1 + $0x14c] sm:$0xf]
  %v104 = vld [vmem:[%s1 + $0x150] sm:$0xf]
  %v105 = vld [vmem:[%s1 + $0x154] sm:$0xf]
  %v106 = vld [vmem:[%s1 + $0x158] sm:$0xf]
  %v107 = vld [vmem:[%s1 + $0x15c] sm:$0xf]
  %v108 = vld [vmem:[%s1 + $0x160] sm:$0xf]
  %v109 = vld [vmem:[%s1 + $0x164] sm:$0xf]
  %v110 = vld [vmem:[%s1 + $0x168] sm:$0xf]
  %v111 = vld [vmem:[%s1 + $0x16c] sm:$0xf]
  %v112 = vld [vmem:[%s1 + $0x170] sm:$0xf]
  %v113 = vld [vmem:[%s1 + $0x174] sm:$0xf]
  %v114 = vld [vmem:[%s1 + $0x178] sm:$0xf]
  %v115 = vld [vmem:[%s1 + $0x17c] sm:$0xf]
  %v116 = vld [vmem:[%s1 + $0x180] sm:$0xf]
  %v117 = vld [vmem:[%s1 + $0x184] sm:$0xf]
  %v118 = vld [vmem:[%s1 + $0x188] sm:$0xf]
  %v119 = vld [vmem:[%s1 + $0x18c] sm:$0xf]
  %v120 = vld [vmem:[%s1 + $0x190] sm:$0xf]
  %v121 = vld [vmem:[%s1 + $0x194] sm:$0xf]
  %v122 = vld [vmem:[%s1 + $0x198] sm:$0xf]
  %v123 = vld [vmem:[%s1 + $0x19c] sm:$0xf]
  %v124 = vld [vmem:[%s1 + $0x1a0] sm:$0xf]
  %v125 = vld [vmem:[%s1 + $0x1a4] sm:$0xf]
  %v126 = vld [vmem:[%s1 + $0x1a8] sm:$0xf]
  %v127 = vld [vmem:[%s1 + $0x1ac] sm:$0xf]
  %v128 = vld [vmem:[%s1 + $0x1b0] sm:$0xf]
  %v129 = vld [vmem:[%s1 + $0x1b4] sm:$0xf]
  %v130 = vld [vmem:[%s1 + $0x1b8] sm:$0xf]
  %v131 = vld [vmem:[%s1 + $0x1bc] sm:$0xf]
  %v132 = vld [vmem:[%s1 + $0x1c0] sm:$0xf]
  %v133 = vld [vmem:[%s1 + $0x1c4] sm:$0xf]
  %v134 = vld [vmem:[%s1 + $0x1c8] sm:$0xf]
  %v135 = vld [vmem:[%s1 + $0x1cc] sm:$0xf]
  %v136 = vld [vmem:[%s1 + $0x1d0] sm:$0xf]
  %v137 = vld [vmem:[%s1 + $0x1d4] sm:$0xf]
  %v138 = vld [vmem:[%s1 + $0x1d8] sm:$0xf]
  %v139 = vld [vmem:[%s1 + $0x1dc] sm:$0xf]
  %v140 = vld [vmem:[%s1 + $0x1e0] sm:$0xf]
  %v141 = vld [vmem:[%s1 + $0x1e4] sm:$0xf]
  %v142 = vld [vmem:[%s1 + $0x1e8] sm:$0xf]
  %v143 = vld [vmem:[%s1 + $0x1ec] sm:$0xf]
  %v144 = vld [vmem:[%s1 + $0x1f0] sm:$0xf]
  %v145 = vld [vmem:[%s1 + $0x1f4] sm:$0xf]
  %v146 = vld [vmem:[%s1 + $0x1f8] sm:$0xf]
  %v147 = vld [vmem:[%s1 + $0x1fc] sm:$0xf]
  %v148 = vld [vmem:[%s1 + $0x200] sm:$0xf]
  %v149 = vld [vmem:[%s1 + $0x204] sm:$0xf]
  %v150 = vld [vmem:[%s1 + $0x208] sm:$0xf]
  %v151 = vld [vmem:[%s1 + $0x20c] sm:$0xf]
  %v152 = vld [vmem:[%s1 + $0x210] sm:$0xf]
  %v153 = vld [vmem:[%s1 + $0x214] sm:$0xf]
  %v154 = vld [vmem:[%s1 + $0x218] sm:$0xf]
  %v155 = vld [vmem:[%s1 + $0x21c] sm:$0xf]
  %v156 = vld [vmem:[%s1 + $0x220] sm:$0xf]
  %v157 = vld [vmem:[%s1 + $0x224] sm:$0xf]
  %v158 = vld [vmem:[%s1 + $0x228] sm:$0xf]
  %v159 = vld [vmem:[%s1 + $0x22c] sm:$0xf]
  %v160 = vld [vmem:[%s1 + $0x230] sm:$0xf]
  %v161 = vld [vmem:[%s1 + $0x234] sm:$0xf]
  %v162 = vld [vmem:[%s1 + $0x238] sm:$0xf]
  %v163 = vld [vmem:[%s1 + $0x23c] sm:$0xf]
  %v169 = vunpack.c.l.b16 %v15
  %v170 = vunpack.c.h.b16 %v15
  %v171 = vunpack.c.l.b16 %v16
  %v172 = vunpack.c.h.b16 %v16
  %v173 = vunpack.c.l.b16 %v17
  %v174 = vunpack.c.h.b16 %v17
  %v175 = vunpack.c.l.b16 %v18
  %v176 = vunpack.c.h.b16 %v18
  %v177 = vunpack.c.l.b16 %v19
  %v178 = vpack.c.b16 %v169, %v169
  %v179 = vpack.c.b16 %v170, %v170
  %v180 = vpack.c.b16 %v171, %v171
  %v181 = vpack.c.b16 %v172, %v172
  %v182 = vpack.c.b16 %v173, %v173
  %v183 = vpack.c.b16 %v174, %v174
  %v184 = vpack.c.b16 %v175, %v175
  %v185 = vpack.c.b16 %v176, %v176
  %v186 = vpack.c.b16 %v177, %v177
  %v340 = vunpack.c.l.b16 %v20
  %v341 = vunpack.c.l.b16 %v21
  %v342 = vunpack.c.l.b16 %v22
  %v343 = vunpack.c.l.b16 %v23
  %v344 = vunpack.c.l.b16 %v24
  %v345 = vunpack.c.l.b16 %v25
  %v346 = vunpack.c.l.b16 %v26
  %v347 = vunpack.c.l.b16 %v27
  %v348 = vunpack.c.l.b16 %v28
  %v349 = vunpack.c.l.b16 %v29
  %v350 = vunpack.c.l.b16 %v30
  %v351 = vunpack.c.l.b16 %v31
  %v352 = vunpack.c.l.b16 %v32
  %v353 = vunpack.c.l.b16 %v33
  %v354 = vunpack.c.l.b16 %v34
  %v355 = vunpack.c.l.b16 %v35
  %v356 = vunpack.c.l.b16 %v36
  %v357 = vunpack.c.l.b16 %v37
  %v358 = vunpack.c.l.b16 %v38
  %v359 = vunpack.c.l.b16 %v39
  %v360 = vunpack.c.l.b16 %v40
  %v361 = vunpack.c.l.b16 %v41
  %v362 = vunpack.c.l.b16 %v42
  %v363 = vunpack.c.l.b16 %v43
  %v364 = vunpack.c.l.b16 %v44
  %v365 = vunpack.c.l.b16 %v45
  %v366 = vunpack.c.l.b16 %v46
  %v367 = vunpack.c.l.b16 %v47
  %v368 = vunpack.c.l.b16 %v48
  %v369 = vunpack.c.l.b16 %v49
  %v370 = vunpack.c.l.b16 %v50
  %v371 = vunpack.c.l.b16 %v51
  %v372 = vunpack.c.l.b16 %v52
  %v373 = vunpack.c.l.b16 %v53
  %v374 = vunpack.c.l.b16 %v54
  %v375 = vunpack.c.l.b16 %v55
  %v376 = vunpack.c.l.b16 %v56
  %v377 = vunpack.c.l.b16 %v57
  %v378 = vunpack.c.l.b16 %v58
  %v379 = vunpack.c.l.b16 %v59
  %v380 = vunpack.c.l.b16 %v60
  %v381 = vunpack.c.l.b16 %v61
  %v382 = vunpack.c.l.b16 %v62
  %v383 = vunpack.c.l.b16 %v63
  %v384 = vunpack.c.l.b16 %v64
  %v385 = vunpack.c.l.b16 %v65
  %v386 = vunpack.c.l.b16 %v66
  %v387 = vunpack.c.l.b16 %v67
  %v388 = vunpack.c.l.b16 %v68
  %v389 = vunpack.c.l.b16 %v69
  %v390 = vunpack.c.l.b16 %v70
  %v391 = vunpack.c.l.b16 %v71
  %v392 = vunpack.c.l.b16 %v72
  %v393 = vunpack.c.l.b16 %v73
  %v394 = vunpack.c.l.b16 %v74
  %v395 = vunpack.c.l.b16 %v75
  %v396 = vunpack.c.l.b16 %v76
  %v397 = vunpack.c.l.b16 %v77
  %v398 = vunpack.c.l.b16 %v78
  %v399 = vunpack.c.l.b16 %v79
  %v400 = vunpack.c.l.b16 %v80
  %v401 = vunpack.c.l.b16 %v81
  %v402 = vunpack.c.l.b16 %v82
  %v403 = vunpack.c.l.b16 %v83
  %v404 = vunpack.c.l.b16 %v84
  %v405 = vunpack.c.l.b16 %v85
  %v406 = vunpack.c.l.b16 %v86
  %v407 = vunpack.c.l.b16 %v87
  %v408 = vunpack.c.l.b16 %v88
  %v409 = vunpack.c.l.b16 %v89
  %v410 = vunpack.c.l.b16 %v90
  %v411 = vunpack.c.l.b16 %v91
  %v412 = vunpack.c.l.b16 %v92
  %v413 = vunpack.c.l.b16 %v93
  %v414 = vunpack.c.l.b16 %v94
  %v415 = vunpack.c.l.b16 %v95
  %v416 = vunpack.c.l.b16 %v96
  %v417 = vunpack.c.l.b16 %v97
  %v418 = vunpack.c.l.b16 %v98
  %v419 = vunpack.c.l.b16 %v99
  %v420 = vunpack.c.l.b16 %v100
  %v421 = vunpack.c.l.b16 %v101
  %v422 = vunpack.c.l.b16 %v102
  %v423 = vunpack.c.l.b16 %v103
  %v424 = vunpack.c.l.b16 %v104
  %v425 = vunpack.c.l.b16 %v105
  %v426 = vunpack.c.l.b16 %v106
  %v427 = vunpack.c.l.b16 %v107
  %v428 = vunpack.c.l.b16 %v108
  %v429 = vunpack.c.l.b16 %v109
  %v430 = vunpack.c.l.b16 %v110
  %v431 = vunpack.c.l.b16 %v111
  %v432 = vunpack.c.l.b16 %v112
  %v433 = vunpack.c.l.b16 %v113
  %v434 = vunpack.c.l.b16 %v114
  %v435 = vunpack.c.l.b16 %v115
  %v436 = vunpack.c.l.b16 %v116
  %v437 = vunpack.c.l.b16 %v117
  %v438 = vunpack.c.l.b16 %v118
  %v439 = vunpack.c.l.b16 %v119
  %v440 = vunpack.c.l.b16 %v120
  %v441 = vunpack.c.l.b16 %v121
  %v442 = vunpack.c.l.b16 %v122
  %v443 = vunpack.c.l.b16 %v123
  %v444 = vunpack.c.l.b16 %v124
  %v445 = vunpack.c.l.b16 %v125
  %v446 = vunpack.c.l.b16 %v126
  %v447 = vunpack.c.l.b16 %v127
  %v448 = vunpack.c.l.b16 %v128
  %v449 = vunpack.c.l.b16 %v129
  %v450 = vunpack.c.l.b16 %v130
  %v451 = vunpack.c.l.b16 %v131
  %v452 = vunpack.c.l.b16 %v132
  %v453 = vunpack.c.l.b16 %v133
  %v454 = vunpack.c.l.b16 %v134
  %v455 = vunpack.c.l.b16 %v135
  %v456 = vunpack.c.l.b16 %v136
  %v457 = vunpack.c.l.b16 %v137
  %v458 = vunpack.c.l.b16 %v138
  %v459 = vunpack.c.l.b16 %v139
  %v460 = vunpack.c.l.b16 %v140
  %v461 = vunpack.c.l.b16 %v141
  %v462 = vunpack.c.l.b16 %v142
  %v463 = vunpack.c.l.b16 %v143
  %v464 = vunpack.c.l.b16 %v144
  %v465 = vunpack.c.l.b16 %v145
  %v466 = vunpack.c.l.b16 %v146
  %v467 = vunpack.c.l.b16 %v147
  %v468 = vunpack.c.l.b16 %v148
  %v469 = vunpack.c.l.b16 %v149
  %v470 = vunpack.c.l.b16 %v150
  %v471 = vunpack.c.l.b16 %v151
  %v472 = vunpack.c.l.b16 %v152
  %v473 = vunpack.c.l.b16 %v153
  %v474 = vunpack.c.l.b16 %v154
  %v475 = vunpack.c.l.b16 %v155
  %v476 = vunpack.c.l.b16 %v156
  %v477 = vunpack.c.l.b16 %v157
  %v478 = vunpack.c.l.b16 %v158
  %v479 = vunpack.c.l.b16 %v159
  %v480 = vunpack.c.l.b16 %v160
  %v481 = vunpack.c.l.b16 %v161
  %v482 = vunpack.c.l.b16 %v162
  %v483 = vunpack.c.l.b16 %v163
  %v484 = vpack.c.b16 %v341, %v340
  %v485 = vpack.c.b16 %v343, %v342
  %v486 = vpack.c.b16 %v345, %v344
  %v487 = vpack.c.b16 %v347, %v346
  %v488 = vpack.c.b16 %v349, %v348
  %v489 = vpack.c.b16 %v351, %v350
  %v490 = vpack.c.b16 %v353, %v352
  %v491 = vpack.c.b16 %v355, %v354
  %v492 = vpack.c.b16 %v357, %v356
  %v493 = vpack.c.b16 %v359, %v358
  %v494 = vpack.c.b16 %v361, %v360
  %v495 = vpack.c.b16 %v363, %v362
  %v496 = vpack.c.b16 %v365, %v364
  %v497 = vpack.c.b16 %v367, %v366
  %v498 = vpack.c.b16 %v369, %v368
  %v499 = vpack.c.b16 %v371, %v370
  %v500 = vpack.c.b16 %v373, %v372
  %v501 = vpack.c.b16 %v375, %v374
  %v502 = vpack.c.b16 %v377, %v376
  %v503 = vpack.c.b16 %v379, %v378
  %v504 = vpack.c.b16 %v381, %v380
  %v505 = vpack.c.b16 %v383, %v382
  %v506 = vpack.c.b16 %v385, %v384
  %v507 = vpack.c.b16 %v387, %v386
  %v508 = vpack.c.b16 %v389, %v388
  %v509 = vpack.c.b16 %v391, %v390
  %v510 = vpack.c.b16 %v393, %v392
  %v511 = vpack.c.b16 %v395, %v394
  %v512 = vpack.c.b16 %v397, %v396
  %v513 = vpack.c.b16 %v399, %v398
  %v514 = vpack.c.b16 %v401, %v400
  %v515 = vpack.c.b16 %v403, %v402
  %v516 = vpack.c.b16 %v405, %v404
  %v517 = vpack.c.b16 %v407, %v406
  %v518 = vpack.c.b16 %v409, %v408
  %v519 = vpack.c.b16 %v411, %v410
  %v520 = vpack.c.b16 %v413, %v412
  %v521 = vpack.c.b16 %v415, %v414
  %v522 = vpack.c.b16 %v417, %v416
  %v523 = vpack.c.b16 %v419, %v418
  %v524 = vpack.c.b16 %v421, %v420
  %v525 = vpack.c.b16 %v423, %v422
  %v526 = vpack.c.b16 %v425, %v424
  %v527 = vpack.c.b16 %v427, %v426
  %v528 = vpack.c.b16 %v429, %v428
  %v529 = vpack.c.b16 %v431, %v430
  %v530 = vpack.c.b16 %v433, %v432
  %v531 = vpack.c.b16 %v435, %v434
  %v532 = vpack.c.b16 %v437, %v436
  %v533 = vpack.c.b16 %v439, %v438
  %v534 = vpack.c.b16 %v441, %v440
  %v535 = vpack.c.b16 %v443, %v442
  %v536 = vpack.c.b16 %v445, %v444
  %v537 = vpack.c.b16 %v447, %v446
  %v538 = vpack.c.b16 %v449, %v448
  %v539 = vpack.c.b16 %v451, %v450
  %v540 = vpack.c.b16 %v453, %v452
  %v541 = vpack.c.b16 %v455, %v454
  %v542 = vpack.c.b16 %v457, %v456
  %v543 = vpack.c.b16 %v459, %v458
  %v544 = vpack.c.b16 %v461, %v460
  %v545 = vpack.c.b16 %v463, %v462
  %v546 = vpack.c.b16 %v465, %v464
  %v547 = vpack.c.b16 %v467, %v466
  %v548 = vpack.c.b16 %v469, %v468
  %v549 = vpack.c.b16 %v471, %v470
  %v550 = vpack.c.b16 %v473, %v472
  %v551 = vpack.c.b16 %v475, %v474
  %v552 = vpack.c.b16 %v477, %v476
  %v553 = vpack.c.b16 %v479, %v478
  %v554 = vpack.c.b16 %v481, %v480
  %v555 = vpack.c.b16 %v483, %v482
  %628 = vmatprep.subr.bf16.mxu0 0
  %629 = vmatpush1.bf16.msra.mxu0 %v484
  %630 = vmatprep.subr.bf16.mxu0 0
  %631 = vmatpush1.bf16.msra.mxu0 %v485
  %632 = vmatprep.subr.bf16.mxu0 0
  %633 = vmatpush1.bf16.msra.mxu0 %v486
  %634 = vmatprep.subr.bf16.mxu0 0
  %635 = vmatpush1.bf16.msra.mxu0 %v487
  %636 = vmatprep.subr.bf16.mxu0 0
  %637 = vmatpush1.bf16.msra.mxu0 %v488
  %638 = vmatprep.subr.bf16.mxu0 0
  %639 = vmatpush1.bf16.msra.mxu0 %v489
  %640 = vmatprep.subr.bf16.mxu0 0
  %641 = vmatpush1.bf16.msra.mxu0 %v490
  %642 = vmatprep.subr.bf16.mxu0 0
  %643 = vmatpush1.bf16.msra.mxu0 %v491
  %644 = vmatprep.subr.bf16.mxu0 0
  %645 = vmatpush1.bf16.msra.mxu0 %v492
  %646 = vmatprep.subr.bf16.mxu0 0
  %647 = vmatpush1.bf16.msra.mxu0 %v493
  %648 = vmatprep.subr.bf16.mxu0 0
  %649 = vmatpush1.bf16.msra.mxu0 %v494
  %650 = vmatprep.subr.bf16.mxu0 0
  %651 = vmatpush1.bf16.msra.mxu0 %v495
  %652 = vmatprep.subr.bf16.mxu0 0
  %653 = vmatpush1.bf16.msra.mxu0 %v496
  %654 = vmatprep.subr.bf16.mxu0 0
  %655 = vmatpush1.bf16.msra.mxu0 %v497
  %656 = vmatprep.subr.bf16.mxu0 0
  %657 = vmatpush1.bf16.msra.mxu0 %v498
  %658 = vmatprep.subr.bf16.mxu0 0
  %659 = vmatpush1.bf16.msra.mxu0 %v499
  %660 = vmatprep.mubr.bf16.mxu0 %v179
  %661 = vmatmul.mubr.bf16.gmra.mrb[0].mxu0 %v178
  %v662 = vpop.f32.mrb[0].mxu0
  %v663 = vadd.f32 0.0, %v662
  %v664 = vpop.f32.mrb[0].mxu0
  %v665 = vpop.f32.mrb[0].mxu0
  %v666 = vpop.f32.mrb[0].mxu0
  %667 = vdwg.mxu0
  %668 = vmatprep.subr.bf16.mxu0 0
  %669 = vmatpush1.bf16.msra.mxu0 %v500
  %670 = vmatprep.subr.bf16.mxu0 0
  %671 = vmatpush1.bf16.msra.mxu0 %v501
  %672 = vmatprep.subr.bf16.mxu0 0
  %673 = vmatpush1.bf16.msra.mxu0 %v502
  %674 = vmatprep.subr.bf16.mxu0 0
  %675 = vmatpush1.bf16.msra.mxu0 %v503
  %676 = vmatprep.subr.bf16.mxu0 0
  %677 = vmatpush1.bf16.msra.mxu0 %v504
  %678 = vmatprep.subr.bf16.mxu0 0
  %679 = vmatpush1.bf16.msra.mxu0 %v505
  %680 = vmatprep.subr.bf16.mxu0 0
  %681 = vmatpush1.bf16.msra.mxu0 %v506
  %682 = vmatprep.subr.bf16.mxu0 0
  %683 = vmatpush1.bf16.msra.mxu0 %v507
  %684 = vmatprep.subr.bf16.mxu0 0
  %685 = vmatpush1.bf16.msra.mxu0 %v508
  %686 = vmatprep.subr.bf16.mxu0 0
  %687 = vmatpush1.bf16.msra.mxu0 %v509
  %688 = vmatprep.subr.bf16.mxu0 0
  %689 = vmatpush1.bf16.msra.mxu0 %v510
  %690 = vmatprep.subr.bf16.mxu0 0
  %691 = vmatpush1.bf16.msra.mxu0 %v511
  %692 = vmatprep.subr.bf16.mxu0 0
  %693 = vmatpush1.bf16.msra.mxu0 %v512
  %694 = vmatprep.subr.bf16.mxu0 0
  %695 = vmatpush1.bf16.msra.mxu0 %v513
  %696 = vmatprep.subr.bf16.mxu0 0
  %697 = vmatpush1.bf16.msra.mxu0 %v514
  %698 = vmatprep.subr.bf16.mxu0 0
  %699 = vmatpush1.bf16.msra.mxu0 %v515
  %700 = vmatprep.mubr.bf16.mxu0 %v181
  %701 = vmatmul.mubr.bf16.gmra.mrb[0].mxu0 %v180
  %v702 = vpop.f32.mrb[0].mxu0
  %v703 = vadd.f32 %v663, %v702
  %v704 = vpop.f32.mrb[0].mxu0
  %v705 = vpop.f32.mrb[0].mxu0
  %v706 = vpop.f32.mrb[0].mxu0
  %707 = vdwg.mxu0
  %708 = vmatprep.subr.bf16.mxu0 0
  %709 = vmatpush1.bf16.msra.mxu0 %v516
  %710 = vmatprep.subr.bf16.mxu0 0
  %711 = vmatpush1.bf16.msra.mxu0 %v517
  %712 = vmatprep.subr.bf16.mxu0 0
  %713 = vmatpush1.bf16.msra.mxu0 %v518
  %714 = vmatprep.subr.bf16.mxu0 0
  %715 = vmatpush1.bf16.msra.mxu0 %v519
  %716 = vmatprep.subr.bf16.mxu0 0
  %717 = vmatpush1.bf16.msra.mxu0 %v520
  %718 = vmatprep.subr.bf16.mxu0 0
  %719 = vmatpush1.bf16.msra.mxu0 %v521
  %720 = vmatprep.subr.bf16.mxu0 0
  %721 = vmatpush1.bf16.msra.mxu0 %v522
  %722 = vmatprep.subr.bf16.mxu0 0
  %723 = vmatpush1.bf16.msra.mxu0 %v523
  %724 = vmatprep.subr.bf16.mxu0 0
  %725 = vmatpush1.bf16.msra.mxu0 %v524
  %726 = vmatprep.subr.bf16.mxu0 0
  %727 = vmatpush1.bf16.msra.mxu0 %v525
  %728 = vmatprep.subr.bf16.mxu0 0
  %729 = vmatpush1.bf16.msra.mxu0 %v526
  %730 = vmatprep.subr.bf16.mxu0 0
  %731 = vmatpush1.bf16.msra.mxu0 %v527
  %732 = vmatprep.subr.bf16.mxu0 0
  %733 = vmatpush1.bf16.msra.mxu0 %v528
  %734 = vmatprep.subr.bf16.mxu0 0
  %735 = vmatpush1.bf16.msra.mxu0 %v529
  %736 = vmatprep.subr.bf16.mxu0 0
  %737 = vmatpush1.bf16.msra.mxu0 %v530
  %738 = vmatprep.subr.bf16.mxu0 0
  %739 = vmatpush1.bf16.msra.mxu0 %v531
  %740 = vmatprep.mubr.bf16.mxu0 %v183
  %741 = vmatmul.mubr.bf16.gmra.mrb[0].mxu0 %v182
  %v742 = vpop.f32.mrb[0].mxu0
  %v743 = vadd.f32 %v703, %v742
  %v744 = vpop.f32.mrb[0].mxu0
  %v745 = vpop.f32.mrb[0].mxu0
  %v746 = vpop.f32.mrb[0].mxu0
  %747 = vdwg.mxu0
  %748 = vmatprep.subr.bf16.mxu0 0
  %749 = vmatpush1.bf16.msra.mxu0 %v532
  %750 = vmatprep.subr.bf16.mxu0 0
  %751 = vmatpush1.bf16.msra.mxu0 %v533
  %752 = vmatprep.subr.bf16.mxu0 0
  %753 = vmatpush1.bf16.msra.mxu0 %v534
  %754 = vmatprep.subr.bf16.mxu0 0
  %755 = vmatpush1.bf16.msra.mxu0 %v535
  %756 = vmatprep.subr.bf16.mxu0 0
  %757 = vmatpush1.bf16.msra.mxu0 %v536
  %758 = vmatprep.subr.bf16.mxu0 0
  %759 = vmatpush1.bf16.msra.mxu0 %v537
  %760 = vmatprep.subr.bf16.mxu0 0
  %761 = vmatpush1.bf16.msra.mxu0 %v538
  %762 = vmatprep.subr.bf16.mxu0 0
  %763 = vmatpush1.bf16.msra.mxu0 %v539
  %764 = vmatprep.subr.bf16.mxu0 0
  %765 = vmatpush1.bf16.msra.mxu0 %v540
  %766 = vmatprep.subr.bf16.mxu0 0
  %767 = vmatpush1.bf16.msra.mxu0 %v541
  %768 = vmatprep.subr.bf16.mxu0 0
  %769 = vmatpush1.bf16.msra.mxu0 %v542
  %770 = vmatprep.subr.bf16.mxu0 0
  %771 = vmatpush1.bf16.msra.mxu0 %v543
  %772 = vmatprep.subr.bf16.mxu0 0
  %773 = vmatpush1.bf16.msra.mxu0 %v544
  %774 = vmatprep.subr.bf16.mxu0 0
  %775 = vmatpush1.bf16.msra.mxu0 %v545
  %776 = vmatprep.subr.bf16.mxu0 0
  %777 = vmatpush1.bf16.msra.mxu0 %v546
  %778 = vmatprep.subr.bf16.mxu0 0
  %779 = vmatpush1.bf16.msra.mxu0 %v547
  %780 = vmatprep.mubr.bf16.mxu0 %v185
  %781 = vmatmul.mubr.bf16.gmra.mrb[0].mxu0 %v184
  %v782 = vpop.f32.mrb[0].mxu0
  %v783 = vadd.f32 %v743, %v782
  %v784 = vpop.f32.mrb[0].mxu0
  %v785 = vpop.f32.mrb[0].mxu0
  %v786 = vpop.f32.mrb[0].mxu0
  %787 = vdwg.mxu0
  %788 = vmatprep.subr.bf16.mxu0 0
  %789 = vmatpush1.bf16.msra.mxu0 %v548
  %790 = vmatprep.subr.bf16.mxu0 0
  %791 = vmatpush1.bf16.msra.mxu0 %v549
  %792 = vmatprep.subr.bf16.mxu0 0
  %793 = vmatpush1.bf16.msra.mxu0 %v550
  %794 = vmatprep.subr.bf16.mxu0 0
  %795 = vmatpush1.bf16.msra.mxu0 %v551
  %796 = vmatprep.subr.bf16.mxu0 0
  %797 = vmatpush1.bf16.msra.mxu0 %v552
  %798 = vmatprep.subr.bf16.mxu0 0
  %799 = vmatpush1.bf16.msra.mxu0 %v553
  %800 = vmatprep.subr.bf16.mxu0 0
  %801 = vmatpush1.bf16.msra.mxu0 %v554
  %802 = vmatprep.subr.bf16.mxu0 0
  %803 = vmatpush1.bf16.msra.mxu0 %v555
  %804 = vmatprep.subr.bf16.mxu0 0
  %805 = vmatpush1.bf16.msra.mxu0 0
  %806 = vmatprep.subr.bf16.mxu0 0
  %807 = vmatpush1.bf16.msra.mxu0 0
  %808 = vmatprep.subr.bf16.mxu0 0
  %809 = vmatpush1.bf16.msra.mxu0 0
  %810 = vmatprep.subr.bf16.mxu0 0
  %811 = vmatpush1.bf16.msra.mxu0 0
  %812 = vmatprep.subr.bf16.mxu0 0
  %813 = vmatpush1.bf16.msra.mxu0 0
  %814 = vmatprep.subr.bf16.mxu0 0
  %815 = vmatpush1.bf16.msra.mxu0 0
  %816 = vmatprep.subr.bf16.mxu0 0
  %817 = vmatpush1.bf16.msra.mxu0 0
  %818 = vmatprep.subr.bf16.mxu0 0
  %819 = vmatpush1.bf16.msra.mxu0 0
  %820 = vmatprep.mubr.bf16.mxu0 0
  %821 = vmatmul.mubr.bf16.gmra.mrb[0].mxu0 %v186
  %v822 = vpop.f32.mrb[0].mxu0
  %v823 = vadd.f32 %v783, %v822
  %v824 = vpop.f32.mrb[0].mxu0
  %v825 = vpop.f32.mrb[0].mxu0
  %v826 = vpop.f32.mrb[0].mxu0
  %827 = vdwg.mxu0
  %828 = vst [vmem:[%s2] sm:$0xff] %v823
  %v829 = vlaneseq
  %v830 = vshrl.u32 %v829, 7
  %vm831 = vcmp.eq.s32.totalorder %v830, 0
  %v832 = vrot.slane %v823, 4
  %v833 = vadd.f32 %v823, %v832
  %v834 = vrot.slane %v833, 2
  %v835 = vadd.f32 %v833, %v834
  %v836 = vrot.slane %v835, 1
  %v837 = vadd.f32 %v835, %v836
  %v838 = vsel %vm831, %v837, 0.0
  %839 = vst [vmem:[%s3] sm:$0xff] %v838
  %v840 = vmul.f32 %v823, %v823
  %v841 = vrot.slane %v840, 4
  %v842 = vadd.f32 %v840, %v841
  %v843 = vrot.slane %v842, 2
  %v844 = vadd.f32 %v842, %v843
  %v845 = vrot.slane %v844, 1
  %v846 = vadd.f32 %v844, %v845
  %v847 = vsel %vm831, %v846, 0.0
  %848 = vst [vmem:[%s4] sm:$0xff] %v847
  // Predicated region
  $region10: #{stereonet_forward.34} parent=0 // pred_check
    _
  $region11: #{stereonet_forward.34} parent=0 // pred_check_branch
    %850 = sbr.rel (0) target = $region13
  $region12: #{stereonet_forward.34} parent=0 // pred_region
    _
  $region13: #{stereonet_forward.34} parent=0 // pred_fallthru
    _
  // Predicated region
  $region14: #{stereonet_forward.34} parent=0 // pred_check
    _
  $region15: #{stereonet_forward.34} parent=0 // pred_check_branch
    %852 = sbr.rel (0) target = $region17
  $region16: #{stereonet_forward.34} parent=0 // pred_region
    _
  $region17: #{stereonet_forward.34} parent=0 // pred_fallthru
    _
  // Predicated region
  $region18: #{stereonet_forward.34} parent=0 // pred_check
    _
  $region19: #{stereonet_forward.34} parent=0 // pred_check_branch
    %854 = sbr.rel (0) target = $region21
  $region20: #{stereonet_forward.34} parent=0 // pred_region
    _
  $region21: #{stereonet_forward.34} parent=0 // pred_fallthru
    _
  // Predicated region
  $region22: #{stereonet_forward.34} parent=0 // pred_check
    _
  $region23: #{stereonet_forward.34} parent=0 // pred_check_branch
    %856 = sbr.rel (0) target = $region25
  $region24: #{stereonet_forward.34} parent=0 // pred_region
    _
  $region25: #{stereonet_forward.34} parent=0 // pred_fallthru
    _
  // Predicated region
  $region26: #{stereonet_forward.34} parent=0 // pred_check
    _
  $region27: #{stereonet_forward.34} parent=0 // pred_check_branch
    %858 = sbr.rel (0) target = $region29
  $region28: #{stereonet_forward.34} parent=0 // pred_region
    _
  $region29: #{stereonet_forward.34} parent=0 // pred_fallthru
    _
  // Predicated region
  $region30: #{stereonet_forward.34} parent=0 // pred_check
    _
  $region31: #{stereonet_forward.34} parent=0 // pred_check_branch
    %860 = sbr.rel (0) target = $region33
  $region32: #{stereonet_forward.34} parent=0 // pred_region
    _
  $region33: #{stereonet_forward.34} parent=0 // pred_fallthru
    _

// kernel: stereonet_forward.32
$region0: #{stereonet_forward.32}
  #allocation0 [shape = 'u32[]', space=smem, size = 0x4, offset = 0x4, fixed_abs, tag = 'smem constant byte address 0x4 - core index']
  #allocation1 [shape = 'u32[144,128]{1,0:T(1,128)}', space=vmem, size = 0x12000, scoped, tag = 'internal scratch']
  %s0 = inlined_call_operand.vmem [shape: bf16[8,2304], index: 0, kind: input, shape index: {}]
  %s1 = inlined_call_operand.vmem [shape: bf16[2304,128], index: 1, kind: input, shape index: {}]
  %s2 = inlined_call_operand.vmem [shape: f32[8,128], index: 2, kind: output, shape index: {0}]
  %s3 = inlined_call_operand.vmem [shape: f32[8,128], index: 3, kind: output, shape index: {1}]
  %s4 = inlined_call_operand.vmem [shape: f32[8,128], index: 4, kind: output, shape index: {2}]
  %5 = xla_tuple %s2, %s3, %s4
  %s6 = sld [smem:[#allocation0]]
  $region34: #{stereonet_forward.32} parent=0
    _
  %s8 = ssub.s32 1, %s6
  %s9 = scalar_select 0, %s8, %s6
  // Predicated region
  $region2: #{stereonet_forward.32} parent=0 // pred_check
    _
  $region3: #{stereonet_forward.32} parent=0 // pred_check_branch
    %11 = sbr.rel (0) target = $region5
  $region4: #{stereonet_forward.32} parent=0 // pred_region
    _
  $region5: #{stereonet_forward.32} parent=0 // pred_fallthru
    _
  // Predicated region
  $region6: #{stereonet_forward.32} parent=0 // pred_check
    _
  $region7: #{stereonet_forward.32} parent=0 // pred_check_branch
    %13 = sbr.rel (0) target = $region9
  $region8: #{stereonet_forward.32} parent=0 // pred_region
    _
  $region9: #{stereonet_forward.32} parent=0 // pred_fallthru
    _
  %v15 = vld [vmem:[%s0] sm:$0xff]
  %v16 = vld [vmem:[%s0 + $0x8] sm:$0xff]
  %v17 = vld [vmem:[%s0 + $0x10] sm:$0xff]
  %v18 = vld [vmem:[%s0 + $0x18] sm:$0xff]
  %v19 = vld [vmem:[%s0 + $0x20] sm:$0xff]
  %v20 = vld [vmem:[%s0 + $0x28] sm:$0xff]
  %v21 = vld [vmem:[%s0 + $0x30] sm:$0xff]
  %v22 = vld [vmem:[%s0 + $0x38] sm:$0xff]
  %v23 = vld [vmem:[%s0 + $0x40] sm:$0xff]
  %v24 = vld [vmem:[%s1] sm:$0xf]
  %v25 = vld [vmem:[%s1 + $0x4] sm:$0xf]
  %v26 = vld [vmem:[%s1 + $0x8] sm:$0xf]
  %v27 = vld [vmem:[%s1 + $0xc] sm:$0xf]
  %v28 = vld [vmem:[%s1 + $0x10] sm:$0xf]
  %v29 = vld [vmem:[%s1 + $0x14] sm:$0xf]
  %v30 = vld [vmem:[%s1 + $0x18] sm:$0xf]
  %v31 = vld [vmem:[%s1 + $0x1c] sm:$0xf]
  %v32 = vld [vmem:[%s1 + $0x20] sm:$0xf]
  %v33 = vld [vmem:[%s1 + $0x24] sm:$0xf]
  %v34 = vld [vmem:[%s1 + $0x28] sm:$0xf]
  %v35 = vld [vmem:[%s1 + $0x2c] sm:$0xf]
  %v36 = vld [vmem:[%s1 + $0x30] sm:$0xf]
  %v37 = vld [vmem:[%s1 + $0x34] sm:$0xf]
  %v38 = vld [vmem:[%s1 + $0x38] sm:$0xf]
  %v39 = vld [vmem:[%s1 + $0x3c] sm:$0xf]
  %v40 = vld [vmem:[%s1 + $0x40] sm:$0xf]
  %v41 = vld [vmem:[%s1 + $0x44] sm:$0xf]
  %v42 = vld [vmem:[%s1 + $0x48] sm:$0xf]
  %v43 = vld [vmem:[%s1 + $0x4c] sm:$0xf]
  %v44 = vld [vmem:[%s1 + $0x50] sm:$0xf]
  %v45 = vld [vmem:[%s1 + $0x54] sm:$0xf]
  %v46 = vld [vmem:[%s1 + $0x58] sm:$0xf]
  %v47 = vld [vmem:[%s1 + $0x5c] sm:$0xf]
  %v48 = vld [vmem:[%s1 + $0x60] sm:$0xf]
  %v49 = vld [vmem:[%s1 + $0x64] sm:$0xf]
  %v50 = vld [vmem:[%s1 + $0x68] sm:$0xf]
  %v51 = vld [vmem:[%s1 + $0x6c] sm:$0xf]
  %v52 = vld [vmem:[%s1 + $0x70] sm:$0xf]
  %v53 = vld [vmem:[%s1 + $0x74] sm:$0xf]
  %v54 = vld [vmem:[%s1 + $0x78] sm:$0xf]
  %v55 = vld [vmem:[%s1 + $0x7c] sm:$0xf]
  %v56 = vld [vmem:[%s1 + $0x80] sm:$0xf]
  %v57 = vld [vmem:[%s1 + $0x84] sm:$0xf]
  %v58 = vld [vmem:[%s1 + $0x88] sm:$0xf]
  %v59 = vld [vmem:[%s1 + $0x8c] sm:$0xf]
  %v60 = vld [vmem:[%s1 + $0x90] sm:$0xf]
  %v61 = vld [vmem:[%s1 + $0x94] sm:$0xf]
  %v62 = vld [vmem:[%s1 + $0x98] sm:$0xf]
  %v63 = vld [vmem:[%s1 + $0x9c] sm:$0xf]
  %v64 = vld [vmem:[%s1 + $0xa0] sm:$0xf]
  %v65 = vld [vmem:[%s1 + $0xa4] sm:$0xf]
  %v66 = vld [vmem:[%s1 + $0xa8] sm:$0xf]
  %v67 = vld [vmem:[%s1 + $0xac] sm:$0xf]
  %v68 = vld [vmem:[%s1 + $0xb0] sm:$0xf]
  %v69 = vld [vmem:[%s1 + $0xb4] sm:$0xf]
  %v70 = vld [vmem:[%s1 + $0xb8] sm:$0xf]
  %v71 = vld [vmem:[%s1 + $0xbc] sm:$0xf]
  %v72 = vld [vmem:[%s1 + $0xc0] sm:$0xf]
  %v73 = vld [vmem:[%s1 + $0xc4] sm:$0xf]
  %v74 = vld [vmem:[%s1 + $0xc8] sm:$0xf]
  %v75 = vld [vmem:[%s1 + $0xcc] sm:$0xf]
  %v76 = vld [vmem:[%s1 + $0xd0] sm:$0xf]
  %v77 = vld [vmem:[%s1 + $0xd4] sm:$0xf]
  %v78 = vld [vmem:[%s1 + $0xd8] sm:$0xf]
  %v79 = vld [vmem:[%s1 + $0xdc] sm:$0xf]
  %v80 = vld [vmem:[%s1 + $0xe0] sm:$0xf]
  %v81 = vld [vmem:[%s1 + $0xe4] sm:$0xf]
  %v82 = vld [vmem:[%s1 + $0xe8] sm:$0xf]
  %v83 = vld [vmem:[%s1 + $0xec] sm:$0xf]
  %v84 = vld [vmem:[%s1 + $0xf0] sm:$0xf]
  %v85 = vld [vmem:[%s1 + $0xf4] sm:$0xf]
  %v86 = vld [vmem:[%s1 + $0xf8] sm:$0xf]
  %v87 = vld [vmem:[%s1 + $0xfc] sm:$0xf]
  %v88 = vld [vmem:[%s1 + $0x100] sm:$0xf]
  %v89 = vld [vmem:[%s1 + $0x104] sm:$0xf]
  %v90 = vld [vmem:[%s1 + $0x108] sm:$0xf]
  %v91 = vld [vmem:[%s1 + $0x10c] sm:$0xf]
  %v92 = vld [vmem:[%s1 + $0x110] sm:$0xf]
  %v93 = vld [vmem:[%s1 + $0x114] sm:$0xf]
  %v94 = vld [vmem:[%s1 + $0x118] sm:$0xf]
  %v95 = vld [vmem:[%s1 + $0x11c] sm:$0xf]
  %v96 = vld [vmem:[%s1 + $0x120] sm:$0xf]
  %v97 = vld [vmem:[%s1 + $0x124] sm:$0xf]
  %v98 = vld [vmem:[%s1 + $0x128] sm:$0xf]
  %v99 = vld [vmem:[%s1 + $0x12c] sm:$0xf]
  %v100 = vld [vmem:[%s1 + $0x130] sm:$0xf]
  %v101 = vld [vmem:[%s1 + $0x134] sm:$0xf]
  %v102 = vld [vmem:[%s1 + $0x138] sm:$0xf]
  %v103 = vld [vmem:[%s1 + $0x13c] sm:$0xf]
  %v104 = vld [vmem:[%s1 + $0x140] sm:$0xf]
  %v105 = vld [vmem:[%s1 + $0x144] sm:$0xf]
  %v106 = vld [vmem:[%s1 + $0x148] sm:$0xf]
  %v107 = vld [vmem:[%s1 + $0x14c] sm:$0xf]
  %v108 = vld [vmem:[%s1 + $0x150] sm:$0xf]
  %v109 = vld [vmem:[%s1 + $0x154] sm:$0xf]
  %v110 = vld [vmem:[%s1 + $0x158] sm:$0xf]
  %v111 = vld [vmem:[%s1 + $0x15c] sm:$0xf]
  %v112 = vld [vmem:[%s1 + $0x160] sm:$0xf]
  %v113 = vld [vmem:[%s1 + $0x164] sm:$0xf]
  %v114 = vld [vmem:[%s1 + $0x168] sm:$0xf]
  %v115 = vld [vmem:[%s1 + $0x16c] sm:$0xf]
  %v116 = vld [vmem:[%s1 + $0x170] sm:$0xf]
  %v117 = vld [vmem:[%s1 + $0x174] sm:$0xf]
  %v118 = vld [vmem:[%s1 + $0x178] sm:$0xf]
  %v119 = vld [vmem:[%s1 + $0x17c] sm:$0xf]
  %v120 = vld [vmem:[%s1 + $0x180] sm:$0xf]
  %v121 = vld [vmem:[%s1 + $0x184] sm:$0xf]
  %v122 = vld [vmem:[%s1 + $0x188] sm:$0xf]
  %v123 = vld [vmem:[%s1 + $0x18c] sm:$0xf]
  %v124 = vld [vmem:[%s1 + $0x190] sm:$0xf]
  %v125 = vld [vmem:[%s1 + $0x194] sm:$0xf]
  %v126 = vld [vmem:[%s1 + $0x198] sm:$0xf]
  %v127 = vld [vmem:[%s1 + $0x19c] sm:$0xf]
  %v128 = vld [vmem:[%s1 + $0x1a0] sm:$0xf]
  %v129 = vld [vmem:[%s1 + $0x1a4] sm:$0xf]
  %v130 = vld [vmem:[%s1 + $0x1a8] sm:$0xf]
  %v131 = vld [vmem:[%s1 + $0x1ac] sm:$0xf]
  %v132 = vld [vmem:[%s1 + $0x1b0] sm:$0xf]
  %v133 = vld [vmem:[%s1 + $0x1b4] sm:$0xf]
  %v134 = vld [vmem:[%s1 + $0x1b8] sm:$0xf]
  %v135 = vld [vmem:[%s1 + $0x1bc] sm:$0xf]
  %v136 = vld [vmem:[%s1 + $0x1c0] sm:$0xf]
  %v137 = vld [vmem:[%s1 + $0x1c4] sm:$0xf]
  %v138 = vld [vmem:[%s1 + $0x1c8] sm:$0xf]
  %v139 = vld [vmem:[%s1 + $0x1cc] sm:$0xf]
  %v140 = vld [vmem:[%s1 + $0x1d0] sm:$0xf]
  %v141 = vld [vmem:[%s1 + $0x1d4] sm:$0xf]
  %v142 = vld [vmem:[%s1 + $0x1d8] sm:$0xf]
  %v143 = vld [vmem:[%s1 + $0x1dc] sm:$0xf]
  %v144 = vld [vmem:[%s1 + $0x1e0] sm:$0xf]
  %v145 = vld [vmem:[%s1 + $0x1e4] sm:$0xf]
  %v146 = vld [vmem:[%s1 + $0x1e8] sm:$0xf]
  %v147 = vld [vmem:[%s1 + $0x1ec] sm:$0xf]
  %v148 = vld [vmem:[%s1 + $0x1f0] sm:$0xf]
  %v149 = vld [vmem:[%s1 + $0x1f4] sm:$0xf]
  %v150 = vld [vmem:[%s1 + $0x1f8] sm:$0xf]
  %v151 = vld [vmem:[%s1 + $0x1fc] sm:$0xf]
  %v152 = vld [vmem:[%s1 + $0x200] sm:$0xf]
  %v153 = vld [vmem:[%s1 + $0x204] sm:$0xf]
  %v154 = vld [vmem:[%s1 + $0x208] sm:$0xf]
  %v155 = vld [vmem:[%s1 + $0x20c] sm:$0xf]
  %v156 = vld [vmem:[%s1 + $0x210] sm:$0xf]
  %v157 = vld [vmem:[%s1 + $0x214] sm:$0xf]
  %v158 = vld [vmem:[%s1 + $0x218] sm:$0xf]
  %v159 = vld [vmem:[%s1 + $0x21c] sm:$0xf]
  %v160 = vld [vmem:[%s1 + $0x220] sm:$0xf]
  %v161 = vld [vmem:[%s1 + $0x224] sm:$0xf]
  %v162 = vld [vmem:[%s1 + $0x228] sm:$0xf]
  %v163 = vld [vmem:[%s1 + $0x22c] sm:$0xf]
  %v164 = vld [vmem:[%s1 + $0x230] sm:$0xf]
  %v165 = vld [vmem:[%s1 + $0x234] sm:$0xf]
  %v166 = vld [vmem:[%s1 + $0x238] sm:$0xf]
  %v167 = vld [vmem:[%s1 + $0x23c] sm:$0xf]
  %v168 = vld [vmem:[%s1 + $0x240] sm:$0xf]
  %v169 = vld [vmem:[%s1 + $0x244] sm:$0xf]
  %v170 = vld [vmem:[%s1 + $0x248] sm:$0xf]
  %v171 = vld [vmem:[%s1 + $0x24c] sm:$0xf]
  %v172 = vld [vmem:[%s1 + $0x250] sm:$0xf]
  %v173 = vld [vmem:[%s1 + $0x254] sm:$0xf]
  %v174 = vld [vmem:[%s1 + $0x258] sm:$0xf]
  %v175 = vld [vmem:[%s1 + $0x25c] sm:$0xf]
  %v176 = vld [vmem:[%s1 + $0x260] sm:$0xf]
  %v177 = vld [vmem:[%s1 + $0x264] sm:$0xf]
  %v178 = vld [vmem:[%s1 + $0x268] sm:$0xf]
  %v179 = vld [vmem:[%s1 + $0x26c] sm:$0xf]
  %v180 = vld [vmem:[%s1 + $0x270] sm:$0xf]
  %v181 = vld [vmem:[%s1 + $0x274] sm:$0xf]
  %v182 = vld [vmem:[%s1 + $0x278] sm:$0xf]
  %v183 = vld [vmem:[%s1 + $0x27c] sm:$0xf]
  %v184 = vld [vmem:[%s1 + $0x280] sm:$0xf]
  %v185 = vld [vmem:[%s1 + $0x284] sm:$0xf]
  %v186 = vld [vmem:[%s1 + $0x288] sm:$0xf]
  %v187 = vld [vmem:[%s1 + $0x28c] sm:$0xf]
  %v188 = vld [vmem:[%s1 + $0x290] sm:$0xf]
  %v189 = vld [vmem:[%s1 + $0x294] sm:$0xf]
  %v190 = vld [vmem:[%s1 + $0x298] sm:$0xf]
  %v191 = vld [vmem:[%s1 + $0x29c] sm:$0xf]
  %v192 = vld [vmem:[%s1 + $0x2a0] sm:$0xf]
  %v193 = vld [vmem:[%s1 + $0x2a4] sm:$0xf]
  %v194 = vld [vmem:[%s1 + $0x2a8] sm:$0xf]
  %v195 = vld [vmem:[%s1 + $0x2ac] sm:$0xf]
  %v196 = vld [vmem:[%s1 + $0x2b0] sm:$0xf]
  %v197 = vld [vmem:[%s1 + $0x2b4] sm:$0xf]
  %v198 = vld [vmem:[%s1 + $0x2b8] sm:$0xf]
  %v199 = vld [vmem:[%s1 + $0x2bc] sm:$0xf]
  %v200 = vld [vmem:[%s1 + $0x2c0] sm:$0xf]
  %v201 = vld [vmem:[%s1 + $0x2c4] sm:$0xf]
  %v202 = vld [vmem:[%s1 + $0x2c8] sm:$0xf]
  %v203 = vld [vmem:[%s1 + $0x2cc] sm:$0xf]
  %v204 = vld [vmem:[%s1 + $0x2d0] sm:$0xf]
  %v205 = vld [vmem:[%s1 + $0x2d4] sm:$0xf]
  %v206 = vld [vmem:[%s1 + $0x2d8] sm:$0xf]
  %v207 = vld [vmem:[%s1 + $0x2dc] sm:$0xf]
  %v208 = vld [vmem:[%s1 + $0x2e0] sm:$0xf]
  %v209 = vld [vmem:[%s1 + $0x2e4] sm:$0xf]
  %v210 = vld [vmem:[%s1 + $0x2e8] sm:$0xf]
  %v211 = vld [vmem:[%s1 + $0x2ec] sm:$0xf]
  %v212 = vld [vmem:[%s1 + $0x2f0] sm:$0xf]
  %v213 = vld [vmem:[%s1 + $0x2f4] sm:$0xf]
  %v214 = vld [vmem:[%s1 + $0x2f8] sm:$0xf]
  %v215 = vld [vmem:[%s1 + $0x2fc] sm:$0xf]
  %v216 = vld [vmem:[%s1 + $0x300] sm:$0xf]
  %v217 = vld [vmem:[%s1 + $0x304] sm:$0xf]
  %v218 = vld [vmem:[%s1 + $0x308] sm:$0xf]
  %v219 = vld [vmem:[%s1 + $0x30c] sm:$0xf]
  %v220 = vld [vmem:[%s1 + $0x310] sm:$0xf]
  %v221 = vld [vmem:[%s1 + $0x314] sm:$0xf]
  %v222 = vld [vmem:[%s1 + $0x318] sm:$0xf]
  %v223 = vld [vmem:[%s1 + $0x31c] sm:$0xf]
  %v224 = vld [vmem:[%s1 + $0x320] sm:$0xf]
  %v225 = vld [vmem:[%s1 + $0x324] sm:$0xf]
  %v226 = vld [vmem:[%s1 + $0x328] sm:$0xf]
  %v227 = vld [vmem:[%s1 + $0x32c] sm:$0xf]
  %v228 = vld [vmem:[%s1 + $0x330] sm:$0xf]
  %v229 = vld [vmem:[%s1 + $0x334] sm:$0xf]
  %v230 = vld [vmem:[%s1 + $0x338] sm:$0xf]
  %v231 = vld [vmem:[%s1 + $0x33c] sm:$0xf]
  %v232 = vld [vmem:[%s1 + $0x340] sm:$0xf]
  %v233 = vld [vmem:[%s1 + $0x344] sm:$0xf]
  %v234 = vld [vmem:[%s1 + $0x348] sm:$0xf]
  %v235 = vld [vmem:[%s1 + $0x34c] sm:$0xf]
  %v236 = vld [vmem:[%s1 + $0x350] sm:$0xf]
  %v237 = vld [vmem:[%s1 + $0x354] sm:$0xf]
  %v238 = vld [vmem:[%s1 + $0x358] sm:$0xf]
  %v239 = vld [vmem:[%s1 + $0x35c] sm:$0xf]
  %v240 = vld [vmem:[%s1 + $0x360] sm:$0xf]
  %v241 = vld [vmem:[%s1 + $0x364] sm:$0xf]
  %v242 = vld [vmem:[%s1 + $0x368] sm:$0xf]
  %v243 = vld [vmem:[%s1 + $0x36c] sm:$0xf]
  %v244 = vld [vmem:[%s1 + $0x370] sm:$0xf]
  %v245 = vld [vmem:[%s1 + $0x374] sm:$0xf]
  %v246 = vld [vmem:[%s1 + $0x378] sm:$0xf]
  %v247 = vld [vmem:[%s1 + $0x37c] sm:$0xf]
  %v248 = vld [vmem:[%s1 + $0x380] sm:$0xf]
  %v249 = vld [vmem:[%s1 + $0x384] sm:$0xf]
  %v250 = vld [vmem:[%s1 + $0x388] sm:$0xf]
  %v251 = vld [vmem:[%s1 + $0x38c] sm:$0xf]
  %v252 = vld [vmem:[%s1 + $0x390] sm:$0xf]
  %v253 = vld [vmem:[%s1 + $0x394] sm:$0xf]
  %v254 = vld [vmem:[%s1 + $0x398] sm:$0xf]
  %v255 = vld [vmem:[%s1 + $0x39c] sm:$0xf]
  %v256 = vld [vmem:[%s1 + $0x3a0] sm:$0xf]
  %v257 = vld [vmem:[%s1 + $0x3a4] sm:$0xf]
  %v258 = vld [vmem:[%s1 + $0x3a8] sm:$0xf]
  %v259 = vld [vmem:[%s1 + $0x3ac] sm:$0xf]
  %v260 = vld [vmem:[%s1 + $0x3b0] sm:$0xf]
  %v261 = vld [vmem:[%s1 + $0x3b4] sm:$0xf]
  %v262 = vld [vmem:[%s1 + $0x3b8] sm:$0xf]
  %v263 = vld [vmem:[%s1 + $0x3bc] sm:$0xf]
  %v264 = vld [vmem:[%s1 + $0x3c0] sm:$0xf]
  %v265 = vld [vmem:[%s1 + $0x3c4] sm:$0xf]
  %v266 = vld [vmem:[%s1 + $0x3c8] sm:$0xf]
  %v267 = vld [vmem:[%s1 + $0x3cc] sm:$0xf]
  %v268 = vld [vmem:[%s1 + $0x3d0] sm:$0xf]
  %v269 = vld [vmem:[%s1 + $0x3d4] sm:$0xf]
  %v270 = vld [vmem:[%s1 + $0x3d8] sm:$0xf]
  %v271 = vld [vmem:[%s1 + $0x3dc] sm:$0xf]
  %v272 = vld [vmem:[%s1 + $0x3e0] sm:$0xf]
  %v273 = vld [vmem:[%s1 + $0x3e4] sm:$0xf]
  %v274 = vld [vmem:[%s1 + $0x3e8] sm:$0xf]
  %v275 = vld [vmem:[%s1 + $0x3ec] sm:$0xf]
  %v276 = vld [vmem:[%s1 + $0x3f0] sm:$0xf]
  %v277 = vld [vmem:[%s1 + $0x3f4] sm:$0xf]
  %v278 = vld [vmem:[%s1 + $0x3f8] sm:$0xf]
  %v279 = vld [vmem:[%s1 + $0x3fc] sm:$0xf]
  %v280 = vld [vmem:[%s1 + $0x400] sm:$0xf]
  %v281 = vld [vmem:[%s1 + $0x404] sm:$0xf]
  %v282 = vld [vmem:[%s1 + $0x408] sm:$0xf]
  %v283 = vld [vmem:[%s1 + $0x40c] sm:$0xf]
  %v284 = vld [vmem:[%s1 + $0x410] sm:$0xf]
  %v285 = vld [vmem:[%s1 + $0x414] sm:$0xf]
  %v286 = vld [vmem:[%s1 + $0x418] sm:$0xf]
  %v287 = vld [vmem:[%s1 + $0x41c] sm:$0xf]
  %v288 = vld [vmem:[%s1 + $0x420] sm:$0xf]
  %v289 = vld [vmem:[%s1 + $0x424] sm:$0xf]
  %v290 = vld [vmem:[%s1 + $0x428] sm:$0xf]
  %v291 = vld [vmem:[%s1 + $0x42c] sm:$0xf]
  %v292 = vld [vmem:[%s1 + $0x430] sm:$0xf]
  %v293 = vld [vmem:[%s1 + $0x434] sm:$0xf]
  %v294 = vld [vmem:[%s1 + $0x438] sm:$0xf]
  %v295 = vld [vmem:[%s1 + $0x43c] sm:$0xf]
  %v296 = vld [vmem:[%s1 + $0x440] sm:$0xf]
  %v297 = vld [vmem:[%s1 + $0x444] sm:$0xf]
  %v298 = vld [vmem:[%s1 + $0x448] sm:$0xf]
  %v299 = vld [vmem:[%s1 + $0x44c] sm:$0xf]
  %v300 = vld [vmem:[%s1 + $0x450] sm:$0xf]
  %v301 = vld [vmem:[%s1 + $0x454] sm:$0xf]
  %v302 = vld [vmem:[%s1 + $0x458] sm:$0xf]
  %v303 = vld [vmem:[%s1 + $0x45c] sm:$0xf]
  %v304 = vld [vmem:[%s1 + $0x460] sm:$0xf]
  %v305 = vld [vmem:[%s1 + $0x464] sm:$0xf]
  %v306 = vld [vmem:[%s1 + $0x468] sm:$0xf]
  %v307 = vld [vmem:[%s1 + $0x46c] sm:$0xf]
  %v308 = vld [vmem:[%s1 + $0x470] sm:$0xf]
  %v309 = vld [vmem:[%s1 + $0x474] sm:$0xf]
  %v310 = vld [vmem:[%s1 + $0x478] sm:$0xf]
  %v311 = vld [vmem:[%s1 + $0x47c] sm:$0xf]
  %v321 = vunpack.c.l.b16 %v15
  %v322 = vunpack.c.h.b16 %v15
  %v323 = vunpack.c.l.b16 %v16
  %v324 = vunpack.c.h.b16 %v16
  %v325 = vunpack.c.l.b16 %v17
  %v326 = vunpack.c.h.b16 %v17
  %v327 = vunpack.c.l.b16 %v18
  %v328 = vunpack.c.h.b16 %v18
  %v329 = vunpack.c.l.b16 %v19
  %v330 = vunpack.c.h.b16 %v19
  %v331 = vunpack.c.l.b16 %v20
  %v332 = vunpack.c.h.b16 %v20
  %v333 = vunpack.c.l.b16 %v21
  %v334 = vunpack.c.h.b16 %v21
  %v335 = vunpack.c.l.b16 %v22
  %v336 = vunpack.c.h.b16 %v22
  %v337 = vunpack.c.l.b16 %v23
  %v338 = vunpack.c.h.b16 %v23
  %v339 = vpack.c.b16 %v321, %v321
  %v340 = vpack.c.b16 %v322, %v322
  %v341 = vpack.c.b16 %v323, %v323
  %v342 = vpack.c.b16 %v324, %v324
  %v343 = vpack.c.b16 %v325, %v325
  %v344 = vpack.c.b16 %v326, %v326
  %v345 = vpack.c.b16 %v327, %v327
  %v346 = vpack.c.b16 %v328, %v328
  %v347 = vpack.c.b16 %v329, %v329
  %v348 = vpack.c.b16 %v330, %v330
  %v349 = vpack.c.b16 %v331, %v331
  %v350 = vpack.c.b16 %v332, %v332
  %v351 = vpack.c.b16 %v333, %v333
  %v352 = vpack.c.b16 %v334, %v334
  %v353 = vpack.c.b16 %v335, %v335
  %v354 = vpack.c.b16 %v336, %v336
  %v355 = vpack.c.b16 %v337, %v337
  %v356 = vpack.c.b16 %v338, %v338
  %v663 = vunpack.c.l.b16 %v24
  %v664 = vunpack.c.l.b16 %v25
  %v665 = vunpack.c.l.b16 %v26
  %v666 = vunpack.c.l.b16 %v27
  %v667 = vunpack.c.l.b16 %v28
  %v668 = vunpack.c.l.b16 %v29
  %v669 = vunpack.c.l.b16 %v30
  %v670 = vunpack.c.l.b16 %v31
  %v671 = vunpack.c.l.b16 %v32
  %v672 = vunpack.c.l.b16 %v33
  %v673 = vunpack.c.l.b16 %v34
  %v674 = vunpack.c.l.b16 %v35
  %v675 = vunpack.c.l.b16 %v36
  %v676 = vunpack.c.l.b16 %v37
  %v677 = vunpack.c.l.b16 %v38
  %v678 = vunpack.c.l.b16 %v39
  %v679 = vunpack.c.l.b16 %v40
  %v680 = vunpack.c.l.b16 %v41
  %v681 = vunpack.c.l.b16 %v42
  %v682 = vunpack.c.l.b16 %v43
  %v683 = vunpack.c.l.b16 %v44
  %v684 = vunpack.c.l.b16 %v45
  %v685 = vunpack.c.l.b16 %v46
  %v686 = vunpack.c.l.b16 %v47
  %v687 = vunpack.c.l.b16 %v48
  %v688 = vunpack.c.l.b16 %v49
  %v689 = vunpack.c.l.b16 %v50
  %v690 = vunpack.c.l.b16 %v51
  %v691 = vunpack.c.l.b16 %v52
  %v692 = vunpack.c.l.b16 %v53
  %v693 = vunpack.c.l.b16 %v54
  %v694 = vunpack.c.l.b16 %v55
  %v695 = vunpack.c.l.b16 %v56
  %v696 = vunpack.c.l.b16 %v57
  %v697 = vunpack.c.l.b16 %v58
  %v698 = vunpack.c.l.b16 %v59
  %v699 = vunpack.c.l.b16 %v60
  %v700 = vunpack.c.l.b16 %v61
  %v701 = vunpack.c.l.b16 %v62
  %v702 = vunpack.c.l.b16 %v63
  %v703 = vunpack.c.l.b16 %v64
  %v704 = vunpack.c.l.b16 %v65
  %v705 = vunpack.c.l.b16 %v66
  %v706 = vunpack.c.l.b16 %v67
  %v707 = vunpack.c.l.b16 %v68
  %v708 = vunpack.c.l.b16 %v69
  %v709 = vunpack.c.l.b16 %v70
  %v710 = vunpack.c.l.b16 %v71
  %v711 = vunpack.c.l.b16 %v72
  %v712 = vunpack.c.l.b16 %v73
  %v713 = vunpack.c.l.b16 %v74
  %v714 = vunpack.c.l.b16 %v75
  %v715 = vunpack.c.l.b16 %v76
  %v716 = vunpack.c.l.b16 %v77
  %v717 = vunpack.c.l.b16 %v78
  %v718 = vunpack.c.l.b16 %v79
  %v719 = vunpack.c.l.b16 %v80
  %v720 = vunpack.c.l.b16 %v81
  %v721 = vunpack.c.l.b16 %v82
  %v722 = vunpack.c.l.b16 %v83
  %v723 = vunpack.c.l.b16 %v84
  %v724 = vunpack.c.l.b16 %v85
  %v725 = vunpack.c.l.b16 %v86
  %v726 = vunpack.c.l.b16 %v87
  %v727 = vunpack.c.l.b16 %v88
  %v728 = vunpack.c.l.b16 %v89
  %v729 = vunpack.c.l.b16 %v90
  %v730 = vunpack.c.l.b16 %v91
  %v731 = vunpack.c.l.b16 %v92
  %v732 = vunpack.c.l.b16 %v93
  %v733 = vunpack.c.l.b16 %v94
  %v734 = vunpack.c.l.b16 %v95
  %v735 = vunpack.c.l.b16 %v96
  %v736 = vunpack.c.l.b16 %v97
  %v737 = vunpack.c.l.b16 %v98
  %v738 = vunpack.c.l.b16 %v99
  %v739 = vunpack.c.l.b16 %v100
  %v740 = vunpack.c.l.b16 %v101
  %v741 = vunpack.c.l.b16 %v102
  %v742 = vunpack.c.l.b16 %v103
  %v743 = vunpack.c.l.b16 %v104
  %v744 = vunpack.c.l.b16 %v105
  %v745 = vunpack.c.l.b16 %v106
  %v746 = vunpack.c.l.b16 %v107
  %v747 = vunpack.c.l.b16 %v108
  %v748 = vunpack.c.l.b16 %v109
  %v749 = vunpack.c.l.b16 %v110
  %v750 = vunpack.c.l.b16 %v111
  %v751 = vunpack.c.l.b16 %v112
  %v752 = vunpack.c.l.b16 %v113
  %v753 = vunpack.c.l.b16 %v114
  %v754 = vunpack.c.l.b16 %v115
  %v755 = vunpack.c.l.b16 %v116
  %v756 = vunpack.c.l.b16 %v117
  %v757 = vunpack.c.l.b16 %v118
  %v758 = vunpack.c.l.b16 %v119
  %v759 = vunpack.c.l.b16 %v120
  %v760 = vunpack.c.l.b16 %v121
  %v761 = vunpack.c.l.b16 %v122
  %v762 = vunpack.c.l.b16 %v123
  %v763 = vunpack.c.l.b16 %v124
  %v764 = vunpack.c.l.b16 %v125
  %v765 = vunpack.c.l.b16 %v126
  %v766 = vunpack.c.l.b16 %v127
  %v767 = vunpack.c.l.b16 %v128
  %v768 = vunpack.c.l.b16 %v129
  %v769 = vunpack.c.l.b16 %v130
  %v770 = vunpack.c.l.b16 %v131
  %v771 = vunpack.c.l.b16 %v132
  %v772 = vunpack.c.l.b16 %v133
  %v773 = vunpack.c.l.b16 %v134
  %v774 = vunpack.c.l.b16 %v135
  %v775 = vunpack.c.l.b16 %v136
  %v776 = vunpack.c.l.b16 %v137
  %v777 = vunpack.c.l.b16 %v138
  %v778 = vunpack.c.l.b16 %v139
  %v779 = vunpack.c.l.b16 %v140
  %v780 = vunpack.c.l.b16 %v141
  %v781 = vunpack.c.l.b16 %v142
  %v782 = vunpack.c.l.b16 %v143
  %v783 = vunpack.c.l.b16 %v144
  %v784 = vunpack.c.l.b16 %v145
  %v785 = vunpack.c.l.b16 %v146
  %v786 = vunpack.c.l.b16 %v147
  %v787 = vunpack.c.l.b16 %v148
  %v788 = vunpack.c.l.b16 %v149
  %v789 = vunpack.c.l.b16 %v150
  %v790 = vunpack.c.l.b16 %v151
  %v791 = vunpack.c.l.b16 %v152
  %v792 = vunpack.c.l.b16 %v153
  %v793 = vunpack.c.l.b16 %v154
  %v794 = vunpack.c.l.b16 %v155
  %v795 = vunpack.c.l.b16 %v156
  %v796 = vunpack.c.l.b16 %v157
  %v797 = vunpack.c.l.b16 %v158
  %v798 = vunpack.c.l.b16 %v159
  %v799 = vunpack.c.l.b16 %v160
  %v800 = vunpack.c.l.b16 %v161
  %v801 = vunpack.c.l.b16 %v162
  %v802 = vunpack.c.l.b16 %v163
  %v803 = vunpack.c.l.b16 %v164
  %v804 = vunpack.c.l.b16 %v165
  %v805 = vunpack.c.l.b16 %v166
  %v806 = vunpack.c.l.b16 %v167
  %v807 = vunpack.c.l.b16 %v168
  %v808 = vunpack.c.l.b16 %v169
  %v809 = vunpack.c.l.b16 %v170
  %v810 = vunpack.c.l.b16 %v171
  %v811 = vunpack.c.l.b16 %v172
  %v812 = vunpack.c.l.b16 %v173
  %v813 = vunpack.c.l.b16 %v174
  %v814 = vunpack.c.l.b16 %v175
  %v815 = vunpack.c.l.b16 %v176
  %v816 = vunpack.c.l.b16 %v177
  %v817 = vunpack.c.l.b16 %v178
  %v818 = vunpack.c.l.b16 %v179
  %v819 = vunpack.c.l.b16 %v180
  %v820 = vunpack.c.l.b16 %v181
  %v821 = vunpack.c.l.b16 %v182
  %v822 = vunpack.c.l.b16 %v183
  %v823 = vunpack.c.l.b16 %v184
  %v824 = vunpack.c.l.b16 %v185
  %v825 = vunpack.c.l.b16 %v186
  %v826 = vunpack.c.l.b16 %v187
  %v827 = vunpack.c.l.b16 %v188
  %v828 = vunpack.c.l.b16 %v189
  %v829 = vunpack.c.l.b16 %v190
  %v830 = vunpack.c.l.b16 %v191
  %v831 = vunpack.c.l.b16 %v192
  %v832 = vunpack.c.l.b16 %v193
  %v833 = vunpack.c.l.b16 %v194
  %v834 = vunpack.c.l.b16 %v195
  %v835 = vunpack.c.l.b16 %v196
  %v836 = vunpack.c.l.b16 %v197
  %v837 = vunpack.c.l.b16 %v198
  %v838 = vunpack.c.l.b16 %v199
  %v839 = vunpack.c.l.b16 %v200
  %v840 = vunpack.c.l.b16 %v201
  %v841 = vunpack.c.l.b16 %v202
  %v842 = vunpack.c.l.b16 %v203
  %v843 = vunpack.c.l.b16 %v204
  %v844 = vunpack.c.l.b16 %v205
  %v845 = vunpack.c.l.b16 %v206
  %v846 = vunpack.c.l.b16 %v207
  %v847 = vunpack.c.l.b16 %v208
  %v848 = vunpack.c.l.b16 %v209
  %v849 = vunpack.c.l.b16 %v210
  %v850 = vunpack.c.l.b16 %v211
  %v851 = vunpack.c.l.b16 %v212
  %v852 = vunpack.c.l.b16 %v213
  %v853 = vunpack.c.l.b16 %v214
  %v854 = vunpack.c.l.b16 %v215
  %v855 = vunpack.c.l.b16 %v216
  %v856 = vunpack.c.l.b16 %v217
  %v857 = vunpack.c.l.b16 %v218
  %v858 = vunpack.c.l.b16 %v219
  %v859 = vunpack.c.l.b16 %v220
  %v860 = vunpack.c.l.b16 %v221
  %v861 = vunpack.c.l.b16 %v222
  %v862 = vunpack.c.l.b16 %v223
  %v863 = vunpack.c.l.b16 %v224
  %v864 = vunpack.c.l.b16 %v225
  %v865 = vunpack.c.l.b16 %v226
  %v866 = vunpack.c.l.b16 %v227
  %v867 = vunpack.c.l.b16 %v228
  %v868 = vunpack.c.l.b16 %v229
  %v869 = vunpack.c.l.b16 %v230
  %v870 = vunpack.c.l.b16 %v231
  %v871 = vunpack.c.l.b16 %v232
  %v872 = vunpack.c.l.b16 %v233
  %v873 = vunpack.c.l.b16 %v234
  %v874 = vunpack.c.l.b16 %v235
  %v875 = vunpack.c.l.b16 %v236
  %v876 = vunpack.c.l.b16 %v237
  %v877 = vunpack.c.l.b16 %v238
  %v878 = vunpack.c.l.b16 %v239
  %v879 = vunpack.c.l.b16 %v240
  %v880 = vunpack.c.l.b16 %v241
  %v881 = vunpack.c.l.b16 %v242
  %v882 = vunpack.c.l.b16 %v243
  %v883 = vunpack.c.l.b16 %v244
  %v884 = vunpack.c.l.b16 %v245
  %v885 = vunpack.c.l.b16 %v246
  %v886 = vunpack.c.l.b16 %v247
  %v887 = vunpack.c.l.b16 %v248
  %v888 = vunpack.c.l.b16 %v249
  %v889 = vunpack.c.l.b16 %v250
  %v890 = vunpack.c.l.b16 %v251
  %v891 = vunpack.c.l.b16 %v252
  %v892 = vunpack.c.l.b16 %v253
  %v893 = vunpack.c.l.b16 %v254
  %v894 = vunpack.c.l.b16 %v255
  %v895 = vunpack.c.l.b16 %v256
  %v896 = vunpack.c.l.b16 %v257
  %v897 = vunpack.c.l.b16 %v258
  %v898 = vunpack.c.l.b16 %v259
  %v899 = vunpack.c.l.b16 %v260
  %v900 = vunpack.c.l.b16 %v261
  %v901 = vunpack.c.l.b16 %v262
  %v902 = vunpack.c.l.b16 %v263
  %v903 = vunpack.c.l.b16 %v264
  %v904 = vunpack.c.l.b16 %v265
  %v905 = vunpack.c.l.b16 %v266
  %v906 = vunpack.c.l.b16 %v267
  %v907 = vunpack.c.l.b16 %v268
  %v908 = vunpack.c.l.b16 %v269
  %v909 = vunpack.c.l.b16 %v270
  %v910 = vunpack.c.l.b16 %v271
  %v911 = vunpack.c.l.b16 %v272
  %v912 = vunpack.c.l.b16 %v273
  %v913 = vunpack.c.l.b16 %v274
  %v914 = vunpack.c.l.b16 %v275
  %v915 = vunpack.c.l.b16 %v276
  %v916 = vunpack.c.l.b16 %v277
  %v917 = vunpack.c.l.b16 %v278
  %v918 = vunpack.c.l.b16 %v279
  %v919 = vunpack.c.l.b16 %v280
  %v920 = vunpack.c.l.b16 %v281
  %v921 = vunpack.c.l.b16 %v282
  %v922 = vunpack.c.l.b16 %v283
  %v923 = vunpack.c.l.b16 %v284
  %v924 = vunpack.c.l.b16 %v285
  %v925 = vunpack.c.l.b16 %v286
  %v926 = vunpack.c.l.b16 %v287
  %v927 = vunpack.c.l.b16 %v288
  %v928 = vunpack.c.l.b16 %v289
  %v929 = vunpack.c.l.b16 %v290
  %v930 = vunpack.c.l.b16 %v291
  %v931 = vunpack.c.l.b16 %v292
  %v932 = vunpack.c.l.b16 %v293
  %v933 = vunpack.c.l.b16 %v294
  %v934 = vunpack.c.l.b16 %v295
  %v935 = vunpack.c.l.b16 %v296
  %v936 = vunpack.c.l.b16 %v297
  %v937 = vunpack.c.l.b16 %v298
  %v938 = vunpack.c.l.b16 %v299
  %v939 = vunpack.c.l.b16 %v300
  %v940 = vunpack.c.l.b16 %v301
  %v941 = vunpack.c.l.b16 %v302
  %v942 = vunpack.c.l.b16 %v303
  %v943 = vunpack.c.l.b16 %v304
  %v944 = vunpack.c.l.b16 %v305
  %v945 = vunpack.c.l.b16 %v306
  %v946 = vunpack.c.l.b16 %v307
  %v947 = vunpack.c.l.b16 %v308
  %v948 = vunpack.c.l.b16 %v309
  %v949 = vunpack.c.l.b16 %v310
  %v950 = vunpack.c.l.b16 %v311
  %v951 = vpack.c.b16 %v664, %v663
  %v952 = vpack.c.b16 %v666, %v665
  %v953 = vpack.c.b16 %v668, %v667
  %v954 = vpack.c.b16 %v670, %v669
  %v955 = vpack.c.b16 %v672, %v671
  %v956 = vpack.c.b16 %v674, %v673
  %v957 = vpack.c.b16 %v676, %v675
  %v958 = vpack.c.b16 %v678, %v677
  %v959 = vpack.c.b16 %v680, %v679
  %v960 = vpack.c.b16 %v682, %v681
  %v961 = vpack.c.b16 %v684, %v683
  %v962 = vpack.c.b16 %v686, %v685
  %v963 = vpack.c.b16 %v688, %v687
  %v964 = vpack.c.b16 %v690, %v689
  %v965 = vpack.c.b16 %v692, %v691
  %v966 = vpack.c.b16 %v694, %v693
  %v967 = vpack.c.b16 %v696, %v695
  %v968 = vpack.c.b16 %v698, %v697
  %v969 = vpack.c.b16 %v700, %v699
  %v970 = vpack.c.b16 %v702, %v701
  %v971 = vpack.c.b16 %v704, %v703
  %v972 = vpack.c.b16 %v706, %v705
  %v973 = vpack.c.b16 %v708, %v707
  %v974 = vpack.c.b16 %v710, %v709
  %v975 = vpack.c.b16 %v712, %v711
  %v976 = vpack.c.b16 %v714, %v713
  %v977 = vpack.c.b16 %v716, %v715
  %v978 = vpack.c.b16 %v718, %v717
  %v979 = vpack.c.b16 %v720, %v719
  %v980 = vpack.c.b16 %v722, %v721
  %v981 = vpack.c.b16 %v724, %v723
  %v982 = vpack.c.b16 %v726, %v725
  %v983 = vpack.c.b16 %v728, %v727
  %v984 = vpack.c.b16 %v730, %v729
  %v985 = vpack.c.b16 %v732, %v731
  %v986 = vpack.c.b16 %v734, %v733
  %v987 = vpack.c.b16 %v736, %v735
  %v988 = vpack.c.b16 %v738, %v737
  %v989 = vpack.c.b16 %v740, %v739
  %v990 = vpack.c.b16 %v742, %v741
  %v991 = vpack.c.b16 %v744, %v743
  %v992 = vpack.c.b16 %v746, %v745
  %v993 = vpack.c.b16 %v748, %v747
  %v994 = vpack.c.b16 %v750, %v749
  %v995 = vpack.c.b16 %v752, %v751
  %v996 = vpack.c.b16 %v754, %v753
  %v997 = vpack.c.b16 %v756, %v755
  %v998 = vpack.c.b16 %v758, %v757
  %v999 = vpack.c.b16 %v760, %v759
  %v1000 = vpack.c.b16 %v762, %v761
  %v1001 = vpack.c.b16 %v764, %v763
  %v1002 = vpack.c.b16 %v766, %v765
  %v1003 = vpack.c.b16 %v768, %v767
  %v1004 = vpack.c.b16 %v770, %v769
  %v1005 = vpack.c.b16 %v772, %v771
  %v1006 = vpack.c.b16 %v774, %v773
  %v1007 = vpack.c.b16 %v776, %v775
  %v1008 = vpack.c.b16 %v778, %v777
  %v1009 = vpack.c.b16 %v780, %v779
  %v1010 = vpack.c.b16 %v782, %v781
  %v1011 = vpack.c.b16 %v784, %v783
  %v1012 = vpack.c.b16 %v786, %v785
  %v1013 = vpack.c.b16 %v788, %v787
  %v1014 = vpack.c.b16 %v790, %v789
  %v1015 = vpack.c.b16 %v792, %v791
  %v1016 = vpack.c.b16 %v794, %v793
  %v1017 = vpack.c.b16 %v796, %v795
  %v1018 = vpack.c.b16 %v798, %v797
  %v1019 = vpack.c.b16 %v800, %v799
  %v1020 = vpack.c.b16 %v802, %v801
  %v1021 = vpack.c.b16 %v804, %v803
  %v1022 = vpack.c.b16 %v806, %v805
  %v1023 = vpack.c.b16 %v808, %v807
  %v1024 = vpack.c.b16 %v810, %v809
  %v1025 = vpack.c.b16 %v812, %v811
  %v1026 = vpack.c.b16 %v814, %v813
  %v1027 = vpack.c.b16 %v816, %v815
  %v1028 = vpack.c.b16 %v818, %v817
  %v1029 = vpack.c.b16 %v820, %v819
  %v1030 = vpack.c.b16 %v822, %v821
  %v1031 = vpack.c.b16 %v824, %v823
  %v1032 = vpack.c.b16 %v826, %v825
  %v1033 = vpack.c.b16 %v828, %v827
  %v1034 = vpack.c.b16 %v830, %v829
  %v1035 = vpack.c.b16 %v832, %v831
  %v1036 = vpack.c.b16 %v834, %v833
  %v1037 = vpack.c.b16 %v836, %v835
  %v1038 = vpack.c.b16 %v838, %v837
  %v1039 = vpack.c.b16 %v840, %v839
  %v1040 = vpack.c.b16 %v842, %v841
  %v1041 = vpack.c.b16 %v844, %v843
  %v1042 = vpack.c.b16 %v846, %v845
  %v1043 = vpack.c.b16 %v848, %v847
  %v1044 = vpack.c.b16 %v850, %v849
  %v1045 = vpack.c.b16 %v852, %v851
  %v1046 = vpack.c.b16 %v854, %v853
  %v1047 = vpack.c.b16 %v856, %v855
  %v1048 = vpack.c.b16 %v858, %v857
  %v1049 = vpack.c.b16 %v860, %v859
  %v1050 = vpack.c.b16 %v862, %v861
  %v1051 = vpack.c.b16 %v864, %v863
  %v1052 = vpack.c.b16 %v866, %v865
  %v1053 = vpack.c.b16 %v868, %v867
  %v1054 = vpack.c.b16 %v870, %v869
  %v1055 = vpack.c.b16 %v872, %v871
  %v1056 = vpack.c.b16 %v874, %v873
  %v1057 = vpack.c.b16 %v876, %v875
  %v1058 = vpack.c.b16 %v878, %v877
  %v1059 = vpack.c.b16 %v880, %v879
  %v1060 = vpack.c.b16 %v882, %v881
  %v1061 = vpack.c.b16 %v884, %v883
  %v1062 = vpack.c.b16 %v886, %v885
  %v1063 = vpack.c.b16 %v888, %v887
  %v1064 = vpack.c.b16 %v890, %v889
  %v1065 = vpack.c.b16 %v892, %v891
  %v1066 = vpack.c.b16 %v894, %v893
  %v1067 = vpack.c.b16 %v896, %v895
  %v1068 = vpack.c.b16 %v898, %v897
  %v1069 = vpack.c.b16 %v900, %v899
  %v1070 = vpack.c.b16 %v902, %v901
  %v1071 = vpack.c.b16 %v904, %v903
  %v1072 = vpack.c.b16 %v906, %v905
  %v1073 = vpack.c.b16 %v908, %v907
  %v1074 = vpack.c.b16 %v910, %v909
  %v1075 = vpack.c.b16 %v912, %v911
  %v1076 = vpack.c.b16 %v914, %v913
  %v1077 = vpack.c.b16 %v916, %v915
  %v1078 = vpack.c.b16 %v918, %v917
  %v1079 = vpack.c.b16 %v920, %v919
  %v1080 = vpack.c.b16 %v922, %v921
  %v1081 = vpack.c.b16 %v924, %v923
  %v1082 = vpack.c.b16 %v926, %v925
  %v1083 = vpack.c.b16 %v928, %v927
  %v1084 = vpack.c.b16 %v930, %v929
  %v1085 = vpack.c.b16 %v932, %v931
  %v1086 = vpack.c.b16 %v934, %v933
  %v1087 = vpack.c.b16 %v936, %v935
  %v1088 = vpack.c.b16 %v938, %v937
  %v1089 = vpack.c.b16 %v940, %v939
  %v1090 = vpack.c.b16 %v942, %v941
  %v1091 = vpack.c.b16 %v944, %v943
  %v1092 = vpack.c.b16 %v946, %v945
  %v1093 = vpack.c.b16 %v948, %v947
  %v1094 = vpack.c.b16 %v950, %v949
  %1239 = vmatprep.subr.bf16.mxu0 0
  %1240 = vmatpush1.bf16.msra.mxu0 %v951
  %1241 = vmatprep.subr.bf16.mxu0 0
  %1242 = vmatpush1.bf16.msra.mxu0 %v952
  %1243 = vmatprep.subr.bf16.mxu0 0
  %1244 = vmatpush1.bf16.msra.mxu0 %v953
  %1245 = vmatprep.subr.bf16.mxu0 0
  %1246 = vmatpush1.bf16.msra.mxu0 %v954
  %1247 = vmatprep.subr.bf16.mxu0 0
  %1248 = vmatpush1.bf16.msra.mxu0 %v955
  %1249 = vmatprep.subr.bf16.mxu0 0
  %1250 = vmatpush1.bf16.msra.mxu0 %v956
  %1251 = vmatprep.subr.bf16.mxu0 0
  %1252 = vmatpush1.bf16.msra.mxu0 %v957
  %1253 = vmatprep.subr.bf16.mxu0 0
  %1254 = vmatpush1.bf16.msra.mxu0 %v958
  %1255 = vmatprep.subr.bf16.mxu0 0
  %1256 = vmatpush1.bf16.msra.mxu0 %v959
  %1257 = vmatprep.subr.bf16.mxu0 0
  %1258 = vmatpush1.bf16.msra.mxu0 %v960
  %1259 = vmatprep.subr.bf16.mxu0 0
  %1260 = vmatpush1.bf16.msra.mxu0 %v961
  %1261 = vmatprep.subr.bf16.mxu0 0
  %1262 = vmatpush1.bf16.msra.mxu0 %v962
  %1263 = vmatprep.subr.bf16.mxu0 0
  %1264 = vmatpush1.bf16.msra.mxu0 %v963
  %1265 = vmatprep.subr.bf16.mxu0 0
  %1266 = vmatpush1.bf16.msra.mxu0 %v964
  %1267 = vmatprep.subr.bf16.mxu0 0
  %1268 = vmatpush1.bf16.msra.mxu0 %v965
  %1269 = vmatprep.subr.bf16.mxu0 0
  %1270 = vmatpush1.bf16.msra.mxu0 %v966
  %1271 = vmatprep.mubr.bf16.mxu0 %v340
  %1272 = vmatmul.mubr.bf16.gmra.mrb[0].mxu0 %v339
  %v1273 = vpop.f32.mrb[0].mxu0
  %v1274 = vadd.f32 0.0, %v1273
  %v1275 = vpop.f32.mrb[0].mxu0
  %v1276 = vpop.f32.mrb[0].mxu0
  %v1277 = vpop.f32.mrb[0].mxu0
  %1278 = vdwg.mxu0
  %1279 = vmatprep.subr.bf16.mxu0 0
  %1280 = vmatpush1.bf16.msra.mxu0 %v967
  %1281 = vmatprep.subr.bf16.mxu0 0
  %1282 = vmatpush1.bf16.msra.mxu0 %v968
  %1283 = vmatprep.subr.bf16.mxu0 0
  %1284 = vmatpush1.bf16.msra.mxu0 %v969
  %1285 = vmatprep.subr.bf16.mxu0 0
  %1286 = vmatpush1.bf16.msra.mxu0 %v970
  %1287 = vmatprep.subr.bf16.mxu0 0
  %1288 = vmatpush1.bf16.msra.mxu0 %v971
  %1289 = vmatprep.subr.bf16.mxu0 0
  %1290 = vmatpush1.bf16.msra.mxu0 %v972
  %1291 = vmatprep.subr.bf16.mxu0 0
  %1292 = vmatpush1.bf16.msra.mxu0 %v973
  %1293 = vmatprep.subr.bf16.mxu0 0
  %1294 = vmatpush1.bf16.msra.mxu0 %v974
  %1295 = vmatprep.subr.bf16.mxu0 0
  %1296 = vmatpush1.bf16.msra.mxu0 %v975
  %1297 = vmatprep.subr.bf16.mxu0 0
  %1298 = vmatpush1.bf16.msra.mxu0 %v976
  %1299 = vmatprep.subr.bf16.mxu0 0
  %1300 = vmatpush1.bf16.msra.mxu0 %v977
  %1301 = vmatprep.subr.bf16.mxu0 0
  %1302 = vmatpush1.bf16.msra.mxu0 %v978
  %1303 = vmatprep.subr.bf16.mxu0 0
  %1304 = vmatpush1.bf16.msra.mxu0 %v979
  %1305 = vmatprep.subr.bf16.mxu0 0
  %1306 = vmatpush1.bf16.msra.mxu0 %v980
  %1307 = vmatprep.subr.bf16.mxu0 0
  %1308 = vmatpush1.bf16.msra.mxu0 %v981
  %1309 = vmatprep.subr.bf16.mxu0 0
  %1310 = vmatpush1.bf16.msra.mxu0 %v982
  %1311 = vmatprep.mubr.bf16.mxu0 %v342
  %1312 = vmatmul.mubr.bf16.gmra.mrb[0].mxu0 %v341
  %v1313 = vpop.f32.mrb[0].mxu0
  %v1314 = vadd.f32 %v1274, %v1313
  %v1315 = vpop.f32.mrb[0].mxu0
  %v1316 = vpop.f32.mrb[0].mxu0
  %v1317 = vpop.f32.mrb[0].mxu0
  %1318 = vdwg.mxu0
  %1319 = vmatprep.subr.bf16.mxu0 0
  %1320 = vmatpush1.bf16.msra.mxu0 %v983
  %1321 = vmatprep.subr.bf16.mxu0 0
  %1322 = vmatpush1.bf16.msra.mxu0 %v984
  %1323 = vmatprep.subr.bf16.mxu0 0
  %1324 = vmatpush1.bf16.msra.mxu0 %v985
  %1325 = vmatprep.subr.bf16.mxu0 0
  %1326 = vmatpush1.bf16.msra.mxu0 %v986
  %1327 = vmatprep.subr.bf16.mxu0 0
  %1328 = vmatpush1.bf16.msra.mxu0 %v987
  %1329 = vmatprep.subr.bf16.mxu0 0
  %1330 = vmatpush1.bf16.msra.mxu0 %v988
  %1331 = vmatprep.subr.bf16.mxu0 0
  %1332 = vmatpush1.bf16.msra.mxu0 %v989
  %1333 = vmatprep.subr.bf16.mxu0 0
  %1334 = vmatpush1.bf16.msra.mxu0 %v990
  %1335 = vmatprep.subr.bf16.mxu0 0
  %1336 = vmatpush1.bf16.msra.mxu0 %v991
  %1337 = vmatprep.subr.bf16.mxu0 0
  %1338 = vmatpush1.bf16.msra.mxu0 %v992
  %1339 = vmatprep.subr.bf16.mxu0 0
  %1340 = vmatpush1.bf16.msra.mxu0 %v993
  %1341 = vmatprep.subr.bf16.mxu0 0
  %1342 = vmatpush1.bf16.msra.mxu0 %v994
  %1343 = vmatprep.subr.bf16.mxu0 0
  %1344 = vmatpush1.bf16.msra.mxu0 %v995
  %1345 = vmatprep.subr.bf16.mxu0 0
  %1346 = vmatpush1.bf16.msra.mxu0 %v996
  %1347 = vmatprep.subr.bf16.mxu0 0
  %1348 = vmatpush1.bf16.msra.mxu0 %v997
  %1349 = vmatprep.subr.bf16.mxu0 0
  %1350 = vmatpush1.bf16.msra.mxu0 %v998
  %1351 = vmatprep.mubr.bf16.mxu0 %v344
  %1352 = vmatmul.mubr.bf16.gmra.mrb[0].mxu0 %v343
  %v1353 = vpop.f32.mrb[0].mxu0
  %v1354 = vadd.f32 %v1314, %v1353
  %v1355 = vpop.f32.mrb[0].mxu0
  %v1356 = vpop.f32.mrb[0].mxu0
  %v1357 = vpop.f32.mrb[0].mxu0
  %1358 = vdwg.mxu0
  %1359 = vmatprep.subr.bf16.mxu0 0
  %1360 = vmatpush1.bf16.msra.mxu0 %v999
  %1361 = vmatprep.subr.bf16.mxu0 0
  %1362 = vmatpush1.bf16.msra.mxu0 %v1000
  %1363 = vmatprep.subr.bf16.mxu0 0
  %1364 = vmatpush1.bf16.msra.mxu0 %v1001
  %1365 = vmatprep.subr.bf16.mxu0 0
  %1366 = vmatpush1.bf16.msra.mxu0 %v1002
  %1367 = vmatprep.subr.bf16.mxu0 0
  %1368 = vmatpush1.bf16.msra.mxu0 %v1003
  %1369 = vmatprep.subr.bf16.mxu0 0
  %1370 = vmatpush1.bf16.msra.mxu0 %v1004
  %1371 = vmatprep.subr.bf16.mxu0 0
  %1372 = vmatpush1.bf16.msra.mxu0 %v1005
  %1373 = vmatprep.subr.bf16.mxu0 0
  %1374 = vmatpush1.bf16.msra.mxu0 %v1006
  %1375 = vmatprep.subr.bf16.mxu0 0
  %1376 = vmatpush1.bf16.msra.mxu0 %v1007
  %1377 = vmatprep.subr.bf16.mxu0 0
  %1378 = vmatpush1.bf16.msra.mxu0 %v1008
  %1379 = vmatprep.subr.bf16.mxu0 0
  %1380 = vmatpush1.bf16.msra.mxu0 %v1009
  %1381 = vmatprep.subr.bf16.mxu0 0
  %1382 = vmatpush1.bf16.msra.mxu0 %v1010
  %1383 = vmatprep.subr.bf16.mxu0 0
  %1384 = vmatpush1.bf16.msra.mxu0 %v1011
  %1385 = vmatprep.subr.bf16.mxu0 0
  %1386 = vmatpush1.bf16.msra.mxu0 %v1012
  %1387 = vmatprep.subr.bf16.mxu0 0
  %1388 = vmatpush1.bf16.msra.mxu0 %v1013
  %1389 = vmatprep.subr.bf16.mxu0 0
  %1390 = vmatpush1.bf16.msra.mxu0 %v1014
  %1391 = vmatprep.mubr.bf16.mxu0 %v346
  %1392 = vmatmul.mubr.bf16.gmra.mrb[0].mxu0 %v345
  %v1393 = vpop.f32.mrb[0].mxu0
  %v1394 = vadd.f32 %v1354, %v1393
  %v1395 = vpop.f32.mrb[0].mxu0
  %v1396 = vpop.f32.mrb[0].mxu0
  %v1397 = vpop.f32.mrb[0].mxu0
  %1398 = vdwg.mxu0
  %1399 = vmatprep.subr.bf16.mxu0 0
  %1400 = vmatpush1.bf16.msra.mxu0 %v1015
  %1401 = vmatprep.subr.bf16.mxu0 0
  %1402 = vmatpush1.bf16.msra.mxu0 %v1016
  %1403 = vmatprep.subr.bf16.mxu0 0
  %1404 = vmatpush1.bf16.msra.mxu0 %v1017
  %1405 = vmatprep.subr.bf16.mxu0 0
  %1406 = vmatpush1.bf16.msra.mxu0 %v1018
  %1407 = vmatprep.subr.bf16.mxu0 0
  %1408 = vmatpush1.bf16.msra.mxu0 %v1019
  %1409 = vmatprep.subr.bf16.mxu0 0
  %1410 = vmatpush1.bf16.msra.mxu0 %v1020
  %1411 = vmatprep.subr.bf16.mxu0 0
  %1412 = vmatpush1.bf16.msra.mxu0 %v1021
  %1413 = vmatprep.subr.bf16.mxu0 0
  %1414 = vmatpush1.bf16.msra.mxu0 %v1022
  %1415 = vmatprep.subr.bf16.mxu0 0
  %1416 = vmatpush1.bf16.msra.mxu0 %v1023
  %1417 = vmatprep.subr.bf16.mxu0 0
  %1418 = vmatpush1.bf16.msra.mxu0 %v1024
  %1419 = vmatprep.subr.bf16.mxu0 0
  %1420 = vmatpush1.bf16.msra.mxu0 %v1025
  %1421 = vmatprep.subr.bf16.mxu0 0
  %1422 = vmatpush1.bf16.msra.mxu0 %v1026
  %1423 = vmatprep.subr.bf16.mxu0 0
  %1424 = vmatpush1.bf16.msra.mxu0 %v1027
  %1425 = vmatprep.subr.bf16.mxu0 0
  %1426 = vmatpush1.bf16.msra.mxu0 %v1028
  %1427 = vmatprep.subr.bf16.mxu0 0
  %1428 = vmatpush1.bf16.msra.mxu0 %v1029
  %1429 = vmatprep.subr.bf16.mxu0 0
  %1430 = vmatpush1.bf16.msra.mxu0 %v1030
  %1431 = vmatprep.mubr.bf16.mxu0 %v348
  %1432 = vmatmul.mubr.bf16.gmra.mrb[0].mxu0 %v347
  %v1433 = vpop.f32.mrb[0].mxu0
  %v1434 = vadd.f32 %v1394, %v1433
  %v1435 = vpop.f32.mrb[0].mxu0
  %v1436 = vpop.f32.mrb[0].mxu0
  %v1437 = vpop.f32.mrb[0].mxu0
  %1438 = vdwg.mxu0
  %1439 = vmatprep.subr.bf16.mxu0 0
  %1440 = vmatpush1.bf16.msra.mxu0 %v1031
  %1441 = vmatprep.subr.bf16.mxu0 0
  %1442 = vmatpush1.bf16.msra.mxu0 %v1032
  %1443 = vmatprep.subr.bf16.mxu0 0
  %1444 = vmatpush1.bf16.msra.mxu0 %v1033
  %1445 = vmatprep.subr.bf16.mxu0 0
  %1446 = vmatpush1.bf16.msra.mxu0 %v1034
  %1447 = vmatprep.subr.bf16.mxu0 0
  %1448 = vmatpush1.bf16.msra.mxu0 %v1035
  %1449 = vmatprep.subr.bf16.mxu0 0
  %1450 = vmatpush1.bf16.msra.mxu0 %v1036
  %1451 = vmatprep.subr.bf16.mxu0 0
  %1452 = vmatpush1.bf16.msra.mxu0 %v1037
  %1453 = vmatprep.subr.bf16.mxu0 0
  %1454 = vmatpush1.bf16.msra.mxu0 %v1038
  %1455 = vmatprep.subr.bf16.mxu0 0
  %1456 = vmatpush1.bf16.msra.mxu0 %v1039
  %1457 = vmatprep.subr.bf16.mxu0 0
  %1458 = vmatpush1.bf16.msra.mxu0 %v1040
  %1459 = vmatprep.subr.bf16.mxu0 0
  %1460 = vmatpush1.bf16.msra.mxu0 %v1041
  %1461 = vmatprep.subr.bf16.mxu0 0
  %1462 = vmatpush1.bf16.msra.mxu0 %v1042
  %1463 = vmatprep.subr.bf16.mxu0 0
  %1464 = vmatpush1.bf16.msra.mxu0 %v1043
  %1465 = vmatprep.subr.bf16.mxu0 0
  %1466 = vmatpush1.bf16.msra.mxu0 %v1044
  %1467 = vmatprep.subr.bf16.mxu0 0
  %1468 = vmatpush1.bf16.msra.mxu0 %v1045
  %1469 = vmatprep.subr.bf16.mxu0 0
  %1470 = vmatpush1.bf16.msra.mxu0 %v1046
  %1471 = vmatprep.mubr.bf16.mxu0 %v350
  %1472 = vmatmul.mubr.bf16.gmra.mrb[0].mxu0 %v349
  %v1473 = vpop.f32.mrb[0].mxu0
  %v1474 = vadd.f32 %v1434, %v1473
  %v1475 = vpop.f32.mrb[0].mxu0
  %v1476 = vpop.f32.mrb[0].mxu0
  %v1477 = vpop.f32.mrb[0].mxu0
  %1478 = vdwg.mxu0
  %1479 = vmatprep.subr.bf16.mxu0 0
  %1480 = vmatpush1.bf16.msra.mxu0 %v1047
  %1481 = vmatprep.subr.bf16.mxu0 0
  %1482 = vmatpush1.bf16.msra.mxu0 %v1048
  %1483 = vmatprep.subr.bf16.mxu0 0
  %1484 = vmatpush1.bf16.msra.mxu0 %v1049
  %1485 = vmatprep.subr.bf16.mxu0 0
  %1486 = vmatpush1.bf16.msra.mxu0 %v1050
  %1487 = vmatprep.subr.bf16.mxu0 0
  %1488 = vmatpush1.bf16.msra.mxu0 %v1051
  %1489 = vmatprep.subr.bf16.mxu0 0
  %1490 = vmatpush1.bf16.msra.mxu0 %v1052
  %1491 = vmatprep.subr.bf16.mxu0 0
  %1492 = vmatpush1.bf16.msra.mxu0 %v1053
  %1493 = vmatprep.subr.bf16.mxu0 0
  %1494 = vmatpush1.bf16.msra.mxu0 %v1054
  %1495 = vmatprep.subr.bf16.mxu0 0
  %1496 = vmatpush1.bf16.msra.mxu0 %v1055
  %1497 = vmatprep.subr.bf16.mxu0 0
  %1498 = vmatpush1.bf16.msra.mxu0 %v1056
  %1499 = vmatprep.subr.bf16.mxu0 0
  %1500 = vmatpush1.bf16.msra.mxu0 %v1057
  %1501 = vmatprep.subr.bf16.mxu0 0
  %1502 = vmatpush1.bf16.msra.mxu0 %v1058
  %1503 = vmatprep.subr.bf16.mxu0 0
  %1504 = vmatpush1.bf16.msra.mxu0 %v1059
  %1505 = vmatprep.subr.bf16.mxu0 0
  %1506 = vmatpush1.bf16.msra.mxu0 %v1060
  %1507 = vmatprep.subr.bf16.mxu0 0
  %1508 = vmatpush1.bf16.msra.mxu0 %v1061
  %1509 = vmatprep.subr.bf16.mxu0 0
  %1510 = vmatpush1.bf16.msra.mxu0 %v1062
  %1511 = vmatprep.mubr.bf16.mxu0 %v352
  %1512 = vmatmul.mubr.bf16.gmra.mrb[0].mxu0 %v351
  %v1513 = vpop.f32.mrb[0].mxu0
  %v1514 = vadd.f32 %v1474, %v1513
  %v1515 = vpop.f32.mrb[0].mxu0
  %v1516 = vpop.f32.mrb[0].mxu0
  %v1517 = vpop.f32.mrb[0].mxu0
  %1518 = vdwg.mxu0
  %1519 = vmatprep.subr.bf16.mxu0 0
  %1520 = vmatpush1.bf16.msra.mxu0 %v1063
  %1521 = vmatprep.subr.bf16.mxu0 0
  %1522 = vmatpush1.bf16.msra.mxu0 %v1064
  %1523 = vmatprep.subr.bf16.mxu0 0
  %1524 = vmatpush1.bf16.msra.mxu0 %v1065
  %1525 = vmatprep.subr.bf16.mxu0 0
  %1526 = vmatpush1.bf16.msra.mxu0 %v1066
  %1527 = vmatprep.subr.bf16.mxu0 0
  %1528 = vmatpush1.bf16.msra.mxu0 %v1067
  %1529 = vmatprep.subr.bf16.mxu0 0
  %1530 = vmatpush1.bf16.msra.mxu0 %v1068
  %1531 = vmatprep.subr.bf16.mxu0 0
  %1532 = vmatpush1.bf16.msra.mxu0 %v1069
  %1533 = vmatprep.subr.bf16.mxu0 0
  %1534 = vmatpush1.bf16.msra.mxu0 %v1070
  %1535 = vmatprep.subr.bf16.mxu0 0
  %1536 = vmatpush1.bf16.msra.mxu0 %v1071
  %1537 = vmatprep.subr.bf16.mxu0 0
  %1538 = vmatpush1.bf16.msra.mxu0 %v1072
  %1539 = vmatprep.subr.bf16.mxu0 0
  %1540 = vmatpush1.bf16.msra.mxu0 %v1073
  %1541 = vmatprep.subr.bf16.mxu0 0
  %1542 = vmatpush1.bf16.msra.mxu0 %v1074
  %1543 = vmatprep.subr.bf16.mxu0 0
  %1544 = vmatpush1.bf16.msra.mxu0 %v1075
  %1545 = vmatprep.subr.bf16.mxu0 0
  %1546 = vmatpush1.bf16.msra.mxu0 %v1076
  %1547 = vmatprep.subr.bf16.mxu0 0
  %1548 = vmatpush1.bf16.msra.mxu0 %v1077
  %1549 = vmatprep.subr.bf16.mxu0 0
  %1550 = vmatpush1.bf16.msra.mxu0 %v1078
  %1551 = vmatprep.mubr.bf16.mxu0 %v354
  %1552 = vmatmul.mubr.bf16.gmra.mrb[0].mxu0 %v353
  %v1553 = vpop.f32.mrb[0].mxu0
  %v1554 = vadd.f32 %v1514, %v1553
  %v1555 = vpop.f32.mrb[0].mxu0
  %v1556 = vpop.f32.mrb[0].mxu0
  %v1557 = vpop.f32.mrb[0].mxu0
  %1558 = vdwg.mxu0
  %1559 = vmatprep.subr.bf16.mxu0 0
  %1560 = vmatpush1.bf16.msra.mxu0 %v1079
  %1561 = vmatprep.subr.bf16.mxu0 0
  %1562 = vmatpush1.bf16.msra.mxu0 %v1080
  %1563 = vmatprep.subr.bf16.mxu0 0
  %1564 = vmatpush1.bf16.msra.mxu0 %v1081
  %1565 = vmatprep.subr.bf16.mxu0 0
  %1566 = vmatpush1.bf16.msra.mxu0 %v1082
  %1567 = vmatprep.subr.bf16.mxu0 0
  %1568 = vmatpush1.bf16.msra.mxu0 %v1083
  %1569 = vmatprep.subr.bf16.mxu0 0
  %1570 = vmatpush1.bf16.msra.mxu0 %v1084
  %1571 = vmatprep.subr.bf16.mxu0 0
  %1572 = vmatpush1.bf16.msra.mxu0 %v1085
  %1573 = vmatprep.subr.bf16.mxu0 0
  %1574 = vmatpush1.bf16.msra.mxu0 %v1086
  %1575 = vmatprep.subr.bf16.mxu0 0
  %1576 = vmatpush1.bf16.msra.mxu0 %v1087
  %1577 = vmatprep.subr.bf16.mxu0 0
  %1578 = vmatpush1.bf16.msra.mxu0 %v1088
  %1579 = vmatprep.subr.bf16.mxu0 0
  %1580 = vmatpush1.bf16.msra.mxu0 %v1089
  %1581 = vmatprep.subr.bf16.mxu0 0
  %1582 = vmatpush1.bf16.msra.mxu0 %v1090
  %1583 = vmatprep.subr.bf16.mxu0 0
  %1584 = vmatpush1.bf16.msra.mxu0 %v1091
  %1585 = vmatprep.subr.bf16.mxu0 0
  %1586 = vmatpush1.bf16.msra.mxu0 %v1092
  %1587 = vmatprep.subr.bf16.mxu0 0
  %1588 = vmatpush1.bf16.msra.mxu0 %v1093
  %1589 = vmatprep.subr.bf16.mxu0 0
  %1590 = vmatpush1.bf16.msra.mxu0 %v1094
  %1591 = vmatprep.mubr.bf16.mxu0 %v356
  %1592 = vmatmul.mubr.bf16.gmra.mrb[0].mxu0 %v355
  %v1593 = vpop.f32.mrb[0].mxu0
  %v1594 = vadd.f32 %v1554, %v1593
  %v1595 = vpop.f32.mrb[0].mxu0
  %v1596 = vpop.f32.mrb[0].mxu0
  %v1597 = vpop.f32.mrb[0].mxu0
  %1598 = vdwg.mxu0
  %1599 = vst [vmem:[%s2] sm:$0xff] %v1594
  %v1600 = vlaneseq
  %v1601 = vshrl.u32 %v1600, 7
  %vm1602 = vcmp.eq.s32.totalorder %v1601, 0
  %v1603 = vrot.slane %v1594, 4
  %v1604 = vadd.f32 %v1594, %v1603
  %v1605 = vrot.slane %v1604, 2
  %v1606 = vadd.f32 %v1604, %v1605
  %v1607 = vrot.slane %v1606, 1
  %v1608 = vadd.f32 %v1606, %v1607
  %v1609 = vsel %vm1602, %v1608, 0.0
  %1610 = vst [vmem:[%s3] sm:$0xff] %v1609
  %v1611 = vmul.f32 %v1594, %v1594
  %v1612 = vrot.slane %v1611, 4
  %v1613 = vadd.f32 %v1611, %v1612
  %v1614 = vrot.slane %v1613, 2
  %v1615 = vadd.f32 %v1613, %v1614
  %v1616 = vrot.slane %v1615, 1
  %v1617 = vadd.f32 %v1615, %v1616
  %v1618 = vsel %vm1602, %v1617, 0.0
  %1619 = vst [vmem:[%s4] sm:$0xff] %v1618
  // Predicated region
  $region10: #{stereonet_forward.32} parent=0 // pred_check
    _
  $region11: #{stereonet_forward.32} parent=0 // pred_check_branch
    %1621 = sbr.rel (0) target = $region13
  $region12: #{stereonet_forward.32} parent=0 // pred_region
    _
  $region13: #{stereonet_forward.32} parent=0 // pred_fallthru
    _
  // Predicated region
  $region14: #{stereonet_forward.32} parent=0 // pred_check
    _
  $region15: #{stereonet_forward.32} parent=0 // pred_check_branch
    %1623 = sbr.rel (0) target = $region17
  $region16: #{stereonet_forward.32} parent=0 // pred_region
    _
  $region17: #{stereonet_forward.32} parent=0 // pred_fallthru
    _
  // Predicated region
  $region18: #{stereonet_forward.32} parent=0 // pred_check
    _
  $region19: #{stereonet_forward.32} parent=0 // pred_check_branch
    %1625 = sbr.rel (0) target = $region21
  $region20: #{stereonet_forward.32} parent=0 // pred_region
    _
  $region21: #{stereonet_forward.32} parent=0 // pred_fallthru
    _
  // Predicated region
  $region22: #{stereonet_forward.32} parent=0 // pred_check
    _
  $region23: #{stereonet_forward.32} parent=0 // pred_check_branch
    %1627 = sbr.rel (0) target = $region25
  $region24: #{stereonet_forward.32} parent=0 // pred_region
    _
  $region25: #{stereonet_forward.32} parent=0 // pred_fallthru
    _
  // Predicated region
  $region26: #{stereonet_forward.32} parent=0 // pred_check
    _
  $region27: #{stereonet_forward.32} parent=0 // pred_check_branch
    %1629 = sbr.rel (0) target = $region29
  $region28: #{stereonet_forward.32} parent=0 // pred_region
    _
  $region29: #{stereonet_forward.32} parent=0 // pred_fallthru
    _
  // Predicated region
  $region30: #{stereonet_forward.32} parent=0 // pred_check
    _
  $region31: #{stereonet_forward.32} parent=0 // pred_check_branch
    %1631 = sbr.rel (0) target = $region33
  $region32: #{stereonet_forward.32} parent=0 // pred_region
    _
  $region33: #{stereonet_forward.32} parent=0 // pred_fallthru
    _

// kernel: stereonet_forward.36
$region0: #{stereonet_forward.36}
  #allocation0 [shape = 'u32[]', space=smem, size = 0x4, offset = 0x4, fixed_abs, tag = 'smem constant byte address 0x4 - core index']
  #allocation1 [shape = 'u32[144,128]{1,0:T(1,128)}', space=vmem, size = 0x12000, scoped, tag = 'internal scratch']
  %s0 = inlined_call_operand.vmem [shape: bf16[8,640], index: 0, kind: input, shape index: {}]
  %s1 = inlined_call_operand.vmem [shape: bf16[640,128], index: 1, kind: input, shape index: {}]
  %s2 = inlined_call_operand.vmem [shape: f32[8,128], index: 2, kind: output, shape index: {0}]
  %s3 = inlined_call_operand.vmem [shape: f32[8,128], index: 3, kind: output, shape index: {1}]
  %s4 = inlined_call_operand.vmem [shape: f32[8,128], index: 4, kind: output, shape index: {2}]
  %5 = xla_tuple %s2, %s3, %s4
  %s6 = sld [smem:[#allocation0]]
  $region34: #{stereonet_forward.36} parent=0
    _
  %s8 = ssub.s32 1, %s6
  %s9 = scalar_select 0, %s8, %s6
  // Predicated region
  $region2: #{stereonet_forward.36} parent=0 // pred_check
    _
  $region3: #{stereonet_forward.36} parent=0 // pred_check_branch
    %11 = sbr.rel (0) target = $region5
  $region4: #{stereonet_forward.36} parent=0 // pred_region
    _
  $region5: #{stereonet_forward.36} parent=0 // pred_fallthru
    _
  // Predicated region
  $region6: #{stereonet_forward.36} parent=0 // pred_check
    _
  $region7: #{stereonet_forward.36} parent=0 // pred_check_branch
    %13 = sbr.rel (0) target = $region9
  $region8: #{stereonet_forward.36} parent=0 // pred_region
    _
  $region9: #{stereonet_forward.36} parent=0 // pred_fallthru
    _
  %v15 = vld [vmem:[%s0] sm:$0xff]
  %v16 = vld [vmem:[%s0 + $0x8] sm:$0xff]
  %v17 = vld [vmem:[%s0 + $0x10] sm:$0xf]
  %v18 = vld [vmem:[%s1] sm:$0xf]
  %v19 = vld [vmem:[%s1 + $0x4] sm:$0xf]
  %v20 = vld [vmem:[%s1 + $0x8] sm:$0xf]
  %v21 = vld [vmem:[%s1 + $0xc] sm:$0xf]
  %v22 = vld [vmem:[%s1 + $0x10] sm:$0xf]
  %v23 = vld [vmem:[%s1 + $0x14] sm:$0xf]
  %v24 = vld [vmem:[%s1 + $0x18] sm:$0xf]
  %v25 = vld [vmem:[%s1 + $0x1c] sm:$0xf]
  %v26 = vld [vmem:[%s1 + $0x20] sm:$0xf]
  %v27 = vld [vmem:[%s1 + $0x24] sm:$0xf]
  %v28 = vld [vmem:[%s1 + $0x28] sm:$0xf]
  %v29 = vld [vmem:[%s1 + $0x2c] sm:$0xf]
  %v30 = vld [vmem:[%s1 + $0x30] sm:$0xf]
  %v31 = vld [vmem:[%s1 + $0x34] sm:$0xf]
  %v32 = vld [vmem:[%s1 + $0x38] sm:$0xf]
  %v33 = vld [vmem:[%s1 + $0x3c] sm:$0xf]
  %v34 = vld [vmem:[%s1 + $0x40] sm:$0xf]
  %v35 = vld [vmem:[%s1 + $0x44] sm:$0xf]
  %v36 = vld [vmem:[%s1 + $0x48] sm:$0xf]
  %v37 = vld [vmem:[%s1 + $0x4c] sm:$0xf]
  %v38 = vld [vmem:[%s1 + $0x50] sm:$0xf]
  %v39 = vld [vmem:[%s1 + $0x54] sm:$0xf]
  %v40 = vld [vmem:[%s1 + $0x58] sm:$0xf]
  %v41 = vld [vmem:[%s1 + $0x5c] sm:$0xf]
  %v42 = vld [vmem:[%s1 + $0x60] sm:$0xf]
  %v43 = vld [vmem:[%s1 + $0x64] sm:$0xf]
  %v44 = vld [vmem:[%s1 + $0x68] sm:$0xf]
  %v45 = vld [vmem:[%s1 + $0x6c] sm:$0xf]
  %v46 = vld [vmem:[%s1 + $0x70] sm:$0xf]
  %v47 = vld [vmem:[%s1 + $0x74] sm:$0xf]
  %v48 = vld [vmem:[%s1 + $0x78] sm:$0xf]
  %v49 = vld [vmem:[%s1 + $0x7c] sm:$0xf]
  %v50 = vld [vmem:[%s1 + $0x80] sm:$0xf]
  %v51 = vld [vmem:[%s1 + $0x84] sm:$0xf]
  %v52 = vld [vmem:[%s1 + $0x88] sm:$0xf]
  %v53 = vld [vmem:[%s1 + $0x8c] sm:$0xf]
  %v54 = vld [vmem:[%s1 + $0x90] sm:$0xf]
  %v55 = vld [vmem:[%s1 + $0x94] sm:$0xf]
  %v56 = vld [vmem:[%s1 + $0x98] sm:$0xf]
  %v57 = vld [vmem:[%s1 + $0x9c] sm:$0xf]
  %v58 = vld [vmem:[%s1 + $0xa0] sm:$0xf]
  %v59 = vld [vmem:[%s1 + $0xa4] sm:$0xf]
  %v60 = vld [vmem:[%s1 + $0xa8] sm:$0xf]
  %v61 = vld [vmem:[%s1 + $0xac] sm:$0xf]
  %v62 = vld [vmem:[%s1 + $0xb0] sm:$0xf]
  %v63 = vld [vmem:[%s1 + $0xb4] sm:$0xf]
  %v64 = vld [vmem:[%s1 + $0xb8] sm:$0xf]
  %v65 = vld [vmem:[%s1 + $0xbc] sm:$0xf]
  %v66 = vld [vmem:[%s1 + $0xc0] sm:$0xf]
  %v67 = vld [vmem:[%s1 + $0xc4] sm:$0xf]
  %v68 = vld [vmem:[%s1 + $0xc8] sm:$0xf]
  %v69 = vld [vmem:[%s1 + $0xcc] sm:$0xf]
  %v70 = vld [vmem:[%s1 + $0xd0] sm:$0xf]
  %v71 = vld [vmem:[%s1 + $0xd4] sm:$0xf]
  %v72 = vld [vmem:[%s1 + $0xd8] sm:$0xf]
  %v73 = vld [vmem:[%s1 + $0xdc] sm:$0xf]
  %v74 = vld [vmem:[%s1 + $0xe0] sm:$0xf]
  %v75 = vld [vmem:[%s1 + $0xe4] sm:$0xf]
  %v76 = vld [vmem:[%s1 + $0xe8] sm:$0xf]
  %v77 = vld [vmem:[%s1 + $0xec] sm:$0xf]
  %v78 = vld [vmem:[%s1 + $0xf0] sm:$0xf]
  %v79 = vld [vmem:[%s1 + $0xf4] sm:$0xf]
  %v80 = vld [vmem:[%s1 + $0xf8] sm:$0xf]
  %v81 = vld [vmem:[%s1 + $0xfc] sm:$0xf]
  %v82 = vld [vmem:[%s1 + $0x100] sm:$0xf]
  %v83 = vld [vmem:[%s1 + $0x104] sm:$0xf]
  %v84 = vld [vmem:[%s1 + $0x108] sm:$0xf]
  %v85 = vld [vmem:[%s1 + $0x10c] sm:$0xf]
  %v86 = vld [vmem:[%s1 + $0x110] sm:$0xf]
  %v87 = vld [vmem:[%s1 + $0x114] sm:$0xf]
  %v88 = vld [vmem:[%s1 + $0x118] sm:$0xf]
  %v89 = vld [vmem:[%s1 + $0x11c] sm:$0xf]
  %v90 = vld [vmem:[%s1 + $0x120] sm:$0xf]
  %v91 = vld [vmem:[%s1 + $0x124] sm:$0xf]
  %v92 = vld [vmem:[%s1 + $0x128] sm:$0xf]
  %v93 = vld [vmem:[%s1 + $0x12c] sm:$0xf]
  %v94 = vld [vmem:[%s1 + $0x130] sm:$0xf]
  %v95 = vld [vmem:[%s1 + $0x134] sm:$0xf]
  %v96 = vld [vmem:[%s1 + $0x138] sm:$0xf]
  %v97 = vld [vmem:[%s1 + $0x13c] sm:$0xf]
  %v101 = vunpack.c.l.b16 %v15
  %v102 = vunpack.c.h.b16 %v15
  %v103 = vunpack.c.l.b16 %v16
  %v104 = vunpack.c.h.b16 %v16
  %v105 = vunpack.c.l.b16 %v17
  %v106 = vpack.c.b16 %v101, %v101
  %v107 = vpack.c.b16 %v102, %v102
  %v108 = vpack.c.b16 %v103, %v103
  %v109 = vpack.c.b16 %v104, %v104
  %v110 = vpack.c.b16 %v105, %v105
  %v196 = vunpack.c.l.b16 %v18
  %v197 = vunpack.c.l.b16 %v19
  %v198 = vunpack.c.l.b16 %v20
  %v199 = vunpack.c.l.b16 %v21
  %v200 = vunpack.c.l.b16 %v22
  %v201 = vunpack.c.l.b16 %v23
  %v202 = vunpack.c.l.b16 %v24
  %v203 = vunpack.c.l.b16 %v25
  %v204 = vunpack.c.l.b16 %v26
  %v205 = vunpack.c.l.b16 %v27
  %v206 = vunpack.c.l.b16 %v28
  %v207 = vunpack.c.l.b16 %v29
  %v208 = vunpack.c.l.b16 %v30
  %v209 = vunpack.c.l.b16 %v31
  %v210 = vunpack.c.l.b16 %v32
  %v211 = vunpack.c.l.b16 %v33
  %v212 = vunpack.c.l.b16 %v34
  %v213 = vunpack.c.l.b16 %v35
  %v214 = vunpack.c.l.b16 %v36
  %v215 = vunpack.c.l.b16 %v37
  %v216 = vunpack.c.l.b16 %v38
  %v217 = vunpack.c.l.b16 %v39
  %v218 = vunpack.c.l.b16 %v40
  %v219 = vunpack.c.l.b16 %v41
  %v220 = vunpack.c.l.b16 %v42
  %v221 = vunpack.c.l.b16 %v43
  %v222 = vunpack.c.l.b16 %v44
  %v223 = vunpack.c.l.b16 %v45
  %v224 = vunpack.c.l.b16 %v46
  %v225 = vunpack.c.l.b16 %v47
  %v226 = vunpack.c.l.b16 %v48
  %v227 = vunpack.c.l.b16 %v49
  %v228 = vunpack.c.l.b16 %v50
  %v229 = vunpack.c.l.b16 %v51
  %v230 = vunpack.c.l.b16 %v52
  %v231 = vunpack.c.l.b16 %v53
  %v232 = vunpack.c.l.b16 %v54
  %v233 = vunpack.c.l.b16 %v55
  %v234 = vunpack.c.l.b16 %v56
  %v235 = vunpack.c.l.b16 %v57
  %v236 = vunpack.c.l.b16 %v58
  %v237 = vunpack.c.l.b16 %v59
  %v238 = vunpack.c.l.b16 %v60
  %v239 = vunpack.c.l.b16 %v61
  %v240 = vunpack.c.l.b16 %v62
  %v241 = vunpack.c.l.b16 %v63
  %v242 = vunpack.c.l.b16 %v64
  %v243 = vunpack.c.l.b16 %v65
  %v244 = vunpack.c.l.b16 %v66
  %v245 = vunpack.c.l.b16 %v67
  %v246 = vunpack.c.l.b16 %v68
  %v247 = vunpack.c.l.b16 %v69
  %v248 = vunpack.c.l.b16 %v70
  %v249 = vunpack.c.l.b16 %v71
  %v250 = vunpack.c.l.b16 %v72
  %v251 = vunpack.c.l.b16 %v73
  %v252 = vunpack.c.l.b16 %v74
  %v253 = vunpack.c.l.b16 %v75
  %v254 = vunpack.c.l.b16 %v76
  %v255 = vunpack.c.l.b16 %v77
  %v256 = vunpack.c.l.b16 %v78
  %v257 = vunpack.c.l.b16 %v79
  %v258 = vunpack.c.l.b16 %v80
  %v259 = vunpack.c.l.b16 %v81
  %v260 = vunpack.c.l.b16 %v82
  %v261 = vunpack.c.l.b16 %v83
  %v262 = vunpack.c.l.b16 %v84
  %v263 = vunpack.c.l.b16 %v85
  %v264 = vunpack.c.l.b16 %v86
  %v265 = vunpack.c.l.b16 %v87
  %v266 = vunpack.c.l.b16 %v88
  %v267 = vunpack.c.l.b16 %v89
  %v268 = vunpack.c.l.b16 %v90
  %v269 = vunpack.c.l.b16 %v91
  %v270 = vunpack.c.l.b16 %v92
  %v271 = vunpack.c.l.b16 %v93
  %v272 = vunpack.c.l.b16 %v94
  %v273 = vunpack.c.l.b16 %v95
  %v274 = vunpack.c.l.b16 %v96
  %v275 = vunpack.c.l.b16 %v97
  %v276 = vpack.c.b16 %v197, %v196
  %v277 = vpack.c.b16 %v199, %v198
  %v278 = vpack.c.b16 %v201, %v200
  %v279 = vpack.c.b16 %v203, %v202
  %v280 = vpack.c.b16 %v205, %v204
  %v281 = vpack.c.b16 %v207, %v206
  %v282 = vpack.c.b16 %v209, %v208
  %v283 = vpack.c.b16 %v211, %v210
  %v284 = vpack.c.b16 %v213, %v212
  %v285 = vpack.c.b16 %v215, %v214
  %v286 = vpack.c.b16 %v217, %v216
  %v287 = vpack.c.b16 %v219, %v218
  %v288 = vpack.c.b16 %v221, %v220
  %v289 = vpack.c.b16 %v223, %v222
  %v290 = vpack.c.b16 %v225, %v224
  %v291 = vpack.c.b16 %v227, %v226
  %v292 = vpack.c.b16 %v229, %v228
  %v293 = vpack.c.b16 %v231, %v230
  %v294 = vpack.c.b16 %v233, %v232
  %v295 = vpack.c.b16 %v235, %v234
  %v296 = vpack.c.b16 %v237, %v236
  %v297 = vpack.c.b16 %v239, %v238
  %v298 = vpack.c.b16 %v241, %v240
  %v299 = vpack.c.b16 %v243, %v242
  %v300 = vpack.c.b16 %v245, %v244
  %v301 = vpack.c.b16 %v247, %v246
  %v302 = vpack.c.b16 %v249, %v248
  %v303 = vpack.c.b16 %v251, %v250
  %v304 = vpack.c.b16 %v253, %v252
  %v305 = vpack.c.b16 %v255, %v254
  %v306 = vpack.c.b16 %v257, %v256
  %v307 = vpack.c.b16 %v259, %v258
  %v308 = vpack.c.b16 %v261, %v260
  %v309 = vpack.c.b16 %v263, %v262
  %v310 = vpack.c.b16 %v265, %v264
  %v311 = vpack.c.b16 %v267, %v266
  %v312 = vpack.c.b16 %v269, %v268
  %v313 = vpack.c.b16 %v271, %v270
  %v314 = vpack.c.b16 %v273, %v272
  %v315 = vpack.c.b16 %v275, %v274
  %356 = vmatprep.subr.bf16.mxu0 0
  %357 = vmatpush1.bf16.msra.mxu0 %v276
  %358 = vmatprep.subr.bf16.mxu0 0
  %359 = vmatpush1.bf16.msra.mxu0 %v277
  %360 = vmatprep.subr.bf16.mxu0 0
  %361 = vmatpush1.bf16.msra.mxu0 %v278
  %362 = vmatprep.subr.bf16.mxu0 0
  %363 = vmatpush1.bf16.msra.mxu0 %v279
  %364 = vmatprep.subr.bf16.mxu0 0
  %365 = vmatpush1.bf16.msra.mxu0 %v280
  %366 = vmatprep.subr.bf16.mxu0 0
  %367 = vmatpush1.bf16.msra.mxu0 %v281
  %368 = vmatprep.subr.bf16.mxu0 0
  %369 = vmatpush1.bf16.msra.mxu0 %v282
  %370 = vmatprep.subr.bf16.mxu0 0
  %371 = vmatpush1.bf16.msra.mxu0 %v283
  %372 = vmatprep.subr.bf16.mxu0 0
  %373 = vmatpush1.bf16.msra.mxu0 %v284
  %374 = vmatprep.subr.bf16.mxu0 0
  %375 = vmatpush1.bf16.msra.mxu0 %v285
  %376 = vmatprep.subr.bf16.mxu0 0
  %377 = vmatpush1.bf16.msra.mxu0 %v286
  %378 = vmatprep.subr.bf16.mxu0 0
  %379 = vmatpush1.bf16.msra.mxu0 %v287
  %380 = vmatprep.subr.bf16.mxu0 0
  %381 = vmatpush1.bf16.msra.mxu0 %v288
  %382 = vmatprep.subr.bf16.mxu0 0
  %383 = vmatpush1.bf16.msra.mxu0 %v289
  %384 = vmatprep.subr.bf16.mxu0 0
  %385 = vmatpush1.bf16.msra.mxu0 %v290
  %386 = vmatprep.subr.bf16.mxu0 0
  %387 = vmatpush1.bf16.msra.mxu0 %v291
  %388 = vmatprep.mubr.bf16.mxu0 %v107
  %389 = vmatmul.mubr.bf16.gmra.mrb[0].mxu0 %v106
  %v390 = vpop.f32.mrb[0].mxu0
  %v391 = vadd.f32 0.0, %v390
  %v392 = vpop.f32.mrb[0].mxu0
  %v393 = vpop.f32.mrb[0].mxu0
  %v394 = vpop.f32.mrb[0].mxu0
  %395 = vdwg.mxu0
  %396 = vmatprep.subr.bf16.mxu0 0
  %397 = vmatpush1.bf16.msra.mxu0 %v292
  %398 = vmatprep.subr.bf16.mxu0 0
  %399 = vmatpush1.bf16.msra.mxu0 %v293
  %400 = vmatprep.subr.bf16.mxu0 0
  %401 = vmatpush1.bf16.msra.mxu0 %v294
  %402 = vmatprep.subr.bf16.mxu0 0
  %403 = vmatpush1.bf16.msra.mxu0 %v295
  %404 = vmatprep.subr.bf16.mxu0 0
  %405 = vmatpush1.bf16.msra.mxu0 %v296
  %406 = vmatprep.subr.bf16.mxu0 0
  %407 = vmatpush1.bf16.msra.mxu0 %v297
  %408 = vmatprep.subr.bf16.mxu0 0
  %409 = vmatpush1.bf16.msra.mxu0 %v298
  %410 = vmatprep.subr.bf16.mxu0 0
  %411 = vmatpush1.bf16.msra.mxu0 %v299
  %412 = vmatprep.subr.bf16.mxu0 0
  %413 = vmatpush1.bf16.msra.mxu0 %v300
  %414 = vmatprep.subr.bf16.mxu0 0
  %415 = vmatpush1.bf16.msra.mxu0 %v301
  %416 = vmatprep.subr.bf16.mxu0 0
  %417 = vmatpush1.bf16.msra.mxu0 %v302
  %418 = vmatprep.subr.bf16.mxu0 0
  %419 = vmatpush1.bf16.msra.mxu0 %v303
  %420 = vmatprep.subr.bf16.mxu0 0
  %421 = vmatpush1.bf16.msra.mxu0 %v304
  %422 = vmatprep.subr.bf16.mxu0 0
  %423 = vmatpush1.bf16.msra.mxu0 %v305
  %424 = vmatprep.subr.bf16.mxu0 0
  %425 = vmatpush1.bf16.msra.mxu0 %v306
  %426 = vmatprep.subr.bf16.mxu0 0
  %427 = vmatpush1.bf16.msra.mxu0 %v307
  %428 = vmatprep.mubr.bf16.mxu0 %v109
  %429 = vmatmul.mubr.bf16.gmra.mrb[0].mxu0 %v108
  %v430 = vpop.f32.mrb[0].mxu0
  %v431 = vadd.f32 %v391, %v430
  %v432 = vpop.f32.mrb[0].mxu0
  %v433 = vpop.f32.mrb[0].mxu0
  %v434 = vpop.f32.mrb[0].mxu0
  %435 = vdwg.mxu0
  %436 = vmatprep.subr.bf16.mxu0 0
  %437 = vmatpush1.bf16.msra.mxu0 %v308
  %438 = vmatprep.subr.bf16.mxu0 0
  %439 = vmatpush1.bf16.msra.mxu0 %v309
  %440 = vmatprep.subr.bf16.mxu0 0
  %441 = vmatpush1.bf16.msra.mxu0 %v310
  %442 = vmatprep.subr.bf16.mxu0 0
  %443 = vmatpush1.bf16.msra.mxu0 %v311
  %444 = vmatprep.subr.bf16.mxu0 0
  %445 = vmatpush1.bf16.msra.mxu0 %v312
  %446 = vmatprep.subr.bf16.mxu0 0
  %447 = vmatpush1.bf16.msra.mxu0 %v313
  %448 = vmatprep.subr.bf16.mxu0 0
  %449 = vmatpush1.bf16.msra.mxu0 %v314
  %450 = vmatprep.subr.bf16.mxu0 0
  %451 = vmatpush1.bf16.msra.mxu0 %v315
  %452 = vmatprep.subr.bf16.mxu0 0
  %453 = vmatpush1.bf16.msra.mxu0 0
  %454 = vmatprep.subr.bf16.mxu0 0
  %455 = vmatpush1.bf16.msra.mxu0 0
  %456 = vmatprep.subr.bf16.mxu0 0
  %457 = vmatpush1.bf16.msra.mxu0 0
  %458 = vmatprep.subr.bf16.mxu0 0
  %459 = vmatpush1.bf16.msra.mxu0 0
  %460 = vmatprep.subr.bf16.mxu0 0
  %461 = vmatpush1.bf16.msra.mxu0 0
  %462 = vmatprep.subr.bf16.mxu0 0
  %463 = vmatpush1.bf16.msra.mxu0 0
  %464 = vmatprep.subr.bf16.mxu0 0
  %465 = vmatpush1.bf16.msra.mxu0 0
  %466 = vmatprep.subr.bf16.mxu0 0
  %467 = vmatpush1.bf16.msra.mxu0 0
  %468 = vmatprep.mubr.bf16.mxu0 0
  %469 = vmatmul.mubr.bf16.gmra.mrb[0].mxu0 %v110
  %v470 = vpop.f32.mrb[0].mxu0
  %v471 = vadd.f32 %v431, %v470
  %v472 = vpop.f32.mrb[0].mxu0
  %v473 = vpop.f32.mrb[0].mxu0
  %v474 = vpop.f32.mrb[0].mxu0
  %475 = vdwg.mxu0
  %476 = vst [vmem:[%s2] sm:$0xff] %v471
  %v477 = vlaneseq
  %v478 = vshrl.u32 %v477, 7
  %vm479 = vcmp.eq.s32.totalorder %v478, 0
  %v480 = vrot.slane %v471, 4
  %v481 = vadd.f32 %v471, %v480
  %v482 = vrot.slane %v481, 2
  %v483 = vadd.f32 %v481, %v482
  %v484 = vrot.slane %v483, 1
  %v485 = vadd.f32 %v483, %v484
  %v486 = vsel %vm479, %v485, 0.0
  %487 = vst [vmem:[%s3] sm:$0xff] %v486
  %v488 = vmul.f32 %v471, %v471
  %v489 = vrot.slane %v488, 4
  %v490 = vadd.f32 %v488, %v489
  %v491 = vrot.slane %v490, 2
  %v492 = vadd.f32 %v490, %v491
  %v493 = vrot.slane %v492, 1
  %v494 = vadd.f32 %v492, %v493
  %v495 = vsel %vm479, %v494, 0.0
  %496 = vst [vmem:[%s4] sm:$0xff] %v495
  // Predicated region
  $region10: #{stereonet_forward.36} parent=0 // pred_check
    _
  $region11: #{stereonet_forward.36} parent=0 // pred_check_branch
    %498 = sbr.rel (0) target = $region13
  $region12: #{stereonet_forward.36} parent=0 // pred_region
    _
  $region13: #{stereonet_forward.36} parent=0 // pred_fallthru
    _
  // Predicated region
  $region14: #{stereonet_forward.36} parent=0 // pred_check
    _
  $region15: #{stereonet_forward.36} parent=0 // pred_check_branch
    %500 = sbr.rel (0) target = $region17
  $region16: #{stereonet_forward.36} parent=0 // pred_region
    _
  $region17: #{stereonet_forward.36} parent=0 // pred_fallthru
    _
  // Predicated region
  $region18: #{stereonet_forward.36} parent=0 // pred_check
    _
  $region19: #{stereonet_forward.36} parent=0 // pred_check_branch
    %502 = sbr.rel (0) target = $region21
  $region20: #{stereonet_forward.36} parent=0 // pred_region
    _
  $region21: #{stereonet_forward.36} parent=0 // pred_fallthru
    _
  // Predicated region
  $region22: #{stereonet_forward.36} parent=0 // pred_check
    _
  $region23: #{stereonet_forward.36} parent=0 // pred_check_branch
    %504 = sbr.rel (0) target = $region25
  $region24: #{stereonet_forward.36} parent=0 // pred_region
    _
  $region25: #{stereonet_forward.36} parent=0 // pred_fallthru
    _
  // Predicated region
  $region26: #{stereonet_forward.36} parent=0 // pred_check
    _
  $region27: #{stereonet_forward.36} parent=0 // pred_check_branch
    %506 = sbr.rel (0) target = $region29
  $region28: #{stereonet_forward.36} parent=0 // pred_region
    _
  $region29: #{stereonet_forward.36} parent=0 // pred_fallthru
    _
  // Predicated region
  $region30: #{stereonet_forward.36} parent=0 // pred_check
    _
  $region31: #{stereonet_forward.36} parent=0 // pred_check_branch
    %508 = sbr.rel (0) target = $region33
  $region32: #{stereonet_forward.36} parent=0 // pred_region
    _
  $region33: #{stereonet_forward.36} parent=0 // pred_fallthru
    _

// kernel: stereonet_forward.38
$region0: #{stereonet_forward.38}
  #allocation0 [shape = 'u32[]', space=smem, size = 0x4, offset = 0x4, fixed_abs, tag = 'smem constant byte address 0x4 - core index']
  #allocation1 [shape = 'u32[144,128]{1,0:T(1,128)}', space=vmem, size = 0x12000, scoped, tag = 'internal scratch']
  %s0 = inlined_call_operand.vmem [shape: bf16[8,384], index: 0, kind: input, shape index: {}]
  %s1 = inlined_call_operand.vmem [shape: bf16[384,128], index: 1, kind: input, shape index: {}]
  %s2 = inlined_call_operand.vmem [shape: f32[1,128], index: 2, kind: input, shape index: {}]
  %s3 = inlined_call_operand.vmem [shape: f32[8,128], index: 3, kind: output, shape index: {}]
  %s4 = sld [smem:[#allocation0]]
  $region22: #{stereonet_forward.38} parent=0
    _
  %s6 = ssub.s32 1, %s4
  %s7 = scalar_select 0, %s6, %s4
  // Predicated region
  $region2: #{stereonet_forward.38} parent=0 // pred_check
    _
  $region3: #{stereonet_forward.38} parent=0 // pred_check_branch
    %9 = sbr.rel (0) target = $region5
  $region4: #{stereonet_forward.38} parent=0 // pred_region
    _
  $region5: #{stereonet_forward.38} parent=0 // pred_fallthru
    _
  // Predicated region
  $region6: #{stereonet_forward.38} parent=0 // pred_check
    _
  $region7: #{stereonet_forward.38} parent=0 // pred_check_branch
    %11 = sbr.rel (0) target = $region9
  $region8: #{stereonet_forward.38} parent=0 // pred_region
    _
  $region9: #{stereonet_forward.38} parent=0 // pred_fallthru
    _
  // Predicated region
  $region10: #{stereonet_forward.38} parent=0 // pred_check
    _
  $region11: #{stereonet_forward.38} parent=0 // pred_check_branch
    %13 = sbr.rel (0) target = $region13
  $region12: #{stereonet_forward.38} parent=0 // pred_region
    _
  $region13: #{stereonet_forward.38} parent=0 // pred_fallthru
    _
  %v15 = vld [vmem:[%s0] sm:$0xff]
  %v16 = vld [vmem:[%s0 + $0x8] sm:$0xf]
  %v17 = vld [vmem:[%s1] sm:$0xf]
  %v18 = vld [vmem:[%s1 + $0x4] sm:$0xf]
  %v19 = vld [vmem:[%s1 + $0x8] sm:$0xf]
  %v20 = vld [vmem:[%s1 + $0xc] sm:$0xf]
  %v21 = vld [vmem:[%s1 + $0x10] sm:$0xf]
  %v22 = vld [vmem:[%s1 + $0x14] sm:$0xf]
  %v23 = vld [vmem:[%s1 + $0x18] sm:$0xf]
  %v24 = vld [vmem:[%s1 + $0x1c] sm:$0xf]
  %v25 = vld [vmem:[%s1 + $0x20] sm:$0xf]
  %v26 = vld [vmem:[%s1 + $0x24] sm:$0xf]
  %v27 = vld [vmem:[%s1 + $0x28] sm:$0xf]
  %v28 = vld [vmem:[%s1 + $0x2c] sm:$0xf]
  %v29 = vld [vmem:[%s1 + $0x30] sm:$0xf]
  %v30 = vld [vmem:[%s1 + $0x34] sm:$0xf]
  %v31 = vld [vmem:[%s1 + $0x38] sm:$0xf]
  %v32 = vld [vmem:[%s1 + $0x3c] sm:$0xf]
  %v33 = vld [vmem:[%s1 + $0x40] sm:$0xf]
  %v34 = vld [vmem:[%s1 + $0x44] sm:$0xf]
  %v35 = vld [vmem:[%s1 + $0x48] sm:$0xf]
  %v36 = vld [vmem:[%s1 + $0x4c] sm:$0xf]
  %v37 = vld [vmem:[%s1 + $0x50] sm:$0xf]
  %v38 = vld [vmem:[%s1 + $0x54] sm:$0xf]
  %v39 = vld [vmem:[%s1 + $0x58] sm:$0xf]
  %v40 = vld [vmem:[%s1 + $0x5c] sm:$0xf]
  %v41 = vld [vmem:[%s1 + $0x60] sm:$0xf]
  %v42 = vld [vmem:[%s1 + $0x64] sm:$0xf]
  %v43 = vld [vmem:[%s1 + $0x68] sm:$0xf]
  %v44 = vld [vmem:[%s1 + $0x6c] sm:$0xf]
  %v45 = vld [vmem:[%s1 + $0x70] sm:$0xf]
  %v46 = vld [vmem:[%s1 + $0x74] sm:$0xf]
  %v47 = vld [vmem:[%s1 + $0x78] sm:$0xf]
  %v48 = vld [vmem:[%s1 + $0x7c] sm:$0xf]
  %v49 = vld [vmem:[%s1 + $0x80] sm:$0xf]
  %v50 = vld [vmem:[%s1 + $0x84] sm:$0xf]
  %v51 = vld [vmem:[%s1 + $0x88] sm:$0xf]
  %v52 = vld [vmem:[%s1 + $0x8c] sm:$0xf]
  %v53 = vld [vmem:[%s1 + $0x90] sm:$0xf]
  %v54 = vld [vmem:[%s1 + $0x94] sm:$0xf]
  %v55 = vld [vmem:[%s1 + $0x98] sm:$0xf]
  %v56 = vld [vmem:[%s1 + $0x9c] sm:$0xf]
  %v57 = vld [vmem:[%s1 + $0xa0] sm:$0xf]
  %v58 = vld [vmem:[%s1 + $0xa4] sm:$0xf]
  %v59 = vld [vmem:[%s1 + $0xa8] sm:$0xf]
  %v60 = vld [vmem:[%s1 + $0xac] sm:$0xf]
  %v61 = vld [vmem:[%s1 + $0xb0] sm:$0xf]
  %v62 = vld [vmem:[%s1 + $0xb4] sm:$0xf]
  %v63 = vld [vmem:[%s1 + $0xb8] sm:$0xf]
  %v64 = vld [vmem:[%s1 + $0xbc] sm:$0xf]
  %v65 = vld [vmem:[%s2] sm:$0x1]
  %v67 = vlaneseq
  %v68 = vshrl.u32 %v67, 7
  %v69 = vsub.s32 0, %v68
  %v70 = vrot.slane %v65, %v69
  %v74 = vunpack.c.l.b16 %v15
  %v75 = vunpack.c.h.b16 %v15
  %v76 = vunpack.c.l.b16 %v16
  %v77 = vpack.c.b16 %v74, %v74
  %v78 = vpack.c.b16 %v75, %v75
  %v79 = vpack.c.b16 %v76, %v76
  %v131 = vunpack.c.l.b16 %v17
  %v132 = vunpack.c.l.b16 %v18
  %v133 = vunpack.c.l.b16 %v19
  %v134 = vunpack.c.l.b16 %v20
  %v135 = vunpack.c.l.b16 %v21
  %v136 = vunpack.c.l.b16 %v22
  %v137 = vunpack.c.l.b16 %v23
  %v138 = vunpack.c.l.b16 %v24
  %v139 = vunpack.c.l.b16 %v25
  %v140 = vunpack.c.l.b16 %v26
  %v141 = vunpack.c.l.b16 %v27
  %v142 = vunpack.c.l.b16 %v28
  %v143 = vunpack.c.l.b16 %v29
  %v144 = vunpack.c.l.b16 %v30
  %v145 = vunpack.c.l.b16 %v31
  %v146 = vunpack.c.l.b16 %v32
  %v147 = vunpack.c.l.b16 %v33
  %v148 = vunpack.c.l.b16 %v34
  %v149 = vunpack.c.l.b16 %v35
  %v150 = vunpack.c.l.b16 %v36
  %v151 = vunpack.c.l.b16 %v37
  %v152 = vunpack.c.l.b16 %v38
  %v153 = vunpack.c.l.b16 %v39
  %v154 = vunpack.c.l.b16 %v40
  %v155 = vunpack.c.l.b16 %v41
  %v156 = vunpack.c.l.b16 %v42
  %v157 = vunpack.c.l.b16 %v43
  %v158 = vunpack.c.l.b16 %v44
  %v159 = vunpack.c.l.b16 %v45
  %v160 = vunpack.c.l.b16 %v46
  %v161 = vunpack.c.l.b16 %v47
  %v162 = vunpack.c.l.b16 %v48
  %v163 = vunpack.c.l.b16 %v49
  %v164 = vunpack.c.l.b16 %v50
  %v165 = vunpack.c.l.b16 %v51
  %v166 = vunpack.c.l.b16 %v52
  %v167 = vunpack.c.l.b16 %v53
  %v168 = vunpack.c.l.b16 %v54
  %v169 = vunpack.c.l.b16 %v55
  %v170 = vunpack.c.l.b16 %v56
  %v171 = vunpack.c.l.b16 %v57
  %v172 = vunpack.c.l.b16 %v58
  %v173 = vunpack.c.l.b16 %v59
  %v174 = vunpack.c.l.b16 %v60
  %v175 = vunpack.c.l.b16 %v61
  %v176 = vunpack.c.l.b16 %v62
  %v177 = vunpack.c.l.b16 %v63
  %v178 = vunpack.c.l.b16 %v64
  %v179 = vpack.c.b16 %v132, %v131
  %v180 = vpack.c.b16 %v134, %v133
  %v181 = vpack.c.b16 %v136, %v135
  %v182 = vpack.c.b16 %v138, %v137
  %v183 = vpack.c.b16 %v140, %v139
  %v184 = vpack.c.b16 %v142, %v141
  %v185 = vpack.c.b16 %v144, %v143
  %v186 = vpack.c.b16 %v146, %v145
  %v187 = vpack.c.b16 %v148, %v147
  %v188 = vpack.c.b16 %v150, %v149
  %v189 = vpack.c.b16 %v152, %v151
  %v190 = vpack.c.b16 %v154, %v153
  %v191 = vpack.c.b16 %v156, %v155
  %v192 = vpack.c.b16 %v158, %v157
  %v193 = vpack.c.b16 %v160, %v159
  %v194 = vpack.c.b16 %v162, %v161
  %v195 = vpack.c.b16 %v164, %v163
  %v196 = vpack.c.b16 %v166, %v165
  %v197 = vpack.c.b16 %v168, %v167
  %v198 = vpack.c.b16 %v170, %v169
  %v199 = vpack.c.b16 %v172, %v171
  %v200 = vpack.c.b16 %v174, %v173
  %v201 = vpack.c.b16 %v176, %v175
  %v202 = vpack.c.b16 %v178, %v177
  %227 = vmatprep.subr.bf16.mxu0 0
  %228 = vmatpush1.bf16.msra.mxu0 %v179
  %229 = vmatprep.subr.bf16.mxu0 0
  %230 = vmatpush1.bf16.msra.mxu0 %v180
  %231 = vmatprep.subr.bf16.mxu0 0
  %232 = vmatpush1.bf16.msra.mxu0 %v181
  %233 = vmatprep.subr.bf16.mxu0 0
  %234 = vmatpush1.bf16.msra.mxu0 %v182
  %235 = vmatprep.subr.bf16.mxu0 0
  %236 = vmatpush1.bf16.msra.mxu0 %v183
  %237 = vmatprep.subr.bf16.mxu0 0
  %238 = vmatpush1.bf16.msra.mxu0 %v184
  %239 = vmatprep.subr.bf16.mxu0 0
  %240 = vmatpush1.bf16.msra.mxu0 %v185
  %241 = vmatprep.subr.bf16.mxu0 0
  %242 = vmatpush1.bf16.msra.mxu0 %v186
  %243 = vmatprep.subr.bf16.mxu0 0
  %244 = vmatpush1.bf16.msra.mxu0 %v187
  %245 = vmatprep.subr.bf16.mxu0 0
  %246 = vmatpush1.bf16.msra.mxu0 %v188
  %247 = vmatprep.subr.bf16.mxu0 0
  %248 = vmatpush1.bf16.msra.mxu0 %v189
  %249 = vmatprep.subr.bf16.mxu0 0
  %250 = vmatpush1.bf16.msra.mxu0 %v190
  %251 = vmatprep.subr.bf16.mxu0 0
  %252 = vmatpush1.bf16.msra.mxu0 %v191
  %253 = vmatprep.subr.bf16.mxu0 0
  %254 = vmatpush1.bf16.msra.mxu0 %v192
  %255 = vmatprep.subr.bf16.mxu0 0
  %256 = vmatpush1.bf16.msra.mxu0 %v193
  %257 = vmatprep.subr.bf16.mxu0 0
  %258 = vmatpush1.bf16.msra.mxu0 %v194
  %259 = vmatprep.mubr.bf16.mxu0 %v78
  %260 = vmatmul.mubr.bf16.gmra.mrb[0].mxu0 %v77
  %v261 = vpop.f32.mrb[0].mxu0
  %v262 = vadd.f32 %v70, %v261
  %v263 = vpop.f32.mrb[0].mxu0
  %v264 = vpop.f32.mrb[0].mxu0
  %v265 = vpop.f32.mrb[0].mxu0
  %266 = vdwg.mxu0
  %267 = vmatprep.subr.bf16.mxu0 0
  %268 = vmatpush1.bf16.msra.mxu0 %v195
  %269 = vmatprep.subr.bf16.mxu0 0
  %270 = vmatpush1.bf16.msra.mxu0 %v196
  %271 = vmatprep.subr.bf16.mxu0 0
  %272 = vmatpush1.bf16.msra.mxu0 %v197
  %273 = vmatprep.subr.bf16.mxu0 0
  %274 = vmatpush1.bf16.msra.mxu0 %v198
  %275 = vmatprep.subr.bf16.mxu0 0
  %276 = vmatpush1.bf16.msra.mxu0 %v199
  %277 = vmatprep.subr.bf16.mxu0 0
  %278 = vmatpush1.bf16.msra.mxu0 %v200
  %279 = vmatprep.subr.bf16.mxu0 0
  %280 = vmatpush1.bf16.msra.mxu0 %v201
  %281 = vmatprep.subr.bf16.mxu0 0
  %282 = vmatpush1.bf16.msra.mxu0 %v202
  %283 = vmatprep.subr.bf16.mxu0 0
  %284 = vmatpush1.bf16.msra.mxu0 0
  %285 = vmatprep.subr.bf16.mxu0 0
  %286 = vmatpush1.bf16.msra.mxu0 0
  %287 = vmatprep.subr.bf16.mxu0 0
  %288 = vmatpush1.bf16.msra.mxu0 0
  %289 = vmatprep.subr.bf16.mxu0 0
  %290 = vmatpush1.bf16.msra.mxu0 0
  %291 = vmatprep.subr.bf16.mxu0 0
  %292 = vmatpush1.bf16.msra.mxu0 0
  %293 = vmatprep.subr.bf16.mxu0 0
  %294 = vmatpush1.bf16.msra.mxu0 0
  %295 = vmatprep.subr.bf16.mxu0 0
  %296 = vmatpush1.bf16.msra.mxu0 0
  %297 = vmatprep.subr.bf16.mxu0 0
  %298 = vmatpush1.bf16.msra.mxu0 0
  %299 = vmatprep.mubr.bf16.mxu0 0
  %300 = vmatmul.mubr.bf16.gmra.mrb[0].mxu0 %v79
  %v301 = vpop.f32.mrb[0].mxu0
  %v302 = vadd.f32 %v262, %v301
  %v303 = vpop.f32.mrb[0].mxu0
  %v304 = vpop.f32.mrb[0].mxu0
  %v305 = vpop.f32.mrb[0].mxu0
  %306 = vdwg.mxu0
  %307 = vst [vmem:[%s3] sm:$0xff] %v302
  // Predicated region
  $region14: #{stereonet_forward.38} parent=0 // pred_check
    _
  $region15: #{stereonet_forward.38} parent=0 // pred_check_branch
    %309 = sbr.rel (0) target = $region17
  $region16: #{stereonet_forward.38} parent=0 // pred_region
    _
  $region17: #{stereonet_forward.38} parent=0 // pred_fallthru
    _
  // Predicated region
  $region18: #{stereonet_forward.38} parent=0 // pred_check
    _
  $region19: #{stereonet_forward.38} parent=0 // pred_check_branch
    %311 = sbr.rel (0) target = $region21
  $region20: #{stereonet_forward.38} parent=0 // pred_region
    _
  $region21: #{stereonet_forward.38} parent=0 // pred_fallthru
    _

// kernel: stereonet_forward.39
$region0: #{stereonet_forward.39}
  #allocation0 [shape = 'u32[]', space=smem, size = 0x4, offset = 0x4, fixed_abs, tag = 'smem constant byte address 0x4 - core index']
  #allocation1 [shape = 'u32[144,128]{1,0:T(1,128)}', space=vmem, size = 0x12000, scoped, tag = 'internal scratch']
  %s0 = inlined_call_operand.vmem [shape: f32[2,8,128], index: 0, kind: input, shape index: {}]
  %s1 = inlined_call_operand.vmem [shape: f32[480,8], index: 1, kind: input, shape index: {}]
  %s2 = inlined_call_operand.vmem [shape: f32[128,640], index: 2, kind: input, shape index: {}]
  %s3 = inlined_call_operand.hbm [shape: f32[2,480,640], index: 3, kind: output, shape index: {}]
  %s4 = sld [smem:[#allocation0]]
  $region45: #{stereonet_forward.39} parent=0
    _
  %s6 = ssub.s32 1, %s4
  %s7 = scalar_select 0, %s6, %s4
  $region1: #{stereonet_forward.39} parent=0
    #allocation2 [shape = 'u8[614400]{0}', space=vmem, size = 0x96000, scoped, tag = 'output window, operand 0']
    #allocation3 [shape = 's32[2]{0}', space=sflag, size = 0x8, scoped, tag = 'scoped memory for stereonet_forward.39']
    %8 = vsyncpa [#allocation3], 0
    %s9 = scalar_lea.sflag [#allocation3], 1
    %10 = vsyncpa %s9, 0
    loop: start=0, step=1, limit=10
    $region2: #{stereonet_forward.39} parent=1 // loop_pre_header
      _
    $region3: #{stereonet_forward.39} parent=1 // loop_header
      %s12 = sphi 0, %s16
      %p13 = scmp.ge.s32.totalorder %s12, 10
      %s19 = sphi 0, %s31
      %s20 = sphi 0, %s27
      %s21 = sphi 0, %s19
      %s22 = sphi 0, %s20
      %s23 = sphi 0, %s21
      %s24 = sphi 0, %s22
      %s34 = sphi 0, %s36
      %s37 = sphi 0, %s34
      %s38 = sphi 0, %s37
      %s54 = sphi 0, %s38
      %s60 = sphi 0, %s62
      %s63 = sphi 0, %s60
      %s64 = sphi 0, %s63
      %s80 = sphi 0, %s64
      %s84 = sphi 0, %s84
      %s86 = sphi 0, %s84
      %s87 = sphi 0, %s86
      %s101 = sphi 0, %s87
      %s109 = sphi 0, %s111
      %s112 = sphi 0, %s109
      %s113 = sphi 0, %s112
      %s129 = sphi 0, %s113
    $region4: #{stereonet_forward.39} parent=1 // loop_header_branch
      %15 = sbr.rel (%p13) target = $region8
    $region5: #{stereonet_forward.39} parent=1 // loop_body
      %s17 = ssub.s32 %s12, 1
      %s18 = ssub.s32 %s12, 2
      %s25 = sadd.s32 1, %s20
      %p26 = scmp.ge.s32.totalorder %s25, 4
      %s27 = scalar_select %p26, 0, %s25
      %s28 = sadd.s32 1, %s19
      %s29 = scalar_select %p26, %s28, %s19
      %p30 = scmp.ge.s32.totalorder %s29, 2
      %s31 = scalar_select %p30, 0, %s29
      %s32 = ssub.s32 %s19, %s31
      %p33 = scmp.eq.s32.totalorder %s32, 0
      %s35 = sadd.s32 %s34, 1
      %s36 = scalar_select %p33, %s34, %s35
      %p39 = pneg %p33
      %p40 = scmp.eq.s32.totalorder %s12, 7
      %p41 = por %p39, %p40
      %p42 = scmp.ne.s32.totalorder %s34, %s37
      %p43 = scmp.eq.s32.totalorder %s12, 0
      %p44 = por %p42, %p43
      %p45 = scmp.ne.s32.totalorder %s34, %s37
      %p46 = scmp.eq.s32.totalorder %s17, 7
      %p47 = por %p45, %p46
      %p48 = scmp.ne.s32.totalorder %s37, %s38
      %p49 = scmp.eq.s32.totalorder %s17, 0
      %p50 = por %p48, %p49
      %p51 = scmp.ne.s32.totalorder %s37, %s38
      %p52 = scmp.eq.s32.totalorder %s18, 7
      %p53 = por %p51, %p52
      %p55 = scmp.ne.s32.totalorder %s38, %s54
      %p56 = scmp.eq.s32.totalorder %s18, 0
      %p57 = por %p55, %p56
      %s58 = ssub.s32 %s20, %s27
      %p59 = scmp.eq.s32.totalorder %s58, 0
      %s61 = sadd.s32 %s60, 1
      %s62 = scalar_select %p59, %s60, %s61
      %p65 = pneg %p59
      %p66 = scmp.eq.s32.totalorder %s12, 7
      %p67 = por %p65, %p66
      %p68 = scmp.ne.s32.totalorder %s60, %s63
      %p69 = scmp.eq.s32.totalorder %s12, 0
      %p70 = por %p68, %p69
      %p71 = scmp.ne.s32.totalorder %s60, %s63
      %p72 = scmp.eq.s32.totalorder %s17, 7
      %p73 = por %p71, %p72
      %p74 = scmp.ne.s32.totalorder %s63, %s64
      %p75 = scmp.eq.s32.totalorder %s17, 0
      %p76 = por %p74, %p75
      %p77 = scmp.ne.s32.totalorder %s63, %s64
      %p78 = scmp.eq.s32.totalorder %s18, 7
      %p79 = por %p77, %p78
      %p81 = scmp.ne.s32.totalorder %s64, %s80
      %p82 = scmp.eq.s32.totalorder %s18, 0
      %p83 = por %p81, %p82
      %s85 = sadd.s32 %s84, 1
      %p88 = scmp.eq.s32.totalorder %s12, 7
      %p89 = scmp.ne.s32.totalorder %s84, %s86
      %p90 = scmp.eq.s32.totalorder %s12, 0
      %p91 = por %p89, %p90
      %p92 = scmp.ne.s32.totalorder %s84, %s86
      %p93 = scmp.eq.s32.totalorder %s17, 7
      %p94 = por %p92, %p93
      %p95 = scmp.ne.s32.totalorder %s86, %s87
      %p96 = scmp.eq.s32.totalorder %s17, 0
      %p97 = por %p95, %p96
      %p98 = scmp.ne.s32.totalorder %s86, %s87
      %p99 = scmp.eq.s32.totalorder %s18, 7
      %p100 = por %p98, %p99
      %p102 = scmp.ne.s32.totalorder %s87, %s101
      %p103 = scmp.eq.s32.totalorder %s18, 0
      %p104 = por %p102, %p103
      %s105 = ssub.s32 %s19, %s31
      %s106 = ssub.s32 %s20, %s27
      %s107 = sor.u32 %s105, %s106
      %p108 = scmp.eq.s32.totalorder %s107, 0
      %s110 = sadd.s32 %s109, 1
      %s111 = scalar_select %p108, %s109, %s110
      %p114 = pneg %p108
      %p115 = scmp.eq.s32.totalorder %s12, 7
      %p116 = por %p114, %p115
      %p117 = scmp.ne.s32.totalorder %s109, %s112
      %p118 = scmp.eq.s32.totalorder %s12, 0
      %p119 = por %p117, %p118
      %p120 = scmp.ne.s32.totalorder %s109, %s112
      %p121 = scmp.eq.s32.totalorder %s17, 7
      %p122 = por %p120, %p121
      %p123 = scmp.ne.s32.totalorder %s112, %s113
      %p124 = scmp.eq.s32.totalorder %s17, 0
      %p125 = por %p123, %p124
      %p126 = scmp.ne.s32.totalorder %s112, %s113
      %p127 = scmp.eq.s32.totalorder %s18, 7
      %p128 = por %p126, %p127
      %p130 = scmp.ne.s32.totalorder %s113, %s129
      %p131 = scmp.eq.s32.totalorder %s18, 0
      %p132 = por %p130, %p131
      %p133 = scmp.le.s32.totalorder 1, %s12
      %p134 = scmp.lt.s32.totalorder %s12, 9
      %p135 = pnand %p133, %p134
      %p136 = pneg %p135
      // Predicated region
      $region9: #{stereonet_forward.39} parent=5 // pred_check
        _
      $region10: #{stereonet_forward.39} parent=5 // pred_check_branch
        %138 = sbr.rel (%p135) target = $region12
      $region11: #{stereonet_forward.39} parent=5 // pred_region
        %s139 = ssub.s32 %s12, 1
        // Predicated region
        $region13: #{stereonet_forward.39} parent=11 // pred_check
          %p140 = pneg %p97
        $region14: #{stereonet_forward.39} parent=11 // pred_check_branch
          %142 = sbr.rel (%p140) target = $region16
        $region15: #{stereonet_forward.39} parent=11 // pred_region
          _
        $region16: #{stereonet_forward.39} parent=11 // pred_fallthru
          _
      $region12: #{stereonet_forward.39} parent=5 // pred_fallthru
        _
      %p143 = scmp.lt.s32.totalorder %s12, 8
      // Predicated region
      $region17: #{stereonet_forward.39} parent=5 // pred_check
        %p144 = pneg %p143
      $region18: #{stereonet_forward.39} parent=5 // pred_check_branch
        %146 = sbr.rel (%p144) target = $region20
      $region19: #{stereonet_forward.39} parent=5 // pred_region
        // Predicated region
        $region21: #{stereonet_forward.39} parent=19 // pred_check
          %p147 = pneg %p44
        $region22: #{stereonet_forward.39} parent=19 // pred_check_branch
          %149 = sbr.rel (%p147) target = $region24
        $region23: #{stereonet_forward.39} parent=19 // pred_region
          %p150 = scmp.lt.s32.totalorder %s19, 1
          %s151 = scalar_select %p150, %s19, 1
          %s152 = smul.addr %s151, 8
          %s153 = scalar_lea.vmem %s0, %s152
        $region24: #{stereonet_forward.39} parent=19 // pred_fallthru
          _
        // Predicated region
        $region25: #{stereonet_forward.39} parent=19 // pred_check
          %p154 = pneg %p70
        $region26: #{stereonet_forward.39} parent=19 // pred_check_branch
          %156 = sbr.rel (%p154) target = $region28
        $region27: #{stereonet_forward.39} parent=19 // pred_region
          %s157 = smul.u32 15, %s20
          %p158 = scmp.lt.s32.totalorder %s157, 59
          %s159 = scalar_select %p158, %s157, 59
          %s160 = smul.addr %s159, 8
          %s161 = scalar_lea.vmem %s1, %s160
          %s162 = smul.u32 15, %s20
        $region28: #{stereonet_forward.39} parent=19 // pred_fallthru
          _
      $region20: #{stereonet_forward.39} parent=5 // pred_fallthru
        _
      %p163 = scmp.le.s32.totalorder 1, %s12
      %p164 = scmp.lt.s32.totalorder %s12, 9
      %p165 = pnand %p163, %p164
      %p166 = pneg %p165
      // Predicated region
      $region29: #{stereonet_forward.39} parent=5 // pred_check
        _
      $region30: #{stereonet_forward.39} parent=5 // pred_check_branch
        %168 = sbr.rel (%p165) target = $region32
      $region31: #{stereonet_forward.39} parent=5 // pred_region
        %s169 = ssub.s32 %s12, 1
        %p170 = scmp.lt.s32.totalorder %s21, 1
        %s171 = scalar_select %p170, %s21, 1
        %s172 = smul.addr %s171, 8
        %s173 = scalar_lea.vmem %s0, %s172
        %p174 = pneg %p50
        %p175 = pneg %p47
        %s176 = smul.u32 15, %s22
        %p177 = scmp.lt.s32.totalorder %s176, 59
        %s178 = scalar_select %p177, %s176, 59
        %s179 = smul.addr %s178, 8
        %s180 = scalar_lea.vmem %s1, %s179
        %p181 = pneg %p76
        %p182 = pneg %p73
        %p183 = pneg %p97
        %p184 = pneg %p94
        %p185 = pneg %p125
        %p186 = pneg %p122
        %s187 = sand.u32 %s112, 1
        %s188 = scalar_lea.sflag [#allocation3], %s187
        %s189 = sand.u32 %s112, 1
        %s190 = smul.addr %s189, 600
        %s191 = scalar_lea.vmem [#allocation2], %s190
        %p192 = scmp.lt.s32.totalorder %s21, 1
        %s193 = scalar_select %p192, %s21, 1
        %s194 = smul.addr %s193, 8
        %s195 = scalar_lea.vmem %s0, %s194
        %s196 = smul.u32 15, %s22
        %p197 = scmp.lt.s32.totalorder %s196, 59
        %s198 = scalar_select %p197, %s196, 59
        %s199 = smul.addr %s198, 8
        %s200 = scalar_lea.vmem %s1, %s199
        %s201 = smul.u32 15, %s22
        %s202 = smul.u32 15, %s22
        %v203 = vld [vmem:[%s200] sm:$0xff]
        %v204 = vld [vmem:[%s200 + $0x8] sm:$0xff]
        %v205 = vld [vmem:[%s200 + $0x10] sm:$0xff]
        %v206 = vld [vmem:[%s200 + $0x18] sm:$0xff]
        %v207 = vld [vmem:[%s200 + $0x20] sm:$0xff]
        %v208 = vld [vmem:[%s200 + $0x28] sm:$0xff]
        %v209 = vld [vmem:[%s200 + $0x30] sm:$0xff]
        %v210 = vld [vmem:[%s200 + $0x38] sm:$0xff]
        %v211 = vld [vmem:[%s200 + $0x40] sm:$0xff]
        %v212 = vld [vmem:[%s200 + $0x48] sm:$0xff]
        %v213 = vld [vmem:[%s200 + $0x50] sm:$0xff]
        %v214 = vld [vmem:[%s200 + $0x58] sm:$0xff]
        %v215 = vld [vmem:[%s200 + $0x60] sm:$0xff]
        %v216 = vld [vmem:[%s200 + $0x68] sm:$0xff]
        %v217 = vld [vmem:[%s200 + $0x70] sm:$0xff]
        %v218 = vld [vmem:[%s195] sm:$0xff]
        %vm219 = vcmask 64512
        %v221 = vsel %vm219, %v203, 0
        %v224 = vsel %vm219, %v204, 0
        %v227 = vsel %vm219, %v205, 0
        %v230 = vsel %vm219, %v206, 0
        %v233 = vsel %vm219, %v207, 0
        %v236 = vsel %vm219, %v208, 0
        %v239 = vsel %vm219, %v209, 0
        %v242 = vsel %vm219, %v210, 0
        %v245 = vsel %vm219, %v211, 0
        %v248 = vsel %vm219, %v212, 0
        %v251 = vsel %vm219, %v213, 0
        %v254 = vsel %vm219, %v214, 0
        %v257 = vsel %vm219, %v215, 0
        %v260 = vsel %vm219, %v216, 0
        %v263 = vsel %vm219, %v217, 0
        %265 = vmatprep.subr.mxu0 0.0
        %266 = vmatpush1.msra.mxu0 %v218
        %267 = vmatprep.subr.mxu0 0.0
        %268 = vmatpush1.msra.mxu0 0.0
        %269 = vmatprep.subr.mxu0 0.0
        %270 = vmatpush1.msra.mxu0 0.0
        %271 = vmatprep.subr.mxu0 0.0
        %272 = vmatpush1.msra.mxu0 0.0
        %273 = vmatprep.subr.mxu0 0.0
        %274 = vmatpush1.msra.mxu0 0.0
        %275 = vmatprep.subr.mxu0 0.0
        %276 = vmatpush1.msra.mxu0 0.0
        %277 = vmatprep.subr.mxu0 0.0
        %278 = vmatpush1.msra.mxu0 0.0
        %279 = vmatprep.subr.mxu0 0.0
        %280 = vmatpush1.msra.mxu0 0.0
        %281 = vmatprep.subr.mxu0 0.0
        %282 = vmatpush1.msra.mxu0 0.0
        %283 = vmatprep.subr.mxu0 0.0
        %284 = vmatpush1.msra.mxu0 0.0
        %285 = vmatprep.subr.mxu0 0.0
        %286 = vmatpush1.msra.mxu0 0.0
        %287 = vmatprep.subr.mxu0 0.0
        %288 = vmatpush1.msra.mxu0 0.0
        %289 = vmatprep.subr.mxu0 0.0
        %290 = vmatpush1.msra.mxu0 0.0
        %291 = vmatprep.subr.mxu0 0.0
        %292 = vmatpush1.msra.mxu0 0.0
        %293 = vmatprep.subr.mxu0 0.0
        %294 = vmatpush1.msra.mxu0 0.0
        %295 = vmatprep.subr.mxu0 0.0
        %296 = vmatpush1.msra.mxu0 0.0
        %297 = vmatprep.subr.mxu0 0.0
        %298 = vmatpush1.msra.mxu0 0.0
        %299 = vmatprep.subr.mxu0 0.0
        %300 = vmatpush1.msra.mxu0 0.0
        %301 = vmatprep.subr.mxu0 0.0
        %302 = vmatpush1.msra.mxu0 0.0
        %303 = vmatprep.subr.mxu0 0.0
        %304 = vmatpush1.msra.mxu0 0.0
        %305 = vmatprep.subr.mxu0 0.0
        %306 = vmatpush1.msra.mxu0 0.0
        %307 = vmatprep.subr.mxu0 0.0
        %308 = vmatpush1.msra.mxu0 0.0
        %309 = vmatprep.subr.mxu0 0.0
        %310 = vmatpush1.msra.mxu0 0.0
        %311 = vmatprep.subr.mxu0 0.0
        %312 = vmatpush1.msra.mxu0 0.0
        %313 = vmatprep.subr.mxu0 0.0
        %314 = vmatpush1.msra.mxu0 0.0
        %315 = vmatprep.subr.mxu0 0.0
        %316 = vmatpush1.msra.mxu0 0.0
        %317 = vmatprep.subr.mxu0 0.0
        %318 = vmatpush1.msra.mxu0 0.0
        %319 = vmatprep.subr.mxu0 0.0
        %320 = vmatpush1.msra.mxu0 0.0
        %321 = vmatprep.subr.mxu0 0.0
        %322 = vmatpush1.msra.mxu0 0.0
        %323 = vmatprep.subr.mxu0 0.0
        %324 = vmatpush1.msra.mxu0 0.0
        %325 = vmatprep.subr.mxu0 0.0
        %326 = vmatpush1.msra.mxu0 0.0
        %327 = vmatprep.subr.mxu0 0.0
        %328 = vmatpush1.msra.mxu0 0.0
        %329 = vmatprep.mubr.f32.mxu0 0.0
        %330 = vmatmul.mubr.f32.gmra.mrb[0].mxu0 %v221
        %v331 = vpop.f32.mrb[0].mxu0
        %v332 = vadd.f32 0.0, %v331
        %v333 = vpop.f32.mrb[0].mxu0
        %334 = vmatprep.mubr.f32.mxu0 0.0
        %335 = vmatmul.mubr.f32.gmra.mrb[0].mxu0 %v224
        %v336 = vpop.f32.mrb[0].mxu0
        %v337 = vadd.f32 0.0, %v336
        %v338 = vpop.f32.mrb[0].mxu0
        %339 = vmatprep.mubr.f32.mxu0 0.0
        %340 = vmatmul.mubr.f32.gmra.mrb[0].mxu0 %v227
        %v341 = vpop.f32.mrb[0].mxu0
        %v342 = vadd.f32 0.0, %v341
        %v343 = vpop.f32.mrb[0].mxu0
        %344 = vmatprep.mubr.f32.mxu0 0.0
        %345 = vmatmul.mubr.f32.gmra.mrb[0].mxu0 %v230
        %v346 = vpop.f32.mrb[0].mxu0
        %v347 = vadd.f32 0.0, %v346
        %v348 = vpop.f32.mrb[0].mxu0
        %349 = vmatprep.mubr.f32.mxu0 0.0
        %350 = vmatmul.mubr.f32.gmra.mrb[0].mxu0 %v233
        %v351 = vpop.f32.mrb[0].mxu0
        %v352 = vadd.f32 0.0, %v351
        %v353 = vpop.f32.mrb[0].mxu0
        %354 = vmatprep.mubr.f32.mxu0 0.0
        %355 = vmatmul.mubr.f32.gmra.mrb[0].mxu0 %v236
        %v356 = vpop.f32.mrb[0].mxu0
        %v357 = vadd.f32 0.0, %v356
        %v358 = vpop.f32.mrb[0].mxu0
        %359 = vmatprep.mubr.f32.mxu0 0.0
        %360 = vmatmul.mubr.f32.gmra.mrb[0].mxu0 %v239
        %v361 = vpop.f32.mrb[0].mxu0
        %v362 = vadd.f32 0.0, %v361
        %v363 = vpop.f32.mrb[0].mxu0
        %364 = vmatprep.mubr.f32.mxu0 0.0
        %365 = vmatmul.mubr.f32.gmra.mrb[0].mxu0 %v242
        %v366 = vpop.f32.mrb[0].mxu0
        %v367 = vadd.f32 0.0, %v366
        %v368 = vpop.f32.mrb[0].mxu0
        %369 = vmatprep.mubr.f32.mxu0 0.0
        %370 = vmatmul.mubr.f32.gmra.mrb[0].mxu0 %v245
        %v371 = vpop.f32.mrb[0].mxu0
        %v372 = vadd.f32 0.0, %v371
        %v373 = vpop.f32.mrb[0].mxu0
        %374 = vmatprep.mubr.f32.mxu0 0.0
        %375 = vmatmul.mubr.f32.gmra.mrb[0].mxu0 %v248
        %v376 = vpop.f32.mrb[0].mxu0
        %v377 = vadd.f32 0.0, %v376
        %v378 = vpop.f32.mrb[0].mxu0
        %379 = vmatprep.mubr.f32.mxu0 0.0
        %380 = vmatmul.mubr.f32.gmra.mrb[0].mxu0 %v251
        %v381 = vpop.f32.mrb[0].mxu0
        %v382 = vadd.f32 0.0, %v381
        %v383 = vpop.f32.mrb[0].mxu0
        %384 = vmatprep.mubr.f32.mxu0 0.0
        %385 = vmatmul.mubr.f32.gmra.mrb[0].mxu0 %v254
        %v386 = vpop.f32.mrb[0].mxu0
        %v387 = vadd.f32 0.0, %v386
        %v388 = vpop.f32.mrb[0].mxu0
        %389 = vmatprep.mubr.f32.mxu0 0.0
        %390 = vmatmul.mubr.f32.gmra.mrb[0].mxu0 %v257
        %v391 = vpop.f32.mrb[0].mxu0
        %v392 = vadd.f32 0.0, %v391
        %v393 = vpop.f32.mrb[0].mxu0
        %394 = vmatprep.mubr.f32.mxu0 0.0
        %395 = vmatmul.mubr.f32.gmra.mrb[0].mxu0 %v260
        %v396 = vpop.f32.mrb[0].mxu0
        %v397 = vadd.f32 0.0, %v396
        %v398 = vpop.f32.mrb[0].mxu0
        %399 = vmatprep.mubr.f32.mxu0 0.0
        %400 = vmatmul.mubr.f32.gmra.mrb[0].mxu0 %v263
        %v401 = vpop.f32.mrb[0].mxu0
        %v402 = vadd.f32 0.0, %v401
        %v403 = vpop.f32.mrb[0].mxu0
        %404 = vdwg.mxu0
        %v405 = vld [vmem:[%s2] sm:$0xff]
        %v406 = vld [vmem:[%s2 + $0x8] sm:$0xff]
        %v407 = vld [vmem:[%s2 + $0x10] sm:$0xff]
        %v408 = vld [vmem:[%s2 + $0x18] sm:$0xff]
        %v409 = vld [vmem:[%s2 + $0x20] sm:$0xff]
        %v410 = vld [vmem:[%s2 + $0x28] sm:$0xff]
        %v411 = vld [vmem:[%s2 + $0x30] sm:$0xff]
        %v412 = vld [vmem:[%s2 + $0x38] sm:$0xff]
        %v413 = vld [vmem:[%s2 + $0x40] sm:$0xff]
        %v414 = vld [vmem:[%s2 + $0x48] sm:$0xff]
        %v415 = vld [vmem:[%s2 + $0x50] sm:$0xff]
        %v416 = vld [vmem:[%s2 + $0x58] sm:$0xff]
        %v417 = vld [vmem:[%s2 + $0x60] sm:$0xff]
        %v418 = vld [vmem:[%s2 + $0x68] sm:$0xff]
        %v419 = vld [vmem:[%s2 + $0x70] sm:$0xff]
        %v420 = vld [vmem:[%s2 + $0x78] sm:$0xff]
        %v421 = vld [vmem:[%s2 + $0x80] sm:$0xff]
        %v422 = vld [vmem:[%s2 + $0x88] sm:$0xff]
        %v423 = vld [vmem:[%s2 + $0x90] sm:$0xff]
        %v424 = vld [vmem:[%s2 + $0x98] sm:$0xff]
        %v425 = vld [vmem:[%s2 + $0xa0] sm:$0xff]
        %v426 = vld [vmem:[%s2 + $0xa8] sm:$0xff]
        %v427 = vld [vmem:[%s2 + $0xb0] sm:$0xff]
        %v428 = vld [vmem:[%s2 + $0xb8] sm:$0xff]
        %v429 = vld [vmem:[%s2 + $0xc0] sm:$0xff]
        %v430 = vld [vmem:[%s2 + $0xc8] sm:$0xff]
        %v431 = vld [vmem:[%s2 + $0xd0] sm:$0xff]
        %v432 = vld [vmem:[%s2 + $0xd8] sm:$0xff]
        %v433 = vld [vmem:[%s2 + $0xe0] sm:$0xff]
        %v434 = vld [vmem:[%s2 + $0xe8] sm:$0xff]
        %v435 = vld [vmem:[%s2 + $0xf0] sm:$0xff]
        %v436 = vld [vmem:[%s2 + $0xf8] sm:$0xff]
        %v437 = vld [vmem:[%s2 + $0x100] sm:$0xff]
        %v438 = vld [vmem:[%s2 + $0x108] sm:$0xff]
        %v439 = vld [vmem:[%s2 + $0x110] sm:$0xff]
        %v440 = vld [vmem:[%s2 + $0x118] sm:$0xff]
        %v441 = vld [vmem:[%s2 + $0x120] sm:$0xff]
        %v442 = vld [vmem:[%s2 + $0x128] sm:$0xff]
        %v443 = vld [vmem:[%s2 + $0x130] sm:$0xff]
        %v444 = vld [vmem:[%s2 + $0x138] sm:$0xff]
        %v445 = vld [vmem:[%s2 + $0x140] sm:$0xff]
        %v446 = vld [vmem:[%s2 + $0x148] sm:$0xff]
        %v447 = vld [vmem:[%s2 + $0x150] sm:$0xff]
        %v448 = vld [vmem:[%s2 + $0x158] sm:$0xff]
        %v449 = vld [vmem:[%s2 + $0x160] sm:$0xff]
        %v450 = vld [vmem:[%s2 + $0x168] sm:$0xff]
        %v451 = vld [vmem:[%s2 + $0x170] sm:$0xff]
        %v452 = vld [vmem:[%s2 + $0x178] sm:$0xff]
        %v453 = vld [vmem:[%s2 + $0x180] sm:$0xff]
        %v454 = vld [vmem:[%s2 + $0x188] sm:$0xff]
        %v455 = vld [vmem:[%s2 + $0x190] sm:$0xff]
        %v456 = vld [vmem:[%s2 + $0x198] sm:$0xff]
        %v457 = vld [vmem:[%s2 + $0x1a0] sm:$0xff]
        %v458 = vld [vmem:[%s2 + $0x1a8] sm:$0xff]
        %v459 = vld [vmem:[%s2 + $0x1b0] sm:$0xff]
        %v460 = vld [vmem:[%s2 + $0x1b8] sm:$0xff]
        %v461 = vld [vmem:[%s2 + $0x1c0] sm:$0xff]
        %v462 = vld [vmem:[%s2 + $0x1c8] sm:$0xff]
        %v463 = vld [vmem:[%s2 + $0x1d0] sm:$0xff]
        %v464 = vld [vmem:[%s2 + $0x1d8] sm:$0xff]
        %v465 = vld [vmem:[%s2 + $0x1e0] sm:$0xff]
        %v466 = vld [vmem:[%s2 + $0x1e8] sm:$0xff]
        %v467 = vld [vmem:[%s2 + $0x1f0] sm:$0xff]
        %v468 = vld [vmem:[%s2 + $0x1f8] sm:$0xff]
        %v469 = vld [vmem:[%s2 + $0x200] sm:$0xff]
        %v470 = vld [vmem:[%s2 + $0x208] sm:$0xff]
        %v471 = vld [vmem:[%s2 + $0x210] sm:$0xff]
        %v472 = vld [vmem:[%s2 + $0x218] sm:$0xff]
        %v473 = vld [vmem:[%s2 + $0x220] sm:$0xff]
        %v474 = vld [vmem:[%s2 + $0x228] sm:$0xff]
        %v475 = vld [vmem:[%s2 + $0x230] sm:$0xff]
        %v476 = vld [vmem:[%s2 + $0x238] sm:$0xff]
        %v477 = vld [vmem:[%s2 + $0x240] sm:$0xff]
        %v478 = vld [vmem:[%s2 + $0x248] sm:$0xff]
        %v479 = vld [vmem:[%s2 + $0x250] sm:$0xff]
        %v480 = vld [vmem:[%s2 + $0x258] sm:$0xff]
        %v481 = vld [vmem:[%s2 + $0x260] sm:$0xff]
        %v482 = vld [vmem:[%s2 + $0x268] sm:$0xff]
        %v483 = vld [vmem:[%s2 + $0x270] sm:$0xff]
        %v484 = vld [vmem:[%s2 + $0x278] sm:$0xff]
        %485 = vmatprep.subr.mxu0 %v406
        %486 = vmatpush1.msra.mxu0 %v405
        %487 = vmatprep.subr.mxu0 %v411
        %488 = vmatpush1.msra.mxu0 %v410
        %489 = vmatprep.subr.mxu0 %v416
        %490 = vmatpush1.msra.mxu0 %v415
        %491 = vmatprep.subr.mxu0 %v421
        %492 = vmatpush1.msra.mxu0 %v420
        %493 = vmatprep.subr.mxu0 %v426
        %494 = vmatpush1.msra.mxu0 %v425
        %495 = vmatprep.subr.mxu0 %v431
        %496 = vmatpush1.msra.mxu0 %v430
        %497 = vmatprep.subr.mxu0 %v436
        %498 = vmatpush1.msra.mxu0 %v435
        %499 = vmatprep.subr.mxu0 %v441
        %500 = vmatpush1.msra.mxu0 %v440
        %501 = vmatprep.subr.mxu0 %v446
        %502 = vmatpush1.msra.mxu0 %v445
        %503 = vmatprep.subr.mxu0 %v451
        %504 = vmatpush1.msra.mxu0 %v450
        %505 = vmatprep.subr.mxu0 %v456
        %506 = vmatpush1.msra.mxu0 %v455
        %507 = vmatprep.subr.mxu0 %v461
        %508 = vmatpush1.msra.mxu0 %v460
        %509 = vmatprep.subr.mxu0 %v466
        %510 = vmatpush1.msra.mxu0 %v465
        %511 = vmatprep.subr.mxu0 %v471
        %512 = vmatpush1.msra.mxu0 %v470
        %513 = vmatprep.subr.mxu0 %v476
        %514 = vmatpush1.msra.mxu0 %v475
        %515 = vmatprep.subr.mxu0 %v481
        %516 = vmatpush1.msra.mxu0 %v480
        %517 = vmatprep.subr.mxu0 0.0
        %518 = vmatpush1.msra.mxu0 0.0
        %519 = vmatprep.subr.mxu0 0.0
        %520 = vmatpush1.msra.mxu0 0.0
        %521 = vmatprep.subr.mxu0 0.0
        %522 = vmatpush1.msra.mxu0 0.0
        %523 = vmatprep.subr.mxu0 0.0
        %524 = vmatpush1.msra.mxu0 0.0
        %525 = vmatprep.subr.mxu0 0.0
        %526 = vmatpush1.msra.mxu0 0.0
        %527 = vmatprep.subr.mxu0 0.0
        %528 = vmatpush1.msra.mxu0 0.0
        %529 = vmatprep.subr.mxu0 0.0
        %530 = vmatpush1.msra.mxu0 0.0
        %531 = vmatprep.subr.mxu0 0.0
        %532 = vmatpush1.msra.mxu0 0.0
        %533 = vmatprep.subr.mxu0 0.0
        %534 = vmatpush1.msra.mxu0 0.0
        %535 = vmatprep.subr.mxu0 0.0
        %536 = vmatpush1.msra.mxu0 0.0
        %537 = vmatprep.subr.mxu0 0.0
        %538 = vmatpush1.msra.mxu0 0.0
        %539 = vmatprep.subr.mxu0 0.0
        %540 = vmatpush1.msra.mxu0 0.0
        %541 = vmatprep.subr.mxu0 0.0
        %542 = vmatpush1.msra.mxu0 0.0
        %543 = vmatprep.subr.mxu0 0.0
        %544 = vmatpush1.msra.mxu0 0.0
        %545 = vmatprep.subr.mxu0 0.0
        %546 = vmatpush1.msra.mxu0 0.0
        %547 = vmatprep.subr.mxu0 0.0
        %548 = vmatpush1.msra.mxu0 0.0
        %549 = vmatprep.mubr.f32.mxu0 0.0
        %550 = vmatmul.mubr.f32.gmra.mrb[0].mxu0 %v332
        %v551 = vpop.f32.mrb[0].mxu0
        %v552 = vadd.f32 0.0, %v551
        %v553 = vpop.f32.mrb[0].mxu0
        %v554 = vadd.f32 0.0, %v553
        %555 = vmatprep.mubr.f32.mxu0 0.0
        %556 = vmatmul.mubr.f32.gmra.mrb[0].mxu0 %v337
        %v557 = vpop.f32.mrb[0].mxu0
        %v558 = vadd.f32 0.0, %v557
        %v559 = vpop.f32.mrb[0].mxu0
        %v560 = vadd.f32 0.0, %v559
        %561 = vmatprep.mubr.f32.mxu0 0.0
        %562 = vmatmul.mubr.f32.gmra.mrb[0].mxu0 %v342
        %v563 = vpop.f32.mrb[0].mxu0
        %v564 = vadd.f32 0.0, %v563
        %v565 = vpop.f32.mrb[0].mxu0
        %v566 = vadd.f32 0.0, %v565
        %567 = vmatprep.mubr.f32.mxu0 0.0
        %568 = vmatmul.mubr.f32.gmra.mrb[0].mxu0 %v347
        %v569 = vpop.f32.mrb[0].mxu0
        %v570 = vadd.f32 0.0, %v569
        %v571 = vpop.f32.mrb[0].mxu0
        %v572 = vadd.f32 0.0, %v571
        %573 = vmatprep.mubr.f32.mxu0 0.0
        %574 = vmatmul.mubr.f32.gmra.mrb[0].mxu0 %v352
        %v575 = vpop.f32.mrb[0].mxu0
        %v576 = vadd.f32 0.0, %v575
        %v577 = vpop.f32.mrb[0].mxu0
        %v578 = vadd.f32 0.0, %v577
        %579 = vmatprep.mubr.f32.mxu0 0.0
        %580 = vmatmul.mubr.f32.gmra.mrb[0].mxu0 %v357
        %v581 = vpop.f32.mrb[0].mxu0
        %v582 = vadd.f32 0.0, %v581
        %v583 = vpop.f32.mrb[0].mxu0
        %v584 = vadd.f32 0.0, %v583
        %585 = vmatprep.mubr.f32.mxu0 0.0
        %586 = vmatmul.mubr.f32.gmra.mrb[0].mxu0 %v362
        %v587 = vpop.f32.mrb[0].mxu0
        %v588 = vadd.f32 0.0, %v587
        %v589 = vpop.f32.mrb[0].mxu0
        %v590 = vadd.f32 0.0, %v589
        %591 = vmatprep.mubr.f32.mxu0 0.0
        %592 = vmatmul.mubr.f32.gmra.mrb[0].mxu0 %v367
        %v593 = vpop.f32.mrb[0].mxu0
        %v594 = vadd.f32 0.0, %v593
        %v595 = vpop.f32.mrb[0].mxu0
        %v596 = vadd.f32 0.0, %v595
        %597 = vmatprep.mubr.f32.mxu0 0.0
        %598 = vmatmul.mubr.f32.gmra.mrb[0].mxu0 %v372
        %v599 = vpop.f32.mrb[0].mxu0
        %v600 = vadd.f32 0.0, %v599
        %v601 = vpop.f32.mrb[0].mxu0
        %v602 = vadd.f32 0.0, %v601
        %603 = vmatprep.mubr.f32.mxu0 0.0
        %604 = vmatmul.mubr.f32.gmra.mrb[0].mxu0 %v377
        %v605 = vpop.f32.mrb[0].mxu0
        %v606 = vadd.f32 0.0, %v605
        %v607 = vpop.f32.mrb[0].mxu0
        %v608 = vadd.f32 0.0, %v607
        %609 = vmatprep.mubr.f32.mxu0 0.0
        %610 = vmatmul.mubr.f32.gmra.mrb[0].mxu0 %v382
        %v611 = vpop.f32.mrb[0].mxu0
        %v612 = vadd.f32 0.0, %v611
        %v613 = vpop.f32.mrb[0].mxu0
        %v614 = vadd.f32 0.0, %v613
        %615 = vmatprep.mubr.f32.mxu0 0.0
        %616 = vmatmul.mubr.f32.gmra.mrb[0].mxu0 %v387
        %v617 = vpop.f32.mrb[0].mxu0
        %v618 = vadd.f32 0.0, %v617
        %v619 = vpop.f32.mrb[0].mxu0
        %v620 = vadd.f32 0.0, %v619
        %621 = vmatprep.mubr.f32.mxu0 0.0
        %622 = vmatmul.mubr.f32.gmra.mrb[0].mxu0 %v392
        %v623 = vpop.f32.mrb[0].mxu0
        %v624 = vadd.f32 0.0, %v623
        %v625 = vpop.f32.mrb[0].mxu0
        %v626 = vadd.f32 0.0, %v625
        %627 = vmatprep.mubr.f32.mxu0 0.0
        %628 = vmatmul.mubr.f32.gmra.mrb[0].mxu0 %v397
        %v629 = vpop.f32.mrb[0].mxu0
        %v630 = vadd.f32 0.0, %v629
        %v631 = vpop.f32.mrb[0].mxu0
        %v632 = vadd.f32 0.0, %v631
        %633 = vmatprep.mubr.f32.mxu0 0.0
        %634 = vmatmul.mubr.f32.gmra.mrb[0].mxu0 %v402
        %v635 = vpop.f32.mrb[0].mxu0
        %v636 = vadd.f32 0.0, %v635
        %v637 = vpop.f32.mrb[0].mxu0
        %v638 = vadd.f32 0.0, %v637
        %639 = vdwg.mxu0
        %640 = vmatprep.subr.mxu0 %v408
        %641 = vmatpush1.msra.mxu0 %v407
        %642 = vmatprep.subr.mxu0 %v413
        %643 = vmatpush1.msra.mxu0 %v412
        %644 = vmatprep.subr.mxu0 %v418
        %645 = vmatpush1.msra.mxu0 %v417
        %646 = vmatprep.subr.mxu0 %v423
        %647 = vmatpush1.msra.mxu0 %v422
        %648 = vmatprep.subr.mxu0 %v428
        %649 = vmatpush1.msra.mxu0 %v427
        %650 = vmatprep.subr.mxu0 %v433
        %651 = vmatpush1.msra.mxu0 %v432
        %652 = vmatprep.subr.mxu0 %v438
        %653 = vmatpush1.msra.mxu0 %v437
        %654 = vmatprep.subr.mxu0 %v443
        %655 = vmatpush1.msra.mxu0 %v442
        %656 = vmatprep.subr.mxu0 %v448
        %657 = vmatpush1.msra.mxu0 %v447
        %658 = vmatprep.subr.mxu0 %v453
        %659 = vmatpush1.msra.mxu0 %v452
        %660 = vmatprep.subr.mxu0 %v458
        %661 = vmatpush1.msra.mxu0 %v457
        %662 = vmatprep.subr.mxu0 %v463
        %663 = vmatpush1.msra.mxu0 %v462
        %664 = vmatprep.subr.mxu0 %v468
        %665 = vmatpush1.msra.mxu0 %v467
        %666 = vmatprep.subr.mxu0 %v473
        %667 = vmatpush1.msra.mxu0 %v472
        %668 = vmatprep.subr.mxu0 %v478
        %669 = vmatpush1.msra.mxu0 %v477
        %670 = vmatprep.subr.mxu0 %v483
        %671 = vmatpush1.msra.mxu0 %v482
        %672 = vmatprep.subr.mxu0 0.0
        %673 = vmatpush1.msra.mxu0 0.0
        %674 = vmatprep.subr.mxu0 0.0
        %675 = vmatpush1.msra.mxu0 0.0
        %676 = vmatprep.subr.mxu0 0.0
        %677 = vmatpush1.msra.mxu0 0.0
        %678 = vmatprep.subr.mxu0 0.0
        %679 = vmatpush1.msra.mxu0 0.0
        %680 = vmatprep.subr.mxu0 0.0
        %681 = vmatpush1.msra.mxu0 0.0
        %682 = vmatprep.subr.mxu0 0.0
        %683 = vmatpush1.msra.mxu0 0.0
        %684 = vmatprep.subr.mxu0 0.0
        %685 = vmatpush1.msra.mxu0 0.0
        %686 = vmatprep.subr.mxu0 0.0
        %687 = vmatpush1.msra.mxu0 0.0
        %688 = vmatprep.subr.mxu0 0.0
        %689 = vmatpush1.msra.mxu0 0.0
        %690 = vmatprep.subr.mxu0 0.0
        %691 = vmatpush1.msra.mxu0 0.0
        %692 = vmatprep.subr.mxu0 0.0
        %693 = vmatpush1.msra.mxu0 0.0
        %694 = vmatprep.subr.mxu0 0.0
        %695 = vmatpush1.msra.mxu0 0.0
        %696 = vmatprep.subr.mxu0 0.0
        %697 = vmatpush1.msra.mxu0 0.0
        %698 = vmatprep.subr.mxu0 0.0
        %699 = vmatpush1.msra.mxu0 0.0
        %700 = vmatprep.subr.mxu0 0.0
        %701 = vmatpush1.msra.mxu0 0.0
        %702 = vmatprep.subr.mxu0 0.0
        %703 = vmatpush1.msra.mxu0 0.0
        %704 = vmatprep.mubr.f32.mxu0 0.0
        %705 = vmatmul.mubr.f32.gmra.mrb[0].mxu0 %v332
        %v706 = vpop.f32.mrb[0].mxu0
        %v707 = vadd.f32 0.0, %v706
        %v708 = vpop.f32.mrb[0].mxu0
        %v709 = vadd.f32 0.0, %v708
        %710 = vmatprep.mubr.f32.mxu0 0.0
        %711 = vmatmul.mubr.f32.gmra.mrb[0].mxu0 %v337
        %v712 = vpop.f32.mrb[0].mxu0
        %v713 = vadd.f32 0.0, %v712
        %v714 = vpop.f32.mrb[0].mxu0
        %v715 = vadd.f32 0.0, %v714
        %716 = vmatprep.mubr.f32.mxu0 0.0
        %717 = vmatmul.mubr.f32.gmra.mrb[0].mxu0 %v342
        %v718 = vpop.f32.mrb[0].mxu0
        %v719 = vadd.f32 0.0, %v718
        %v720 = vpop.f32.mrb[0].mxu0
        %v721 = vadd.f32 0.0, %v720
        %722 = vmatprep.mubr.f32.mxu0 0.0
        %723 = vmatmul.mubr.f32.gmra.mrb[0].mxu0 %v347
        %v724 = vpop.f32.mrb[0].mxu0
        %v725 = vadd.f32 0.0, %v724
        %v726 = vpop.f32.mrb[0].mxu0
        %v727 = vadd.f32 0.0, %v726
        %728 = vmatprep.mubr.f32.mxu0 0.0
        %729 = vmatmul.mubr.f32.gmra.mrb[0].mxu0 %v352
        %v730 = vpop.f32.mrb[0].mxu0
        %v731 = vadd.f32 0.0, %v730
        %v732 = vpop.f32.mrb[0].mxu0
        %v733 = vadd.f32 0.0, %v732
        %734 = vmatprep.mubr.f32.mxu0 0.0
        %735 = vmatmul.mubr.f32.gmra.mrb[0].mxu0 %v357
        %v736 = vpop.f32.mrb[0].mxu0
        %v737 = vadd.f32 0.0, %v736
        %v738 = vpop.f32.mrb[0].mxu0
        %v739 = vadd.f32 0.0, %v738
        %740 = vmatprep.mubr.f32.mxu0 0.0
        %741 = vmatmul.mubr.f32.gmra.mrb[0].mxu0 %v362
        %v742 = vpop.f32.mrb[0].mxu0
        %v743 = vadd.f32 0.0, %v742
        %v744 = vpop.f32.mrb[0].mxu0
        %v745 = vadd.f32 0.0, %v744
        %746 = vmatprep.mubr.f32.mxu0 0.0
        %747 = vmatmul.mubr.f32.gmra.mrb[0].mxu0 %v367
        %v748 = vpop.f32.mrb[0].mxu0
        %v749 = vadd.f32 0.0, %v748
        %v750 = vpop.f32.mrb[0].mxu0
        %v751 = vadd.f32 0.0, %v750
        %752 = vmatprep.mubr.f32.mxu0 0.0
        %753 = vmatmul.mubr.f32.gmra.mrb[0].mxu0 %v372
        %v754 = vpop.f32.mrb[0].mxu0
        %v755 = vadd.f32 0.0, %v754
        %v756 = vpop.f32.mrb[0].mxu0
        %v757 = vadd.f32 0.0, %v756
        %758 = vmatprep.mubr.f32.mxu0 0.0
        %759 = vmatmul.mubr.f32.gmra.mrb[0].mxu0 %v377
        %v760 = vpop.f32.mrb[0].mxu0
        %v761 = vadd.f32 0.0, %v760
        %v762 = vpop.f32.mrb[0].mxu0
        %v763 = vadd.f32 0.0, %v762
        %764 = vmatprep.mubr.f32.mxu0 0.0
        %765 = vmatmul.mubr.f32.gmra.mrb[0].mxu0 %v382
        %v766 = vpop.f32.mrb[0].mxu0
        %v767 = vadd.f32 0.0, %v766
        %v768 = vpop.f32.mrb[0].mxu0
        %v769 = vadd.f32 0.0, %v768
        %770 = vmatprep.mubr.f32.mxu0 0.0
        %771 = vmatmul.mubr.f32.gmra.mrb[0].mxu0 %v387
        %v772 = vpop.f32.mrb[0].mxu0
        %v773 = vadd.f32 0.0, %v772
        %v774 = vpop.f32.mrb[0].mxu0
        %v775 = vadd.f32 0.0, %v774
        %776 = vmatprep.mubr.f32.mxu0 0.0
        %777 = vmatmul.mubr.f32.gmra.mrb[0].mxu0 %v392
        %v778 = vpop.f32.mrb[0].mxu0
        %v779 = vadd.f32 0.0, %v778
        %v780 = vpop.f32.mrb[0].mxu0
        %v781 = vadd.f32 0.0, %v780
        %782 = vmatprep.mubr.f32.mxu0 0.0
        %783 = vmatmul.mubr.f32.gmra.mrb[0].mxu0 %v397
        %v784 = vpop.f32.mrb[0].mxu0
        %v785 = vadd.f32 0.0, %v784
        %v786 = vpop.f32.mrb[0].mxu0
        %v787 = vadd.f32 0.0, %v786
        %788 = vmatprep.mubr.f32.mxu0 0.0
        %789 = vmatmul.mubr.f32.gmra.mrb[0].mxu0 %v402
        %v790 = vpop.f32.mrb[0].mxu0
        %v791 = vadd.f32 0.0, %v790
        %v792 = vpop.f32.mrb[0].mxu0
        %v793 = vadd.f32 0.0, %v792
        %794 = vdwg.mxu0
        %795 = vmatprep.subr.mxu0 0.0
        %796 = vmatpush1.msra.mxu0 %v409
        %797 = vmatprep.subr.mxu0 0.0
        %798 = vmatpush1.msra.mxu0 %v414
        %799 = vmatprep.subr.mxu0 0.0
        %800 = vmatpush1.msra.mxu0 %v419
        %801 = vmatprep.subr.mxu0 0.0
        %802 = vmatpush1.msra.mxu0 %v424
        %803 = vmatprep.subr.mxu0 0.0
        %804 = vmatpush1.msra.mxu0 %v429
        %805 = vmatprep.subr.mxu0 0.0
        %806 = vmatpush1.msra.mxu0 %v434
        %807 = vmatprep.subr.mxu0 0.0
        %808 = vmatpush1.msra.mxu0 %v439
        %809 = vmatprep.subr.mxu0 0.0
        %810 = vmatpush1.msra.mxu0 %v444
        %811 = vmatprep.subr.mxu0 0.0
        %812 = vmatpush1.msra.mxu0 %v449
        %813 = vmatprep.subr.mxu0 0.0
        %814 = vmatpush1.msra.mxu0 %v454
        %815 = vmatprep.subr.mxu0 0.0
        %816 = vmatpush1.msra.mxu0 %v459
        %817 = vmatprep.subr.mxu0 0.0
        %818 = vmatpush1.msra.mxu0 %v464
        %819 = vmatprep.subr.mxu0 0.0
        %820 = vmatpush1.msra.mxu0 %v469
        %821 = vmatprep.subr.mxu0 0.0
        %822 = vmatpush1.msra.mxu0 %v474
        %823 = vmatprep.subr.mxu0 0.0
        %824 = vmatpush1.msra.mxu0 %v479
        %825 = vmatprep.subr.mxu0 0.0
        %826 = vmatpush1.msra.mxu0 %v484
        %827 = vmatprep.subr.mxu0 0.0
        %828 = vmatpush1.msra.mxu0 0.0
        %829 = vmatprep.subr.mxu0 0.0
        %830 = vmatpush1.msra.mxu0 0.0
        %831 = vmatprep.subr.mxu0 0.0
        %832 = vmatpush1.msra.mxu0 0.0
        %833 = vmatprep.subr.mxu0 0.0
        %834 = vmatpush1.msra.mxu0 0.0
        %835 = vmatprep.subr.mxu0 0.0
        %836 = vmatpush1.msra.mxu0 0.0
        %837 = vmatprep.subr.mxu0 0.0
        %838 = vmatpush1.msra.mxu0 0.0
        %839 = vmatprep.subr.mxu0 0.0
        %840 = vmatpush1.msra.mxu0 0.0
        %841 = vmatprep.subr.mxu0 0.0
        %842 = vmatpush1.msra.mxu0 0.0
        %843 = vmatprep.subr.mxu0 0.0
        %844 = vmatpush1.msra.mxu0 0.0
        %845 = vmatprep.subr.mxu0 0.0
        %846 = vmatpush1.msra.mxu0 0.0
        %847 = vmatprep.subr.mxu0 0.0
        %848 = vmatpush1.msra.mxu0 0.0
        %849 = vmatprep.subr.mxu0 0.0
        %850 = vmatpush1.msra.mxu0 0.0
        %851 = vmatprep.subr.mxu0 0.0
        %852 = vmatpush1.msra.mxu0 0.0
        %853 = vmatprep.subr.mxu0 0.0
        %854 = vmatpush1.msra.mxu0 0.0
        %855 = vmatprep.subr.mxu0 0.0
        %856 = vmatpush1.msra.mxu0 0.0
        %857 = vmatprep.subr.mxu0 0.0
        %858 = vmatpush1.msra.mxu0 0.0
        %859 = vmatprep.mubr.f32.mxu0 0.0
        %860 = vmatmul.mubr.f32.gmra.mrb[0].mxu0 %v332
        %v861 = vpop.f32.mrb[0].mxu0
        %v862 = vadd.f32 0.0, %v861
        %v863 = vpop.f32.mrb[0].mxu0
        %864 = vmatprep.mubr.f32.mxu0 0.0
        %865 = vmatmul.mubr.f32.gmra.mrb[0].mxu0 %v337
        %v866 = vpop.f32.mrb[0].mxu0
        %v867 = vadd.f32 0.0, %v866
        %v868 = vpop.f32.mrb[0].mxu0
        %869 = vmatprep.mubr.f32.mxu0 0.0
        %870 = vmatmul.mubr.f32.gmra.mrb[0].mxu0 %v342
        %v871 = vpop.f32.mrb[0].mxu0
        %v872 = vadd.f32 0.0, %v871
        %v873 = vpop.f32.mrb[0].mxu0
        %874 = vmatprep.mubr.f32.mxu0 0.0
        %875 = vmatmul.mubr.f32.gmra.mrb[0].mxu0 %v347
        %v876 = vpop.f32.mrb[0].mxu0
        %v877 = vadd.f32 0.0, %v876
        %v878 = vpop.f32.mrb[0].mxu0
        %879 = vmatprep.mubr.f32.mxu0 0.0
        %880 = vmatmul.mubr.f32.gmra.mrb[0].mxu0 %v352
        %v881 = vpop.f32.mrb[0].mxu0
        %v882 = vadd.f32 0.0, %v881
        %v883 = vpop.f32.mrb[0].mxu0
        %884 = vmatprep.mubr.f32.mxu0 0.0
        %885 = vmatmul.mubr.f32.gmra.mrb[0].mxu0 %v357
        %v886 = vpop.f32.mrb[0].mxu0
        %v887 = vadd.f32 0.0, %v886
        %v888 = vpop.f32.mrb[0].mxu0
        %889 = vmatprep.mubr.f32.mxu0 0.0
        %890 = vmatmul.mubr.f32.gmra.mrb[0].mxu0 %v362
        %v891 = vpop.f32.mrb[0].mxu0
        %v892 = vadd.f32 0.0, %v891
        %v893 = vpop.f32.mrb[0].mxu0
        %894 = vmatprep.mubr.f32.mxu0 0.0
        %895 = vmatmul.mubr.f32.gmra.mrb[0].mxu0 %v367
        %v896 = vpop.f32.mrb[0].mxu0
        %v897 = vadd.f32 0.0, %v896
        %v898 = vpop.f32.mrb[0].mxu0
        %899 = vmatprep.mubr.f32.mxu0 0.0
        %900 = vmatmul.mubr.f32.gmra.mrb[0].mxu0 %v372
        %v901 = vpop.f32.mrb[0].mxu0
        %v902 = vadd.f32 0.0, %v901
        %v903 = vpop.f32.mrb[0].mxu0
        %904 = vmatprep.mubr.f32.mxu0 0.0
        %905 = vmatmul.mubr.f32.gmra.mrb[0].mxu0 %v377
        %v906 = vpop.f32.mrb[0].mxu0
        %v907 = vadd.f32 0.0, %v906
        %v908 = vpop.f32.mrb[0].mxu0
        %909 = vmatprep.mubr.f32.mxu0 0.0
        %910 = vmatmul.mubr.f32.gmra.mrb[0].mxu0 %v382
        %v911 = vpop.f32.mrb[0].mxu0
        %v912 = vadd.f32 0.0, %v911
        %v913 = vpop.f32.mrb[0].mxu0
        %914 = vmatprep.mubr.f32.mxu0 0.0
        %915 = vmatmul.mubr.f32.gmra.mrb[0].mxu0 %v387
        %v916 = vpop.f32.mrb[0].mxu0
        %v917 = vadd.f32 0.0, %v916
        %v918 = vpop.f32.mrb[0].mxu0
        %919 = vmatprep.mubr.f32.mxu0 0.0
        %920 = vmatmul.mubr.f32.gmra.mrb[0].mxu0 %v392
        %v921 = vpop.f32.mrb[0].mxu0
        %v922 = vadd.f32 0.0, %v921
        %v923 = vpop.f32.mrb[0].mxu0
        %924 = vmatprep.mubr.f32.mxu0 0.0
        %925 = vmatmul.mubr.f32.gmra.mrb[0].mxu0 %v397
        %v926 = vpop.f32.mrb[0].mxu0
        %v927 = vadd.f32 0.0, %v926
        %v928 = vpop.f32.mrb[0].mxu0
        %929 = vmatprep.mubr.f32.mxu0 0.0
        %930 = vmatmul.mubr.f32.gmra.mrb[0].mxu0 %v402
        %v931 = vpop.f32.mrb[0].mxu0
        %v932 = vadd.f32 0.0, %v931
        %v933 = vpop.f32.mrb[0].mxu0
        %934 = vdwg.mxu0
        %935 = vst [vmem:[%s191] sm:$0xff] %v552
        %936 = vst [vmem:[%s191 + $0x8] sm:$0xff] %v554
        %937 = vst [vmem:[%s191 + $0x10] sm:$0xff] %v707
        %938 = vst [vmem:[%s191 + $0x18] sm:$0xff] %v709
        %939 = vst [vmem:[%s191 + $0x20] sm:$0xff] %v862
        %940 = vst [vmem:[%s191 + $0x28] sm:$0xff] %v558
        %941 = vst [vmem:[%s191 + $0x30] sm:$0xff] %v560
        %942 = vst [vmem:[%s191 + $0x38] sm:$0xff] %v713
        %943 = vst [vmem:[%s191 + $0x40] sm:$0xff] %v715
        %944 = vst [vmem:[%s191 + $0x48] sm:$0xff] %v867
        %945 = vst [vmem:[%s191 + $0x50] sm:$0xff] %v564
        %946 = vst [vmem:[%s191 + $0x58] sm:$0xff] %v566
        %947 = vst [vmem:[%s191 + $0x60] sm:$0xff] %v719
        %948 = vst [vmem:[%s191 + $0x68] sm:$0xff] %v721
        %949 = vst [vmem:[%s191 + $0x70] sm:$0xff] %v872
        %950 = vst [vmem:[%s191 + $0x78] sm:$0xff] %v570
        %951 = vst [vmem:[%s191 + $0x80] sm:$0xff] %v572
        %952 = vst [vmem:[%s191 + $0x88] sm:$0xff] %v725
        %953 = vst [vmem:[%s191 + $0x90] sm:$0xff] %v727
        %954 = vst [vmem:[%s191 + $0x98] sm:$0xff] %v877
        %955 = vst [vmem:[%s191 + $0xa0] sm:$0xff] %v576
        %956 = vst [vmem:[%s191 + $0xa8] sm:$0xff] %v578
        %957 = vst [vmem:[%s191 + $0xb0] sm:$0xff] %v731
        %958 = vst [vmem:[%s191 + $0xb8] sm:$0xff] %v733
        %959 = vst [vmem:[%s191 + $0xc0] sm:$0xff] %v882
        %960 = vst [vmem:[%s191 + $0xc8] sm:$0xff] %v582
        %961 = vst [vmem:[%s191 + $0xd0] sm:$0xff] %v584
        %962 = vst [vmem:[%s191 + $0xd8] sm:$0xff] %v737
        %963 = vst [vmem:[%s191 + $0xe0] sm:$0xff] %v739
        %964 = vst [vmem:[%s191 + $0xe8] sm:$0xff] %v887
        %965 = vst [vmem:[%s191 + $0xf0] sm:$0xff] %v588
        %966 = vst [vmem:[%s191 + $0xf8] sm:$0xff] %v590
        %967 = vst [vmem:[%s191 + $0x100] sm:$0xff] %v743
        %968 = vst [vmem:[%s191 + $0x108] sm:$0xff] %v745
        %969 = vst [vmem:[%s191 + $0x110] sm:$0xff] %v892
        %970 = vst [vmem:[%s191 + $0x118] sm:$0xff] %v594
        %971 = vst [vmem:[%s191 + $0x120] sm:$0xff] %v596
        %972 = vst [vmem:[%s191 + $0x128] sm:$0xff] %v749
        %973 = vst [vmem:[%s191 + $0x130] sm:$0xff] %v751
        %974 = vst [vmem:[%s191 + $0x138] sm:$0xff] %v897
        %975 = vst [vmem:[%s191 + $0x140] sm:$0xff] %v600
        %976 = vst [vmem:[%s191 + $0x148] sm:$0xff] %v602
        %977 = vst [vmem:[%s191 + $0x150] sm:$0xff] %v755
        %978 = vst [vmem:[%s191 + $0x158] sm:$0xff] %v757
        %979 = vst [vmem:[%s191 + $0x160] sm:$0xff] %v902
        %980 = vst [vmem:[%s191 + $0x168] sm:$0xff] %v606
        %981 = vst [vmem:[%s191 + $0x170] sm:$0xff] %v608
        %982 = vst [vmem:[%s191 + $0x178] sm:$0xff] %v761
        %983 = vst [vmem:[%s191 + $0x180] sm:$0xff] %v763
        %984 = vst [vmem:[%s191 + $0x188] sm:$0xff] %v907
        %985 = vst [vmem:[%s191 + $0x190] sm:$0xff] %v612
        %986 = vst [vmem:[%s191 + $0x198] sm:$0xff] %v614
        %987 = vst [vmem:[%s191 + $0x1a0] sm:$0xff] %v767
        %988 = vst [vmem:[%s191 + $0x1a8] sm:$0xff] %v769
        %989 = vst [vmem:[%s191 + $0x1b0] sm:$0xff] %v912
        %990 = vst [vmem:[%s191 + $0x1b8] sm:$0xff] %v618
        %991 = vst [vmem:[%s191 + $0x1c0] sm:$0xff] %v620
        %992 = vst [vmem:[%s191 + $0x1c8] sm:$0xff] %v773
        %993 = vst [vmem:[%s191 + $0x1d0] sm:$0xff] %v775
        %994 = vst [vmem:[%s191 + $0x1d8] sm:$0xff] %v917
        %995 = vst [vmem:[%s191 + $0x1e0] sm:$0xff] %v624
        %996 = vst [vmem:[%s191 + $0x1e8] sm:$0xff] %v626
        %997 = vst [vmem:[%s191 + $0x1f0] sm:$0xff] %v779
        %998 = vst [vmem:[%s191 + $0x1f8] sm:$0xff] %v781
        %999 = vst [vmem:[%s191 + $0x200] sm:$0xff] %v922
        %1000 = vst [vmem:[%s191 + $0x208] sm:$0xff] %v630
        %1001 = vst [vmem:[%s191 + $0x210] sm:$0xff] %v632
        %1002 = vst [vmem:[%s191 + $0x218] sm:$0xff] %v785
        %1003 = vst [vmem:[%s191 + $0x220] sm:$0xff] %v787
        %1004 = vst [vmem:[%s191 + $0x228] sm:$0xff] %v927
        %1005 = vst [vmem:[%s191 + $0x230] sm:$0xff] %v636
        %1006 = vst [vmem:[%s191 + $0x238] sm:$0xff] %v638
        %1007 = vst [vmem:[%s191 + $0x240] sm:$0xff] %v791
        %1008 = vst [vmem:[%s191 + $0x248] sm:$0xff] %v793
        %1009 = vst [vmem:[%s191 + $0x250] sm:$0xff] %v932
        %s1010 = sand.u32 %s112, 1
        %s1011 = scalar_lea.sflag [#allocation3], %s1010
        %s1012 = sand.u32 %s112, 1
        %s1013 = smul.addr %s1012, 600
        %s1014 = scalar_lea.vmem [#allocation2], %s1013
        // Predicated region
        $region33: #{stereonet_forward.39} parent=31 // pred_check
          %p1015 = pneg %p122
        $region34: #{stereonet_forward.39} parent=31 // pred_check_branch
          %1017 = sbr.rel (%p1015) target = $region36
        $region35: #{stereonet_forward.39} parent=31 // pred_region
          %s1018 = smul.u32 15, %s22
          %s1020 = ssub.s32 9600, 9600
          %1021 = vsyncadd %s1011, %s1020
          %s1022 = smul.addr %s1018, 5
          %s1023 = smul.addr %s21, 300
          %s1024 = sadd.s32 %s1022, %s1023
          %s1025 = smul.addr %s1024, 128
          %s1026 = scalar_lea.hbm %s3, %s1025
          %s1027 = sshll.u32 %s1014, 4
          %s1028 = int_to_ptr.vmem [resolvable:$true] %s1027
          %1033 = dma.vmem_to_hbm [thread:$0]  %s1028, 9600, %s1026, %s1011, 640, 640, 40
        $region36: #{stereonet_forward.39} parent=31 // pred_fallthru
          _
      $region32: #{stereonet_forward.39} parent=5 // pred_fallthru
        _
      %p1034 = scmp.le.s32.totalorder 2, %s12
      // Predicated region
      $region37: #{stereonet_forward.39} parent=5 // pred_check
        %p1035 = pneg %p1034
      $region38: #{stereonet_forward.39} parent=5 // pred_check_branch
        %1037 = sbr.rel (%p1035) target = $region40
      $region39: #{stereonet_forward.39} parent=5 // pred_region
        %s1038 = ssub.s32 %s12, 2
        // Predicated region
        $region41: #{stereonet_forward.39} parent=39 // pred_check
          %p1039 = pneg %p128
        $region42: #{stereonet_forward.39} parent=39 // pred_check_branch
          %1041 = sbr.rel (%p1039) target = $region44
        $region43: #{stereonet_forward.39} parent=39 // pred_region
          %s1042 = sand.u32 %s113, 1
          %s1043 = scalar_lea.sflag [#allocation3], %s1042
          %s1044 = sand.u32 %s113, 1
          %s1045 = smul.addr %s1044, 600
          %s1046 = scalar_lea.vmem [#allocation2], %s1045
          %1047 = dma.done %s1043, 9600
        $region44: #{stereonet_forward.39} parent=39 // pred_fallthru
          _
      $region40: #{stereonet_forward.39} parent=5 // pred_fallthru
        _
    $region6: #{stereonet_forward.39} parent=1 // loop_footer
      %s16 = sadd.s32 1, %s12
    $region7: #{stereonet_forward.39} parent=1 // loop_footer_branch
      %11 = sbr.rel target = $region3
    $region8: #{stereonet_forward.39} parent=1 // loop_exit
      _
    %1048 = vsyncpa [#allocation3], 1
    %s1049 = scalar_lea.sflag [#allocation3], 1
    %1050 = vsyncpa %s1049, 1

</llo_original>
